<compile_context>
chip_gen: v7x
topology: tpu7x:2x2x1
jax: 0.10.0
libtpu: 0.0.40
codegen_flags: <defaults>
</compile_context>

<pallas_src>
import functools

import jax
import jax.numpy as jnp
import numpy as np
from jax.experimental import pallas as pl
from jax.experimental.pallas import tpu as pltpu


# ------------------------------ configuration ------------------------------ #

CONFIG = dict(c1=8, c2=16, c3=32, c4=32, fc_size=64,
              dropout_p=0.1, activation="relu")
LATENT_DIM = 16
KERNEL_SIZE = 3
IN_CHANNELS = 3
SIZE = 1                # spatial size after conv4 for 32x32 input
BN_EPS = 1e-5


# ------------------------------ Pallas kernel ------------------------------ #

def _encoder_kernel(p1_ref, w1_ref,
                    g2_ref, w2_ref, g3_ref, w3_ref, g4_ref, w4_ref,
                    wlx_ref, wll_ref, wms_ref,
                    vec_ref, lab_ref, eps_ref,
                    z_ref, *, c1, c2, c3, c4, fc, latent):
    dot = functools.partial(jnp.dot, preferred_element_type=jnp.float32)

    # ---- unpack the packed per-channel parameter column (static slices) ----
    vec = vec_ref[...]                       # (P, 1)
    off = 0

    def take(n):
        nonlocal off
        v = vec[off:off + n, :]
        off += n
        return v

    b1, b2, b3, b4 = take(c1), take(c2), take(c3), take(c4)
    gamma, beta = take(c2), take(c2)
    blin = take(fc)
    bms = take(2 * latent)                   # rows [0:latent]=b_mu, rest=b_sigma

    # Stride-2 3x3 conv in channels-major layout via 0/1 selection matmuls:
    #   out(Cout, Mout) = sum_t W_t(Cout, Cin) @ (act(Cin, Min) @ G_t(Min, Mout)) + b
    def conv_stride2(act, g_ref, w_ref, bias):
        acc = dot(w_ref[0], dot(act, g_ref[0]))
        for t in range(1, 9):
            acc = acc + dot(w_ref[t], dot(act, g_ref[t]))
        return acc + bias

    # conv1 (pre-im2col'd patches) + ReLU                  -> (c1, B*16*16)
    a1 = jnp.maximum(dot(w1_ref[...], p1_ref[...]) + b1, 0.0)

    # conv2 -> BatchNorm2d (batch statistics) -> dropout -> ReLU   (c2, B*7*7)
    y2 = conv_stride2(a1, g2_ref, w2_ref, b2)
    mean = jnp.mean(y2, axis=1, keepdims=True)                   # per channel
    var = jnp.mean(jnp.square(y2 - mean), axis=1, keepdims=True)  # biased var
    scale = gamma * jax.lax.rsqrt(var + BN_EPS)
    shift = beta - mean * scale
    # TODO(synk): nn.Dropout train-mode masking/scaling omitted (eval-mode identity).
    a2 = jnp.maximum(y2 * scale + shift, 0.0)

    # conv3 + ReLU                                          -> (c3, B*3*3)
    a3 = jnp.maximum(conv_stride2(a2, g3_ref, w3_ref, b3), 0.0)
    # conv4 + ReLU                                          -> (c4, B)
    a4 = jnp.maximum(conv_stride2(a3, g4_ref, w4_ref, b4), 0.0)

    # linear1 on [flatten(x) ; labels]  (labels enter as a rank-1 outer product)
    h = dot(wlx_ref[...], a4) + wll_ref[...] * lab_ref[...] + blin   # (fc, B)

    # fused mu/sigma heads (single MXU matmul) + reparameterisation
    ms = dot(wms_ref[...], h) + bms                                  # (2L, B)
    mu = ms[0:latent, :]
    sigma = jnp.exp(ms[latent:2 * latent, :])
    z_ref[...] = (mu + sigma * eps_ref[...]).astype(z_ref.dtype)
    # NOTE: self.kl is a stored side-effect in the torch module and is not returned.


# ------------------------------- JAX glue ----------------------------------- #

def _conv1_patches(x, k, stride, pad):
    """NCHW x -> im2col patches (Cin*k*k, B*Ho*Wo); row order (c, kh, kw)."""
    n, c, h, w = x.shape
    xp = jnp.pad(x, ((0, 0), (0, 0), (pad, pad), (pad, pad)))
    ho = (h + 2 * pad - k) // stride + 1
    wo = (w + 2 * pad - k) // stride + 1
    cols = []
    for di in range(k):
        for dj in range(k):
            cols.append(xp[:, :, di:di + stride * ho:stride, dj:dj + stride * wo:stride])
    p = jnp.stack(cols, axis=2)                # (B, C, k*k, Ho, Wo), tap = di*k+dj
    p = p.transpose(1, 2, 0, 3, 4)             # (C, k*k, B, Ho, Wo)
    return p.reshape(c * k * k, n * ho * wo), ho, wo


def _selection_matrices(batch, h, w, k, stride):
    """Constant 0/1 gather matrices G (k*k, B*H*W, B*Ho*Wo) for a stride-s conv."""
    ho = (h - k) // stride + 1
    wo = (w - k) // stride + 1
    g = np.zeros((k * k, batch * h * w, batch * ho * wo), np.float32)
    for di in range(k):
        for dj in range(k):
            t = di * k + dj
            for b in range(batch):
                for i in range(ho):
                    for j in range(wo):
                        m_in = (b * h + stride * i + di) * w + (stride * j + dj)
                        m_out = (b * ho + i) * wo + j
                        g[t, m_in, m_out] = 1.0
    return jnp.asarray(g), ho, wo


def _full_spec(shape):
    nd = len(shape)
    return pl.BlockSpec(shape, lambda i, _nd=nd: (0,) * _nd)


@jax.jit
def encoder_forward(params, x, labels, eps):
    """x: (B, IN_CHANNELS, 32, 32) NCHW; labels: (B,); eps: (B, LATENT_DIM)."""
    c1, c2, c3, c4 = CONFIG["c1"], CONFIG["c2"], CONFIG["c3"], CONFIG["c4"]
    fc, latent, k = CONFIG["fc_size"], LATENT_DIM, KERNEL_SIZE
    batch = x.shape[0]
    size_fc = c4 * SIZE * SIZE

    # conv1 im2col (tiny, one-time layout op on the HBM-resident input).
    p1, h1, w1o = _conv1_patches(x, k, stride=2, pad=1)            # (27, B*256)

    # Compile-time constant gather matrices for the in-kernel stride-2 convs.
    g2, h2, w2o = _selection_matrices(batch, h1, w1o, k, 2)        # (9, B*256, B*49)
    g3, h3, w3o = _selection_matrices(batch, h2, w2o, k, 2)        # (9, B*49,  B*9)
    g4, _, _ = _selection_matrices(batch, h3, w3o, k, 2)           # (9, B*9,   B)

    # Weights re-laid-out for the channels-major (C, M) dataflow.
    def taps(wc):  # (Cout, Cin, k, k) -> (k*k, Cout, Cin), tap index = kh*k + kw
        co, ci = wc.shape[0], wc.shape[1]
        return wc.transpose(2, 3, 0, 1).reshape(k * k, co, ci)

    w1f = params["w1"].reshape(c1, IN_CHANNELS * k * k)            # (c1, 27)
    w2t, w3t, w4t = taps(params["w2"]), taps(params["w3"]), taps(params["w4"])

    wl = params["w_lin1"].T                                        # (fc, size_fc+1)
    wlx, wll = wl[:, :size_fc], wl[:, size_fc:]                    # (fc, size_fc), (fc, 1)
    wms = jnp.concatenate([params["w_mu"].T, params["w_sig"].T], axis=0)  # (2L, fc)

    # All per-channel vectors packed into one small column -> one DMA.
    vec = jnp.concatenate([
        params["b1"], params["b2"], params["b3"], params["b4"],
        params["bn_gamma"], params["bn_beta"],
        params["b_lin1"], params["b_mu"], params["b_sig"],
    ]).reshape(-1, 1)

    lab = labels.astype(jnp.float32).reshape(1, batch)
    eps_t = eps.T                                                  # (latent, B)

    kern = functools.partial(_encoder_kernel, c1=c1, c2=c2, c3=c3, c4=c4,
                             fc=fc, latent=latent)
    operands = (p1, w1f, g2, w2t, g3, w3t, g4, w4t, wlx, wll, wms, vec, lab, eps_t)

    z_t = pl.pallas_call(
        kern,
        out_shape=jax.ShapeDtypeStruct((latent, batch), x.dtype),
        grid=(1,),
        in_specs=[_full_spec(op.shape) for op in operands],
        out_specs=_full_spec((latent, batch)),
        compiler_params=pltpu.CompilerParams(dimension_semantics=("arbitrary",)),
    )(*operands)
    return z_t.T                                                   # (B, latent)


# ---------------------------- parameter init -------------------------------- #

def init_params(key):
    c1, c2, c3, c4 = CONFIG["c1"], CONFIG["c2"], CONFIG["c3"], CONFIG["c4"]
    fc_size = CONFIG["fc_size"]
    size_fc = c4 * SIZE * SIZE
    k = KERNEL_SIZE

    def uinit(kk, shape, fan_in):
        bound = 1.0 / jnp.sqrt(jnp.float32(fan_in))
        return jax.random.uniform(kk, shape, jnp.float32, -bound, bound)

    ks = jax.random.split(key, 16)
    p = {}
    p["w1"] = uinit(ks[0], (c1, IN_CHANNELS, k, k), IN_CHANNELS * k * k)
    p["b1"] = uinit(ks[1], (c1,), IN_CHANNELS * k * k)
    p["w2"] = uinit(ks[2], (c2, c1, k, k), c1 * k * k)
    p["b2"] = uinit(ks[3], (c2,), c1 * k * k)
    p["w3"] = uinit(ks[4], (c3, c2, k, k), c2 * k * k)
    p["b3"] = uinit(ks[5], (c3,), c2 * k * k)
    p["w4"] = uinit(ks[6], (c4, c3, k, k), c3 * k * k)
    p["b4"] = uinit(ks[7], (c4,), c3 * k * k)
    p["w_lin1"] = uinit(ks[8], (size_fc + 1, fc_size), size_fc + 1)
    p["b_lin1"] = uinit(ks[9], (fc_size,), size_fc + 1)
    p["w_mu"] = uinit(ks[10], (fc_size, LATENT_DIM), fc_size)
    p["b_mu"] = uinit(ks[11], (LATENT_DIM,), fc_size)
    p["w_sig"] = uinit(ks[12], (fc_size, LATENT_DIM), fc_size)
    p["b_sig"] = uinit(ks[13], (LATENT_DIM,), fc_size)
    p["bn_gamma"] = jnp.ones((c2,), jnp.float32)
    p["bn_beta"] = jnp.zeros((c2,), jnp.float32)
    return p


if __name__ == "__main__":
    key = jax.random.PRNGKey(0)
    kp, kx, ke = jax.random.split(key, 3)

    params = init_params(kp)
    x = jax.random.normal(kx, (2, IN_CHANNELS, 32, 32), jnp.float32)
    labels = jnp.array([0.0, 1.0], jnp.float32)
    eps = jax.random.normal(ke, (2, LATENT_DIM), jnp.float32)

    z = encoder_forward(params, x, labels, eps)
    z = jax.block_until_ready(z)
    assert z.shape == (2, LATENT_DIM) and z.dtype == jnp.float32
    assert bool(jnp.all(jnp.isfinite(z)))
    print("KERNEL_OK")
</pallas_src>

<mosaic_0001>
module attributes {stable_mosaic.version = 11 : i64} {
  func.func @_encoder_kernel(%arg0: i32, %arg1: memref<27x512xf32, #tpu.memory_space<vmem>>, %arg2: memref<8x27xf32, #tpu.memory_space<vmem>>, %arg3: memref<9x512x98xf32, #tpu.memory_space<vmem>>, %arg4: memref<9x16x8xf32, #tpu.memory_space<vmem>>, %arg5: memref<9x98x18xf32, #tpu.memory_space<vmem>>, %arg6: memref<9x32x16xf32, #tpu.memory_space<vmem>>, %arg7: memref<9x18x2xf32, #tpu.memory_space<vmem>>, %arg8: memref<9x32x32xf32, #tpu.memory_space<vmem>>, %arg9: memref<64x32xf32, #tpu.memory_space<vmem>>, %arg10: memref<64x1xf32, #tpu.memory_space<vmem>>, %arg11: memref<32x64xf32, #tpu.memory_space<vmem>>, %arg12: memref<216x1xf32, #tpu.memory_space<vmem>>, %arg13: memref<1x2xf32, #tpu.memory_space<vmem>>, %arg14: memref<16x2xf32, #tpu.memory_space<vmem>>, %arg15: memref<16x2xf32, #tpu.memory_space<vmem>>) attributes {dimension_semantics = [#tpu.dimension_semantics<arbitrary>], iteration_bounds = array<i64: 1>, scalar_prefetch = 0 : i64, scratch_operands = 0 : i64, tpu.core_type = #tpu.core_type<tc>, window_params = [{pipeline_mode = #tpu.pipeline_mode<synchronous>, transform_indices = @transform_0, window_bounds = array<i64: 27, 512>}, {pipeline_mode = #tpu.pipeline_mode<synchronous>, transform_indices = @transform_1, window_bounds = array<i64: 8, 27>}, {pipeline_mode = #tpu.pipeline_mode<synchronous>, transform_indices = @transform_2, window_bounds = array<i64: 9, 512, 98>}, {pipeline_mode = #tpu.pipeline_mode<synchronous>, transform_indices = @transform_3, window_bounds = array<i64: 9, 16, 8>}, {pipeline_mode = #tpu.pipeline_mode<synchronous>, transform_indices = @transform_4, window_bounds = array<i64: 9, 98, 18>}, {pipeline_mode = #tpu.pipeline_mode<synchronous>, transform_indices = @transform_5, window_bounds = array<i64: 9, 32, 16>}, {pipeline_mode = #tpu.pipeline_mode<synchronous>, transform_indices = @transform_6, window_bounds = array<i64: 9, 18, 2>}, {pipeline_mode = #tpu.pipeline_mode<synchronous>, transform_indices = @transform_7, window_bounds = array<i64: 9, 32, 32>}, {pipeline_mode = #tpu.pipeline_mode<synchronous>, transform_indices = @transform_8, window_bounds = array<i64: 64, 32>}, {pipeline_mode = #tpu.pipeline_mode<synchronous>, transform_indices = @transform_9, window_bounds = array<i64: 64, 1>}, {pipeline_mode = #tpu.pipeline_mode<synchronous>, transform_indices = @transform_10, window_bounds = array<i64: 32, 64>}, {pipeline_mode = #tpu.pipeline_mode<synchronous>, transform_indices = @transform_11, window_bounds = array<i64: 216, 1>}, {pipeline_mode = #tpu.pipeline_mode<synchronous>, transform_indices = @transform_12, window_bounds = array<i64: 1, 2>}, {pipeline_mode = #tpu.pipeline_mode<synchronous>, transform_indices = @transform_13, window_bounds = array<i64: 16, 2>}, {pipeline_mode = #tpu.pipeline_mode<synchronous>, transform_indices = @transform_14, window_bounds = array<i64: 16, 2>}]} {
    %c0 = arith.constant 0 : index
    %c0_0 = arith.constant 0 : index
    %0 = vector.load %arg12[%c0, %c0_0] : memref<216x1xf32, #tpu.memory_space<vmem>>, vector<216x1xf32>
    %1 = vector.extract_strided_slice %0 {offsets = [0, 0], sizes = [8, 1], strides = [1, 1]} : vector<216x1xf32> to vector<8x1xf32>
    %2 = vector.extract_strided_slice %0 {offsets = [8, 0], sizes = [16, 1], strides = [1, 1]} : vector<216x1xf32> to vector<16x1xf32>
    %3 = vector.extract_strided_slice %0 {offsets = [24, 0], sizes = [32, 1], strides = [1, 1]} : vector<216x1xf32> to vector<32x1xf32>
    %4 = vector.extract_strided_slice %0 {offsets = [56, 0], sizes = [32, 1], strides = [1, 1]} : vector<216x1xf32> to vector<32x1xf32>
    %5 = vector.extract_strided_slice %0 {offsets = [88, 0], sizes = [16, 1], strides = [1, 1]} : vector<216x1xf32> to vector<16x1xf32>
    %6 = vector.extract_strided_slice %0 {offsets = [104, 0], sizes = [16, 1], strides = [1, 1]} : vector<216x1xf32> to vector<16x1xf32>
    %7 = vector.extract_strided_slice %0 {offsets = [120, 0], sizes = [64, 1], strides = [1, 1]} : vector<216x1xf32> to vector<64x1xf32>
    %8 = vector.extract_strided_slice %0 {offsets = [184, 0], sizes = [32, 1], strides = [1, 1]} : vector<216x1xf32> to vector<32x1xf32>
    %c0_1 = arith.constant 0 : index
    %c0_2 = arith.constant 0 : index
    %9 = vector.load %arg2[%c0_1, %c0_2] : memref<8x27xf32, #tpu.memory_space<vmem>>, vector<8x27xf32>
    %c0_3 = arith.constant 0 : index
    %c0_4 = arith.constant 0 : index
    %10 = vector.load %arg1[%c0_3, %c0_4] : memref<27x512xf32, #tpu.memory_space<vmem>>, vector<27x512xf32>
    %cst = arith.constant dense<0.000000e+00> : vector<8x512xf32>
    %11 = tpu.matmul %9, %10, %cst {dimension_numbers = #tpu.dot_dimension_numbers<[1], [0], [0], [1], [0, 0, 1, 1], [], []>} : vector<8x27xf32>, vector<27x512xf32>, vector<8x512xf32> -> vector<8x512xf32>
    %12 = vector.broadcast %1 : vector<8x1xf32> to vector<8x512xf32>
    %13 = arith.addf %11, %12 : vector<8x512xf32>
    %cst_5 = arith.constant 0.000000e+00 : f32
    %14 = vector.broadcast %cst_5 : f32 to vector<8x512xf32>
    %15 = arith.maximumf %13, %14 : vector<8x512xf32>
    %c0_6 = arith.constant 0 : index
    %c0_7 = arith.constant 0 : index
    %c0_8 = arith.constant 0 : index
    %16 = vector.load %arg4[%c0_6, %c0_7, %c0_8] : memref<9x16x8xf32, #tpu.memory_space<vmem>>, vector<1x16x8xf32>
    %17 = vector.shape_cast %16 : vector<1x16x8xf32> to vector<16x8xf32>
    %c0_9 = arith.constant 0 : index
    %c0_10 = arith.constant 0 : index
    %c0_11 = arith.constant 0 : index
    %18 = vector.load %arg3[%c0_9, %c0_10, %c0_11] : memref<9x512x98xf32, #tpu.memory_space<vmem>>, vector<1x512x98xf32>
    %19 = vector.shape_cast %18 : vector<1x512x98xf32> to vector<512x98xf32>
    %cst_12 = arith.constant dense<0.000000e+00> : vector<8x98xf32>
    %20 = tpu.matmul %15, %19, %cst_12 {dimension_numbers = #tpu.dot_dimension_numbers<[1], [0], [0], [1], [0, 0, 1, 1], [], []>} : vector<8x512xf32>, vector<512x98xf32>, vector<8x98xf32> -> vector<8x98xf32>
    %cst_13 = arith.constant dense<0.000000e+00> : vector<16x98xf32>
    %21 = tpu.matmul %17, %20, %cst_13 {dimension_numbers = #tpu.dot_dimension_numbers<[1], [0], [0], [1], [0, 0, 1, 1], [], []>} : vector<16x8xf32>, vector<8x98xf32>, vector<16x98xf32> -> vector<16x98xf32>
    %c1 = arith.constant 1 : index
    %c0_14 = arith.constant 0 : index
    %c0_15 = arith.constant 0 : index
    %22 = vector.load %arg4[%c1, %c0_14, %c0_15] : memref<9x16x8xf32, #tpu.memory_space<vmem>>, vector<1x16x8xf32>
    %23 = vector.shape_cast %22 : vector<1x16x8xf32> to vector<16x8xf32>
    %c1_16 = arith.constant 1 : index
    %c0_17 = arith.constant 0 : index
    %c0_18 = arith.constant 0 : index
    %24 = vector.load %arg3[%c1_16, %c0_17, %c0_18] : memref<9x512x98xf32, #tpu.memory_space<vmem>>, vector<1x512x98xf32>
    %25 = vector.shape_cast %24 : vector<1x512x98xf32> to vector<512x98xf32>
    %cst_19 = arith.constant dense<0.000000e+00> : vector<8x98xf32>
    %26 = tpu.matmul %15, %25, %cst_19 {dimension_numbers = #tpu.dot_dimension_numbers<[1], [0], [0], [1], [0, 0, 1, 1], [], []>} : vector<8x512xf32>, vector<512x98xf32>, vector<8x98xf32> -> vector<8x98xf32>
    %cst_20 = arith.constant dense<0.000000e+00> : vector<16x98xf32>
    %27 = tpu.matmul %23, %26, %cst_20 {dimension_numbers = #tpu.dot_dimension_numbers<[1], [0], [0], [1], [0, 0, 1, 1], [], []>} : vector<16x8xf32>, vector<8x98xf32>, vector<16x98xf32> -> vector<16x98xf32>
    %28 = arith.addf %21, %27 : vector<16x98xf32>
    %c2 = arith.constant 2 : index
    %c0_21 = arith.constant 0 : index
    %c0_22 = arith.constant 0 : index
    %29 = vector.load %arg4[%c2, %c0_21, %c0_22] : memref<9x16x8xf32, #tpu.memory_space<vmem>>, vector<1x16x8xf32>
    %30 = vector.shape_cast %29 : vector<1x16x8xf32> to vector<16x8xf32>
    %c2_23 = arith.constant 2 : index
    %c0_24 = arith.constant 0 : index
    %c0_25 = arith.constant 0 : index
    %31 = vector.load %arg3[%c2_23, %c0_24, %c0_25] : memref<9x512x98xf32, #tpu.memory_space<vmem>>, vector<1x512x98xf32>
    %32 = vector.shape_cast %31 : vector<1x512x98xf32> to vector<512x98xf32>
    %cst_26 = arith.constant dense<0.000000e+00> : vector<8x98xf32>
    %33 = tpu.matmul %15, %32, %cst_26 {dimension_numbers = #tpu.dot_dimension_numbers<[1], [0], [0], [1], [0, 0, 1, 1], [], []>} : vector<8x512xf32>, vector<512x98xf32>, vector<8x98xf32> -> vector<8x98xf32>
    %cst_27 = arith.constant dense<0.000000e+00> : vector<16x98xf32>
    %34 = tpu.matmul %30, %33, %cst_27 {dimension_numbers = #tpu.dot_dimension_numbers<[1], [0], [0], [1], [0, 0, 1, 1], [], []>} : vector<16x8xf32>, vector<8x98xf32>, vector<16x98xf32> -> vector<16x98xf32>
    %35 = arith.addf %28, %34 : vector<16x98xf32>
    %c3 = arith.constant 3 : index
    %c0_28 = arith.constant 0 : index
    %c0_29 = arith.constant 0 : index
    %36 = vector.load %arg4[%c3, %c0_28, %c0_29] : memref<9x16x8xf32, #tpu.memory_space<vmem>>, vector<1x16x8xf32>
    %37 = vector.shape_cast %36 : vector<1x16x8xf32> to vector<16x8xf32>
    %c3_30 = arith.constant 3 : index
    %c0_31 = arith.constant 0 : index
    %c0_32 = arith.constant 0 : index
    %38 = vector.load %arg3[%c3_30, %c0_31, %c0_32] : memref<9x512x98xf32, #tpu.memory_space<vmem>>, vector<1x512x98xf32>
    %39 = vector.shape_cast %38 : vector<1x512x98xf32> to vector<512x98xf32>
    %cst_33 = arith.constant dense<0.000000e+00> : vector<8x98xf32>
    %40 = tpu.matmul %15, %39, %cst_33 {dimension_numbers = #tpu.dot_dimension_numbers<[1], [0], [0], [1], [0, 0, 1, 1], [], []>} : vector<8x512xf32>, vector<512x98xf32>, vector<8x98xf32> -> vector<8x98xf32>
    %cst_34 = arith.constant dense<0.000000e+00> : vector<16x98xf32>
    %41 = tpu.matmul %37, %40, %cst_34 {dimension_numbers = #tpu.dot_dimension_numbers<[1], [0], [0], [1], [0, 0, 1, 1], [], []>} : vector<16x8xf32>, vector<8x98xf32>, vector<16x98xf32> -> vector<16x98xf32>
    %42 = arith.addf %35, %41 : vector<16x98xf32>
    %c4 = arith.constant 4 : index
    %c0_35 = arith.constant 0 : index
    %c0_36 = arith.constant 0 : index
    %43 = vector.load %arg4[%c4, %c0_35, %c0_36] : memref<9x16x8xf32, #tpu.memory_space<vmem>>, vector<1x16x8xf32>
    %44 = vector.shape_cast %43 : vector<1x16x8xf32> to vector<16x8xf32>
    %c4_37 = arith.constant 4 : index
    %c0_38 = arith.constant 0 : index
    %c0_39 = arith.constant 0 : index
    %45 = vector.load %arg3[%c4_37, %c0_38, %c0_39] : memref<9x512x98xf32, #tpu.memory_space<vmem>>, vector<1x512x98xf32>
    %46 = vector.shape_cast %45 : vector<1x512x98xf32> to vector<512x98xf32>
    %cst_40 = arith.constant dense<0.000000e+00> : vector<8x98xf32>
    %47 = tpu.matmul %15, %46, %cst_40 {dimension_numbers = #tpu.dot_dimension_numbers<[1], [0], [0], [1], [0, 0, 1, 1], [], []>} : vector<8x512xf32>, vector<512x98xf32>, vector<8x98xf32> -> vector<8x98xf32>
    %cst_41 = arith.constant dense<0.000000e+00> : vector<16x98xf32>
    %48 = tpu.matmul %44, %47, %cst_41 {dimension_numbers = #tpu.dot_dimension_numbers<[1], [0], [0], [1], [0, 0, 1, 1], [], []>} : vector<16x8xf32>, vector<8x98xf32>, vector<16x98xf32> -> vector<16x98xf32>
    %49 = arith.addf %42, %48 : vector<16x98xf32>
    %c5 = arith.constant 5 : index
    %c0_42 = arith.constant 0 : index
    %c0_43 = arith.constant 0 : index
    %50 = vector.load %arg4[%c5, %c0_42, %c0_43] : memref<9x16x8xf32, #tpu.memory_space<vmem>>, vector<1x16x8xf32>
    %51 = vector.shape_cast %50 : vector<1x16x8xf32> to vector<16x8xf32>
    %c5_44 = arith.constant 5 : index
    %c0_45 = arith.constant 0 : index
    %c0_46 = arith.constant 0 : index
    %52 = vector.load %arg3[%c5_44, %c0_45, %c0_46] : memref<9x512x98xf32, #tpu.memory_space<vmem>>, vector<1x512x98xf32>
    %53 = vector.shape_cast %52 : vector<1x512x98xf32> to vector<512x98xf32>
    %cst_47 = arith.constant dense<0.000000e+00> : vector<8x98xf32>
    %54 = tpu.matmul %15, %53, %cst_47 {dimension_numbers = #tpu.dot_dimension_numbers<[1], [0], [0], [1], [0, 0, 1, 1], [], []>} : vector<8x512xf32>, vector<512x98xf32>, vector<8x98xf32> -> vector<8x98xf32>
    %cst_48 = arith.constant dense<0.000000e+00> : vector<16x98xf32>
    %55 = tpu.matmul %51, %54, %cst_48 {dimension_numbers = #tpu.dot_dimension_numbers<[1], [0], [0], [1], [0, 0, 1, 1], [], []>} : vector<16x8xf32>, vector<8x98xf32>, vector<16x98xf32> -> vector<16x98xf32>
    %56 = arith.addf %49, %55 : vector<16x98xf32>
    %c6 = arith.constant 6 : index
    %c0_49 = arith.constant 0 : index
    %c0_50 = arith.constant 0 : index
    %57 = vector.load %arg4[%c6, %c0_49, %c0_50] : memref<9x16x8xf32, #tpu.memory_space<vmem>>, vector<1x16x8xf32>
    %58 = vector.shape_cast %57 : vector<1x16x8xf32> to vector<16x8xf32>
    %c6_51 = arith.constant 6 : index
    %c0_52 = arith.constant 0 : index
    %c0_53 = arith.constant 0 : index
    %59 = vector.load %arg3[%c6_51, %c0_52, %c0_53] : memref<9x512x98xf32, #tpu.memory_space<vmem>>, vector<1x512x98xf32>
    %60 = vector.shape_cast %59 : vector<1x512x98xf32> to vector<512x98xf32>
    %cst_54 = arith.constant dense<0.000000e+00> : vector<8x98xf32>
    %61 = tpu.matmul %15, %60, %cst_54 {dimension_numbers = #tpu.dot_dimension_numbers<[1], [0], [0], [1], [0, 0, 1, 1], [], []>} : vector<8x512xf32>, vector<512x98xf32>, vector<8x98xf32> -> vector<8x98xf32>
    %cst_55 = arith.constant dense<0.000000e+00> : vector<16x98xf32>
    %62 = tpu.matmul %58, %61, %cst_55 {dimension_numbers = #tpu.dot_dimension_numbers<[1], [0], [0], [1], [0, 0, 1, 1], [], []>} : vector<16x8xf32>, vector<8x98xf32>, vector<16x98xf32> -> vector<16x98xf32>
    %63 = arith.addf %56, %62 : vector<16x98xf32>
    %c7 = arith.constant 7 : index
    %c0_56 = arith.constant 0 : index
    %c0_57 = arith.constant 0 : index
    %64 = vector.load %arg4[%c7, %c0_56, %c0_57] : memref<9x16x8xf32, #tpu.memory_space<vmem>>, vector<1x16x8xf32>
    %65 = vector.shape_cast %64 : vector<1x16x8xf32> to vector<16x8xf32>
    %c7_58 = arith.constant 7 : index
    %c0_59 = arith.constant 0 : index
    %c0_60 = arith.constant 0 : index
    %66 = vector.load %arg3[%c7_58, %c0_59, %c0_60] : memref<9x512x98xf32, #tpu.memory_space<vmem>>, vector<1x512x98xf32>
    %67 = vector.shape_cast %66 : vector<1x512x98xf32> to vector<512x98xf32>
    %cst_61 = arith.constant dense<0.000000e+00> : vector<8x98xf32>
    %68 = tpu.matmul %15, %67, %cst_61 {dimension_numbers = #tpu.dot_dimension_numbers<[1], [0], [0], [1], [0, 0, 1, 1], [], []>} : vector<8x512xf32>, vector<512x98xf32>, vector<8x98xf32> -> vector<8x98xf32>
    %cst_62 = arith.constant dense<0.000000e+00> : vector<16x98xf32>
    %69 = tpu.matmul %65, %68, %cst_62 {dimension_numbers = #tpu.dot_dimension_numbers<[1], [0], [0], [1], [0, 0, 1, 1], [], []>} : vector<16x8xf32>, vector<8x98xf32>, vector<16x98xf32> -> vector<16x98xf32>
    %70 = arith.addf %63, %69 : vector<16x98xf32>
    %c8 = arith.constant 8 : index
    %c0_63 = arith.constant 0 : index
    %c0_64 = arith.constant 0 : index
    %71 = vector.load %arg4[%c8, %c0_63, %c0_64] : memref<9x16x8xf32, #tpu.memory_space<vmem>>, vector<1x16x8xf32>
    %72 = vector.shape_cast %71 : vector<1x16x8xf32> to vector<16x8xf32>
    %c8_65 = arith.constant 8 : index
    %c0_66 = arith.constant 0 : index
    %c0_67 = arith.constant 0 : index
    %73 = vector.load %arg3[%c8_65, %c0_66, %c0_67] : memref<9x512x98xf32, #tpu.memory_space<vmem>>, vector<1x512x98xf32>
    %74 = vector.shape_cast %73 : vector<1x512x98xf32> to vector<512x98xf32>
    %cst_68 = arith.constant dense<0.000000e+00> : vector<8x98xf32>
    %75 = tpu.matmul %15, %74, %cst_68 {dimension_numbers = #tpu.dot_dimension_numbers<[1], [0], [0], [1], [0, 0, 1, 1], [], []>} : vector<8x512xf32>, vector<512x98xf32>, vector<8x98xf32> -> vector<8x98xf32>
    %cst_69 = arith.constant dense<0.000000e+00> : vector<16x98xf32>
    %76 = tpu.matmul %72, %75, %cst_69 {dimension_numbers = #tpu.dot_dimension_numbers<[1], [0], [0], [1], [0, 0, 1, 1], [], []>} : vector<16x8xf32>, vector<8x98xf32>, vector<16x98xf32> -> vector<16x98xf32>
    %77 = arith.addf %70, %76 : vector<16x98xf32>
    %78 = vector.broadcast %2 : vector<16x1xf32> to vector<16x98xf32>
    %79 = arith.addf %77, %78 : vector<16x98xf32>
    %cst_70 = arith.constant dense<0.000000e+00> : vector<16xf32>
    %80 = vector.multi_reduction <add>, %79, %cst_70 [1] : vector<16x98xf32> to vector<16xf32>
    %81 = vector.shape_cast %80 : vector<16xf32> to vector<16x1xf32>
    %cst_71 = arith.constant 9.800000e+01 : f32
    %82 = vector.broadcast %cst_71 : f32 to vector<16x1xf32>
    %83 = arith.divf %81, %82 : vector<16x1xf32>
    %84 = vector.broadcast %83 : vector<16x1xf32> to vector<16x98xf32>
    %85 = arith.subf %79, %84 : vector<16x98xf32>
    %86 = arith.mulf %85, %85 : vector<16x98xf32>
    %cst_72 = arith.constant dense<0.000000e+00> : vector<16xf32>
    %87 = vector.multi_reduction <add>, %86, %cst_72 [1] : vector<16x98xf32> to vector<16xf32>
    %88 = vector.shape_cast %87 : vector<16xf32> to vector<16x1xf32>
    %cst_73 = arith.constant 9.800000e+01 : f32
    %89 = vector.broadcast %cst_73 : f32 to vector<16x1xf32>
    %90 = arith.divf %88, %89 : vector<16x1xf32>
    %cst_74 = arith.constant 9.99999974E-6 : f32
    %91 = vector.broadcast %cst_74 : f32 to vector<16x1xf32>
    %92 = arith.addf %90, %91 : vector<16x1xf32>
    %93 = math.rsqrt %92 : vector<16x1xf32>
    %94 = arith.mulf %5, %93 : vector<16x1xf32>
    %95 = arith.mulf %83, %94 : vector<16x1xf32>
    %96 = arith.subf %6, %95 : vector<16x1xf32>
    %97 = vector.broadcast %94 : vector<16x1xf32> to vector<16x98xf32>
    %98 = arith.mulf %79, %97 : vector<16x98xf32>
    %99 = vector.broadcast %96 : vector<16x1xf32> to vector<16x98xf32>
    %100 = arith.addf %98, %99 : vector<16x98xf32>
    %cst_75 = arith.constant 0.000000e+00 : f32
    %101 = vector.broadcast %cst_75 : f32 to vector<16x98xf32>
    %102 = arith.maximumf %100, %101 : vector<16x98xf32>
    %c0_76 = arith.constant 0 : index
    %c0_77 = arith.constant 0 : index
    %c0_78 = arith.constant 0 : index
    %103 = vector.load %arg6[%c0_76, %c0_77, %c0_78] : memref<9x32x16xf32, #tpu.memory_space<vmem>>, vector<1x32x16xf32>
    %104 = vector.shape_cast %103 : vector<1x32x16xf32> to vector<32x16xf32>
    %c0_79 = arith.constant 0 : index
    %c0_80 = arith.constant 0 : index
    %c0_81 = arith.constant 0 : index
    %105 = vector.load %arg5[%c0_79, %c0_80, %c0_81] : memref<9x98x18xf32, #tpu.memory_space<vmem>>, vector<1x98x18xf32>
    %106 = vector.shape_cast %105 : vector<1x98x18xf32> to vector<98x18xf32>
    %cst_82 = arith.constant dense<0.000000e+00> : vector<16x18xf32>
    %107 = tpu.matmul %102, %106, %cst_82 {dimension_numbers = #tpu.dot_dimension_numbers<[1], [0], [0], [1], [0, 0, 1, 1], [], []>} : vector<16x98xf32>, vector<98x18xf32>, vector<16x18xf32> -> vector<16x18xf32>
    %cst_83 = arith.constant dense<0.000000e+00> : vector<32x18xf32>
    %108 = tpu.matmul %104, %107, %cst_83 {dimension_numbers = #tpu.dot_dimension_numbers<[1], [0], [0], [1], [0, 0, 1, 1], [], []>} : vector<32x16xf32>, vector<16x18xf32>, vector<32x18xf32> -> vector<32x18xf32>
    %c1_84 = arith.constant 1 : index
    %c0_85 = arith.constant 0 : index
    %c0_86 = arith.constant 0 : index
    %109 = vector.load %arg6[%c1_84, %c0_85, %c0_86] : memref<9x32x16xf32, #tpu.memory_space<vmem>>, vector<1x32x16xf32>
    %110 = vector.shape_cast %109 : vector<1x32x16xf32> to vector<32x16xf32>
    %c1_87 = arith.constant 1 : index
    %c0_88 = arith.constant 0 : index
    %c0_89 = arith.constant 0 : index
    %111 = vector.load %arg5[%c1_87, %c0_88, %c0_89] : memref<9x98x18xf32, #tpu.memory_space<vmem>>, vector<1x98x18xf32>
    %112 = vector.shape_cast %111 : vector<1x98x18xf32> to vector<98x18xf32>
    %cst_90 = arith.constant dense<0.000000e+00> : vector<16x18xf32>
    %113 = tpu.matmul %102, %112, %cst_90 {dimension_numbers = #tpu.dot_dimension_numbers<[1], [0], [0], [1], [0, 0, 1, 1], [], []>} : vector<16x98xf32>, vector<98x18xf32>, vector<16x18xf32> -> vector<16x18xf32>
    %cst_91 = arith.constant dense<0.000000e+00> : vector<32x18xf32>
    %114 = tpu.matmul %110, %113, %cst_91 {dimension_numbers = #tpu.dot_dimension_numbers<[1], [0], [0], [1], [0, 0, 1, 1], [], []>} : vector<32x16xf32>, vector<16x18xf32>, vector<32x18xf32> -> vector<32x18xf32>
    %115 = arith.addf %108, %114 : vector<32x18xf32>
    %c2_92 = arith.constant 2 : index
    %c0_93 = arith.constant 0 : index
    %c0_94 = arith.constant 0 : index
    %116 = vector.load %arg6[%c2_92, %c0_93, %c0_94] : memref<9x32x16xf32, #tpu.memory_space<vmem>>, vector<1x32x16xf32>
    %117 = vector.shape_cast %116 : vector<1x32x16xf32> to vector<32x16xf32>
    %c2_95 = arith.constant 2 : index
    %c0_96 = arith.constant 0 : index
    %c0_97 = arith.constant 0 : index
    %118 = vector.load %arg5[%c2_95, %c0_96, %c0_97] : memref<9x98x18xf32, #tpu.memory_space<vmem>>, vector<1x98x18xf32>
    %119 = vector.shape_cast %118 : vector<1x98x18xf32> to vector<98x18xf32>
    %cst_98 = arith.constant dense<0.000000e+00> : vector<16x18xf32>
    %120 = tpu.matmul %102, %119, %cst_98 {dimension_numbers = #tpu.dot_dimension_numbers<[1], [0], [0], [1], [0, 0, 1, 1], [], []>} : vector<16x98xf32>, vector<98x18xf32>, vector<16x18xf32> -> vector<16x18xf32>
    %cst_99 = arith.constant dense<0.000000e+00> : vector<32x18xf32>
    %121 = tpu.matmul %117, %120, %cst_99 {dimension_numbers = #tpu.dot_dimension_numbers<[1], [0], [0], [1], [0, 0, 1, 1], [], []>} : vector<32x16xf32>, vector<16x18xf32>, vector<32x18xf32> -> vector<32x18xf32>
    %122 = arith.addf %115, %121 : vector<32x18xf32>
    %c3_100 = arith.constant 3 : index
    %c0_101 = arith.constant 0 : index
    %c0_102 = arith.constant 0 : index
    %123 = vector.load %arg6[%c3_100, %c0_101, %c0_102] : memref<9x32x16xf32, #tpu.memory_space<vmem>>, vector<1x32x16xf32>
    %124 = vector.shape_cast %123 : vector<1x32x16xf32> to vector<32x16xf32>
    %c3_103 = arith.constant 3 : index
    %c0_104 = arith.constant 0 : index
    %c0_105 = arith.constant 0 : index
    %125 = vector.load %arg5[%c3_103, %c0_104, %c0_105] : memref<9x98x18xf32, #tpu.memory_space<vmem>>, vector<1x98x18xf32>
    %126 = vector.shape_cast %125 : vector<1x98x18xf32> to vector<98x18xf32>
    %cst_106 = arith.constant dense<0.000000e+00> : vector<16x18xf32>
    %127 = tpu.matmul %102, %126, %cst_106 {dimension_numbers = #tpu.dot_dimension_numbers<[1], [0], [0], [1], [0, 0, 1, 1], [], []>} : vector<16x98xf32>, vector<98x18xf32>, vector<16x18xf32> -> vector<16x18xf32>
    %cst_107 = arith.constant dense<0.000000e+00> : vector<32x18xf32>
    %128 = tpu.matmul %124, %127, %cst_107 {dimension_numbers = #tpu.dot_dimension_numbers<[1], [0], [0], [1], [0, 0, 1, 1], [], []>} : vector<32x16xf32>, vector<16x18xf32>, vector<32x18xf32> -> vector<32x18xf32>
    %129 = arith.addf %122, %128 : vector<32x18xf32>
    %c4_108 = arith.constant 4 : index
    %c0_109 = arith.constant 0 : index
    %c0_110 = arith.constant 0 : index
    %130 = vector.load %arg6[%c4_108, %c0_109, %c0_110] : memref<9x32x16xf32, #tpu.memory_space<vmem>>, vector<1x32x16xf32>
    %131 = vector.shape_cast %130 : vector<1x32x16xf32> to vector<32x16xf32>
    %c4_111 = arith.constant 4 : index
    %c0_112 = arith.constant 0 : index
    %c0_113 = arith.constant 0 : index
    %132 = vector.load %arg5[%c4_111, %c0_112, %c0_113] : memref<9x98x18xf32, #tpu.memory_space<vmem>>, vector<1x98x18xf32>
    %133 = vector.shape_cast %132 : vector<1x98x18xf32> to vector<98x18xf32>
    %cst_114 = arith.constant dense<0.000000e+00> : vector<16x18xf32>
    %134 = tpu.matmul %102, %133, %cst_114 {dimension_numbers = #tpu.dot_dimension_numbers<[1], [0], [0], [1], [0, 0, 1, 1], [], []>} : vector<16x98xf32>, vector<98x18xf32>, vector<16x18xf32> -> vector<16x18xf32>
    %cst_115 = arith.constant dense<0.000000e+00> : vector<32x18xf32>
    %135 = tpu.matmul %131, %134, %cst_115 {dimension_numbers = #tpu.dot_dimension_numbers<[1], [0], [0], [1], [0, 0, 1, 1], [], []>} : vector<32x16xf32>, vector<16x18xf32>, vector<32x18xf32> -> vector<32x18xf32>
    %136 = arith.addf %129, %135 : vector<32x18xf32>
    %c5_116 = arith.constant 5 : index
    %c0_117 = arith.constant 0 : index
    %c0_118 = arith.constant 0 : index
    %137 = vector.load %arg6[%c5_116, %c0_117, %c0_118] : memref<9x32x16xf32, #tpu.memory_space<vmem>>, vector<1x32x16xf32>
    %138 = vector.shape_cast %137 : vector<1x32x16xf32> to vector<32x16xf32>
    %c5_119 = arith.constant 5 : index
    %c0_120 = arith.constant 0 : index
    %c0_121 = arith.constant 0 : index
    %139 = vector.load %arg5[%c5_119, %c0_120, %c0_121] : memref<9x98x18xf32, #tpu.memory_space<vmem>>, vector<1x98x18xf32>
    %140 = vector.shape_cast %139 : vector<1x98x18xf32> to vector<98x18xf32>
    %cst_122 = arith.constant dense<0.000000e+00> : vector<16x18xf32>
    %141 = tpu.matmul %102, %140, %cst_122 {dimension_numbers = #tpu.dot_dimension_numbers<[1], [0], [0], [1], [0, 0, 1, 1], [], []>} : vector<16x98xf32>, vector<98x18xf32>, vector<16x18xf32> -> vector<16x18xf32>
    %cst_123 = arith.constant dense<0.000000e+00> : vector<32x18xf32>
    %142 = tpu.matmul %138, %141, %cst_123 {dimension_numbers = #tpu.dot_dimension_numbers<[1], [0], [0], [1], [0, 0, 1, 1], [], []>} : vector<32x16xf32>, vector<16x18xf32>, vector<32x18xf32> -> vector<32x18xf32>
    %143 = arith.addf %136, %142 : vector<32x18xf32>
    %c6_124 = arith.constant 6 : index
    %c0_125 = arith.constant 0 : index
    %c0_126 = arith.constant 0 : index
    %144 = vector.load %arg6[%c6_124, %c0_125, %c0_126] : memref<9x32x16xf32, #tpu.memory_space<vmem>>, vector<1x32x16xf32>
    %145 = vector.shape_cast %144 : vector<1x32x16xf32> to vector<32x16xf32>
    %c6_127 = arith.constant 6 : index
    %c0_128 = arith.constant 0 : index
    %c0_129 = arith.constant 0 : index
    %146 = vector.load %arg5[%c6_127, %c0_128, %c0_129] : memref<9x98x18xf32, #tpu.memory_space<vmem>>, vector<1x98x18xf32>
    %147 = vector.shape_cast %146 : vector<1x98x18xf32> to vector<98x18xf32>
    %cst_130 = arith.constant dense<0.000000e+00> : vector<16x18xf32>
    %148 = tpu.matmul %102, %147, %cst_130 {dimension_numbers = #tpu.dot_dimension_numbers<[1], [0], [0], [1], [0, 0, 1, 1], [], []>} : vector<16x98xf32>, vector<98x18xf32>, vector<16x18xf32> -> vector<16x18xf32>
    %cst_131 = arith.constant dense<0.000000e+00> : vector<32x18xf32>
    %149 = tpu.matmul %145, %148, %cst_131 {dimension_numbers = #tpu.dot_dimension_numbers<[1], [0], [0], [1], [0, 0, 1, 1], [], []>} : vector<32x16xf32>, vector<16x18xf32>, vector<32x18xf32> -> vector<32x18xf32>
    %150 = arith.addf %143, %149 : vector<32x18xf32>
    %c7_132 = arith.constant 7 : index
    %c0_133 = arith.constant 0 : index
    %c0_134 = arith.constant 0 : index
    %151 = vector.load %arg6[%c7_132, %c0_133, %c0_134] : memref<9x32x16xf32, #tpu.memory_space<vmem>>, vector<1x32x16xf32>
    %152 = vector.shape_cast %151 : vector<1x32x16xf32> to vector<32x16xf32>
    %c7_135 = arith.constant 7 : index
    %c0_136 = arith.constant 0 : index
    %c0_137 = arith.constant 0 : index
    %153 = vector.load %arg5[%c7_135, %c0_136, %c0_137] : memref<9x98x18xf32, #tpu.memory_space<vmem>>, vector<1x98x18xf32>
    %154 = vector.shape_cast %153 : vector<1x98x18xf32> to vector<98x18xf32>
    %cst_138 = arith.constant dense<0.000000e+00> : vector<16x18xf32>
    %155 = tpu.matmul %102, %154, %cst_138 {dimension_numbers = #tpu.dot_dimension_numbers<[1], [0], [0], [1], [0, 0, 1, 1], [], []>} : vector<16x98xf32>, vector<98x18xf32>, vector<16x18xf32> -> vector<16x18xf32>
    %cst_139 = arith.constant dense<0.000000e+00> : vector<32x18xf32>
    %156 = tpu.matmul %152, %155, %cst_139 {dimension_numbers = #tpu.dot_dimension_numbers<[1], [0], [0], [1], [0, 0, 1, 1], [], []>} : vector<32x16xf32>, vector<16x18xf32>, vector<32x18xf32> -> vector<32x18xf32>
    %157 = arith.addf %150, %156 : vector<32x18xf32>
    %c8_140 = arith.constant 8 : index
    %c0_141 = arith.constant 0 : index
    %c0_142 = arith.constant 0 : index
    %158 = vector.load %arg6[%c8_140, %c0_141, %c0_142] : memref<9x32x16xf32, #tpu.memory_space<vmem>>, vector<1x32x16xf32>
    %159 = vector.shape_cast %158 : vector<1x32x16xf32> to vector<32x16xf32>
    %c8_143 = arith.constant 8 : index
    %c0_144 = arith.constant 0 : index
    %c0_145 = arith.constant 0 : index
    %160 = vector.load %arg5[%c8_143, %c0_144, %c0_145] : memref<9x98x18xf32, #tpu.memory_space<vmem>>, vector<1x98x18xf32>
    %161 = vector.shape_cast %160 : vector<1x98x18xf32> to vector<98x18xf32>
    %cst_146 = arith.constant dense<0.000000e+00> : vector<16x18xf32>
    %162 = tpu.matmul %102, %161, %cst_146 {dimension_numbers = #tpu.dot_dimension_numbers<[1], [0], [0], [1], [0, 0, 1, 1], [], []>} : vector<16x98xf32>, vector<98x18xf32>, vector<16x18xf32> -> vector<16x18xf32>
    %cst_147 = arith.constant dense<0.000000e+00> : vector<32x18xf32>
    %163 = tpu.matmul %159, %162, %cst_147 {dimension_numbers = #tpu.dot_dimension_numbers<[1], [0], [0], [1], [0, 0, 1, 1], [], []>} : vector<32x16xf32>, vector<16x18xf32>, vector<32x18xf32> -> vector<32x18xf32>
    %164 = arith.addf %157, %163 : vector<32x18xf32>
    %165 = vector.broadcast %3 : vector<32x1xf32> to vector<32x18xf32>
    %166 = arith.addf %164, %165 : vector<32x18xf32>
    %cst_148 = arith.constant 0.000000e+00 : f32
    %167 = vector.broadcast %cst_148 : f32 to vector<32x18xf32>
    %168 = arith.maximumf %166, %167 : vector<32x18xf32>
    %c0_149 = arith.constant 0 : index
    %c0_150 = arith.constant 0 : index
    %c0_151 = arith.constant 0 : index
    %169 = vector.load %arg8[%c0_149, %c0_150, %c0_151] : memref<9x32x32xf32, #tpu.memory_space<vmem>>, vector<1x32x32xf32>
    %170 = vector.shape_cast %169 : vector<1x32x32xf32> to vector<32x32xf32>
    %c0_152 = arith.constant 0 : index
    %c0_153 = arith.constant 0 : index
    %c0_154 = arith.constant 0 : index
    %171 = vector.load %arg7[%c0_152, %c0_153, %c0_154] : memref<9x18x2xf32, #tpu.memory_space<vmem>>, vector<1x18x2xf32>
    %172 = vector.shape_cast %171 : vector<1x18x2xf32> to vector<18x2xf32>
    %cst_155 = arith.constant dense<0.000000e+00> : vector<32x2xf32>
    %173 = tpu.matmul %168, %172, %cst_155 {dimension_numbers = #tpu.dot_dimension_numbers<[1], [0], [0], [1], [0, 0, 1, 1], [], []>} : vector<32x18xf32>, vector<18x2xf32>, vector<32x2xf32> -> vector<32x2xf32>
    %cst_156 = arith.constant dense<0.000000e+00> : vector<32x2xf32>
    %174 = tpu.matmul %170, %173, %cst_156 {dimension_numbers = #tpu.dot_dimension_numbers<[1], [0], [0], [1], [0, 0, 1, 1], [], []>} : vector<32x32xf32>, vector<32x2xf32>, vector<32x2xf32> -> vector<32x2xf32>
    %c1_157 = arith.constant 1 : index
    %c0_158 = arith.constant 0 : index
    %c0_159 = arith.constant 0 : index
    %175 = vector.load %arg8[%c1_157, %c0_158, %c0_159] : memref<9x32x32xf32, #tpu.memory_space<vmem>>, vector<1x32x32xf32>
    %176 = vector.shape_cast %175 : vector<1x32x32xf32> to vector<32x32xf32>
    %c1_160 = arith.constant 1 : index
    %c0_161 = arith.constant 0 : index
    %c0_162 = arith.constant 0 : index
    %177 = vector.load %arg7[%c1_160, %c0_161, %c0_162] : memref<9x18x2xf32, #tpu.memory_space<vmem>>, vector<1x18x2xf32>
    %178 = vector.shape_cast %177 : vector<1x18x2xf32> to vector<18x2xf32>
    %cst_163 = arith.constant dense<0.000000e+00> : vector<32x2xf32>
    %179 = tpu.matmul %168, %178, %cst_163 {dimension_numbers = #tpu.dot_dimension_numbers<[1], [0], [0], [1], [0, 0, 1, 1], [], []>} : vector<32x18xf32>, vector<18x2xf32>, vector<32x2xf32> -> vector<32x2xf32>
    %cst_164 = arith.constant dense<0.000000e+00> : vector<32x2xf32>
    %180 = tpu.matmul %176, %179, %cst_164 {dimension_numbers = #tpu.dot_dimension_numbers<[1], [0], [0], [1], [0, 0, 1, 1], [], []>} : vector<32x32xf32>, vector<32x2xf32>, vector<32x2xf32> -> vector<32x2xf32>
    %181 = arith.addf %174, %180 : vector<32x2xf32>
    %c2_165 = arith.constant 2 : index
    %c0_166 = arith.constant 0 : index
    %c0_167 = arith.constant 0 : index
    %182 = vector.load %arg8[%c2_165, %c0_166, %c0_167] : memref<9x32x32xf32, #tpu.memory_space<vmem>>, vector<1x32x32xf32>
    %183 = vector.shape_cast %182 : vector<1x32x32xf32> to vector<32x32xf32>
    %c2_168 = arith.constant 2 : index
    %c0_169 = arith.constant 0 : index
    %c0_170 = arith.constant 0 : index
    %184 = vector.load %arg7[%c2_168, %c0_169, %c0_170] : memref<9x18x2xf32, #tpu.memory_space<vmem>>, vector<1x18x2xf32>
    %185 = vector.shape_cast %184 : vector<1x18x2xf32> to vector<18x2xf32>
    %cst_171 = arith.constant dense<0.000000e+00> : vector<32x2xf32>
    %186 = tpu.matmul %168, %185, %cst_171 {dimension_numbers = #tpu.dot_dimension_numbers<[1], [0], [0], [1], [0, 0, 1, 1], [], []>} : vector<32x18xf32>, vector<18x2xf32>, vector<32x2xf32> -> vector<32x2xf32>
    %cst_172 = arith.constant dense<0.000000e+00> : vector<32x2xf32>
    %187 = tpu.matmul %183, %186, %cst_172 {dimension_numbers = #tpu.dot_dimension_numbers<[1], [0], [0], [1], [0, 0, 1, 1], [], []>} : vector<32x32xf32>, vector<32x2xf32>, vector<32x2xf32> -> vector<32x2xf32>
    %188 = arith.addf %181, %187 : vector<32x2xf32>
    %c3_173 = arith.constant 3 : index
    %c0_174 = arith.constant 0 : index
    %c0_175 = arith.constant 0 : index
    %189 = vector.load %arg8[%c3_173, %c0_174, %c0_175] : memref<9x32x32xf32, #tpu.memory_space<vmem>>, vector<1x32x32xf32>
    %190 = vector.shape_cast %189 : vector<1x32x32xf32> to vector<32x32xf32>
    %c3_176 = arith.constant 3 : index
    %c0_177 = arith.constant 0 : index
    %c0_178 = arith.constant 0 : index
    %191 = vector.load %arg7[%c3_176, %c0_177, %c0_178] : memref<9x18x2xf32, #tpu.memory_space<vmem>>, vector<1x18x2xf32>
    %192 = vector.shape_cast %191 : vector<1x18x2xf32> to vector<18x2xf32>
    %cst_179 = arith.constant dense<0.000000e+00> : vector<32x2xf32>
    %193 = tpu.matmul %168, %192, %cst_179 {dimension_numbers = #tpu.dot_dimension_numbers<[1], [0], [0], [1], [0, 0, 1, 1], [], []>} : vector<32x18xf32>, vector<18x2xf32>, vector<32x2xf32> -> vector<32x2xf32>
    %cst_180 = arith.constant dense<0.000000e+00> : vector<32x2xf32>
    %194 = tpu.matmul %190, %193, %cst_180 {dimension_numbers = #tpu.dot_dimension_numbers<[1], [0], [0], [1], [0, 0, 1, 1], [], []>} : vector<32x32xf32>, vector<32x2xf32>, vector<32x2xf32> -> vector<32x2xf32>
    %195 = arith.addf %188, %194 : vector<32x2xf32>
    %c4_181 = arith.constant 4 : index
    %c0_182 = arith.constant 0 : index
    %c0_183 = arith.constant 0 : index
    %196 = vector.load %arg8[%c4_181, %c0_182, %c0_183] : memref<9x32x32xf32, #tpu.memory_space<vmem>>, vector<1x32x32xf32>
    %197 = vector.shape_cast %196 : vector<1x32x32xf32> to vector<32x32xf32>
    %c4_184 = arith.constant 4 : index
    %c0_185 = arith.constant 0 : index
    %c0_186 = arith.constant 0 : index
    %198 = vector.load %arg7[%c4_184, %c0_185, %c0_186] : memref<9x18x2xf32, #tpu.memory_space<vmem>>, vector<1x18x2xf32>
    %199 = vector.shape_cast %198 : vector<1x18x2xf32> to vector<18x2xf32>
    %cst_187 = arith.constant dense<0.000000e+00> : vector<32x2xf32>
    %200 = tpu.matmul %168, %199, %cst_187 {dimension_numbers = #tpu.dot_dimension_numbers<[1], [0], [0], [1], [0, 0, 1, 1], [], []>} : vector<32x18xf32>, vector<18x2xf32>, vector<32x2xf32> -> vector<32x2xf32>
    %cst_188 = arith.constant dense<0.000000e+00> : vector<32x2xf32>
    %201 = tpu.matmul %197, %200, %cst_188 {dimension_numbers = #tpu.dot_dimension_numbers<[1], [0], [0], [1], [0, 0, 1, 1], [], []>} : vector<32x32xf32>, vector<32x2xf32>, vector<32x2xf32> -> vector<32x2xf32>
    %202 = arith.addf %195, %201 : vector<32x2xf32>
    %c5_189 = arith.constant 5 : index
    %c0_190 = arith.constant 0 : index
    %c0_191 = arith.constant 0 : index
    %203 = vector.load %arg8[%c5_189, %c0_190, %c0_191] : memref<9x32x32xf32, #tpu.memory_space<vmem>>, vector<1x32x32xf32>
    %204 = vector.shape_cast %203 : vector<1x32x32xf32> to vector<32x32xf32>
    %c5_192 = arith.constant 5 : index
    %c0_193 = arith.constant 0 : index
    %c0_194 = arith.constant 0 : index
    %205 = vector.load %arg7[%c5_192, %c0_193, %c0_194] : memref<9x18x2xf32, #tpu.memory_space<vmem>>, vector<1x18x2xf32>
    %206 = vector.shape_cast %205 : vector<1x18x2xf32> to vector<18x2xf32>
    %cst_195 = arith.constant dense<0.000000e+00> : vector<32x2xf32>
    %207 = tpu.matmul %168, %206, %cst_195 {dimension_numbers = #tpu.dot_dimension_numbers<[1], [0], [0], [1], [0, 0, 1, 1], [], []>} : vector<32x18xf32>, vector<18x2xf32>, vector<32x2xf32> -> vector<32x2xf32>
    %cst_196 = arith.constant dense<0.000000e+00> : vector<32x2xf32>
    %208 = tpu.matmul %204, %207, %cst_196 {dimension_numbers = #tpu.dot_dimension_numbers<[1], [0], [0], [1], [0, 0, 1, 1], [], []>} : vector<32x32xf32>, vector<32x2xf32>, vector<32x2xf32> -> vector<32x2xf32>
    %209 = arith.addf %202, %208 : vector<32x2xf32>
    %c6_197 = arith.constant 6 : index
    %c0_198 = arith.constant 0 : index
    %c0_199 = arith.constant 0 : index
    %210 = vector.load %arg8[%c6_197, %c0_198, %c0_199] : memref<9x32x32xf32, #tpu.memory_space<vmem>>, vector<1x32x32xf32>
    %211 = vector.shape_cast %210 : vector<1x32x32xf32> to vector<32x32xf32>
    %c6_200 = arith.constant 6 : index
    %c0_201 = arith.constant 0 : index
    %c0_202 = arith.constant 0 : index
    %212 = vector.load %arg7[%c6_200, %c0_201, %c0_202] : memref<9x18x2xf32, #tpu.memory_space<vmem>>, vector<1x18x2xf32>
    %213 = vector.shape_cast %212 : vector<1x18x2xf32> to vector<18x2xf32>
    %cst_203 = arith.constant dense<0.000000e+00> : vector<32x2xf32>
    %214 = tpu.matmul %168, %213, %cst_203 {dimension_numbers = #tpu.dot_dimension_numbers<[1], [0], [0], [1], [0, 0, 1, 1], [], []>} : vector<32x18xf32>, vector<18x2xf32>, vector<32x2xf32> -> vector<32x2xf32>
    %cst_204 = arith.constant dense<0.000000e+00> : vector<32x2xf32>
    %215 = tpu.matmul %211, %214, %cst_204 {dimension_numbers = #tpu.dot_dimension_numbers<[1], [0], [0], [1], [0, 0, 1, 1], [], []>} : vector<32x32xf32>, vector<32x2xf32>, vector<32x2xf32> -> vector<32x2xf32>
    %216 = arith.addf %209, %215 : vector<32x2xf32>
    %c7_205 = arith.constant 7 : index
    %c0_206 = arith.constant 0 : index
    %c0_207 = arith.constant 0 : index
    %217 = vector.load %arg8[%c7_205, %c0_206, %c0_207] : memref<9x32x32xf32, #tpu.memory_space<vmem>>, vector<1x32x32xf32>
    %218 = vector.shape_cast %217 : vector<1x32x32xf32> to vector<32x32xf32>
    %c7_208 = arith.constant 7 : index
    %c0_209 = arith.constant 0 : index
    %c0_210 = arith.constant 0 : index
    %219 = vector.load %arg7[%c7_208, %c0_209, %c0_210] : memref<9x18x2xf32, #tpu.memory_space<vmem>>, vector<1x18x2xf32>
    %220 = vector.shape_cast %219 : vector<1x18x2xf32> to vector<18x2xf32>
    %cst_211 = arith.constant dense<0.000000e+00> : vector<32x2xf32>
    %221 = tpu.matmul %168, %220, %cst_211 {dimension_numbers = #tpu.dot_dimension_numbers<[1], [0], [0], [1], [0, 0, 1, 1], [], []>} : vector<32x18xf32>, vector<18x2xf32>, vector<32x2xf32> -> vector<32x2xf32>
    %cst_212 = arith.constant dense<0.000000e+00> : vector<32x2xf32>
    %222 = tpu.matmul %218, %221, %cst_212 {dimension_numbers = #tpu.dot_dimension_numbers<[1], [0], [0], [1], [0, 0, 1, 1], [], []>} : vector<32x32xf32>, vector<32x2xf32>, vector<32x2xf32> -> vector<32x2xf32>
    %223 = arith.addf %216, %222 : vector<32x2xf32>
    %c8_213 = arith.constant 8 : index
    %c0_214 = arith.constant 0 : index
    %c0_215 = arith.constant 0 : index
    %224 = vector.load %arg8[%c8_213, %c0_214, %c0_215] : memref<9x32x32xf32, #tpu.memory_space<vmem>>, vector<1x32x32xf32>
    %225 = vector.shape_cast %224 : vector<1x32x32xf32> to vector<32x32xf32>
    %c8_216 = arith.constant 8 : index
    %c0_217 = arith.constant 0 : index
    %c0_218 = arith.constant 0 : index
    %226 = vector.load %arg7[%c8_216, %c0_217, %c0_218] : memref<9x18x2xf32, #tpu.memory_space<vmem>>, vector<1x18x2xf32>
    %227 = vector.shape_cast %226 : vector<1x18x2xf32> to vector<18x2xf32>
    %cst_219 = arith.constant dense<0.000000e+00> : vector<32x2xf32>
    %228 = tpu.matmul %168, %227, %cst_219 {dimension_numbers = #tpu.dot_dimension_numbers<[1], [0], [0], [1], [0, 0, 1, 1], [], []>} : vector<32x18xf32>, vector<18x2xf32>, vector<32x2xf32> -> vector<32x2xf32>
    %cst_220 = arith.constant dense<0.000000e+00> : vector<32x2xf32>
    %229 = tpu.matmul %225, %228, %cst_220 {dimension_numbers = #tpu.dot_dimension_numbers<[1], [0], [0], [1], [0, 0, 1, 1], [], []>} : vector<32x32xf32>, vector<32x2xf32>, vector<32x2xf32> -> vector<32x2xf32>
    %230 = arith.addf %223, %229 : vector<32x2xf32>
    %231 = vector.broadcast %4 : vector<32x1xf32> to vector<32x2xf32>
    %232 = arith.addf %230, %231 : vector<32x2xf32>
    %cst_221 = arith.constant 0.000000e+00 : f32
    %233 = vector.broadcast %cst_221 : f32 to vector<32x2xf32>
    %234 = arith.maximumf %232, %233 : vector<32x2xf32>
    %c0_222 = arith.constant 0 : index
    %c0_223 = arith.constant 0 : index
    %235 = vector.load %arg9[%c0_222, %c0_223] : memref<64x32xf32, #tpu.memory_space<vmem>>, vector<64x32xf32>
    %cst_224 = arith.constant dense<0.000000e+00> : vector<64x2xf32>
    %236 = tpu.matmul %235, %234, %cst_224 {dimension_numbers = #tpu.dot_dimension_numbers<[1], [0], [0], [1], [0, 0, 1, 1], [], []>} : vector<64x32xf32>, vector<32x2xf32>, vector<64x2xf32> -> vector<64x2xf32>
    %c0_225 = arith.constant 0 : index
    %c0_226 = arith.constant 0 : index
    %237 = vector.load %arg10[%c0_225, %c0_226] : memref<64x1xf32, #tpu.memory_space<vmem>>, vector<64x1xf32>
    %c0_227 = arith.constant 0 : index
    %c0_228 = arith.constant 0 : index
    %238 = vector.load %arg13[%c0_227, %c0_228] : memref<1x2xf32, #tpu.memory_space<vmem>>, vector<1x2xf32>
    %239 = vector.broadcast %237 : vector<64x1xf32> to vector<64x2xf32>
    %240 = vector.broadcast %238 : vector<1x2xf32> to vector<64x2xf32>
    %241 = arith.mulf %239, %240 : vector<64x2xf32>
    %242 = arith.addf %236, %241 : vector<64x2xf32>
    %243 = vector.broadcast %7 : vector<64x1xf32> to vector<64x2xf32>
    %244 = arith.addf %242, %243 : vector<64x2xf32>
    %c0_229 = arith.constant 0 : index
    %c0_230 = arith.constant 0 : index
    %245 = vector.load %arg11[%c0_229, %c0_230] : memref<32x64xf32, #tpu.memory_space<vmem>>, vector<32x64xf32>
    %cst_231 = arith.constant dense<0.000000e+00> : vector<32x2xf32>
    %246 = tpu.matmul %245, %244, %cst_231 {dimension_numbers = #tpu.dot_dimension_numbers<[1], [0], [0], [1], [0, 0, 1, 1], [], []>} : vector<32x64xf32>, vector<64x2xf32>, vector<32x2xf32> -> vector<32x2xf32>
    %247 = vector.broadcast %8 : vector<32x1xf32> to vector<32x2xf32>
    %248 = arith.addf %246, %247 : vector<32x2xf32>
    %249 = vector.extract_strided_slice %248 {offsets = [0, 0], sizes = [16, 2], strides = [1, 1]} : vector<32x2xf32> to vector<16x2xf32>
    %250 = vector.extract_strided_slice %248 {offsets = [16, 0], sizes = [16, 2], strides = [1, 1]} : vector<32x2xf32> to vector<16x2xf32>
    %251 = math.exp %250 : vector<16x2xf32>
    %c0_232 = arith.constant 0 : index
    %c0_233 = arith.constant 0 : index
    %252 = vector.load %arg14[%c0_232, %c0_233] : memref<16x2xf32, #tpu.memory_space<vmem>>, vector<16x2xf32>
    %253 = arith.mulf %251, %252 : vector<16x2xf32>
    %254 = arith.addf %249, %253 : vector<16x2xf32>
    %c0_234 = arith.constant 0 : index
    %c0_235 = arith.constant 0 : index
    %255 = vector.load %arg15[%c0_234, %c0_235] : memref<16x2xf32, #tpu.memory_space<vmem>>, vector<16x2xf32>
    tpu.vector_store %arg15[%c0_234, %c0_235], %254 {strides = array<i32>} : memref<16x2xf32, #tpu.memory_space<vmem>>, vector<16x2xf32>,
    return
  }
  func.func @transform_0(%arg0: i32) -> (i32, i32) {
    %c0_i32 = arith.constant 0 : i32
    %c0_i32_0 = arith.constant 0 : i32
    %c0_i32_1 = arith.constant 0 : i32
    return %c0_i32, %c0_i32_0 : i32, i32
  }
  func.func @transform_1(%arg0: i32) -> (i32, i32) {
    %c0_i32 = arith.constant 0 : i32
    %c0_i32_0 = arith.constant 0 : i32
    %c0_i32_1 = arith.constant 0 : i32
    return %c0_i32, %c0_i32_0 : i32, i32
  }
  func.func @transform_2(%arg0: i32) -> (i32, i32, i32) {
    %c0_i32 = arith.constant 0 : i32
    %c0_i32_0 = arith.constant 0 : i32
    %c0_i32_1 = arith.constant 0 : i32
    %c0_i32_2 = arith.constant 0 : i32
    return %c0_i32, %c0_i32_0, %c0_i32_1 : i32, i32, i32
  }
  func.func @transform_3(%arg0: i32) -> (i32, i32, i32) {
    %c0_i32 = arith.constant 0 : i32
    %c0_i32_0 = arith.constant 0 : i32
    %c0_i32_1 = arith.constant 0 : i32
    %c0_i32_2 = arith.constant 0 : i32
    return %c0_i32, %c0_i32_0, %c0_i32_1 : i32, i32, i32
  }
  func.func @transform_4(%arg0: i32) -> (i32, i32, i32) {
    %c0_i32 = arith.constant 0 : i32
    %c0_i32_0 = arith.constant 0 : i32
    %c0_i32_1 = arith.constant 0 : i32
    %c0_i32_2 = arith.constant 0 : i32
    return %c0_i32, %c0_i32_0, %c0_i32_1 : i32, i32, i32
  }
  func.func @transform_5(%arg0: i32) -> (i32, i32, i32) {
    %c0_i32 = arith.constant 0 : i32
    %c0_i32_0 = arith.constant 0 : i32
    %c0_i32_1 = arith.constant 0 : i32
    %c0_i32_2 = arith.constant 0 : i32
    return %c0_i32, %c0_i32_0, %c0_i32_1 : i32, i32, i32
  }
  func.func @transform_6(%arg0: i32) -> (i32, i32, i32) {
    %c0_i32 = arith.constant 0 : i32
    %c0_i32_0 = arith.constant 0 : i32
    %c0_i32_1 = arith.constant 0 : i32
    %c0_i32_2 = arith.constant 0 : i32
    return %c0_i32, %c0_i32_0, %c0_i32_1 : i32, i32, i32
  }
  func.func @transform_7(%arg0: i32) -> (i32, i32, i32) {
    %c0_i32 = arith.constant 0 : i32
    %c0_i32_0 = arith.constant 0 : i32
    %c0_i32_1 = arith.constant 0 : i32
    %c0_i32_2 = arith.constant 0 : i32
    return %c0_i32, %c0_i32_0, %c0_i32_1 : i32, i32, i32
  }
  func.func @transform_8(%arg0: i32) -> (i32, i32) {
    %c0_i32 = arith.constant 0 : i32
    %c0_i32_0 = arith.constant 0 : i32
    %c0_i32_1 = arith.constant 0 : i32
    return %c0_i32, %c0_i32_0 : i32, i32
  }
  func.func @transform_9(%arg0: i32) -> (i32, i32) {
    %c0_i32 = arith.constant 0 : i32
    %c0_i32_0 = arith.constant 0 : i32
    %c0_i32_1 = arith.constant 0 : i32
    return %c0_i32, %c0_i32_0 : i32, i32
  }
  func.func @transform_10(%arg0: i32) -> (i32, i32) {
    %c0_i32 = arith.constant 0 : i32
    %c0_i32_0 = arith.constant 0 : i32
    %c0_i32_1 = arith.constant 0 : i32
    return %c0_i32, %c0_i32_0 : i32, i32
  }
  func.func @transform_11(%arg0: i32) -> (i32, i32) {
    %c0_i32 = arith.constant 0 : i32
    %c0_i32_0 = arith.constant 0 : i32
    %c0_i32_1 = arith.constant 0 : i32
    return %c0_i32, %c0_i32_0 : i32, i32
  }
  func.func @transform_12(%arg0: i32) -> (i32, i32) {
    %c0_i32 = arith.constant 0 : i32
    %c0_i32_0 = arith.constant 0 : i32
    %c0_i32_1 = arith.constant 0 : i32
    return %c0_i32, %c0_i32_0 : i32, i32
  }
  func.func @transform_13(%arg0: i32) -> (i32, i32) {
    %c0_i32 = arith.constant 0 : i32
    %c0_i32_0 = arith.constant 0 : i32
    %c0_i32_1 = arith.constant 0 : i32
    return %c0_i32, %c0_i32_0 : i32, i32
  }
  func.func @transform_14(%arg0: i32) -> (i32, i32) {
    %c0_i32 = arith.constant 0 : i32
    %c0_i32_0 = arith.constant 0 : i32
    %c0_i32_1 = arith.constant 0 : i32
    return %c0_i32, %c0_i32_0 : i32, i32
  }
}

</mosaic_0001>

<llo_original>
// kernel: encoder_forward.1
$region0: #{encoder_forward.1}
  #allocation0 [shape = 'u32[]', space=smem, size = 0x4, offset = 0x4, fixed_abs, tag = 'smem constant byte address 0x4 - core index']
  #allocation1 [shape = 'u32[144,128]{1,0:T(1,128)}', space=vmem, size = 0x12000, scoped, tag = 'internal scratch']
  %s0 = inlined_call_operand.vmem [shape: f32[27,512], index: 0, kind: input, shape index: {}]
  %s1 = inlined_call_operand.vmem [shape: f32[8,27], index: 1, kind: input, shape index: {}]
  %s2 = inlined_call_operand.vmem [shape: f32[9,512,98], index: 2, kind: input, shape index: {}]
  %s3 = inlined_call_operand.vmem [shape: f32[9,16,8], index: 3, kind: input, shape index: {}]
  %s4 = inlined_call_operand.vmem [shape: f32[9,98,18], index: 4, kind: input, shape index: {}]
  %s5 = inlined_call_operand.vmem [shape: f32[9,32,16], index: 5, kind: input, shape index: {}]
  %s6 = inlined_call_operand.vmem [shape: f32[9,18,2], index: 6, kind: input, shape index: {}]
  %s7 = inlined_call_operand.vmem [shape: f32[9,32,32], index: 7, kind: input, shape index: {}]
  %s8 = inlined_call_operand.vmem [shape: f32[64,32], index: 8, kind: input, shape index: {}]
  %s9 = inlined_call_operand.vmem [shape: f32[64,1], index: 9, kind: input, shape index: {}]
  %s10 = inlined_call_operand.vmem [shape: f32[32,64], index: 10, kind: input, shape index: {}]
  %s11 = inlined_call_operand.vmem [shape: f32[216,1], index: 11, kind: input, shape index: {}]
  %s12 = inlined_call_operand.vmem [shape: f32[1,2], index: 12, kind: input, shape index: {}]
  %s13 = inlined_call_operand.vmem [shape: f32[16,2], index: 13, kind: input, shape index: {}]
  %s14 = inlined_call_operand.vmem [shape: f32[16,2], index: 14, kind: output, shape index: {}]
  %s15 = sld [smem:[#allocation0]]
  $region66: #{encoder_forward.1} parent=0
    _
  %s17 = ssub.s32 1, %s15
  %s18 = scalar_select 0, %s17, %s15
  // Predicated region
  $region2: #{encoder_forward.1} parent=0 // pred_check
    _
  $region3: #{encoder_forward.1} parent=0 // pred_check_branch
    %20 = sbr.rel (0) target = $region5
  $region4: #{encoder_forward.1} parent=0 // pred_region
    _
  $region5: #{encoder_forward.1} parent=0 // pred_fallthru
    _
  // Predicated region
  $region6: #{encoder_forward.1} parent=0 // pred_check
    _
  $region7: #{encoder_forward.1} parent=0 // pred_check_branch
    %22 = sbr.rel (0) target = $region9
  $region8: #{encoder_forward.1} parent=0 // pred_region
    _
  $region9: #{encoder_forward.1} parent=0 // pred_fallthru
    _
  // Predicated region
  $region10: #{encoder_forward.1} parent=0 // pred_check
    _
  $region11: #{encoder_forward.1} parent=0 // pred_check_branch
    %24 = sbr.rel (0) target = $region13
  $region12: #{encoder_forward.1} parent=0 // pred_region
    _
  $region13: #{encoder_forward.1} parent=0 // pred_fallthru
    _
  // Predicated region
  $region14: #{encoder_forward.1} parent=0 // pred_check
    _
  $region15: #{encoder_forward.1} parent=0 // pred_check_branch
    %26 = sbr.rel (0) target = $region17
  $region16: #{encoder_forward.1} parent=0 // pred_region
    _
  $region17: #{encoder_forward.1} parent=0 // pred_fallthru
    _
  // Predicated region
  $region18: #{encoder_forward.1} parent=0 // pred_check
    _
  $region19: #{encoder_forward.1} parent=0 // pred_check_branch
    %28 = sbr.rel (0) target = $region21
  $region20: #{encoder_forward.1} parent=0 // pred_region
    _
  $region21: #{encoder_forward.1} parent=0 // pred_fallthru
    _
  // Predicated region
  $region22: #{encoder_forward.1} parent=0 // pred_check
    _
  $region23: #{encoder_forward.1} parent=0 // pred_check_branch
    %30 = sbr.rel (0) target = $region25
  $region24: #{encoder_forward.1} parent=0 // pred_region
    _
  $region25: #{encoder_forward.1} parent=0 // pred_fallthru
    _
  // Predicated region
  $region26: #{encoder_forward.1} parent=0 // pred_check
    _
  $region27: #{encoder_forward.1} parent=0 // pred_check_branch
    %32 = sbr.rel (0) target = $region29
  $region28: #{encoder_forward.1} parent=0 // pred_region
    _
  $region29: #{encoder_forward.1} parent=0 // pred_fallthru
    _
  // Predicated region
  $region30: #{encoder_forward.1} parent=0 // pred_check
    _
  $region31: #{encoder_forward.1} parent=0 // pred_check_branch
    %34 = sbr.rel (0) target = $region33
  $region32: #{encoder_forward.1} parent=0 // pred_region
    _
  $region33: #{encoder_forward.1} parent=0 // pred_fallthru
    _
  // Predicated region
  $region34: #{encoder_forward.1} parent=0 // pred_check
    _
  $region35: #{encoder_forward.1} parent=0 // pred_check_branch
    %36 = sbr.rel (0) target = $region37
  $region36: #{encoder_forward.1} parent=0 // pred_region
    _
  $region37: #{encoder_forward.1} parent=0 // pred_fallthru
    _
  // Predicated region
  $region38: #{encoder_forward.1} parent=0 // pred_check
    _
  $region39: #{encoder_forward.1} parent=0 // pred_check_branch
    %38 = sbr.rel (0) target = $region41
  $region40: #{encoder_forward.1} parent=0 // pred_region
    _
  $region41: #{encoder_forward.1} parent=0 // pred_fallthru
    _
  // Predicated region
  $region42: #{encoder_forward.1} parent=0 // pred_check
    _
  $region43: #{encoder_forward.1} parent=0 // pred_check_branch
    %40 = sbr.rel (0) target = $region45
  $region44: #{encoder_forward.1} parent=0 // pred_region
    _
  $region45: #{encoder_forward.1} parent=0 // pred_fallthru
    _
  // Predicated region
  $region46: #{encoder_forward.1} parent=0 // pred_check
    _
  $region47: #{encoder_forward.1} parent=0 // pred_check_branch
    %42 = sbr.rel (0) target = $region49
  $region48: #{encoder_forward.1} parent=0 // pred_region
    _
  $region49: #{encoder_forward.1} parent=0 // pred_fallthru
    _
  // Predicated region
  $region50: #{encoder_forward.1} parent=0 // pred_check
    _
  $region51: #{encoder_forward.1} parent=0 // pred_check_branch
    %44 = sbr.rel (0) target = $region53
  $region52: #{encoder_forward.1} parent=0 // pred_region
    _
  $region53: #{encoder_forward.1} parent=0 // pred_fallthru
    _
  // Predicated region
  $region54: #{encoder_forward.1} parent=0 // pred_check
    _
  $region55: #{encoder_forward.1} parent=0 // pred_check_branch
    %46 = sbr.rel (0) target = $region57
  $region56: #{encoder_forward.1} parent=0 // pred_region
    _
  $region57: #{encoder_forward.1} parent=0 // pred_fallthru
    _
  %v47 = vld [vmem:[%s11] sm:$0xff]
  %v48 = vld [vmem:[%s11 + $0x8] sm:$0xff]
  %v49 = vld [vmem:[%s11 + $0x10] sm:$0xff]
  %v50 = vld [vmem:[%s11 + $0x18] sm:$0xff]
  %v51 = vld [vmem:[%s11 + $0x20] sm:$0xff]
  %v52 = vld [vmem:[%s11 + $0x28] sm:$0xff]
  %v53 = vld [vmem:[%s11 + $0x30] sm:$0xff]
  %v54 = vld [vmem:[%s11 + $0x38] sm:$0xff]
  %v55 = vld [vmem:[%s11 + $0x40] sm:$0xff]
  %v56 = vld [vmem:[%s11 + $0x48] sm:$0xff]
  %v57 = vld [vmem:[%s11 + $0x50] sm:$0xff]
  %v58 = vld [vmem:[%s11 + $0x58] sm:$0xff]
  %v59 = vld [vmem:[%s11 + $0x60] sm:$0xff]
  %v60 = vld [vmem:[%s11 + $0x68] sm:$0xff]
  %v61 = vld [vmem:[%s11 + $0x70] sm:$0xff]
  %v62 = vld [vmem:[%s11 + $0x78] sm:$0xff]
  %v63 = vld [vmem:[%s11 + $0x80] sm:$0xff]
  %v64 = vld [vmem:[%s11 + $0x88] sm:$0xff]
  %v65 = vld [vmem:[%s11 + $0x90] sm:$0xff]
  %v66 = vld [vmem:[%s11 + $0x98] sm:$0xff]
  %v67 = vld [vmem:[%s11 + $0xa0] sm:$0xff]
  %v68 = vld [vmem:[%s11 + $0xa8] sm:$0xff]
  %v69 = vld [vmem:[%s11 + $0xb0] sm:$0xff]
  %v70 = vld [vmem:[%s11 + $0xb8] sm:$0xff]
  %v71 = vld [vmem:[%s11 + $0xc0] sm:$0xff]
  %v72 = vld [vmem:[%s11 + $0xc8] sm:$0xff]
  %v73 = vld [vmem:[%s11 + $0xd0] sm:$0xff]
  %v74 = vld [vmem:[%s1] sm:$0xff]
  %v75 = vld [vmem:[%s0] sm:$0xff]
  %v76 = vld [vmem:[%s0 + $0x8] sm:$0xff]
  %v77 = vld [vmem:[%s0 + $0x10] sm:$0xff]
  %v78 = vld [vmem:[%s0 + $0x18] sm:$0xff]
  %v79 = vld [vmem:[%s0 + $0x20] sm:$0xff]
  %v80 = vld [vmem:[%s0 + $0x28] sm:$0xff]
  %v81 = vld [vmem:[%s0 + $0x30] sm:$0xff]
  %v82 = vld [vmem:[%s0 + $0x38] sm:$0xff]
  %v83 = vld [vmem:[%s0 + $0x40] sm:$0xff]
  %v84 = vld [vmem:[%s0 + $0x48] sm:$0xff]
  %v85 = vld [vmem:[%s0 + $0x50] sm:$0xff]
  %v86 = vld [vmem:[%s0 + $0x58] sm:$0xff]
  %v87 = vld [vmem:[%s0 + $0x60] sm:$0x7]
  %v88 = vld [vmem:[%s0 + $0x68] sm:$0x7]
  %v89 = vld [vmem:[%s0 + $0x70] sm:$0x7]
  %v90 = vld [vmem:[%s0 + $0x78] sm:$0x7]
  %92 = vset.pattern.permute.xlu0 0
  %93 = vperm.xlu0 %92, %v47
  %v94 = vpop.permute.xlu0 %93
  %vm96 = vcmask 220160
  %v98 = vsel %vm96, %v74, 0
  %vm100 = vcmask 1042432
  %v102 = vsel %vm100, %v87, 0
  %v105 = vsel %vm100, %v88, 0
  %v108 = vsel %vm100, %v89, 0
  %v111 = vsel %vm100, %v90, 0
  %113 = vmatprep.subr.mxu0 %v76
  %114 = vmatpush1.msra.mxu0 %v75
  %115 = vmatprep.subr.mxu0 %v80
  %116 = vmatpush1.msra.mxu0 %v79
  %117 = vmatprep.subr.mxu0 %v84
  %118 = vmatpush1.msra.mxu0 %v83
  %119 = vmatprep.subr.mxu0 %v105
  %120 = vmatpush1.msra.mxu0 %v102
  %121 = vmatprep.subr.mxu0 0.0
  %122 = vmatpush1.msra.mxu0 0.0
  %123 = vmatprep.subr.mxu0 0.0
  %124 = vmatpush1.msra.mxu0 0.0
  %125 = vmatprep.subr.mxu0 0.0
  %126 = vmatpush1.msra.mxu0 0.0
  %127 = vmatprep.subr.mxu0 0.0
  %128 = vmatpush1.msra.mxu0 0.0
  %129 = vmatprep.subr.mxu0 0.0
  %130 = vmatpush1.msra.mxu0 0.0
  %131 = vmatprep.subr.mxu0 0.0
  %132 = vmatpush1.msra.mxu0 0.0
  %133 = vmatprep.subr.mxu0 0.0
  %134 = vmatpush1.msra.mxu0 0.0
  %135 = vmatprep.subr.mxu0 0.0
  %136 = vmatpush1.msra.mxu0 0.0
  %137 = vmatprep.subr.mxu0 0.0
  %138 = vmatpush1.msra.mxu0 0.0
  %139 = vmatprep.subr.mxu0 0.0
  %140 = vmatpush1.msra.mxu0 0.0
  %141 = vmatprep.subr.mxu0 0.0
  %142 = vmatpush1.msra.mxu0 0.0
  %143 = vmatprep.subr.mxu0 0.0
  %144 = vmatpush1.msra.mxu0 0.0
  %145 = vmatprep.subr.mxu0 0.0
  %146 = vmatpush1.msra.mxu0 0.0
  %147 = vmatprep.subr.mxu0 0.0
  %148 = vmatpush1.msra.mxu0 0.0
  %149 = vmatprep.subr.mxu0 0.0
  %150 = vmatpush1.msra.mxu0 0.0
  %151 = vmatprep.subr.mxu0 0.0
  %152 = vmatpush1.msra.mxu0 0.0
  %153 = vmatprep.subr.mxu0 0.0
  %154 = vmatpush1.msra.mxu0 0.0
  %155 = vmatprep.subr.mxu0 0.0
  %156 = vmatpush1.msra.mxu0 0.0
  %157 = vmatprep.subr.mxu0 0.0
  %158 = vmatpush1.msra.mxu0 0.0
  %159 = vmatprep.subr.mxu0 0.0
  %160 = vmatpush1.msra.mxu0 0.0
  %161 = vmatprep.subr.mxu0 0.0
  %162 = vmatpush1.msra.mxu0 0.0
  %163 = vmatprep.subr.mxu0 0.0
  %164 = vmatpush1.msra.mxu0 0.0
  %165 = vmatprep.subr.mxu0 0.0
  %166 = vmatpush1.msra.mxu0 0.0
  %167 = vmatprep.subr.mxu0 0.0
  %168 = vmatpush1.msra.mxu0 0.0
  %169 = vmatprep.subr.mxu0 0.0
  %170 = vmatpush1.msra.mxu0 0.0
  %171 = vmatprep.subr.mxu0 0.0
  %172 = vmatpush1.msra.mxu0 0.0
  %173 = vmatprep.subr.mxu0 0.0
  %174 = vmatpush1.msra.mxu0 0.0
  %175 = vmatprep.subr.mxu0 0.0
  %176 = vmatpush1.msra.mxu0 0.0
  %177 = vmatprep.mubr.f32.mxu0 0.0
  %178 = vmatmul.mubr.f32.gmra.mrb[0].mxu0 %v98
  %v179 = vpop.f32.mrb[0].mxu0
  %v180 = vadd.f32 %v94, %v179
  %v181 = vpop.f32.mrb[0].mxu0
  %v182 = vadd.f32 %v94, %v181
  %183 = vdwg.mxu0
  %184 = vmatprep.subr.mxu0 %v78
  %185 = vmatpush1.msra.mxu0 %v77
  %186 = vmatprep.subr.mxu0 %v82
  %187 = vmatpush1.msra.mxu0 %v81
  %188 = vmatprep.subr.mxu0 %v86
  %189 = vmatpush1.msra.mxu0 %v85
  %190 = vmatprep.subr.mxu0 %v111
  %191 = vmatpush1.msra.mxu0 %v108
  %192 = vmatprep.subr.mxu0 0.0
  %193 = vmatpush1.msra.mxu0 0.0
  %194 = vmatprep.subr.mxu0 0.0
  %195 = vmatpush1.msra.mxu0 0.0
  %196 = vmatprep.subr.mxu0 0.0
  %197 = vmatpush1.msra.mxu0 0.0
  %198 = vmatprep.subr.mxu0 0.0
  %199 = vmatpush1.msra.mxu0 0.0
  %200 = vmatprep.subr.mxu0 0.0
  %201 = vmatpush1.msra.mxu0 0.0
  %202 = vmatprep.subr.mxu0 0.0
  %203 = vmatpush1.msra.mxu0 0.0
  %204 = vmatprep.subr.mxu0 0.0
  %205 = vmatpush1.msra.mxu0 0.0
  %206 = vmatprep.subr.mxu0 0.0
  %207 = vmatpush1.msra.mxu0 0.0
  %208 = vmatprep.subr.mxu0 0.0
  %209 = vmatpush1.msra.mxu0 0.0
  %210 = vmatprep.subr.mxu0 0.0
  %211 = vmatpush1.msra.mxu0 0.0
  %212 = vmatprep.subr.mxu0 0.0
  %213 = vmatpush1.msra.mxu0 0.0
  %214 = vmatprep.subr.mxu0 0.0
  %215 = vmatpush1.msra.mxu0 0.0
  %216 = vmatprep.subr.mxu0 0.0
  %217 = vmatpush1.msra.mxu0 0.0
  %218 = vmatprep.subr.mxu0 0.0
  %219 = vmatpush1.msra.mxu0 0.0
  %220 = vmatprep.subr.mxu0 0.0
  %221 = vmatpush1.msra.mxu0 0.0
  %222 = vmatprep.subr.mxu0 0.0
  %223 = vmatpush1.msra.mxu0 0.0
  %224 = vmatprep.subr.mxu0 0.0
  %225 = vmatpush1.msra.mxu0 0.0
  %226 = vmatprep.subr.mxu0 0.0
  %227 = vmatpush1.msra.mxu0 0.0
  %228 = vmatprep.subr.mxu0 0.0
  %229 = vmatpush1.msra.mxu0 0.0
  %230 = vmatprep.subr.mxu0 0.0
  %231 = vmatpush1.msra.mxu0 0.0
  %232 = vmatprep.subr.mxu0 0.0
  %233 = vmatpush1.msra.mxu0 0.0
  %234 = vmatprep.subr.mxu0 0.0
  %235 = vmatpush1.msra.mxu0 0.0
  %236 = vmatprep.subr.mxu0 0.0
  %237 = vmatpush1.msra.mxu0 0.0
  %238 = vmatprep.subr.mxu0 0.0
  %239 = vmatpush1.msra.mxu0 0.0
  %240 = vmatprep.subr.mxu0 0.0
  %241 = vmatpush1.msra.mxu0 0.0
  %242 = vmatprep.subr.mxu0 0.0
  %243 = vmatpush1.msra.mxu0 0.0
  %244 = vmatprep.subr.mxu0 0.0
  %245 = vmatpush1.msra.mxu0 0.0
  %246 = vmatprep.subr.mxu0 0.0
  %247 = vmatpush1.msra.mxu0 0.0
  %248 = vmatprep.mubr.f32.mxu0 0.0
  %249 = vmatmul.mubr.f32.gmra.mrb[0].mxu0 %v98
  %v250 = vpop.f32.mrb[0].mxu0
  %v251 = vadd.f32 %v94, %v250
  %v252 = vpop.f32.mrb[0].mxu0
  %v253 = vadd.f32 %v94, %v252
  %254 = vdwg.mxu0
  %v255 = vmax.f32 %v180, 0.0
  %v256 = vmax.f32 %v182, 0.0
  %v257 = vmax.f32 %v251, 0.0
  %v258 = vmax.f32 %v253, 0.0
  %v259 = vld [vmem:[%s3] sm:$0xff]
  %v260 = vld [vmem:[%s3 + $0x8] sm:$0xff]
  %v261 = vld [vmem:[%s2] sm:$0xff]
  %v262 = vld [vmem:[%s2 + $0x8] sm:$0xff]
  %v263 = vld [vmem:[%s2 + $0x10] sm:$0xff]
  %v264 = vld [vmem:[%s2 + $0x18] sm:$0xff]
  %v265 = vld [vmem:[%s2 + $0x20] sm:$0xff]
  %v266 = vld [vmem:[%s2 + $0x28] sm:$0xff]
  %v267 = vld [vmem:[%s2 + $0x30] sm:$0xff]
  %v268 = vld [vmem:[%s2 + $0x38] sm:$0xff]
  %v269 = vld [vmem:[%s2 + $0x40] sm:$0xff]
  %v270 = vld [vmem:[%s2 + $0x48] sm:$0xff]
  %v271 = vld [vmem:[%s2 + $0x50] sm:$0xff]
  %v272 = vld [vmem:[%s2 + $0x58] sm:$0xff]
  %v273 = vld [vmem:[%s2 + $0x60] sm:$0xff]
  %v274 = vld [vmem:[%s2 + $0x68] sm:$0xff]
  %v275 = vld [vmem:[%s2 + $0x70] sm:$0xff]
  %v276 = vld [vmem:[%s2 + $0x78] sm:$0xff]
  %v277 = vld [vmem:[%s2 + $0x80] sm:$0xff]
  %v278 = vld [vmem:[%s2 + $0x88] sm:$0xff]
  %v279 = vld [vmem:[%s2 + $0x90] sm:$0xff]
  %v280 = vld [vmem:[%s2 + $0x98] sm:$0xff]
  %v281 = vld [vmem:[%s2 + $0xa0] sm:$0xff]
  %v282 = vld [vmem:[%s2 + $0xa8] sm:$0xff]
  %v283 = vld [vmem:[%s2 + $0xb0] sm:$0xff]
  %v284 = vld [vmem:[%s2 + $0xb8] sm:$0xff]
  %v285 = vld [vmem:[%s2 + $0xc0] sm:$0xff]
  %v286 = vld [vmem:[%s2 + $0xc8] sm:$0xff]
  %v287 = vld [vmem:[%s2 + $0xd0] sm:$0xff]
  %v288 = vld [vmem:[%s2 + $0xd8] sm:$0xff]
  %v289 = vld [vmem:[%s2 + $0xe0] sm:$0xff]
  %v290 = vld [vmem:[%s2 + $0xe8] sm:$0xff]
  %v291 = vld [vmem:[%s2 + $0xf0] sm:$0xff]
  %v292 = vld [vmem:[%s2 + $0xf8] sm:$0xff]
  %v293 = vld [vmem:[%s2 + $0x100] sm:$0xff]
  %v294 = vld [vmem:[%s2 + $0x108] sm:$0xff]
  %v295 = vld [vmem:[%s2 + $0x110] sm:$0xff]
  %v296 = vld [vmem:[%s2 + $0x118] sm:$0xff]
  %v297 = vld [vmem:[%s2 + $0x120] sm:$0xff]
  %v298 = vld [vmem:[%s2 + $0x128] sm:$0xff]
  %v299 = vld [vmem:[%s2 + $0x130] sm:$0xff]
  %v300 = vld [vmem:[%s2 + $0x138] sm:$0xff]
  %v301 = vld [vmem:[%s2 + $0x140] sm:$0xff]
  %v302 = vld [vmem:[%s2 + $0x148] sm:$0xff]
  %v303 = vld [vmem:[%s2 + $0x150] sm:$0xff]
  %v304 = vld [vmem:[%s2 + $0x158] sm:$0xff]
  %v305 = vld [vmem:[%s2 + $0x160] sm:$0xff]
  %v306 = vld [vmem:[%s2 + $0x168] sm:$0xff]
  %v307 = vld [vmem:[%s2 + $0x170] sm:$0xff]
  %v308 = vld [vmem:[%s2 + $0x178] sm:$0xff]
  %v309 = vld [vmem:[%s2 + $0x180] sm:$0xff]
  %v310 = vld [vmem:[%s2 + $0x188] sm:$0xff]
  %v311 = vld [vmem:[%s2 + $0x190] sm:$0xff]
  %v312 = vld [vmem:[%s2 + $0x198] sm:$0xff]
  %v313 = vld [vmem:[%s2 + $0x1a0] sm:$0xff]
  %v314 = vld [vmem:[%s2 + $0x1a8] sm:$0xff]
  %v315 = vld [vmem:[%s2 + $0x1b0] sm:$0xff]
  %v316 = vld [vmem:[%s2 + $0x1b8] sm:$0xff]
  %v317 = vld [vmem:[%s2 + $0x1c0] sm:$0xff]
  %v318 = vld [vmem:[%s2 + $0x1c8] sm:$0xff]
  %v319 = vld [vmem:[%s2 + $0x1d0] sm:$0xff]
  %v320 = vld [vmem:[%s2 + $0x1d8] sm:$0xff]
  %v321 = vld [vmem:[%s2 + $0x1e0] sm:$0xff]
  %v322 = vld [vmem:[%s2 + $0x1e8] sm:$0xff]
  %v323 = vld [vmem:[%s2 + $0x1f0] sm:$0xff]
  %v324 = vld [vmem:[%s2 + $0x1f8] sm:$0xff]
  %325 = vmatprep.subr.mxu0 0.0
  %326 = vmatpush1.msra.mxu0 %v261
  %327 = vmatprep.subr.mxu0 0.0
  %328 = vmatpush1.msra.mxu0 %v262
  %329 = vmatprep.subr.mxu0 0.0
  %330 = vmatpush1.msra.mxu0 %v263
  %331 = vmatprep.subr.mxu0 0.0
  %332 = vmatpush1.msra.mxu0 %v264
  %333 = vmatprep.subr.mxu0 0.0
  %334 = vmatpush1.msra.mxu0 %v265
  %335 = vmatprep.subr.mxu0 0.0
  %336 = vmatpush1.msra.mxu0 %v266
  %337 = vmatprep.subr.mxu0 0.0
  %338 = vmatpush1.msra.mxu0 %v267
  %339 = vmatprep.subr.mxu0 0.0
  %340 = vmatpush1.msra.mxu0 %v268
  %341 = vmatprep.subr.mxu0 0.0
  %342 = vmatpush1.msra.mxu0 %v269
  %343 = vmatprep.subr.mxu0 0.0
  %344 = vmatpush1.msra.mxu0 %v270
  %345 = vmatprep.subr.mxu0 0.0
  %346 = vmatpush1.msra.mxu0 %v271
  %347 = vmatprep.subr.mxu0 0.0
  %348 = vmatpush1.msra.mxu0 %v272
  %349 = vmatprep.subr.mxu0 0.0
  %350 = vmatpush1.msra.mxu0 %v273
  %351 = vmatprep.subr.mxu0 0.0
  %352 = vmatpush1.msra.mxu0 %v274
  %353 = vmatprep.subr.mxu0 0.0
  %354 = vmatpush1.msra.mxu0 %v275
  %355 = vmatprep.subr.mxu0 0.0
  %356 = vmatpush1.msra.mxu0 %v276
  %357 = vmatprep.subr.mxu0 0.0
  %358 = vmatpush1.msra.mxu0 %v277
  %359 = vmatprep.subr.mxu0 0.0
  %360 = vmatpush1.msra.mxu0 %v278
  %361 = vmatprep.subr.mxu0 0.0
  %362 = vmatpush1.msra.mxu0 %v279
  %363 = vmatprep.subr.mxu0 0.0
  %364 = vmatpush1.msra.mxu0 %v280
  %365 = vmatprep.subr.mxu0 0.0
  %366 = vmatpush1.msra.mxu0 %v281
  %367 = vmatprep.subr.mxu0 0.0
  %368 = vmatpush1.msra.mxu0 %v282
  %369 = vmatprep.subr.mxu0 0.0
  %370 = vmatpush1.msra.mxu0 %v283
  %371 = vmatprep.subr.mxu0 0.0
  %372 = vmatpush1.msra.mxu0 %v284
  %373 = vmatprep.subr.mxu0 0.0
  %374 = vmatpush1.msra.mxu0 %v285
  %375 = vmatprep.subr.mxu0 0.0
  %376 = vmatpush1.msra.mxu0 %v286
  %377 = vmatprep.subr.mxu0 0.0
  %378 = vmatpush1.msra.mxu0 %v287
  %379 = vmatprep.subr.mxu0 0.0
  %380 = vmatpush1.msra.mxu0 %v288
  %381 = vmatprep.subr.mxu0 0.0
  %382 = vmatpush1.msra.mxu0 %v289
  %383 = vmatprep.subr.mxu0 0.0
  %384 = vmatpush1.msra.mxu0 %v290
  %385 = vmatprep.subr.mxu0 0.0
  %386 = vmatpush1.msra.mxu0 %v291
  %387 = vmatprep.subr.mxu0 0.0
  %388 = vmatpush1.msra.mxu0 %v292
  %389 = vmatprep.mubr.f32.mxu0 %v256
  %390 = vmatmul.mubr.f32.gmra.mrb[0].mxu0 %v255
  %v391 = vpop.f32.mrb[0].mxu0
  %v392 = vadd.f32 0.0, %v391
  %v393 = vpop.f32.mrb[0].mxu0
  %394 = vdwg.mxu0
  %395 = vmatprep.subr.mxu0 0.0
  %396 = vmatpush1.msra.mxu0 %v293
  %397 = vmatprep.subr.mxu0 0.0
  %398 = vmatpush1.msra.mxu0 %v294
  %399 = vmatprep.subr.mxu0 0.0
  %400 = vmatpush1.msra.mxu0 %v295
  %401 = vmatprep.subr.mxu0 0.0
  %402 = vmatpush1.msra.mxu0 %v296
  %403 = vmatprep.subr.mxu0 0.0
  %404 = vmatpush1.msra.mxu0 %v297
  %405 = vmatprep.subr.mxu0 0.0
  %406 = vmatpush1.msra.mxu0 %v298
  %407 = vmatprep.subr.mxu0 0.0
  %408 = vmatpush1.msra.mxu0 %v299
  %409 = vmatprep.subr.mxu0 0.0
  %410 = vmatpush1.msra.mxu0 %v300
  %411 = vmatprep.subr.mxu0 0.0
  %412 = vmatpush1.msra.mxu0 %v301
  %413 = vmatprep.subr.mxu0 0.0
  %414 = vmatpush1.msra.mxu0 %v302
  %415 = vmatprep.subr.mxu0 0.0
  %416 = vmatpush1.msra.mxu0 %v303
  %417 = vmatprep.subr.mxu0 0.0
  %418 = vmatpush1.msra.mxu0 %v304
  %419 = vmatprep.subr.mxu0 0.0
  %420 = vmatpush1.msra.mxu0 %v305
  %421 = vmatprep.subr.mxu0 0.0
  %422 = vmatpush1.msra.mxu0 %v306
  %423 = vmatprep.subr.mxu0 0.0
  %424 = vmatpush1.msra.mxu0 %v307
  %425 = vmatprep.subr.mxu0 0.0
  %426 = vmatpush1.msra.mxu0 %v308
  %427 = vmatprep.subr.mxu0 0.0
  %428 = vmatpush1.msra.mxu0 %v309
  %429 = vmatprep.subr.mxu0 0.0
  %430 = vmatpush1.msra.mxu0 %v310
  %431 = vmatprep.subr.mxu0 0.0
  %432 = vmatpush1.msra.mxu0 %v311
  %433 = vmatprep.subr.mxu0 0.0
  %434 = vmatpush1.msra.mxu0 %v312
  %435 = vmatprep.subr.mxu0 0.0
  %436 = vmatpush1.msra.mxu0 %v313
  %437 = vmatprep.subr.mxu0 0.0
  %438 = vmatpush1.msra.mxu0 %v314
  %439 = vmatprep.subr.mxu0 0.0
  %440 = vmatpush1.msra.mxu0 %v315
  %441 = vmatprep.subr.mxu0 0.0
  %442 = vmatpush1.msra.mxu0 %v316
  %443 = vmatprep.subr.mxu0 0.0
  %444 = vmatpush1.msra.mxu0 %v317
  %445 = vmatprep.subr.mxu0 0.0
  %446 = vmatpush1.msra.mxu0 %v318
  %447 = vmatprep.subr.mxu0 0.0
  %448 = vmatpush1.msra.mxu0 %v319
  %449 = vmatprep.subr.mxu0 0.0
  %450 = vmatpush1.msra.mxu0 %v320
  %451 = vmatprep.subr.mxu0 0.0
  %452 = vmatpush1.msra.mxu0 %v321
  %453 = vmatprep.subr.mxu0 0.0
  %454 = vmatpush1.msra.mxu0 %v322
  %455 = vmatprep.subr.mxu0 0.0
  %456 = vmatpush1.msra.mxu0 %v323
  %457 = vmatprep.subr.mxu0 0.0
  %458 = vmatpush1.msra.mxu0 %v324
  %459 = vmatprep.mubr.f32.mxu0 %v258
  %460 = vmatmul.mubr.f32.gmra.mrb[0].mxu0 %v257
  %v461 = vpop.f32.mrb[0].mxu0
  %v462 = vadd.f32 %v392, %v461
  %v463 = vpop.f32.mrb[0].mxu0
  %464 = vdwg.mxu0
  %s465 = scalar_lea.vmem %s3, 16
  %v466 = vld [vmem:[%s465] sm:$0xff]
  %v467 = vld [vmem:[%s465 + $0x8] sm:$0xff]
  %s468 = scalar_lea.vmem %s2, 512
  %v469 = vld [vmem:[%s468] sm:$0xff]
  %v470 = vld [vmem:[%s468 + $0x8] sm:$0xff]
  %v471 = vld [vmem:[%s468 + $0x10] sm:$0xff]
  %v472 = vld [vmem:[%s468 + $0x18] sm:$0xff]
  %v473 = vld [vmem:[%s468 + $0x20] sm:$0xff]
  %v474 = vld [vmem:[%s468 + $0x28] sm:$0xff]
  %v475 = vld [vmem:[%s468 + $0x30] sm:$0xff]
  %v476 = vld [vmem:[%s468 + $0x38] sm:$0xff]
  %v477 = vld [vmem:[%s468 + $0x40] sm:$0xff]
  %v478 = vld [vmem:[%s468 + $0x48] sm:$0xff]
  %v479 = vld [vmem:[%s468 + $0x50] sm:$0xff]
  %v480 = vld [vmem:[%s468 + $0x58] sm:$0xff]
  %v481 = vld [vmem:[%s468 + $0x60] sm:$0xff]
  %v482 = vld [vmem:[%s468 + $0x68] sm:$0xff]
  %v483 = vld [vmem:[%s468 + $0x70] sm:$0xff]
  %v484 = vld [vmem:[%s468 + $0x78] sm:$0xff]
  %v485 = vld [vmem:[%s468 + $0x80] sm:$0xff]
  %v486 = vld [vmem:[%s468 + $0x88] sm:$0xff]
  %v487 = vld [vmem:[%s468 + $0x90] sm:$0xff]
  %v488 = vld [vmem:[%s468 + $0x98] sm:$0xff]
  %v489 = vld [vmem:[%s468 + $0xa0] sm:$0xff]
  %v490 = vld [vmem:[%s468 + $0xa8] sm:$0xff]
  %v491 = vld [vmem:[%s468 + $0xb0] sm:$0xff]
  %v492 = vld [vmem:[%s468 + $0xb8] sm:$0xff]
  %v493 = vld [vmem:[%s468 + $0xc0] sm:$0xff]
  %v494 = vld [vmem:[%s468 + $0xc8] sm:$0xff]
  %v495 = vld [vmem:[%s468 + $0xd0] sm:$0xff]
  %v496 = vld [vmem:[%s468 + $0xd8] sm:$0xff]
  %v497 = vld [vmem:[%s468 + $0xe0] sm:$0xff]
  %v498 = vld [vmem:[%s468 + $0xe8] sm:$0xff]
  %v499 = vld [vmem:[%s468 + $0xf0] sm:$0xff]
  %v500 = vld [vmem:[%s468 + $0xf8] sm:$0xff]
  %v501 = vld [vmem:[%s468 + $0x100] sm:$0xff]
  %v502 = vld [vmem:[%s468 + $0x108] sm:$0xff]
  %v503 = vld [vmem:[%s468 + $0x110] sm:$0xff]
  %v504 = vld [vmem:[%s468 + $0x118] sm:$0xff]
  %v505 = vld [vmem:[%s468 + $0x120] sm:$0xff]
  %v506 = vld [vmem:[%s468 + $0x128] sm:$0xff]
  %v507 = vld [vmem:[%s468 + $0x130] sm:$0xff]
  %v508 = vld [vmem:[%s468 + $0x138] sm:$0xff]
  %v509 = vld [vmem:[%s468 + $0x140] sm:$0xff]
  %v510 = vld [vmem:[%s468 + $0x148] sm:$0xff]
  %v511 = vld [vmem:[%s468 + $0x150] sm:$0xff]
  %v512 = vld [vmem:[%s468 + $0x158] sm:$0xff]
  %v513 = vld [vmem:[%s468 + $0x160] sm:$0xff]
  %v514 = vld [vmem:[%s468 + $0x168] sm:$0xff]
  %v515 = vld [vmem:[%s468 + $0x170] sm:$0xff]
  %v516 = vld [vmem:[%s468 + $0x178] sm:$0xff]
  %v517 = vld [vmem:[%s468 + $0x180] sm:$0xff]
  %v518 = vld [vmem:[%s468 + $0x188] sm:$0xff]
  %v519 = vld [vmem:[%s468 + $0x190] sm:$0xff]
  %v520 = vld [vmem:[%s468 + $0x198] sm:$0xff]
  %v521 = vld [vmem:[%s468 + $0x1a0] sm:$0xff]
  %v522 = vld [vmem:[%s468 + $0x1a8] sm:$0xff]
  %v523 = vld [vmem:[%s468 + $0x1b0] sm:$0xff]
  %v524 = vld [vmem:[%s468 + $0x1b8] sm:$0xff]
  %v525 = vld [vmem:[%s468 + $0x1c0] sm:$0xff]
  %v526 = vld [vmem:[%s468 + $0x1c8] sm:$0xff]
  %v527 = vld [vmem:[%s468 + $0x1d0] sm:$0xff]
  %v528 = vld [vmem:[%s468 + $0x1d8] sm:$0xff]
  %v529 = vld [vmem:[%s468 + $0x1e0] sm:$0xff]
  %v530 = vld [vmem:[%s468 + $0x1e8] sm:$0xff]
  %v531 = vld [vmem:[%s468 + $0x1f0] sm:$0xff]
  %v532 = vld [vmem:[%s468 + $0x1f8] sm:$0xff]
  %533 = vmatprep.subr.mxu0 0.0
  %534 = vmatpush1.msra.mxu0 %v469
  %535 = vmatprep.subr.mxu0 0.0
  %536 = vmatpush1.msra.mxu0 %v470
  %537 = vmatprep.subr.mxu0 0.0
  %538 = vmatpush1.msra.mxu0 %v471
  %539 = vmatprep.subr.mxu0 0.0
  %540 = vmatpush1.msra.mxu0 %v472
  %541 = vmatprep.subr.mxu0 0.0
  %542 = vmatpush1.msra.mxu0 %v473
  %543 = vmatprep.subr.mxu0 0.0
  %544 = vmatpush1.msra.mxu0 %v474
  %545 = vmatprep.subr.mxu0 0.0
  %546 = vmatpush1.msra.mxu0 %v475
  %547 = vmatprep.subr.mxu0 0.0
  %548 = vmatpush1.msra.mxu0 %v476
  %549 = vmatprep.subr.mxu0 0.0
  %550 = vmatpush1.msra.mxu0 %v477
  %551 = vmatprep.subr.mxu0 0.0
  %552 = vmatpush1.msra.mxu0 %v478
  %553 = vmatprep.subr.mxu0 0.0
  %554 = vmatpush1.msra.mxu0 %v479
  %555 = vmatprep.subr.mxu0 0.0
  %556 = vmatpush1.msra.mxu0 %v480
  %557 = vmatprep.subr.mxu0 0.0
  %558 = vmatpush1.msra.mxu0 %v481
  %559 = vmatprep.subr.mxu0 0.0
  %560 = vmatpush1.msra.mxu0 %v482
  %561 = vmatprep.subr.mxu0 0.0
  %562 = vmatpush1.msra.mxu0 %v483
  %563 = vmatprep.subr.mxu0 0.0
  %564 = vmatpush1.msra.mxu0 %v484
  %565 = vmatprep.subr.mxu0 0.0
  %566 = vmatpush1.msra.mxu0 %v485
  %567 = vmatprep.subr.mxu0 0.0
  %568 = vmatpush1.msra.mxu0 %v486
  %569 = vmatprep.subr.mxu0 0.0
  %570 = vmatpush1.msra.mxu0 %v487
  %571 = vmatprep.subr.mxu0 0.0
  %572 = vmatpush1.msra.mxu0 %v488
  %573 = vmatprep.subr.mxu0 0.0
  %574 = vmatpush1.msra.mxu0 %v489
  %575 = vmatprep.subr.mxu0 0.0
  %576 = vmatpush1.msra.mxu0 %v490
  %577 = vmatprep.subr.mxu0 0.0
  %578 = vmatpush1.msra.mxu0 %v491
  %579 = vmatprep.subr.mxu0 0.0
  %580 = vmatpush1.msra.mxu0 %v492
  %581 = vmatprep.subr.mxu0 0.0
  %582 = vmatpush1.msra.mxu0 %v493
  %583 = vmatprep.subr.mxu0 0.0
  %584 = vmatpush1.msra.mxu0 %v494
  %585 = vmatprep.subr.mxu0 0.0
  %586 = vmatpush1.msra.mxu0 %v495
  %587 = vmatprep.subr.mxu0 0.0
  %588 = vmatpush1.msra.mxu0 %v496
  %589 = vmatprep.subr.mxu0 0.0
  %590 = vmatpush1.msra.mxu0 %v497
  %591 = vmatprep.subr.mxu0 0.0
  %592 = vmatpush1.msra.mxu0 %v498
  %593 = vmatprep.subr.mxu0 0.0
  %594 = vmatpush1.msra.mxu0 %v499
  %595 = vmatprep.subr.mxu0 0.0
  %596 = vmatpush1.msra.mxu0 %v500
  %597 = vmatprep.mubr.f32.mxu0 %v256
  %598 = vmatmul.mubr.f32.gmra.mrb[0].mxu0 %v255
  %v599 = vpop.f32.mrb[0].mxu0
  %v600 = vadd.f32 0.0, %v599
  %v601 = vpop.f32.mrb[0].mxu0
  %602 = vdwg.mxu0
  %603 = vmatprep.subr.mxu0 0.0
  %604 = vmatpush1.msra.mxu0 %v501
  %605 = vmatprep.subr.mxu0 0.0
  %606 = vmatpush1.msra.mxu0 %v502
  %607 = vmatprep.subr.mxu0 0.0
  %608 = vmatpush1.msra.mxu0 %v503
  %609 = vmatprep.subr.mxu0 0.0
  %610 = vmatpush1.msra.mxu0 %v504
  %611 = vmatprep.subr.mxu0 0.0
  %612 = vmatpush1.msra.mxu0 %v505
  %613 = vmatprep.subr.mxu0 0.0
  %614 = vmatpush1.msra.mxu0 %v506
  %615 = vmatprep.subr.mxu0 0.0
  %616 = vmatpush1.msra.mxu0 %v507
  %617 = vmatprep.subr.mxu0 0.0
  %618 = vmatpush1.msra.mxu0 %v508
  %619 = vmatprep.subr.mxu0 0.0
  %620 = vmatpush1.msra.mxu0 %v509
  %621 = vmatprep.subr.mxu0 0.0
  %622 = vmatpush1.msra.mxu0 %v510
  %623 = vmatprep.subr.mxu0 0.0
  %624 = vmatpush1.msra.mxu0 %v511
  %625 = vmatprep.subr.mxu0 0.0
  %626 = vmatpush1.msra.mxu0 %v512
  %627 = vmatprep.subr.mxu0 0.0
  %628 = vmatpush1.msra.mxu0 %v513
  %629 = vmatprep.subr.mxu0 0.0
  %630 = vmatpush1.msra.mxu0 %v514
  %631 = vmatprep.subr.mxu0 0.0
  %632 = vmatpush1.msra.mxu0 %v515
  %633 = vmatprep.subr.mxu0 0.0
  %634 = vmatpush1.msra.mxu0 %v516
  %635 = vmatprep.subr.mxu0 0.0
  %636 = vmatpush1.msra.mxu0 %v517
  %637 = vmatprep.subr.mxu0 0.0
  %638 = vmatpush1.msra.mxu0 %v518
  %639 = vmatprep.subr.mxu0 0.0
  %640 = vmatpush1.msra.mxu0 %v519
  %641 = vmatprep.subr.mxu0 0.0
  %642 = vmatpush1.msra.mxu0 %v520
  %643 = vmatprep.subr.mxu0 0.0
  %644 = vmatpush1.msra.mxu0 %v521
  %645 = vmatprep.subr.mxu0 0.0
  %646 = vmatpush1.msra.mxu0 %v522
  %647 = vmatprep.subr.mxu0 0.0
  %648 = vmatpush1.msra.mxu0 %v523
  %649 = vmatprep.subr.mxu0 0.0
  %650 = vmatpush1.msra.mxu0 %v524
  %651 = vmatprep.subr.mxu0 0.0
  %652 = vmatpush1.msra.mxu0 %v525
  %653 = vmatprep.subr.mxu0 0.0
  %654 = vmatpush1.msra.mxu0 %v526
  %655 = vmatprep.subr.mxu0 0.0
  %656 = vmatpush1.msra.mxu0 %v527
  %657 = vmatprep.subr.mxu0 0.0
  %658 = vmatpush1.msra.mxu0 %v528
  %659 = vmatprep.subr.mxu0 0.0
  %660 = vmatpush1.msra.mxu0 %v529
  %661 = vmatprep.subr.mxu0 0.0
  %662 = vmatpush1.msra.mxu0 %v530
  %663 = vmatprep.subr.mxu0 0.0
  %664 = vmatpush1.msra.mxu0 %v531
  %665 = vmatprep.subr.mxu0 0.0
  %666 = vmatpush1.msra.mxu0 %v532
  %667 = vmatprep.mubr.f32.mxu0 %v258
  %668 = vmatmul.mubr.f32.gmra.mrb[0].mxu0 %v257
  %v669 = vpop.f32.mrb[0].mxu0
  %v670 = vadd.f32 %v600, %v669
  %v671 = vpop.f32.mrb[0].mxu0
  %672 = vdwg.mxu0
  %vm673 = vcmask 64512
  %v675 = vsel %vm673, %v466, 0
  %v678 = vsel %vm673, %v467, 0
  %680 = vmatprep.subr.mxu0 0.0
  %681 = vmatpush1.msra.mxu0 %v670
  %682 = vmatprep.subr.mxu0 0.0
  %683 = vmatpush1.msra.mxu0 0.0
  %684 = vmatprep.subr.mxu0 0.0
  %685 = vmatpush1.msra.mxu0 0.0
  %686 = vmatprep.subr.mxu0 0.0
  %687 = vmatpush1.msra.mxu0 0.0
  %688 = vmatprep.subr.mxu0 0.0
  %689 = vmatpush1.msra.mxu0 0.0
  %690 = vmatprep.subr.mxu0 0.0
  %691 = vmatpush1.msra.mxu0 0.0
  %692 = vmatprep.subr.mxu0 0.0
  %693 = vmatpush1.msra.mxu0 0.0
  %694 = vmatprep.subr.mxu0 0.0
  %695 = vmatpush1.msra.mxu0 0.0
  %696 = vmatprep.subr.mxu0 0.0
  %697 = vmatpush1.msra.mxu0 0.0
  %698 = vmatprep.subr.mxu0 0.0
  %699 = vmatpush1.msra.mxu0 0.0
  %700 = vmatprep.subr.mxu0 0.0
  %701 = vmatpush1.msra.mxu0 0.0
  %702 = vmatprep.subr.mxu0 0.0
  %703 = vmatpush1.msra.mxu0 0.0
  %704 = vmatprep.subr.mxu0 0.0
  %705 = vmatpush1.msra.mxu0 0.0
  %706 = vmatprep.subr.mxu0 0.0
  %707 = vmatpush1.msra.mxu0 0.0
  %708 = vmatprep.subr.mxu0 0.0
  %709 = vmatpush1.msra.mxu0 0.0
  %710 = vmatprep.subr.mxu0 0.0
  %711 = vmatpush1.msra.mxu0 0.0
  %712 = vmatprep.subr.mxu0 0.0
  %713 = vmatpush1.msra.mxu0 0.0
  %714 = vmatprep.subr.mxu0 0.0
  %715 = vmatpush1.msra.mxu0 0.0
  %716 = vmatprep.subr.mxu0 0.0
  %717 = vmatpush1.msra.mxu0 0.0
  %718 = vmatprep.subr.mxu0 0.0
  %719 = vmatpush1.msra.mxu0 0.0
  %720 = vmatprep.subr.mxu0 0.0
  %721 = vmatpush1.msra.mxu0 0.0
  %722 = vmatprep.subr.mxu0 0.0
  %723 = vmatpush1.msra.mxu0 0.0
  %724 = vmatprep.subr.mxu0 0.0
  %725 = vmatpush1.msra.mxu0 0.0
  %726 = vmatprep.subr.mxu0 0.0
  %727 = vmatpush1.msra.mxu0 0.0
  %728 = vmatprep.subr.mxu0 0.0
  %729 = vmatpush1.msra.mxu0 0.0
  %730 = vmatprep.subr.mxu0 0.0
  %731 = vmatpush1.msra.mxu0 0.0
  %732 = vmatprep.subr.mxu0 0.0
  %733 = vmatpush1.msra.mxu0 0.0
  %734 = vmatprep.subr.mxu0 0.0
  %735 = vmatpush1.msra.mxu0 0.0
  %736 = vmatprep.subr.mxu0 0.0
  %737 = vmatpush1.msra.mxu0 0.0
  %738 = vmatprep.subr.mxu0 0.0
  %739 = vmatpush1.msra.mxu0 0.0
  %740 = vmatprep.subr.mxu0 0.0
  %741 = vmatpush1.msra.mxu0 0.0
  %742 = vmatprep.subr.mxu0 0.0
  %743 = vmatpush1.msra.mxu0 0.0
  %744 = vmatprep.mubr.f32.mxu0 0.0
  %745 = vmatmul.mubr.f32.gmra.mrb[0].mxu0 %v675
  %v746 = vpop.f32.mrb[0].mxu0
  %v747 = vadd.f32 0.0, %v746
  %v748 = vpop.f32.mrb[0].mxu0
  %749 = vmatprep.mubr.f32.mxu0 0.0
  %750 = vmatmul.mubr.f32.gmra.mrb[0].mxu0 %v678
  %v751 = vpop.f32.mrb[0].mxu0
  %v752 = vadd.f32 0.0, %v751
  %v753 = vpop.f32.mrb[0].mxu0
  %754 = vdwg.mxu0
  %v756 = vsel %vm673, %v259, 0
  %v759 = vsel %vm673, %v260, 0
  %761 = vmatprep.subr.mxu0 0.0
  %762 = vmatpush1.msra.mxu0 %v462
  %763 = vmatprep.subr.mxu0 0.0
  %764 = vmatpush1.msra.mxu0 0.0
  %765 = vmatprep.subr.mxu0 0.0
  %766 = vmatpush1.msra.mxu0 0.0
  %767 = vmatprep.subr.mxu0 0.0
  %768 = vmatpush1.msra.mxu0 0.0
  %769 = vmatprep.subr.mxu0 0.0
  %770 = vmatpush1.msra.mxu0 0.0
  %771 = vmatprep.subr.mxu0 0.0
  %772 = vmatpush1.msra.mxu0 0.0
  %773 = vmatprep.subr.mxu0 0.0
  %774 = vmatpush1.msra.mxu0 0.0
  %775 = vmatprep.subr.mxu0 0.0
  %776 = vmatpush1.msra.mxu0 0.0
  %777 = vmatprep.subr.mxu0 0.0
  %778 = vmatpush1.msra.mxu0 0.0
  %779 = vmatprep.subr.mxu0 0.0
  %780 = vmatpush1.msra.mxu0 0.0
  %781 = vmatprep.subr.mxu0 0.0
  %782 = vmatpush1.msra.mxu0 0.0
  %783 = vmatprep.subr.mxu0 0.0
  %784 = vmatpush1.msra.mxu0 0.0
  %785 = vmatprep.subr.mxu0 0.0
  %786 = vmatpush1.msra.mxu0 0.0
  %787 = vmatprep.subr.mxu0 0.0
  %788 = vmatpush1.msra.mxu0 0.0
  %789 = vmatprep.subr.mxu0 0.0
  %790 = vmatpush1.msra.mxu0 0.0
  %791 = vmatprep.subr.mxu0 0.0
  %792 = vmatpush1.msra.mxu0 0.0
  %793 = vmatprep.subr.mxu0 0.0
  %794 = vmatpush1.msra.mxu0 0.0
  %795 = vmatprep.subr.mxu0 0.0
  %796 = vmatpush1.msra.mxu0 0.0
  %797 = vmatprep.subr.mxu0 0.0
  %798 = vmatpush1.msra.mxu0 0.0
  %799 = vmatprep.subr.mxu0 0.0
  %800 = vmatpush1.msra.mxu0 0.0
  %801 = vmatprep.subr.mxu0 0.0
  %802 = vmatpush1.msra.mxu0 0.0
  %803 = vmatprep.subr.mxu0 0.0
  %804 = vmatpush1.msra.mxu0 0.0
  %805 = vmatprep.subr.mxu0 0.0
  %806 = vmatpush1.msra.mxu0 0.0
  %807 = vmatprep.subr.mxu0 0.0
  %808 = vmatpush1.msra.mxu0 0.0
  %809 = vmatprep.subr.mxu0 0.0
  %810 = vmatpush1.msra.mxu0 0.0
  %811 = vmatprep.subr.mxu0 0.0
  %812 = vmatpush1.msra.mxu0 0.0
  %813 = vmatprep.subr.mxu0 0.0
  %814 = vmatpush1.msra.mxu0 0.0
  %815 = vmatprep.subr.mxu0 0.0
  %816 = vmatpush1.msra.mxu0 0.0
  %817 = vmatprep.subr.mxu0 0.0
  %818 = vmatpush1.msra.mxu0 0.0
  %819 = vmatprep.subr.mxu0 0.0
  %820 = vmatpush1.msra.mxu0 0.0
  %821 = vmatprep.subr.mxu0 0.0
  %822 = vmatpush1.msra.mxu0 0.0
  %823 = vmatprep.subr.mxu0 0.0
  %824 = vmatpush1.msra.mxu0 0.0
  %825 = vmatprep.mubr.f32.mxu0 0.0
  %826 = vmatmul.mubr.f32.gmra.mrb[0].mxu0 %v756
  %v827 = vpop.f32.mrb[0].mxu0
  %v828 = vadd.f32 %v747, %v827
  %v829 = vpop.f32.mrb[0].mxu0
  %830 = vmatprep.mubr.f32.mxu0 0.0
  %831 = vmatmul.mubr.f32.gmra.mrb[0].mxu0 %v759
  %v832 = vpop.f32.mrb[0].mxu0
  %v833 = vadd.f32 %v752, %v832
  %v834 = vpop.f32.mrb[0].mxu0
  %835 = vdwg.mxu0
  %s836 = scalar_lea.vmem %s3, 32
  %v837 = vld [vmem:[%s836] sm:$0xff]
  %v838 = vld [vmem:[%s836 + $0x8] sm:$0xff]
  %s839 = scalar_lea.vmem %s2, 1024
  %v840 = vld [vmem:[%s839] sm:$0xff]
  %v841 = vld [vmem:[%s839 + $0x8] sm:$0xff]
  %v842 = vld [vmem:[%s839 + $0x10] sm:$0xff]
  %v843 = vld [vmem:[%s839 + $0x18] sm:$0xff]
  %v844 = vld [vmem:[%s839 + $0x20] sm:$0xff]
  %v845 = vld [vmem:[%s839 + $0x28] sm:$0xff]
  %v846 = vld [vmem:[%s839 + $0x30] sm:$0xff]
  %v847 = vld [vmem:[%s839 + $0x38] sm:$0xff]
  %v848 = vld [vmem:[%s839 + $0x40] sm:$0xff]
  %v849 = vld [vmem:[%s839 + $0x48] sm:$0xff]
  %v850 = vld [vmem:[%s839 + $0x50] sm:$0xff]
  %v851 = vld [vmem:[%s839 + $0x58] sm:$0xff]
  %v852 = vld [vmem:[%s839 + $0x60] sm:$0xff]
  %v853 = vld [vmem:[%s839 + $0x68] sm:$0xff]
  %v854 = vld [vmem:[%s839 + $0x70] sm:$0xff]
  %v855 = vld [vmem:[%s839 + $0x78] sm:$0xff]
  %v856 = vld [vmem:[%s839 + $0x80] sm:$0xff]
  %v857 = vld [vmem:[%s839 + $0x88] sm:$0xff]
  %v858 = vld [vmem:[%s839 + $0x90] sm:$0xff]
  %v859 = vld [vmem:[%s839 + $0x98] sm:$0xff]
  %v860 = vld [vmem:[%s839 + $0xa0] sm:$0xff]
  %v861 = vld [vmem:[%s839 + $0xa8] sm:$0xff]
  %v862 = vld [vmem:[%s839 + $0xb0] sm:$0xff]
  %v863 = vld [vmem:[%s839 + $0xb8] sm:$0xff]
  %v864 = vld [vmem:[%s839 + $0xc0] sm:$0xff]
  %v865 = vld [vmem:[%s839 + $0xc8] sm:$0xff]
  %v866 = vld [vmem:[%s839 + $0xd0] sm:$0xff]
  %v867 = vld [vmem:[%s839 + $0xd8] sm:$0xff]
  %v868 = vld [vmem:[%s839 + $0xe0] sm:$0xff]
  %v869 = vld [vmem:[%s839 + $0xe8] sm:$0xff]
  %v870 = vld [vmem:[%s839 + $0xf0] sm:$0xff]
  %v871 = vld [vmem:[%s839 + $0xf8] sm:$0xff]
  %v872 = vld [vmem:[%s839 + $0x100] sm:$0xff]
  %v873 = vld [vmem:[%s839 + $0x108] sm:$0xff]
  %v874 = vld [vmem:[%s839 + $0x110] sm:$0xff]
  %v875 = vld [vmem:[%s839 + $0x118] sm:$0xff]
  %v876 = vld [vmem:[%s839 + $0x120] sm:$0xff]
  %v877 = vld [vmem:[%s839 + $0x128] sm:$0xff]
  %v878 = vld [vmem:[%s839 + $0x130] sm:$0xff]
  %v879 = vld [vmem:[%s839 + $0x138] sm:$0xff]
  %v880 = vld [vmem:[%s839 + $0x140] sm:$0xff]
  %v881 = vld [vmem:[%s839 + $0x148] sm:$0xff]
  %v882 = vld [vmem:[%s839 + $0x150] sm:$0xff]
  %v883 = vld [vmem:[%s839 + $0x158] sm:$0xff]
  %v884 = vld [vmem:[%s839 + $0x160] sm:$0xff]
  %v885 = vld [vmem:[%s839 + $0x168] sm:$0xff]
  %v886 = vld [vmem:[%s839 + $0x170] sm:$0xff]
  %v887 = vld [vmem:[%s839 + $0x178] sm:$0xff]
  %v888 = vld [vmem:[%s839 + $0x180] sm:$0xff]
  %v889 = vld [vmem:[%s839 + $0x188] sm:$0xff]
  %v890 = vld [vmem:[%s839 + $0x190] sm:$0xff]
  %v891 = vld [vmem:[%s839 + $0x198] sm:$0xff]
  %v892 = vld [vmem:[%s839 + $0x1a0] sm:$0xff]
  %v893 = vld [vmem:[%s839 + $0x1a8] sm:$0xff]
  %v894 = vld [vmem:[%s839 + $0x1b0] sm:$0xff]
  %v895 = vld [vmem:[%s839 + $0x1b8] sm:$0xff]
  %v896 = vld [vmem:[%s839 + $0x1c0] sm:$0xff]
  %v897 = vld [vmem:[%s839 + $0x1c8] sm:$0xff]
  %v898 = vld [vmem:[%s839 + $0x1d0] sm:$0xff]
  %v899 = vld [vmem:[%s839 + $0x1d8] sm:$0xff]
  %v900 = vld [vmem:[%s839 + $0x1e0] sm:$0xff]
  %v901 = vld [vmem:[%s839 + $0x1e8] sm:$0xff]
  %v902 = vld [vmem:[%s839 + $0x1f0] sm:$0xff]
  %v903 = vld [vmem:[%s839 + $0x1f8] sm:$0xff]
  %904 = vmatprep.subr.mxu0 0.0
  %905 = vmatpush1.msra.mxu0 %v840
  %906 = vmatprep.subr.mxu0 0.0
  %907 = vmatpush1.msra.mxu0 %v841
  %908 = vmatprep.subr.mxu0 0.0
  %909 = vmatpush1.msra.mxu0 %v842
  %910 = vmatprep.subr.mxu0 0.0
  %911 = vmatpush1.msra.mxu0 %v843
  %912 = vmatprep.subr.mxu0 0.0
  %913 = vmatpush1.msra.mxu0 %v844
  %914 = vmatprep.subr.mxu0 0.0
  %915 = vmatpush1.msra.mxu0 %v845
  %916 = vmatprep.subr.mxu0 0.0
  %917 = vmatpush1.msra.mxu0 %v846
  %918 = vmatprep.subr.mxu0 0.0
  %919 = vmatpush1.msra.mxu0 %v847
  %920 = vmatprep.subr.mxu0 0.0
  %921 = vmatpush1.msra.mxu0 %v848
  %922 = vmatprep.subr.mxu0 0.0
  %923 = vmatpush1.msra.mxu0 %v849
  %924 = vmatprep.subr.mxu0 0.0
  %925 = vmatpush1.msra.mxu0 %v850
  %926 = vmatprep.subr.mxu0 0.0
  %927 = vmatpush1.msra.mxu0 %v851
  %928 = vmatprep.subr.mxu0 0.0
  %929 = vmatpush1.msra.mxu0 %v852
  %930 = vmatprep.subr.mxu0 0.0
  %931 = vmatpush1.msra.mxu0 %v853
  %932 = vmatprep.subr.mxu0 0.0
  %933 = vmatpush1.msra.mxu0 %v854
  %934 = vmatprep.subr.mxu0 0.0
  %935 = vmatpush1.msra.mxu0 %v855
  %936 = vmatprep.subr.mxu0 0.0
  %937 = vmatpush1.msra.mxu0 %v856
  %938 = vmatprep.subr.mxu0 0.0
  %939 = vmatpush1.msra.mxu0 %v857
  %940 = vmatprep.subr.mxu0 0.0
  %941 = vmatpush1.msra.mxu0 %v858
  %942 = vmatprep.subr.mxu0 0.0
  %943 = vmatpush1.msra.mxu0 %v859
  %944 = vmatprep.subr.mxu0 0.0
  %945 = vmatpush1.msra.mxu0 %v860
  %946 = vmatprep.subr.mxu0 0.0
  %947 = vmatpush1.msra.mxu0 %v861
  %948 = vmatprep.subr.mxu0 0.0
  %949 = vmatpush1.msra.mxu0 %v862
  %950 = vmatprep.subr.mxu0 0.0
  %951 = vmatpush1.msra.mxu0 %v863
  %952 = vmatprep.subr.mxu0 0.0
  %953 = vmatpush1.msra.mxu0 %v864
  %954 = vmatprep.subr.mxu0 0.0
  %955 = vmatpush1.msra.mxu0 %v865
  %956 = vmatprep.subr.mxu0 0.0
  %957 = vmatpush1.msra.mxu0 %v866
  %958 = vmatprep.subr.mxu0 0.0
  %959 = vmatpush1.msra.mxu0 %v867
  %960 = vmatprep.subr.mxu0 0.0
  %961 = vmatpush1.msra.mxu0 %v868
  %962 = vmatprep.subr.mxu0 0.0
  %963 = vmatpush1.msra.mxu0 %v869
  %964 = vmatprep.subr.mxu0 0.0
  %965 = vmatpush1.msra.mxu0 %v870
  %966 = vmatprep.subr.mxu0 0.0
  %967 = vmatpush1.msra.mxu0 %v871
  %968 = vmatprep.mubr.f32.mxu0 %v256
  %969 = vmatmul.mubr.f32.gmra.mrb[0].mxu0 %v255
  %v970 = vpop.f32.mrb[0].mxu0
  %v971 = vadd.f32 0.0, %v970
  %v972 = vpop.f32.mrb[0].mxu0
  %973 = vdwg.mxu0
  %974 = vmatprep.subr.mxu0 0.0
  %975 = vmatpush1.msra.mxu0 %v872
  %976 = vmatprep.subr.mxu0 0.0
  %977 = vmatpush1.msra.mxu0 %v873
  %978 = vmatprep.subr.mxu0 0.0
  %979 = vmatpush1.msra.mxu0 %v874
  %980 = vmatprep.subr.mxu0 0.0
  %981 = vmatpush1.msra.mxu0 %v875
  %982 = vmatprep.subr.mxu0 0.0
  %983 = vmatpush1.msra.mxu0 %v876
  %984 = vmatprep.subr.mxu0 0.0
  %985 = vmatpush1.msra.mxu0 %v877
  %986 = vmatprep.subr.mxu0 0.0
  %987 = vmatpush1.msra.mxu0 %v878
  %988 = vmatprep.subr.mxu0 0.0
  %989 = vmatpush1.msra.mxu0 %v879
  %990 = vmatprep.subr.mxu0 0.0
  %991 = vmatpush1.msra.mxu0 %v880
  %992 = vmatprep.subr.mxu0 0.0
  %993 = vmatpush1.msra.mxu0 %v881
  %994 = vmatprep.subr.mxu0 0.0
  %995 = vmatpush1.msra.mxu0 %v882
  %996 = vmatprep.subr.mxu0 0.0
  %997 = vmatpush1.msra.mxu0 %v883
  %998 = vmatprep.subr.mxu0 0.0
  %999 = vmatpush1.msra.mxu0 %v884
  %1000 = vmatprep.subr.mxu0 0.0
  %1001 = vmatpush1.msra.mxu0 %v885
  %1002 = vmatprep.subr.mxu0 0.0
  %1003 = vmatpush1.msra.mxu0 %v886
  %1004 = vmatprep.subr.mxu0 0.0
  %1005 = vmatpush1.msra.mxu0 %v887
  %1006 = vmatprep.subr.mxu0 0.0
  %1007 = vmatpush1.msra.mxu0 %v888
  %1008 = vmatprep.subr.mxu0 0.0
  %1009 = vmatpush1.msra.mxu0 %v889
  %1010 = vmatprep.subr.mxu0 0.0
  %1011 = vmatpush1.msra.mxu0 %v890
  %1012 = vmatprep.subr.mxu0 0.0
  %1013 = vmatpush1.msra.mxu0 %v891
  %1014 = vmatprep.subr.mxu0 0.0
  %1015 = vmatpush1.msra.mxu0 %v892
  %1016 = vmatprep.subr.mxu0 0.0
  %1017 = vmatpush1.msra.mxu0 %v893
  %1018 = vmatprep.subr.mxu0 0.0
  %1019 = vmatpush1.msra.mxu0 %v894
  %1020 = vmatprep.subr.mxu0 0.0
  %1021 = vmatpush1.msra.mxu0 %v895
  %1022 = vmatprep.subr.mxu0 0.0
  %1023 = vmatpush1.msra.mxu0 %v896
  %1024 = vmatprep.subr.mxu0 0.0
  %1025 = vmatpush1.msra.mxu0 %v897
  %1026 = vmatprep.subr.mxu0 0.0
  %1027 = vmatpush1.msra.mxu0 %v898
  %1028 = vmatprep.subr.mxu0 0.0
  %1029 = vmatpush1.msra.mxu0 %v899
  %1030 = vmatprep.subr.mxu0 0.0
  %1031 = vmatpush1.msra.mxu0 %v900
  %1032 = vmatprep.subr.mxu0 0.0
  %1033 = vmatpush1.msra.mxu0 %v901
  %1034 = vmatprep.subr.mxu0 0.0
  %1035 = vmatpush1.msra.mxu0 %v902
  %1036 = vmatprep.subr.mxu0 0.0
  %1037 = vmatpush1.msra.mxu0 %v903
  %1038 = vmatprep.mubr.f32.mxu0 %v258
  %1039 = vmatmul.mubr.f32.gmra.mrb[0].mxu0 %v257
  %v1040 = vpop.f32.mrb[0].mxu0
  %v1041 = vadd.f32 %v971, %v1040
  %v1042 = vpop.f32.mrb[0].mxu0
  %1043 = vdwg.mxu0
  %v1045 = vsel %vm673, %v837, 0
  %v1048 = vsel %vm673, %v838, 0
  %1050 = vmatprep.subr.mxu0 0.0
  %1051 = vmatpush1.msra.mxu0 %v1041
  %1052 = vmatprep.subr.mxu0 0.0
  %1053 = vmatpush1.msra.mxu0 0.0
  %1054 = vmatprep.subr.mxu0 0.0
  %1055 = vmatpush1.msra.mxu0 0.0
  %1056 = vmatprep.subr.mxu0 0.0
  %1057 = vmatpush1.msra.mxu0 0.0
  %1058 = vmatprep.subr.mxu0 0.0
  %1059 = vmatpush1.msra.mxu0 0.0
  %1060 = vmatprep.subr.mxu0 0.0
  %1061 = vmatpush1.msra.mxu0 0.0
  %1062 = vmatprep.subr.mxu0 0.0
  %1063 = vmatpush1.msra.mxu0 0.0
  %1064 = vmatprep.subr.mxu0 0.0
  %1065 = vmatpush1.msra.mxu0 0.0
  %1066 = vmatprep.subr.mxu0 0.0
  %1067 = vmatpush1.msra.mxu0 0.0
  %1068 = vmatprep.subr.mxu0 0.0
  %1069 = vmatpush1.msra.mxu0 0.0
  %1070 = vmatprep.subr.mxu0 0.0
  %1071 = vmatpush1.msra.mxu0 0.0
  %1072 = vmatprep.subr.mxu0 0.0
  %1073 = vmatpush1.msra.mxu0 0.0
  %1074 = vmatprep.subr.mxu0 0.0
  %1075 = vmatpush1.msra.mxu0 0.0
  %1076 = vmatprep.subr.mxu0 0.0
  %1077 = vmatpush1.msra.mxu0 0.0
  %1078 = vmatprep.subr.mxu0 0.0
  %1079 = vmatpush1.msra.mxu0 0.0
  %1080 = vmatprep.subr.mxu0 0.0
  %1081 = vmatpush1.msra.mxu0 0.0
  %1082 = vmatprep.subr.mxu0 0.0
  %1083 = vmatpush1.msra.mxu0 0.0
  %1084 = vmatprep.subr.mxu0 0.0
  %1085 = vmatpush1.msra.mxu0 0.0
  %1086 = vmatprep.subr.mxu0 0.0
  %1087 = vmatpush1.msra.mxu0 0.0
  %1088 = vmatprep.subr.mxu0 0.0
  %1089 = vmatpush1.msra.mxu0 0.0
  %1090 = vmatprep.subr.mxu0 0.0
  %1091 = vmatpush1.msra.mxu0 0.0
  %1092 = vmatprep.subr.mxu0 0.0
  %1093 = vmatpush1.msra.mxu0 0.0
  %1094 = vmatprep.subr.mxu0 0.0
  %1095 = vmatpush1.msra.mxu0 0.0
  %1096 = vmatprep.subr.mxu0 0.0
  %1097 = vmatpush1.msra.mxu0 0.0
  %1098 = vmatprep.subr.mxu0 0.0
  %1099 = vmatpush1.msra.mxu0 0.0
  %1100 = vmatprep.subr.mxu0 0.0
  %1101 = vmatpush1.msra.mxu0 0.0
  %1102 = vmatprep.subr.mxu0 0.0
  %1103 = vmatpush1.msra.mxu0 0.0
  %1104 = vmatprep.subr.mxu0 0.0
  %1105 = vmatpush1.msra.mxu0 0.0
  %1106 = vmatprep.subr.mxu0 0.0
  %1107 = vmatpush1.msra.mxu0 0.0
  %1108 = vmatprep.subr.mxu0 0.0
  %1109 = vmatpush1.msra.mxu0 0.0
  %1110 = vmatprep.subr.mxu0 0.0
  %1111 = vmatpush1.msra.mxu0 0.0
  %1112 = vmatprep.subr.mxu0 0.0
  %1113 = vmatpush1.msra.mxu0 0.0
  %1114 = vmatprep.mubr.f32.mxu0 0.0
  %1115 = vmatmul.mubr.f32.gmra.mrb[0].mxu0 %v1045
  %v1116 = vpop.f32.mrb[0].mxu0
  %v1117 = vadd.f32 0.0, %v1116
  %v1118 = vpop.f32.mrb[0].mxu0
  %1119 = vmatprep.mubr.f32.mxu0 0.0
  %1120 = vmatmul.mubr.f32.gmra.mrb[0].mxu0 %v1048
  %v1121 = vpop.f32.mrb[0].mxu0
  %v1122 = vadd.f32 0.0, %v1121
  %v1123 = vpop.f32.mrb[0].mxu0
  %1124 = vdwg.mxu0
  %v1125 = vadd.f32 %v828, %v1117
  %v1126 = vadd.f32 %v833, %v1122
  %s1127 = scalar_lea.vmem %s3, 48
  %v1128 = vld [vmem:[%s1127] sm:$0xff]
  %v1129 = vld [vmem:[%s1127 + $0x8] sm:$0xff]
  %s1130 = scalar_lea.vmem %s2, 1536
  %v1131 = vld [vmem:[%s1130] sm:$0xff]
  %v1132 = vld [vmem:[%s1130 + $0x8] sm:$0xff]
  %v1133 = vld [vmem:[%s1130 + $0x10] sm:$0xff]
  %v1134 = vld [vmem:[%s1130 + $0x18] sm:$0xff]
  %v1135 = vld [vmem:[%s1130 + $0x20] sm:$0xff]
  %v1136 = vld [vmem:[%s1130 + $0x28] sm:$0xff]
  %v1137 = vld [vmem:[%s1130 + $0x30] sm:$0xff]
  %v1138 = vld [vmem:[%s1130 + $0x38] sm:$0xff]
  %v1139 = vld [vmem:[%s1130 + $0x40] sm:$0xff]
  %v1140 = vld [vmem:[%s1130 + $0x48] sm:$0xff]
  %v1141 = vld [vmem:[%s1130 + $0x50] sm:$0xff]
  %v1142 = vld [vmem:[%s1130 + $0x58] sm:$0xff]
  %v1143 = vld [vmem:[%s1130 + $0x60] sm:$0xff]
  %v1144 = vld [vmem:[%s1130 + $0x68] sm:$0xff]
  %v1145 = vld [vmem:[%s1130 + $0x70] sm:$0xff]
  %v1146 = vld [vmem:[%s1130 + $0x78] sm:$0xff]
  %v1147 = vld [vmem:[%s1130 + $0x80] sm:$0xff]
  %v1148 = vld [vmem:[%s1130 + $0x88] sm:$0xff]
  %v1149 = vld [vmem:[%s1130 + $0x90] sm:$0xff]
  %v1150 = vld [vmem:[%s1130 + $0x98] sm:$0xff]
  %v1151 = vld [vmem:[%s1130 + $0xa0] sm:$0xff]
  %v1152 = vld [vmem:[%s1130 + $0xa8] sm:$0xff]
  %v1153 = vld [vmem:[%s1130 + $0xb0] sm:$0xff]
  %v1154 = vld [vmem:[%s1130 + $0xb8] sm:$0xff]
  %v1155 = vld [vmem:[%s1130 + $0xc0] sm:$0xff]
  %v1156 = vld [vmem:[%s1130 + $0xc8] sm:$0xff]
  %v1157 = vld [vmem:[%s1130 + $0xd0] sm:$0xff]
  %v1158 = vld [vmem:[%s1130 + $0xd8] sm:$0xff]
  %v1159 = vld [vmem:[%s1130 + $0xe0] sm:$0xff]
  %v1160 = vld [vmem:[%s1130 + $0xe8] sm:$0xff]
  %v1161 = vld [vmem:[%s1130 + $0xf0] sm:$0xff]
  %v1162 = vld [vmem:[%s1130 + $0xf8] sm:$0xff]
  %v1163 = vld [vmem:[%s1130 + $0x100] sm:$0xff]
  %v1164 = vld [vmem:[%s1130 + $0x108] sm:$0xff]
  %v1165 = vld [vmem:[%s1130 + $0x110] sm:$0xff]
  %v1166 = vld [vmem:[%s1130 + $0x118] sm:$0xff]
  %v1167 = vld [vmem:[%s1130 + $0x120] sm:$0xff]
  %v1168 = vld [vmem:[%s1130 + $0x128] sm:$0xff]
  %v1169 = vld [vmem:[%s1130 + $0x130] sm:$0xff]
  %v1170 = vld [vmem:[%s1130 + $0x138] sm:$0xff]
  %v1171 = vld [vmem:[%s1130 + $0x140] sm:$0xff]
  %v1172 = vld [vmem:[%s1130 + $0x148] sm:$0xff]
  %v1173 = vld [vmem:[%s1130 + $0x150] sm:$0xff]
  %v1174 = vld [vmem:[%s1130 + $0x158] sm:$0xff]
  %v1175 = vld [vmem:[%s1130 + $0x160] sm:$0xff]
  %v1176 = vld [vmem:[%s1130 + $0x168] sm:$0xff]
  %v1177 = vld [vmem:[%s1130 + $0x170] sm:$0xff]
  %v1178 = vld [vmem:[%s1130 + $0x178] sm:$0xff]
  %v1179 = vld [vmem:[%s1130 + $0x180] sm:$0xff]
  %v1180 = vld [vmem:[%s1130 + $0x188] sm:$0xff]
  %v1181 = vld [vmem:[%s1130 + $0x190] sm:$0xff]
  %v1182 = vld [vmem:[%s1130 + $0x198] sm:$0xff]
  %v1183 = vld [vmem:[%s1130 + $0x1a0] sm:$0xff]
  %v1184 = vld [vmem:[%s1130 + $0x1a8] sm:$0xff]
  %v1185 = vld [vmem:[%s1130 + $0x1b0] sm:$0xff]
  %v1186 = vld [vmem:[%s1130 + $0x1b8] sm:$0xff]
  %v1187 = vld [vmem:[%s1130 + $0x1c0] sm:$0xff]
  %v1188 = vld [vmem:[%s1130 + $0x1c8] sm:$0xff]
  %v1189 = vld [vmem:[%s1130 + $0x1d0] sm:$0xff]
  %v1190 = vld [vmem:[%s1130 + $0x1d8] sm:$0xff]
  %v1191 = vld [vmem:[%s1130 + $0x1e0] sm:$0xff]
  %v1192 = vld [vmem:[%s1130 + $0x1e8] sm:$0xff]
  %v1193 = vld [vmem:[%s1130 + $0x1f0] sm:$0xff]
  %v1194 = vld [vmem:[%s1130 + $0x1f8] sm:$0xff]
  %1195 = vmatprep.subr.mxu0 0.0
  %1196 = vmatpush1.msra.mxu0 %v1131
  %1197 = vmatprep.subr.mxu0 0.0
  %1198 = vmatpush1.msra.mxu0 %v1132
  %1199 = vmatprep.subr.mxu0 0.0
  %1200 = vmatpush1.msra.mxu0 %v1133
  %1201 = vmatprep.subr.mxu0 0.0
  %1202 = vmatpush1.msra.mxu0 %v1134
  %1203 = vmatprep.subr.mxu0 0.0
  %1204 = vmatpush1.msra.mxu0 %v1135
  %1205 = vmatprep.subr.mxu0 0.0
  %1206 = vmatpush1.msra.mxu0 %v1136
  %1207 = vmatprep.subr.mxu0 0.0
  %1208 = vmatpush1.msra.mxu0 %v1137
  %1209 = vmatprep.subr.mxu0 0.0
  %1210 = vmatpush1.msra.mxu0 %v1138
  %1211 = vmatprep.subr.mxu0 0.0
  %1212 = vmatpush1.msra.mxu0 %v1139
  %1213 = vmatprep.subr.mxu0 0.0
  %1214 = vmatpush1.msra.mxu0 %v1140
  %1215 = vmatprep.subr.mxu0 0.0
  %1216 = vmatpush1.msra.mxu0 %v1141
  %1217 = vmatprep.subr.mxu0 0.0
  %1218 = vmatpush1.msra.mxu0 %v1142
  %1219 = vmatprep.subr.mxu0 0.0
  %1220 = vmatpush1.msra.mxu0 %v1143
  %1221 = vmatprep.subr.mxu0 0.0
  %1222 = vmatpush1.msra.mxu0 %v1144
  %1223 = vmatprep.subr.mxu0 0.0
  %1224 = vmatpush1.msra.mxu0 %v1145
  %1225 = vmatprep.subr.mxu0 0.0
  %1226 = vmatpush1.msra.mxu0 %v1146
  %1227 = vmatprep.subr.mxu0 0.0
  %1228 = vmatpush1.msra.mxu0 %v1147
  %1229 = vmatprep.subr.mxu0 0.0
  %1230 = vmatpush1.msra.mxu0 %v1148
  %1231 = vmatprep.subr.mxu0 0.0
  %1232 = vmatpush1.msra.mxu0 %v1149
  %1233 = vmatprep.subr.mxu0 0.0
  %1234 = vmatpush1.msra.mxu0 %v1150
  %1235 = vmatprep.subr.mxu0 0.0
  %1236 = vmatpush1.msra.mxu0 %v1151
  %1237 = vmatprep.subr.mxu0 0.0
  %1238 = vmatpush1.msra.mxu0 %v1152
  %1239 = vmatprep.subr.mxu0 0.0
  %1240 = vmatpush1.msra.mxu0 %v1153
  %1241 = vmatprep.subr.mxu0 0.0
  %1242 = vmatpush1.msra.mxu0 %v1154
  %1243 = vmatprep.subr.mxu0 0.0
  %1244 = vmatpush1.msra.mxu0 %v1155
  %1245 = vmatprep.subr.mxu0 0.0
  %1246 = vmatpush1.msra.mxu0 %v1156
  %1247 = vmatprep.subr.mxu0 0.0
  %1248 = vmatpush1.msra.mxu0 %v1157
  %1249 = vmatprep.subr.mxu0 0.0
  %1250 = vmatpush1.msra.mxu0 %v1158
  %1251 = vmatprep.subr.mxu0 0.0
  %1252 = vmatpush1.msra.mxu0 %v1159
  %1253 = vmatprep.subr.mxu0 0.0
  %1254 = vmatpush1.msra.mxu0 %v1160
  %1255 = vmatprep.subr.mxu0 0.0
  %1256 = vmatpush1.msra.mxu0 %v1161
  %1257 = vmatprep.subr.mxu0 0.0
  %1258 = vmatpush1.msra.mxu0 %v1162
  %1259 = vmatprep.mubr.f32.mxu0 %v256
  %1260 = vmatmul.mubr.f32.gmra.mrb[0].mxu0 %v255
  %v1261 = vpop.f32.mrb[0].mxu0
  %v1262 = vadd.f32 0.0, %v1261
  %v1263 = vpop.f32.mrb[0].mxu0
  %1264 = vdwg.mxu0
  %1265 = vmatprep.subr.mxu0 0.0
  %1266 = vmatpush1.msra.mxu0 %v1163
  %1267 = vmatprep.subr.mxu0 0.0
  %1268 = vmatpush1.msra.mxu0 %v1164
  %1269 = vmatprep.subr.mxu0 0.0
  %1270 = vmatpush1.msra.mxu0 %v1165
  %1271 = vmatprep.subr.mxu0 0.0
  %1272 = vmatpush1.msra.mxu0 %v1166
  %1273 = vmatprep.subr.mxu0 0.0
  %1274 = vmatpush1.msra.mxu0 %v1167
  %1275 = vmatprep.subr.mxu0 0.0
  %1276 = vmatpush1.msra.mxu0 %v1168
  %1277 = vmatprep.subr.mxu0 0.0
  %1278 = vmatpush1.msra.mxu0 %v1169
  %1279 = vmatprep.subr.mxu0 0.0
  %1280 = vmatpush1.msra.mxu0 %v1170
  %1281 = vmatprep.subr.mxu0 0.0
  %1282 = vmatpush1.msra.mxu0 %v1171
  %1283 = vmatprep.subr.mxu0 0.0
  %1284 = vmatpush1.msra.mxu0 %v1172
  %1285 = vmatprep.subr.mxu0 0.0
  %1286 = vmatpush1.msra.mxu0 %v1173
  %1287 = vmatprep.subr.mxu0 0.0
  %1288 = vmatpush1.msra.mxu0 %v1174
  %1289 = vmatprep.subr.mxu0 0.0
  %1290 = vmatpush1.msra.mxu0 %v1175
  %1291 = vmatprep.subr.mxu0 0.0
  %1292 = vmatpush1.msra.mxu0 %v1176
  %1293 = vmatprep.subr.mxu0 0.0
  %1294 = vmatpush1.msra.mxu0 %v1177
  %1295 = vmatprep.subr.mxu0 0.0
  %1296 = vmatpush1.msra.mxu0 %v1178
  %1297 = vmatprep.subr.mxu0 0.0
  %1298 = vmatpush1.msra.mxu0 %v1179
  %1299 = vmatprep.subr.mxu0 0.0
  %1300 = vmatpush1.msra.mxu0 %v1180
  %1301 = vmatprep.subr.mxu0 0.0
  %1302 = vmatpush1.msra.mxu0 %v1181
  %1303 = vmatprep.subr.mxu0 0.0
  %1304 = vmatpush1.msra.mxu0 %v1182
  %1305 = vmatprep.subr.mxu0 0.0
  %1306 = vmatpush1.msra.mxu0 %v1183
  %1307 = vmatprep.subr.mxu0 0.0
  %1308 = vmatpush1.msra.mxu0 %v1184
  %1309 = vmatprep.subr.mxu0 0.0
  %1310 = vmatpush1.msra.mxu0 %v1185
  %1311 = vmatprep.subr.mxu0 0.0
  %1312 = vmatpush1.msra.mxu0 %v1186
  %1313 = vmatprep.subr.mxu0 0.0
  %1314 = vmatpush1.msra.mxu0 %v1187
  %1315 = vmatprep.subr.mxu0 0.0
  %1316 = vmatpush1.msra.mxu0 %v1188
  %1317 = vmatprep.subr.mxu0 0.0
  %1318 = vmatpush1.msra.mxu0 %v1189
  %1319 = vmatprep.subr.mxu0 0.0
  %1320 = vmatpush1.msra.mxu0 %v1190
  %1321 = vmatprep.subr.mxu0 0.0
  %1322 = vmatpush1.msra.mxu0 %v1191
  %1323 = vmatprep.subr.mxu0 0.0
  %1324 = vmatpush1.msra.mxu0 %v1192
  %1325 = vmatprep.subr.mxu0 0.0
  %1326 = vmatpush1.msra.mxu0 %v1193
  %1327 = vmatprep.subr.mxu0 0.0
  %1328 = vmatpush1.msra.mxu0 %v1194
  %1329 = vmatprep.mubr.f32.mxu0 %v258
  %1330 = vmatmul.mubr.f32.gmra.mrb[0].mxu0 %v257
  %v1331 = vpop.f32.mrb[0].mxu0
  %v1332 = vadd.f32 %v1262, %v1331
  %v1333 = vpop.f32.mrb[0].mxu0
  %1334 = vdwg.mxu0
  %v1336 = vsel %vm673, %v1128, 0
  %v1339 = vsel %vm673, %v1129, 0
  %1341 = vmatprep.subr.mxu0 0.0
  %1342 = vmatpush1.msra.mxu0 %v1332
  %1343 = vmatprep.subr.mxu0 0.0
  %1344 = vmatpush1.msra.mxu0 0.0
  %1345 = vmatprep.subr.mxu0 0.0
  %1346 = vmatpush1.msra.mxu0 0.0
  %1347 = vmatprep.subr.mxu0 0.0
  %1348 = vmatpush1.msra.mxu0 0.0
  %1349 = vmatprep.subr.mxu0 0.0
  %1350 = vmatpush1.msra.mxu0 0.0
  %1351 = vmatprep.subr.mxu0 0.0
  %1352 = vmatpush1.msra.mxu0 0.0
  %1353 = vmatprep.subr.mxu0 0.0
  %1354 = vmatpush1.msra.mxu0 0.0
  %1355 = vmatprep.subr.mxu0 0.0
  %1356 = vmatpush1.msra.mxu0 0.0
  %1357 = vmatprep.subr.mxu0 0.0
  %1358 = vmatpush1.msra.mxu0 0.0
  %1359 = vmatprep.subr.mxu0 0.0
  %1360 = vmatpush1.msra.mxu0 0.0
  %1361 = vmatprep.subr.mxu0 0.0
  %1362 = vmatpush1.msra.mxu0 0.0
  %1363 = vmatprep.subr.mxu0 0.0
  %1364 = vmatpush1.msra.mxu0 0.0
  %1365 = vmatprep.subr.mxu0 0.0
  %1366 = vmatpush1.msra.mxu0 0.0
  %1367 = vmatprep.subr.mxu0 0.0
  %1368 = vmatpush1.msra.mxu0 0.0
  %1369 = vmatprep.subr.mxu0 0.0
  %1370 = vmatpush1.msra.mxu0 0.0
  %1371 = vmatprep.subr.mxu0 0.0
  %1372 = vmatpush1.msra.mxu0 0.0
  %1373 = vmatprep.subr.mxu0 0.0
  %1374 = vmatpush1.msra.mxu0 0.0
  %1375 = vmatprep.subr.mxu0 0.0
  %1376 = vmatpush1.msra.mxu0 0.0
  %1377 = vmatprep.subr.mxu0 0.0
  %1378 = vmatpush1.msra.mxu0 0.0
  %1379 = vmatprep.subr.mxu0 0.0
  %1380 = vmatpush1.msra.mxu0 0.0
  %1381 = vmatprep.subr.mxu0 0.0
  %1382 = vmatpush1.msra.mxu0 0.0
  %1383 = vmatprep.subr.mxu0 0.0
  %1384 = vmatpush1.msra.mxu0 0.0
  %1385 = vmatprep.subr.mxu0 0.0
  %1386 = vmatpush1.msra.mxu0 0.0
  %1387 = vmatprep.subr.mxu0 0.0
  %1388 = vmatpush1.msra.mxu0 0.0
  %1389 = vmatprep.subr.mxu0 0.0
  %1390 = vmatpush1.msra.mxu0 0.0
  %1391 = vmatprep.subr.mxu0 0.0
  %1392 = vmatpush1.msra.mxu0 0.0
  %1393 = vmatprep.subr.mxu0 0.0
  %1394 = vmatpush1.msra.mxu0 0.0
  %1395 = vmatprep.subr.mxu0 0.0
  %1396 = vmatpush1.msra.mxu0 0.0
  %1397 = vmatprep.subr.mxu0 0.0
  %1398 = vmatpush1.msra.mxu0 0.0
  %1399 = vmatprep.subr.mxu0 0.0
  %1400 = vmatpush1.msra.mxu0 0.0
  %1401 = vmatprep.subr.mxu0 0.0
  %1402 = vmatpush1.msra.mxu0 0.0
  %1403 = vmatprep.subr.mxu0 0.0
  %1404 = vmatpush1.msra.mxu0 0.0
  %1405 = vmatprep.mubr.f32.mxu0 0.0
  %1406 = vmatmul.mubr.f32.gmra.mrb[0].mxu0 %v1336
  %v1407 = vpop.f32.mrb[0].mxu0
  %v1408 = vadd.f32 0.0, %v1407
  %v1409 = vpop.f32.mrb[0].mxu0
  %1410 = vmatprep.mubr.f32.mxu0 0.0
  %1411 = vmatmul.mubr.f32.gmra.mrb[0].mxu0 %v1339
  %v1412 = vpop.f32.mrb[0].mxu0
  %v1413 = vadd.f32 0.0, %v1412
  %v1414 = vpop.f32.mrb[0].mxu0
  %1415 = vdwg.mxu0
  %v1416 = vadd.f32 %v1125, %v1408
  %v1417 = vadd.f32 %v1126, %v1413
  %s1418 = scalar_lea.vmem %s3, 64
  %v1419 = vld [vmem:[%s1418] sm:$0xff]
  %v1420 = vld [vmem:[%s1418 + $0x8] sm:$0xff]
  %s1421 = scalar_lea.vmem %s2, 2048
  %v1422 = vld [vmem:[%s1421] sm:$0xff]
  %v1423 = vld [vmem:[%s1421 + $0x8] sm:$0xff]
  %v1424 = vld [vmem:[%s1421 + $0x10] sm:$0xff]
  %v1425 = vld [vmem:[%s1421 + $0x18] sm:$0xff]
  %v1426 = vld [vmem:[%s1421 + $0x20] sm:$0xff]
  %v1427 = vld [vmem:[%s1421 + $0x28] sm:$0xff]
  %v1428 = vld [vmem:[%s1421 + $0x30] sm:$0xff]
  %v1429 = vld [vmem:[%s1421 + $0x38] sm:$0xff]
  %v1430 = vld [vmem:[%s1421 + $0x40] sm:$0xff]
  %v1431 = vld [vmem:[%s1421 + $0x48] sm:$0xff]
  %v1432 = vld [vmem:[%s1421 + $0x50] sm:$0xff]
  %v1433 = vld [vmem:[%s1421 + $0x58] sm:$0xff]
  %v1434 = vld [vmem:[%s1421 + $0x60] sm:$0xff]
  %v1435 = vld [vmem:[%s1421 + $0x68] sm:$0xff]
  %v1436 = vld [vmem:[%s1421 + $0x70] sm:$0xff]
  %v1437 = vld [vmem:[%s1421 + $0x78] sm:$0xff]
  %v1438 = vld [vmem:[%s1421 + $0x80] sm:$0xff]
  %v1439 = vld [vmem:[%s1421 + $0x88] sm:$0xff]
  %v1440 = vld [vmem:[%s1421 + $0x90] sm:$0xff]
  %v1441 = vld [vmem:[%s1421 + $0x98] sm:$0xff]
  %v1442 = vld [vmem:[%s1421 + $0xa0] sm:$0xff]
  %v1443 = vld [vmem:[%s1421 + $0xa8] sm:$0xff]
  %v1444 = vld [vmem:[%s1421 + $0xb0] sm:$0xff]
  %v1445 = vld [vmem:[%s1421 + $0xb8] sm:$0xff]
  %v1446 = vld [vmem:[%s1421 + $0xc0] sm:$0xff]
  %v1447 = vld [vmem:[%s1421 + $0xc8] sm:$0xff]
  %v1448 = vld [vmem:[%s1421 + $0xd0] sm:$0xff]
  %v1449 = vld [vmem:[%s1421 + $0xd8] sm:$0xff]
  %v1450 = vld [vmem:[%s1421 + $0xe0] sm:$0xff]
  %v1451 = vld [vmem:[%s1421 + $0xe8] sm:$0xff]
  %v1452 = vld [vmem:[%s1421 + $0xf0] sm:$0xff]
  %v1453 = vld [vmem:[%s1421 + $0xf8] sm:$0xff]
  %v1454 = vld [vmem:[%s1421 + $0x100] sm:$0xff]
  %v1455 = vld [vmem:[%s1421 + $0x108] sm:$0xff]
  %v1456 = vld [vmem:[%s1421 + $0x110] sm:$0xff]
  %v1457 = vld [vmem:[%s1421 + $0x118] sm:$0xff]
  %v1458 = vld [vmem:[%s1421 + $0x120] sm:$0xff]
  %v1459 = vld [vmem:[%s1421 + $0x128] sm:$0xff]
  %v1460 = vld [vmem:[%s1421 + $0x130] sm:$0xff]
  %v1461 = vld [vmem:[%s1421 + $0x138] sm:$0xff]
  %v1462 = vld [vmem:[%s1421 + $0x140] sm:$0xff]
  %v1463 = vld [vmem:[%s1421 + $0x148] sm:$0xff]
  %v1464 = vld [vmem:[%s1421 + $0x150] sm:$0xff]
  %v1465 = vld [vmem:[%s1421 + $0x158] sm:$0xff]
  %v1466 = vld [vmem:[%s1421 + $0x160] sm:$0xff]
  %v1467 = vld [vmem:[%s1421 + $0x168] sm:$0xff]
  %v1468 = vld [vmem:[%s1421 + $0x170] sm:$0xff]
  %v1469 = vld [vmem:[%s1421 + $0x178] sm:$0xff]
  %v1470 = vld [vmem:[%s1421 + $0x180] sm:$0xff]
  %v1471 = vld [vmem:[%s1421 + $0x188] sm:$0xff]
  %v1472 = vld [vmem:[%s1421 + $0x190] sm:$0xff]
  %v1473 = vld [vmem:[%s1421 + $0x198] sm:$0xff]
  %v1474 = vld [vmem:[%s1421 + $0x1a0] sm:$0xff]
  %v1475 = vld [vmem:[%s1421 + $0x1a8] sm:$0xff]
  %v1476 = vld [vmem:[%s1421 + $0x1b0] sm:$0xff]
  %v1477 = vld [vmem:[%s1421 + $0x1b8] sm:$0xff]
  %v1478 = vld [vmem:[%s1421 + $0x1c0] sm:$0xff]
  %v1479 = vld [vmem:[%s1421 + $0x1c8] sm:$0xff]
  %v1480 = vld [vmem:[%s1421 + $0x1d0] sm:$0xff]
  %v1481 = vld [vmem:[%s1421 + $0x1d8] sm:$0xff]
  %v1482 = vld [vmem:[%s1421 + $0x1e0] sm:$0xff]
  %v1483 = vld [vmem:[%s1421 + $0x1e8] sm:$0xff]
  %v1484 = vld [vmem:[%s1421 + $0x1f0] sm:$0xff]
  %v1485 = vld [vmem:[%s1421 + $0x1f8] sm:$0xff]
  %1486 = vmatprep.subr.mxu0 0.0
  %1487 = vmatpush1.msra.mxu0 %v1422
  %1488 = vmatprep.subr.mxu0 0.0
  %1489 = vmatpush1.msra.mxu0 %v1423
  %1490 = vmatprep.subr.mxu0 0.0
  %1491 = vmatpush1.msra.mxu0 %v1424
  %1492 = vmatprep.subr.mxu0 0.0
  %1493 = vmatpush1.msra.mxu0 %v1425
  %1494 = vmatprep.subr.mxu0 0.0
  %1495 = vmatpush1.msra.mxu0 %v1426
  %1496 = vmatprep.subr.mxu0 0.0
  %1497 = vmatpush1.msra.mxu0 %v1427
  %1498 = vmatprep.subr.mxu0 0.0
  %1499 = vmatpush1.msra.mxu0 %v1428
  %1500 = vmatprep.subr.mxu0 0.0
  %1501 = vmatpush1.msra.mxu0 %v1429
  %1502 = vmatprep.subr.mxu0 0.0
  %1503 = vmatpush1.msra.mxu0 %v1430
  %1504 = vmatprep.subr.mxu0 0.0
  %1505 = vmatpush1.msra.mxu0 %v1431
  %1506 = vmatprep.subr.mxu0 0.0
  %1507 = vmatpush1.msra.mxu0 %v1432
  %1508 = vmatprep.subr.mxu0 0.0
  %1509 = vmatpush1.msra.mxu0 %v1433
  %1510 = vmatprep.subr.mxu0 0.0
  %1511 = vmatpush1.msra.mxu0 %v1434
  %1512 = vmatprep.subr.mxu0 0.0
  %1513 = vmatpush1.msra.mxu0 %v1435
  %1514 = vmatprep.subr.mxu0 0.0
  %1515 = vmatpush1.msra.mxu0 %v1436
  %1516 = vmatprep.subr.mxu0 0.0
  %1517 = vmatpush1.msra.mxu0 %v1437
  %1518 = vmatprep.subr.mxu0 0.0
  %1519 = vmatpush1.msra.mxu0 %v1438
  %1520 = vmatprep.subr.mxu0 0.0
  %1521 = vmatpush1.msra.mxu0 %v1439
  %1522 = vmatprep.subr.mxu0 0.0
  %1523 = vmatpush1.msra.mxu0 %v1440
  %1524 = vmatprep.subr.mxu0 0.0
  %1525 = vmatpush1.msra.mxu0 %v1441
  %1526 = vmatprep.subr.mxu0 0.0
  %1527 = vmatpush1.msra.mxu0 %v1442
  %1528 = vmatprep.subr.mxu0 0.0
  %1529 = vmatpush1.msra.mxu0 %v1443
  %1530 = vmatprep.subr.mxu0 0.0
  %1531 = vmatpush1.msra.mxu0 %v1444
  %1532 = vmatprep.subr.mxu0 0.0
  %1533 = vmatpush1.msra.mxu0 %v1445
  %1534 = vmatprep.subr.mxu0 0.0
  %1535 = vmatpush1.msra.mxu0 %v1446
  %1536 = vmatprep.subr.mxu0 0.0
  %1537 = vmatpush1.msra.mxu0 %v1447
  %1538 = vmatprep.subr.mxu0 0.0
  %1539 = vmatpush1.msra.mxu0 %v1448
  %1540 = vmatprep.subr.mxu0 0.0
  %1541 = vmatpush1.msra.mxu0 %v1449
  %1542 = vmatprep.subr.mxu0 0.0
  %1543 = vmatpush1.msra.mxu0 %v1450
  %1544 = vmatprep.subr.mxu0 0.0
  %1545 = vmatpush1.msra.mxu0 %v1451
  %1546 = vmatprep.subr.mxu0 0.0
  %1547 = vmatpush1.msra.mxu0 %v1452
  %1548 = vmatprep.subr.mxu0 0.0
  %1549 = vmatpush1.msra.mxu0 %v1453
  %1550 = vmatprep.mubr.f32.mxu0 %v256
  %1551 = vmatmul.mubr.f32.gmra.mrb[0].mxu0 %v255
  %v1552 = vpop.f32.mrb[0].mxu0
  %v1553 = vadd.f32 0.0, %v1552
  %v1554 = vpop.f32.mrb[0].mxu0
  %1555 = vdwg.mxu0
  %1556 = vmatprep.subr.mxu0 0.0
  %1557 = vmatpush1.msra.mxu0 %v1454
  %1558 = vmatprep.subr.mxu0 0.0
  %1559 = vmatpush1.msra.mxu0 %v1455
  %1560 = vmatprep.subr.mxu0 0.0
  %1561 = vmatpush1.msra.mxu0 %v1456
  %1562 = vmatprep.subr.mxu0 0.0
  %1563 = vmatpush1.msra.mxu0 %v1457
  %1564 = vmatprep.subr.mxu0 0.0
  %1565 = vmatpush1.msra.mxu0 %v1458
  %1566 = vmatprep.subr.mxu0 0.0
  %1567 = vmatpush1.msra.mxu0 %v1459
  %1568 = vmatprep.subr.mxu0 0.0
  %1569 = vmatpush1.msra.mxu0 %v1460
  %1570 = vmatprep.subr.mxu0 0.0
  %1571 = vmatpush1.msra.mxu0 %v1461
  %1572 = vmatprep.subr.mxu0 0.0
  %1573 = vmatpush1.msra.mxu0 %v1462
  %1574 = vmatprep.subr.mxu0 0.0
  %1575 = vmatpush1.msra.mxu0 %v1463
  %1576 = vmatprep.subr.mxu0 0.0
  %1577 = vmatpush1.msra.mxu0 %v1464
  %1578 = vmatprep.subr.mxu0 0.0
  %1579 = vmatpush1.msra.mxu0 %v1465
  %1580 = vmatprep.subr.mxu0 0.0
  %1581 = vmatpush1.msra.mxu0 %v1466
  %1582 = vmatprep.subr.mxu0 0.0
  %1583 = vmatpush1.msra.mxu0 %v1467
  %1584 = vmatprep.subr.mxu0 0.0
  %1585 = vmatpush1.msra.mxu0 %v1468
  %1586 = vmatprep.subr.mxu0 0.0
  %1587 = vmatpush1.msra.mxu0 %v1469
  %1588 = vmatprep.subr.mxu0 0.0
  %1589 = vmatpush1.msra.mxu0 %v1470
  %1590 = vmatprep.subr.mxu0 0.0
  %1591 = vmatpush1.msra.mxu0 %v1471
  %1592 = vmatprep.subr.mxu0 0.0
  %1593 = vmatpush1.msra.mxu0 %v1472
  %1594 = vmatprep.subr.mxu0 0.0
  %1595 = vmatpush1.msra.mxu0 %v1473
  %1596 = vmatprep.subr.mxu0 0.0
  %1597 = vmatpush1.msra.mxu0 %v1474
  %1598 = vmatprep.subr.mxu0 0.0
  %1599 = vmatpush1.msra.mxu0 %v1475
  %1600 = vmatprep.subr.mxu0 0.0
  %1601 = vmatpush1.msra.mxu0 %v1476
  %1602 = vmatprep.subr.mxu0 0.0
  %1603 = vmatpush1.msra.mxu0 %v1477
  %1604 = vmatprep.subr.mxu0 0.0
  %1605 = vmatpush1.msra.mxu0 %v1478
  %1606 = vmatprep.subr.mxu0 0.0
  %1607 = vmatpush1.msra.mxu0 %v1479
  %1608 = vmatprep.subr.mxu0 0.0
  %1609 = vmatpush1.msra.mxu0 %v1480
  %1610 = vmatprep.subr.mxu0 0.0
  %1611 = vmatpush1.msra.mxu0 %v1481
  %1612 = vmatprep.subr.mxu0 0.0
  %1613 = vmatpush1.msra.mxu0 %v1482
  %1614 = vmatprep.subr.mxu0 0.0
  %1615 = vmatpush1.msra.mxu0 %v1483
  %1616 = vmatprep.subr.mxu0 0.0
  %1617 = vmatpush1.msra.mxu0 %v1484
  %1618 = vmatprep.subr.mxu0 0.0
  %1619 = vmatpush1.msra.mxu0 %v1485
  %1620 = vmatprep.mubr.f32.mxu0 %v258
  %1621 = vmatmul.mubr.f32.gmra.mrb[0].mxu0 %v257
  %v1622 = vpop.f32.mrb[0].mxu0
  %v1623 = vadd.f32 %v1553, %v1622
  %v1624 = vpop.f32.mrb[0].mxu0
  %1625 = vdwg.mxu0
  %v1627 = vsel %vm673, %v1419, 0
  %v1630 = vsel %vm673, %v1420, 0
  %1632 = vmatprep.subr.mxu0 0.0
  %1633 = vmatpush1.msra.mxu0 %v1623
  %1634 = vmatprep.subr.mxu0 0.0
  %1635 = vmatpush1.msra.mxu0 0.0
  %1636 = vmatprep.subr.mxu0 0.0
  %1637 = vmatpush1.msra.mxu0 0.0
  %1638 = vmatprep.subr.mxu0 0.0
  %1639 = vmatpush1.msra.mxu0 0.0
  %1640 = vmatprep.subr.mxu0 0.0
  %1641 = vmatpush1.msra.mxu0 0.0
  %1642 = vmatprep.subr.mxu0 0.0
  %1643 = vmatpush1.msra.mxu0 0.0
  %1644 = vmatprep.subr.mxu0 0.0
  %1645 = vmatpush1.msra.mxu0 0.0
  %1646 = vmatprep.subr.mxu0 0.0
  %1647 = vmatpush1.msra.mxu0 0.0
  %1648 = vmatprep.subr.mxu0 0.0
  %1649 = vmatpush1.msra.mxu0 0.0
  %1650 = vmatprep.subr.mxu0 0.0
  %1651 = vmatpush1.msra.mxu0 0.0
  %1652 = vmatprep.subr.mxu0 0.0
  %1653 = vmatpush1.msra.mxu0 0.0
  %1654 = vmatprep.subr.mxu0 0.0
  %1655 = vmatpush1.msra.mxu0 0.0
  %1656 = vmatprep.subr.mxu0 0.0
  %1657 = vmatpush1.msra.mxu0 0.0
  %1658 = vmatprep.subr.mxu0 0.0
  %1659 = vmatpush1.msra.mxu0 0.0
  %1660 = vmatprep.subr.mxu0 0.0
  %1661 = vmatpush1.msra.mxu0 0.0
  %1662 = vmatprep.subr.mxu0 0.0
  %1663 = vmatpush1.msra.mxu0 0.0
  %1664 = vmatprep.subr.mxu0 0.0
  %1665 = vmatpush1.msra.mxu0 0.0
  %1666 = vmatprep.subr.mxu0 0.0
  %1667 = vmatpush1.msra.mxu0 0.0
  %1668 = vmatprep.subr.mxu0 0.0
  %1669 = vmatpush1.msra.mxu0 0.0
  %1670 = vmatprep.subr.mxu0 0.0
  %1671 = vmatpush1.msra.mxu0 0.0
  %1672 = vmatprep.subr.mxu0 0.0
  %1673 = vmatpush1.msra.mxu0 0.0
  %1674 = vmatprep.subr.mxu0 0.0
  %1675 = vmatpush1.msra.mxu0 0.0
  %1676 = vmatprep.subr.mxu0 0.0
  %1677 = vmatpush1.msra.mxu0 0.0
  %1678 = vmatprep.subr.mxu0 0.0
  %1679 = vmatpush1.msra.mxu0 0.0
  %1680 = vmatprep.subr.mxu0 0.0
  %1681 = vmatpush1.msra.mxu0 0.0
  %1682 = vmatprep.subr.mxu0 0.0
  %1683 = vmatpush1.msra.mxu0 0.0
  %1684 = vmatprep.subr.mxu0 0.0
  %1685 = vmatpush1.msra.mxu0 0.0
  %1686 = vmatprep.subr.mxu0 0.0
  %1687 = vmatpush1.msra.mxu0 0.0
  %1688 = vmatprep.subr.mxu0 0.0
  %1689 = vmatpush1.msra.mxu0 0.0
  %1690 = vmatprep.subr.mxu0 0.0
  %1691 = vmatpush1.msra.mxu0 0.0
  %1692 = vmatprep.subr.mxu0 0.0
  %1693 = vmatpush1.msra.mxu0 0.0
  %1694 = vmatprep.subr.mxu0 0.0
  %1695 = vmatpush1.msra.mxu0 0.0
  %1696 = vmatprep.mubr.f32.mxu0 0.0
  %1697 = vmatmul.mubr.f32.gmra.mrb[0].mxu0 %v1627
  %v1698 = vpop.f32.mrb[0].mxu0
  %v1699 = vadd.f32 0.0, %v1698
  %v1700 = vpop.f32.mrb[0].mxu0
  %1701 = vmatprep.mubr.f32.mxu0 0.0
  %1702 = vmatmul.mubr.f32.gmra.mrb[0].mxu0 %v1630
  %v1703 = vpop.f32.mrb[0].mxu0
  %v1704 = vadd.f32 0.0, %v1703
  %v1705 = vpop.f32.mrb[0].mxu0
  %1706 = vdwg.mxu0
  %v1707 = vadd.f32 %v1416, %v1699
  %v1708 = vadd.f32 %v1417, %v1704
  %s1709 = scalar_lea.vmem %s3, 80
  %v1710 = vld [vmem:[%s1709] sm:$0xff]
  %v1711 = vld [vmem:[%s1709 + $0x8] sm:$0xff]
  %s1712 = scalar_lea.vmem %s2, 2560
  %v1713 = vld [vmem:[%s1712] sm:$0xff]
  %v1714 = vld [vmem:[%s1712 + $0x8] sm:$0xff]
  %v1715 = vld [vmem:[%s1712 + $0x10] sm:$0xff]
  %v1716 = vld [vmem:[%s1712 + $0x18] sm:$0xff]
  %v1717 = vld [vmem:[%s1712 + $0x20] sm:$0xff]
  %v1718 = vld [vmem:[%s1712 + $0x28] sm:$0xff]
  %v1719 = vld [vmem:[%s1712 + $0x30] sm:$0xff]
  %v1720 = vld [vmem:[%s1712 + $0x38] sm:$0xff]
  %v1721 = vld [vmem:[%s1712 + $0x40] sm:$0xff]
  %v1722 = vld [vmem:[%s1712 + $0x48] sm:$0xff]
  %v1723 = vld [vmem:[%s1712 + $0x50] sm:$0xff]
  %v1724 = vld [vmem:[%s1712 + $0x58] sm:$0xff]
  %v1725 = vld [vmem:[%s1712 + $0x60] sm:$0xff]
  %v1726 = vld [vmem:[%s1712 + $0x68] sm:$0xff]
  %v1727 = vld [vmem:[%s1712 + $0x70] sm:$0xff]
  %v1728 = vld [vmem:[%s1712 + $0x78] sm:$0xff]
  %v1729 = vld [vmem:[%s1712 + $0x80] sm:$0xff]
  %v1730 = vld [vmem:[%s1712 + $0x88] sm:$0xff]
  %v1731 = vld [vmem:[%s1712 + $0x90] sm:$0xff]
  %v1732 = vld [vmem:[%s1712 + $0x98] sm:$0xff]
  %v1733 = vld [vmem:[%s1712 + $0xa0] sm:$0xff]
  %v1734 = vld [vmem:[%s1712 + $0xa8] sm:$0xff]
  %v1735 = vld [vmem:[%s1712 + $0xb0] sm:$0xff]
  %v1736 = vld [vmem:[%s1712 + $0xb8] sm:$0xff]
  %v1737 = vld [vmem:[%s1712 + $0xc0] sm:$0xff]
  %v1738 = vld [vmem:[%s1712 + $0xc8] sm:$0xff]
  %v1739 = vld [vmem:[%s1712 + $0xd0] sm:$0xff]
  %v1740 = vld [vmem:[%s1712 + $0xd8] sm:$0xff]
  %v1741 = vld [vmem:[%s1712 + $0xe0] sm:$0xff]
  %v1742 = vld [vmem:[%s1712 + $0xe8] sm:$0xff]
  %v1743 = vld [vmem:[%s1712 + $0xf0] sm:$0xff]
  %v1744 = vld [vmem:[%s1712 + $0xf8] sm:$0xff]
  %v1745 = vld [vmem:[%s1712 + $0x100] sm:$0xff]
  %v1746 = vld [vmem:[%s1712 + $0x108] sm:$0xff]
  %v1747 = vld [vmem:[%s1712 + $0x110] sm:$0xff]
  %v1748 = vld [vmem:[%s1712 + $0x118] sm:$0xff]
  %v1749 = vld [vmem:[%s1712 + $0x120] sm:$0xff]
  %v1750 = vld [vmem:[%s1712 + $0x128] sm:$0xff]
  %v1751 = vld [vmem:[%s1712 + $0x130] sm:$0xff]
  %v1752 = vld [vmem:[%s1712 + $0x138] sm:$0xff]
  %v1753 = vld [vmem:[%s1712 + $0x140] sm:$0xff]
  %v1754 = vld [vmem:[%s1712 + $0x148] sm:$0xff]
  %v1755 = vld [vmem:[%s1712 + $0x150] sm:$0xff]
  %v1756 = vld [vmem:[%s1712 + $0x158] sm:$0xff]
  %v1757 = vld [vmem:[%s1712 + $0x160] sm:$0xff]
  %v1758 = vld [vmem:[%s1712 + $0x168] sm:$0xff]
  %v1759 = vld [vmem:[%s1712 + $0x170] sm:$0xff]
  %v1760 = vld [vmem:[%s1712 + $0x178] sm:$0xff]
  %v1761 = vld [vmem:[%s1712 + $0x180] sm:$0xff]
  %v1762 = vld [vmem:[%s1712 + $0x188] sm:$0xff]
  %v1763 = vld [vmem:[%s1712 + $0x190] sm:$0xff]
  %v1764 = vld [vmem:[%s1712 + $0x198] sm:$0xff]
  %v1765 = vld [vmem:[%s1712 + $0x1a0] sm:$0xff]
  %v1766 = vld [vmem:[%s1712 + $0x1a8] sm:$0xff]
  %v1767 = vld [vmem:[%s1712 + $0x1b0] sm:$0xff]
  %v1768 = vld [vmem:[%s1712 + $0x1b8] sm:$0xff]
  %v1769 = vld [vmem:[%s1712 + $0x1c0] sm:$0xff]
  %v1770 = vld [vmem:[%s1712 + $0x1c8] sm:$0xff]
  %v1771 = vld [vmem:[%s1712 + $0x1d0] sm:$0xff]
  %v1772 = vld [vmem:[%s1712 + $0x1d8] sm:$0xff]
  %v1773 = vld [vmem:[%s1712 + $0x1e0] sm:$0xff]
  %v1774 = vld [vmem:[%s1712 + $0x1e8] sm:$0xff]
  %v1775 = vld [vmem:[%s1712 + $0x1f0] sm:$0xff]
  %v1776 = vld [vmem:[%s1712 + $0x1f8] sm:$0xff]
  %1777 = vmatprep.subr.mxu0 0.0
  %1778 = vmatpush1.msra.mxu0 %v1713
  %1779 = vmatprep.subr.mxu0 0.0
  %1780 = vmatpush1.msra.mxu0 %v1714
  %1781 = vmatprep.subr.mxu0 0.0
  %1782 = vmatpush1.msra.mxu0 %v1715
  %1783 = vmatprep.subr.mxu0 0.0
  %1784 = vmatpush1.msra.mxu0 %v1716
  %1785 = vmatprep.subr.mxu0 0.0
  %1786 = vmatpush1.msra.mxu0 %v1717
  %1787 = vmatprep.subr.mxu0 0.0
  %1788 = vmatpush1.msra.mxu0 %v1718
  %1789 = vmatprep.subr.mxu0 0.0
  %1790 = vmatpush1.msra.mxu0 %v1719
  %1791 = vmatprep.subr.mxu0 0.0
  %1792 = vmatpush1.msra.mxu0 %v1720
  %1793 = vmatprep.subr.mxu0 0.0
  %1794 = vmatpush1.msra.mxu0 %v1721
  %1795 = vmatprep.subr.mxu0 0.0
  %1796 = vmatpush1.msra.mxu0 %v1722
  %1797 = vmatprep.subr.mxu0 0.0
  %1798 = vmatpush1.msra.mxu0 %v1723
  %1799 = vmatprep.subr.mxu0 0.0
  %1800 = vmatpush1.msra.mxu0 %v1724
  %1801 = vmatprep.subr.mxu0 0.0
  %1802 = vmatpush1.msra.mxu0 %v1725
  %1803 = vmatprep.subr.mxu0 0.0
  %1804 = vmatpush1.msra.mxu0 %v1726
  %1805 = vmatprep.subr.mxu0 0.0
  %1806 = vmatpush1.msra.mxu0 %v1727
  %1807 = vmatprep.subr.mxu0 0.0
  %1808 = vmatpush1.msra.mxu0 %v1728
  %1809 = vmatprep.subr.mxu0 0.0
  %1810 = vmatpush1.msra.mxu0 %v1729
  %1811 = vmatprep.subr.mxu0 0.0
  %1812 = vmatpush1.msra.mxu0 %v1730
  %1813 = vmatprep.subr.mxu0 0.0
  %1814 = vmatpush1.msra.mxu0 %v1731
  %1815 = vmatprep.subr.mxu0 0.0
  %1816 = vmatpush1.msra.mxu0 %v1732
  %1817 = vmatprep.subr.mxu0 0.0
  %1818 = vmatpush1.msra.mxu0 %v1733
  %1819 = vmatprep.subr.mxu0 0.0
  %1820 = vmatpush1.msra.mxu0 %v1734
  %1821 = vmatprep.subr.mxu0 0.0
  %1822 = vmatpush1.msra.mxu0 %v1735
  %1823 = vmatprep.subr.mxu0 0.0
  %1824 = vmatpush1.msra.mxu0 %v1736
  %1825 = vmatprep.subr.mxu0 0.0
  %1826 = vmatpush1.msra.mxu0 %v1737
  %1827 = vmatprep.subr.mxu0 0.0
  %1828 = vmatpush1.msra.mxu0 %v1738
  %1829 = vmatprep.subr.mxu0 0.0
  %1830 = vmatpush1.msra.mxu0 %v1739
  %1831 = vmatprep.subr.mxu0 0.0
  %1832 = vmatpush1.msra.mxu0 %v1740
  %1833 = vmatprep.subr.mxu0 0.0
  %1834 = vmatpush1.msra.mxu0 %v1741
  %1835 = vmatprep.subr.mxu0 0.0
  %1836 = vmatpush1.msra.mxu0 %v1742
  %1837 = vmatprep.subr.mxu0 0.0
  %1838 = vmatpush1.msra.mxu0 %v1743
  %1839 = vmatprep.subr.mxu0 0.0
  %1840 = vmatpush1.msra.mxu0 %v1744
  %1841 = vmatprep.mubr.f32.mxu0 %v256
  %1842 = vmatmul.mubr.f32.gmra.mrb[0].mxu0 %v255
  %v1843 = vpop.f32.mrb[0].mxu0
  %v1844 = vadd.f32 0.0, %v1843
  %v1845 = vpop.f32.mrb[0].mxu0
  %1846 = vdwg.mxu0
  %1847 = vmatprep.subr.mxu0 0.0
  %1848 = vmatpush1.msra.mxu0 %v1745
  %1849 = vmatprep.subr.mxu0 0.0
  %1850 = vmatpush1.msra.mxu0 %v1746
  %1851 = vmatprep.subr.mxu0 0.0
  %1852 = vmatpush1.msra.mxu0 %v1747
  %1853 = vmatprep.subr.mxu0 0.0
  %1854 = vmatpush1.msra.mxu0 %v1748
  %1855 = vmatprep.subr.mxu0 0.0
  %1856 = vmatpush1.msra.mxu0 %v1749
  %1857 = vmatprep.subr.mxu0 0.0
  %1858 = vmatpush1.msra.mxu0 %v1750
  %1859 = vmatprep.subr.mxu0 0.0
  %1860 = vmatpush1.msra.mxu0 %v1751
  %1861 = vmatprep.subr.mxu0 0.0
  %1862 = vmatpush1.msra.mxu0 %v1752
  %1863 = vmatprep.subr.mxu0 0.0
  %1864 = vmatpush1.msra.mxu0 %v1753
  %1865 = vmatprep.subr.mxu0 0.0
  %1866 = vmatpush1.msra.mxu0 %v1754
  %1867 = vmatprep.subr.mxu0 0.0
  %1868 = vmatpush1.msra.mxu0 %v1755
  %1869 = vmatprep.subr.mxu0 0.0
  %1870 = vmatpush1.msra.mxu0 %v1756
  %1871 = vmatprep.subr.mxu0 0.0
  %1872 = vmatpush1.msra.mxu0 %v1757
  %1873 = vmatprep.subr.mxu0 0.0
  %1874 = vmatpush1.msra.mxu0 %v1758
  %1875 = vmatprep.subr.mxu0 0.0
  %1876 = vmatpush1.msra.mxu0 %v1759
  %1877 = vmatprep.subr.mxu0 0.0
  %1878 = vmatpush1.msra.mxu0 %v1760
  %1879 = vmatprep.subr.mxu0 0.0
  %1880 = vmatpush1.msra.mxu0 %v1761
  %1881 = vmatprep.subr.mxu0 0.0
  %1882 = vmatpush1.msra.mxu0 %v1762
  %1883 = vmatprep.subr.mxu0 0.0
  %1884 = vmatpush1.msra.mxu0 %v1763
  %1885 = vmatprep.subr.mxu0 0.0
  %1886 = vmatpush1.msra.mxu0 %v1764
  %1887 = vmatprep.subr.mxu0 0.0
  %1888 = vmatpush1.msra.mxu0 %v1765
  %1889 = vmatprep.subr.mxu0 0.0
  %1890 = vmatpush1.msra.mxu0 %v1766
  %1891 = vmatprep.subr.mxu0 0.0
  %1892 = vmatpush1.msra.mxu0 %v1767
  %1893 = vmatprep.subr.mxu0 0.0
  %1894 = vmatpush1.msra.mxu0 %v1768
  %1895 = vmatprep.subr.mxu0 0.0
  %1896 = vmatpush1.msra.mxu0 %v1769
  %1897 = vmatprep.subr.mxu0 0.0
  %1898 = vmatpush1.msra.mxu0 %v1770
  %1899 = vmatprep.subr.mxu0 0.0
  %1900 = vmatpush1.msra.mxu0 %v1771
  %1901 = vmatprep.subr.mxu0 0.0
  %1902 = vmatpush1.msra.mxu0 %v1772
  %1903 = vmatprep.subr.mxu0 0.0
  %1904 = vmatpush1.msra.mxu0 %v1773
  %1905 = vmatprep.subr.mxu0 0.0
  %1906 = vmatpush1.msra.mxu0 %v1774
  %1907 = vmatprep.subr.mxu0 0.0
  %1908 = vmatpush1.msra.mxu0 %v1775
  %1909 = vmatprep.subr.mxu0 0.0
  %1910 = vmatpush1.msra.mxu0 %v1776
  %1911 = vmatprep.mubr.f32.mxu0 %v258
  %1912 = vmatmul.mubr.f32.gmra.mrb[0].mxu0 %v257
  %v1913 = vpop.f32.mrb[0].mxu0
  %v1914 = vadd.f32 %v1844, %v1913
  %v1915 = vpop.f32.mrb[0].mxu0
  %1916 = vdwg.mxu0
  %v1918 = vsel %vm673, %v1710, 0
  %v1921 = vsel %vm673, %v1711, 0
  %1923 = vmatprep.subr.mxu0 0.0
  %1924 = vmatpush1.msra.mxu0 %v1914
  %1925 = vmatprep.subr.mxu0 0.0
  %1926 = vmatpush1.msra.mxu0 0.0
  %1927 = vmatprep.subr.mxu0 0.0
  %1928 = vmatpush1.msra.mxu0 0.0
  %1929 = vmatprep.subr.mxu0 0.0
  %1930 = vmatpush1.msra.mxu0 0.0
  %1931 = vmatprep.subr.mxu0 0.0
  %1932 = vmatpush1.msra.mxu0 0.0
  %1933 = vmatprep.subr.mxu0 0.0
  %1934 = vmatpush1.msra.mxu0 0.0
  %1935 = vmatprep.subr.mxu0 0.0
  %1936 = vmatpush1.msra.mxu0 0.0
  %1937 = vmatprep.subr.mxu0 0.0
  %1938 = vmatpush1.msra.mxu0 0.0
  %1939 = vmatprep.subr.mxu0 0.0
  %1940 = vmatpush1.msra.mxu0 0.0
  %1941 = vmatprep.subr.mxu0 0.0
  %1942 = vmatpush1.msra.mxu0 0.0
  %1943 = vmatprep.subr.mxu0 0.0
  %1944 = vmatpush1.msra.mxu0 0.0
  %1945 = vmatprep.subr.mxu0 0.0
  %1946 = vmatpush1.msra.mxu0 0.0
  %1947 = vmatprep.subr.mxu0 0.0
  %1948 = vmatpush1.msra.mxu0 0.0
  %1949 = vmatprep.subr.mxu0 0.0
  %1950 = vmatpush1.msra.mxu0 0.0
  %1951 = vmatprep.subr.mxu0 0.0
  %1952 = vmatpush1.msra.mxu0 0.0
  %1953 = vmatprep.subr.mxu0 0.0
  %1954 = vmatpush1.msra.mxu0 0.0
  %1955 = vmatprep.subr.mxu0 0.0
  %1956 = vmatpush1.msra.mxu0 0.0
  %1957 = vmatprep.subr.mxu0 0.0
  %1958 = vmatpush1.msra.mxu0 0.0
  %1959 = vmatprep.subr.mxu0 0.0
  %1960 = vmatpush1.msra.mxu0 0.0
  %1961 = vmatprep.subr.mxu0 0.0
  %1962 = vmatpush1.msra.mxu0 0.0
  %1963 = vmatprep.subr.mxu0 0.0
  %1964 = vmatpush1.msra.mxu0 0.0
  %1965 = vmatprep.subr.mxu0 0.0
  %1966 = vmatpush1.msra.mxu0 0.0
  %1967 = vmatprep.subr.mxu0 0.0
  %1968 = vmatpush1.msra.mxu0 0.0
  %1969 = vmatprep.subr.mxu0 0.0
  %1970 = vmatpush1.msra.mxu0 0.0
  %1971 = vmatprep.subr.mxu0 0.0
  %1972 = vmatpush1.msra.mxu0 0.0
  %1973 = vmatprep.subr.mxu0 0.0
  %1974 = vmatpush1.msra.mxu0 0.0
  %1975 = vmatprep.subr.mxu0 0.0
  %1976 = vmatpush1.msra.mxu0 0.0
  %1977 = vmatprep.subr.mxu0 0.0
  %1978 = vmatpush1.msra.mxu0 0.0
  %1979 = vmatprep.subr.mxu0 0.0
  %1980 = vmatpush1.msra.mxu0 0.0
  %1981 = vmatprep.subr.mxu0 0.0
  %1982 = vmatpush1.msra.mxu0 0.0
  %1983 = vmatprep.subr.mxu0 0.0
  %1984 = vmatpush1.msra.mxu0 0.0
  %1985 = vmatprep.subr.mxu0 0.0
  %1986 = vmatpush1.msra.mxu0 0.0
  %1987 = vmatprep.mubr.f32.mxu0 0.0
  %1988 = vmatmul.mubr.f32.gmra.mrb[0].mxu0 %v1918
  %v1989 = vpop.f32.mrb[0].mxu0
  %v1990 = vadd.f32 0.0, %v1989
  %v1991 = vpop.f32.mrb[0].mxu0
  %1992 = vmatprep.mubr.f32.mxu0 0.0
  %1993 = vmatmul.mubr.f32.gmra.mrb[0].mxu0 %v1921
  %v1994 = vpop.f32.mrb[0].mxu0
  %v1995 = vadd.f32 0.0, %v1994
  %v1996 = vpop.f32.mrb[0].mxu0
  %1997 = vdwg.mxu0
  %v1998 = vadd.f32 %v1707, %v1990
  %v1999 = vadd.f32 %v1708, %v1995
  %s2000 = scalar_lea.vmem %s3, 96
  %v2001 = vld [vmem:[%s2000] sm:$0xff]
  %v2002 = vld [vmem:[%s2000 + $0x8] sm:$0xff]
  %s2003 = scalar_lea.vmem %s2, 3072
  %v2004 = vld [vmem:[%s2003] sm:$0xff]
  %v2005 = vld [vmem:[%s2003 + $0x8] sm:$0xff]
  %v2006 = vld [vmem:[%s2003 + $0x10] sm:$0xff]
  %v2007 = vld [vmem:[%s2003 + $0x18] sm:$0xff]
  %v2008 = vld [vmem:[%s2003 + $0x20] sm:$0xff]
  %v2009 = vld [vmem:[%s2003 + $0x28] sm:$0xff]
  %v2010 = vld [vmem:[%s2003 + $0x30] sm:$0xff]
  %v2011 = vld [vmem:[%s2003 + $0x38] sm:$0xff]
  %v2012 = vld [vmem:[%s2003 + $0x40] sm:$0xff]
  %v2013 = vld [vmem:[%s2003 + $0x48] sm:$0xff]
  %v2014 = vld [vmem:[%s2003 + $0x50] sm:$0xff]
  %v2015 = vld [vmem:[%s2003 + $0x58] sm:$0xff]
  %v2016 = vld [vmem:[%s2003 + $0x60] sm:$0xff]
  %v2017 = vld [vmem:[%s2003 + $0x68] sm:$0xff]
  %v2018 = vld [vmem:[%s2003 + $0x70] sm:$0xff]
  %v2019 = vld [vmem:[%s2003 + $0x78] sm:$0xff]
  %v2020 = vld [vmem:[%s2003 + $0x80] sm:$0xff]
  %v2021 = vld [vmem:[%s2003 + $0x88] sm:$0xff]
  %v2022 = vld [vmem:[%s2003 + $0x90] sm:$0xff]
  %v2023 = vld [vmem:[%s2003 + $0x98] sm:$0xff]
  %v2024 = vld [vmem:[%s2003 + $0xa0] sm:$0xff]
  %v2025 = vld [vmem:[%s2003 + $0xa8] sm:$0xff]
  %v2026 = vld [vmem:[%s2003 + $0xb0] sm:$0xff]
  %v2027 = vld [vmem:[%s2003 + $0xb8] sm:$0xff]
  %v2028 = vld [vmem:[%s2003 + $0xc0] sm:$0xff]
  %v2029 = vld [vmem:[%s2003 + $0xc8] sm:$0xff]
  %v2030 = vld [vmem:[%s2003 + $0xd0] sm:$0xff]
  %v2031 = vld [vmem:[%s2003 + $0xd8] sm:$0xff]
  %v2032 = vld [vmem:[%s2003 + $0xe0] sm:$0xff]
  %v2033 = vld [vmem:[%s2003 + $0xe8] sm:$0xff]
  %v2034 = vld [vmem:[%s2003 + $0xf0] sm:$0xff]
  %v2035 = vld [vmem:[%s2003 + $0xf8] sm:$0xff]
  %v2036 = vld [vmem:[%s2003 + $0x100] sm:$0xff]
  %v2037 = vld [vmem:[%s2003 + $0x108] sm:$0xff]
  %v2038 = vld [vmem:[%s2003 + $0x110] sm:$0xff]
  %v2039 = vld [vmem:[%s2003 + $0x118] sm:$0xff]
  %v2040 = vld [vmem:[%s2003 + $0x120] sm:$0xff]
  %v2041 = vld [vmem:[%s2003 + $0x128] sm:$0xff]
  %v2042 = vld [vmem:[%s2003 + $0x130] sm:$0xff]
  %v2043 = vld [vmem:[%s2003 + $0x138] sm:$0xff]
  %v2044 = vld [vmem:[%s2003 + $0x140] sm:$0xff]
  %v2045 = vld [vmem:[%s2003 + $0x148] sm:$0xff]
  %v2046 = vld [vmem:[%s2003 + $0x150] sm:$0xff]
  %v2047 = vld [vmem:[%s2003 + $0x158] sm:$0xff]
  %v2048 = vld [vmem:[%s2003 + $0x160] sm:$0xff]
  %v2049 = vld [vmem:[%s2003 + $0x168] sm:$0xff]
  %v2050 = vld [vmem:[%s2003 + $0x170] sm:$0xff]
  %v2051 = vld [vmem:[%s2003 + $0x178] sm:$0xff]
  %v2052 = vld [vmem:[%s2003 + $0x180] sm:$0xff]
  %v2053 = vld [vmem:[%s2003 + $0x188] sm:$0xff]
  %v2054 = vld [vmem:[%s2003 + $0x190] sm:$0xff]
  %v2055 = vld [vmem:[%s2003 + $0x198] sm:$0xff]
  %v2056 = vld [vmem:[%s2003 + $0x1a0] sm:$0xff]
  %v2057 = vld [vmem:[%s2003 + $0x1a8] sm:$0xff]
  %v2058 = vld [vmem:[%s2003 + $0x1b0] sm:$0xff]
  %v2059 = vld [vmem:[%s2003 + $0x1b8] sm:$0xff]
  %v2060 = vld [vmem:[%s2003 + $0x1c0] sm:$0xff]
  %v2061 = vld [vmem:[%s2003 + $0x1c8] sm:$0xff]
  %v2062 = vld [vmem:[%s2003 + $0x1d0] sm:$0xff]
  %v2063 = vld [vmem:[%s2003 + $0x1d8] sm:$0xff]
  %v2064 = vld [vmem:[%s2003 + $0x1e0] sm:$0xff]
  %v2065 = vld [vmem:[%s2003 + $0x1e8] sm:$0xff]
  %v2066 = vld [vmem:[%s2003 + $0x1f0] sm:$0xff]
  %v2067 = vld [vmem:[%s2003 + $0x1f8] sm:$0xff]
  %2068 = vmatprep.subr.mxu0 0.0
  %2069 = vmatpush1.msra.mxu0 %v2004
  %2070 = vmatprep.subr.mxu0 0.0
  %2071 = vmatpush1.msra.mxu0 %v2005
  %2072 = vmatprep.subr.mxu0 0.0
  %2073 = vmatpush1.msra.mxu0 %v2006
  %2074 = vmatprep.subr.mxu0 0.0
  %2075 = vmatpush1.msra.mxu0 %v2007
  %2076 = vmatprep.subr.mxu0 0.0
  %2077 = vmatpush1.msra.mxu0 %v2008
  %2078 = vmatprep.subr.mxu0 0.0
  %2079 = vmatpush1.msra.mxu0 %v2009
  %2080 = vmatprep.subr.mxu0 0.0
  %2081 = vmatpush1.msra.mxu0 %v2010
  %2082 = vmatprep.subr.mxu0 0.0
  %2083 = vmatpush1.msra.mxu0 %v2011
  %2084 = vmatprep.subr.mxu0 0.0
  %2085 = vmatpush1.msra.mxu0 %v2012
  %2086 = vmatprep.subr.mxu0 0.0
  %2087 = vmatpush1.msra.mxu0 %v2013
  %2088 = vmatprep.subr.mxu0 0.0
  %2089 = vmatpush1.msra.mxu0 %v2014
  %2090 = vmatprep.subr.mxu0 0.0
  %2091 = vmatpush1.msra.mxu0 %v2015
  %2092 = vmatprep.subr.mxu0 0.0
  %2093 = vmatpush1.msra.mxu0 %v2016
  %2094 = vmatprep.subr.mxu0 0.0
  %2095 = vmatpush1.msra.mxu0 %v2017
  %2096 = vmatprep.subr.mxu0 0.0
  %2097 = vmatpush1.msra.mxu0 %v2018
  %2098 = vmatprep.subr.mxu0 0.0
  %2099 = vmatpush1.msra.mxu0 %v2019
  %2100 = vmatprep.subr.mxu0 0.0
  %2101 = vmatpush1.msra.mxu0 %v2020
  %2102 = vmatprep.subr.mxu0 0.0
  %2103 = vmatpush1.msra.mxu0 %v2021
  %2104 = vmatprep.subr.mxu0 0.0
  %2105 = vmatpush1.msra.mxu0 %v2022
  %2106 = vmatprep.subr.mxu0 0.0
  %2107 = vmatpush1.msra.mxu0 %v2023
  %2108 = vmatprep.subr.mxu0 0.0
  %2109 = vmatpush1.msra.mxu0 %v2024
  %2110 = vmatprep.subr.mxu0 0.0
  %2111 = vmatpush1.msra.mxu0 %v2025
  %2112 = vmatprep.subr.mxu0 0.0
  %2113 = vmatpush1.msra.mxu0 %v2026
  %2114 = vmatprep.subr.mxu0 0.0
  %2115 = vmatpush1.msra.mxu0 %v2027
  %2116 = vmatprep.subr.mxu0 0.0
  %2117 = vmatpush1.msra.mxu0 %v2028
  %2118 = vmatprep.subr.mxu0 0.0
  %2119 = vmatpush1.msra.mxu0 %v2029
  %2120 = vmatprep.subr.mxu0 0.0
  %2121 = vmatpush1.msra.mxu0 %v2030
  %2122 = vmatprep.subr.mxu0 0.0
  %2123 = vmatpush1.msra.mxu0 %v2031
  %2124 = vmatprep.subr.mxu0 0.0
  %2125 = vmatpush1.msra.mxu0 %v2032
  %2126 = vmatprep.subr.mxu0 0.0
  %2127 = vmatpush1.msra.mxu0 %v2033
  %2128 = vmatprep.subr.mxu0 0.0
  %2129 = vmatpush1.msra.mxu0 %v2034
  %2130 = vmatprep.subr.mxu0 0.0
  %2131 = vmatpush1.msra.mxu0 %v2035
  %2132 = vmatprep.mubr.f32.mxu0 %v256
  %2133 = vmatmul.mubr.f32.gmra.mrb[0].mxu0 %v255
  %v2134 = vpop.f32.mrb[0].mxu0
  %v2135 = vadd.f32 0.0, %v2134
  %v2136 = vpop.f32.mrb[0].mxu0
  %2137 = vdwg.mxu0
  %2138 = vmatprep.subr.mxu0 0.0
  %2139 = vmatpush1.msra.mxu0 %v2036
  %2140 = vmatprep.subr.mxu0 0.0
  %2141 = vmatpush1.msra.mxu0 %v2037
  %2142 = vmatprep.subr.mxu0 0.0
  %2143 = vmatpush1.msra.mxu0 %v2038
  %2144 = vmatprep.subr.mxu0 0.0
  %2145 = vmatpush1.msra.mxu0 %v2039
  %2146 = vmatprep.subr.mxu0 0.0
  %2147 = vmatpush1.msra.mxu0 %v2040
  %2148 = vmatprep.subr.mxu0 0.0
  %2149 = vmatpush1.msra.mxu0 %v2041
  %2150 = vmatprep.subr.mxu0 0.0
  %2151 = vmatpush1.msra.mxu0 %v2042
  %2152 = vmatprep.subr.mxu0 0.0
  %2153 = vmatpush1.msra.mxu0 %v2043
  %2154 = vmatprep.subr.mxu0 0.0
  %2155 = vmatpush1.msra.mxu0 %v2044
  %2156 = vmatprep.subr.mxu0 0.0
  %2157 = vmatpush1.msra.mxu0 %v2045
  %2158 = vmatprep.subr.mxu0 0.0
  %2159 = vmatpush1.msra.mxu0 %v2046
  %2160 = vmatprep.subr.mxu0 0.0
  %2161 = vmatpush1.msra.mxu0 %v2047
  %2162 = vmatprep.subr.mxu0 0.0
  %2163 = vmatpush1.msra.mxu0 %v2048
  %2164 = vmatprep.subr.mxu0 0.0
  %2165 = vmatpush1.msra.mxu0 %v2049
  %2166 = vmatprep.subr.mxu0 0.0
  %2167 = vmatpush1.msra.mxu0 %v2050
  %2168 = vmatprep.subr.mxu0 0.0
  %2169 = vmatpush1.msra.mxu0 %v2051
  %2170 = vmatprep.subr.mxu0 0.0
  %2171 = vmatpush1.msra.mxu0 %v2052
  %2172 = vmatprep.subr.mxu0 0.0
  %2173 = vmatpush1.msra.mxu0 %v2053
  %2174 = vmatprep.subr.mxu0 0.0
  %2175 = vmatpush1.msra.mxu0 %v2054
  %2176 = vmatprep.subr.mxu0 0.0
  %2177 = vmatpush1.msra.mxu0 %v2055
  %2178 = vmatprep.subr.mxu0 0.0
  %2179 = vmatpush1.msra.mxu0 %v2056
  %2180 = vmatprep.subr.mxu0 0.0
  %2181 = vmatpush1.msra.mxu0 %v2057
  %2182 = vmatprep.subr.mxu0 0.0
  %2183 = vmatpush1.msra.mxu0 %v2058
  %2184 = vmatprep.subr.mxu0 0.0
  %2185 = vmatpush1.msra.mxu0 %v2059
  %2186 = vmatprep.subr.mxu0 0.0
  %2187 = vmatpush1.msra.mxu0 %v2060
  %2188 = vmatprep.subr.mxu0 0.0
  %2189 = vmatpush1.msra.mxu0 %v2061
  %2190 = vmatprep.subr.mxu0 0.0
  %2191 = vmatpush1.msra.mxu0 %v2062
  %2192 = vmatprep.subr.mxu0 0.0
  %2193 = vmatpush1.msra.mxu0 %v2063
  %2194 = vmatprep.subr.mxu0 0.0
  %2195 = vmatpush1.msra.mxu0 %v2064
  %2196 = vmatprep.subr.mxu0 0.0
  %2197 = vmatpush1.msra.mxu0 %v2065
  %2198 = vmatprep.subr.mxu0 0.0
  %2199 = vmatpush1.msra.mxu0 %v2066
  %2200 = vmatprep.subr.mxu0 0.0
  %2201 = vmatpush1.msra.mxu0 %v2067
  %2202 = vmatprep.mubr.f32.mxu0 %v258
  %2203 = vmatmul.mubr.f32.gmra.mrb[0].mxu0 %v257
  %v2204 = vpop.f32.mrb[0].mxu0
  %v2205 = vadd.f32 %v2135, %v2204
  %v2206 = vpop.f32.mrb[0].mxu0
  %2207 = vdwg.mxu0
  %v2209 = vsel %vm673, %v2001, 0
  %v2212 = vsel %vm673, %v2002, 0
  %2214 = vmatprep.subr.mxu0 0.0
  %2215 = vmatpush1.msra.mxu0 %v2205
  %2216 = vmatprep.subr.mxu0 0.0
  %2217 = vmatpush1.msra.mxu0 0.0
  %2218 = vmatprep.subr.mxu0 0.0
  %2219 = vmatpush1.msra.mxu0 0.0
  %2220 = vmatprep.subr.mxu0 0.0
  %2221 = vmatpush1.msra.mxu0 0.0
  %2222 = vmatprep.subr.mxu0 0.0
  %2223 = vmatpush1.msra.mxu0 0.0
  %2224 = vmatprep.subr.mxu0 0.0
  %2225 = vmatpush1.msra.mxu0 0.0
  %2226 = vmatprep.subr.mxu0 0.0
  %2227 = vmatpush1.msra.mxu0 0.0
  %2228 = vmatprep.subr.mxu0 0.0
  %2229 = vmatpush1.msra.mxu0 0.0
  %2230 = vmatprep.subr.mxu0 0.0
  %2231 = vmatpush1.msra.mxu0 0.0
  %2232 = vmatprep.subr.mxu0 0.0
  %2233 = vmatpush1.msra.mxu0 0.0
  %2234 = vmatprep.subr.mxu0 0.0
  %2235 = vmatpush1.msra.mxu0 0.0
  %2236 = vmatprep.subr.mxu0 0.0
  %2237 = vmatpush1.msra.mxu0 0.0
  %2238 = vmatprep.subr.mxu0 0.0
  %2239 = vmatpush1.msra.mxu0 0.0
  %2240 = vmatprep.subr.mxu0 0.0
  %2241 = vmatpush1.msra.mxu0 0.0
  %2242 = vmatprep.subr.mxu0 0.0
  %2243 = vmatpush1.msra.mxu0 0.0
  %2244 = vmatprep.subr.mxu0 0.0
  %2245 = vmatpush1.msra.mxu0 0.0
  %2246 = vmatprep.subr.mxu0 0.0
  %2247 = vmatpush1.msra.mxu0 0.0
  %2248 = vmatprep.subr.mxu0 0.0
  %2249 = vmatpush1.msra.mxu0 0.0
  %2250 = vmatprep.subr.mxu0 0.0
  %2251 = vmatpush1.msra.mxu0 0.0
  %2252 = vmatprep.subr.mxu0 0.0
  %2253 = vmatpush1.msra.mxu0 0.0
  %2254 = vmatprep.subr.mxu0 0.0
  %2255 = vmatpush1.msra.mxu0 0.0
  %2256 = vmatprep.subr.mxu0 0.0
  %2257 = vmatpush1.msra.mxu0 0.0
  %2258 = vmatprep.subr.mxu0 0.0
  %2259 = vmatpush1.msra.mxu0 0.0
  %2260 = vmatprep.subr.mxu0 0.0
  %2261 = vmatpush1.msra.mxu0 0.0
  %2262 = vmatprep.subr.mxu0 0.0
  %2263 = vmatpush1.msra.mxu0 0.0
  %2264 = vmatprep.subr.mxu0 0.0
  %2265 = vmatpush1.msra.mxu0 0.0
  %2266 = vmatprep.subr.mxu0 0.0
  %2267 = vmatpush1.msra.mxu0 0.0
  %2268 = vmatprep.subr.mxu0 0.0
  %2269 = vmatpush1.msra.mxu0 0.0
  %2270 = vmatprep.subr.mxu0 0.0
  %2271 = vmatpush1.msra.mxu0 0.0
  %2272 = vmatprep.subr.mxu0 0.0
  %2273 = vmatpush1.msra.mxu0 0.0
  %2274 = vmatprep.subr.mxu0 0.0
  %2275 = vmatpush1.msra.mxu0 0.0
  %2276 = vmatprep.subr.mxu0 0.0
  %2277 = vmatpush1.msra.mxu0 0.0
  %2278 = vmatprep.mubr.f32.mxu0 0.0
  %2279 = vmatmul.mubr.f32.gmra.mrb[0].mxu0 %v2209
  %v2280 = vpop.f32.mrb[0].mxu0
  %v2281 = vadd.f32 0.0, %v2280
  %v2282 = vpop.f32.mrb[0].mxu0
  %2283 = vmatprep.mubr.f32.mxu0 0.0
  %2284 = vmatmul.mubr.f32.gmra.mrb[0].mxu0 %v2212
  %v2285 = vpop.f32.mrb[0].mxu0
  %v2286 = vadd.f32 0.0, %v2285
  %v2287 = vpop.f32.mrb[0].mxu0
  %2288 = vdwg.mxu0
  %v2289 = vadd.f32 %v1998, %v2281
  %v2290 = vadd.f32 %v1999, %v2286
  %s2291 = scalar_lea.vmem %s3, 112
  %v2292 = vld [vmem:[%s2291] sm:$0xff]
  %v2293 = vld [vmem:[%s2291 + $0x8] sm:$0xff]
  %s2294 = scalar_lea.vmem %s2, 3584
  %v2295 = vld [vmem:[%s2294] sm:$0xff]
  %v2296 = vld [vmem:[%s2294 + $0x8] sm:$0xff]
  %v2297 = vld [vmem:[%s2294 + $0x10] sm:$0xff]
  %v2298 = vld [vmem:[%s2294 + $0x18] sm:$0xff]
  %v2299 = vld [vmem:[%s2294 + $0x20] sm:$0xff]
  %v2300 = vld [vmem:[%s2294 + $0x28] sm:$0xff]
  %v2301 = vld [vmem:[%s2294 + $0x30] sm:$0xff]
  %v2302 = vld [vmem:[%s2294 + $0x38] sm:$0xff]
  %v2303 = vld [vmem:[%s2294 + $0x40] sm:$0xff]
  %v2304 = vld [vmem:[%s2294 + $0x48] sm:$0xff]
  %v2305 = vld [vmem:[%s2294 + $0x50] sm:$0xff]
  %v2306 = vld [vmem:[%s2294 + $0x58] sm:$0xff]
  %v2307 = vld [vmem:[%s2294 + $0x60] sm:$0xff]
  %v2308 = vld [vmem:[%s2294 + $0x68] sm:$0xff]
  %v2309 = vld [vmem:[%s2294 + $0x70] sm:$0xff]
  %v2310 = vld [vmem:[%s2294 + $0x78] sm:$0xff]
  %v2311 = vld [vmem:[%s2294 + $0x80] sm:$0xff]
  %v2312 = vld [vmem:[%s2294 + $0x88] sm:$0xff]
  %v2313 = vld [vmem:[%s2294 + $0x90] sm:$0xff]
  %v2314 = vld [vmem:[%s2294 + $0x98] sm:$0xff]
  %v2315 = vld [vmem:[%s2294 + $0xa0] sm:$0xff]
  %v2316 = vld [vmem:[%s2294 + $0xa8] sm:$0xff]
  %v2317 = vld [vmem:[%s2294 + $0xb0] sm:$0xff]
  %v2318 = vld [vmem:[%s2294 + $0xb8] sm:$0xff]
  %v2319 = vld [vmem:[%s2294 + $0xc0] sm:$0xff]
  %v2320 = vld [vmem:[%s2294 + $0xc8] sm:$0xff]
  %v2321 = vld [vmem:[%s2294 + $0xd0] sm:$0xff]
  %v2322 = vld [vmem:[%s2294 + $0xd8] sm:$0xff]
  %v2323 = vld [vmem:[%s2294 + $0xe0] sm:$0xff]
  %v2324 = vld [vmem:[%s2294 + $0xe8] sm:$0xff]
  %v2325 = vld [vmem:[%s2294 + $0xf0] sm:$0xff]
  %v2326 = vld [vmem:[%s2294 + $0xf8] sm:$0xff]
  %v2327 = vld [vmem:[%s2294 + $0x100] sm:$0xff]
  %v2328 = vld [vmem:[%s2294 + $0x108] sm:$0xff]
  %v2329 = vld [vmem:[%s2294 + $0x110] sm:$0xff]
  %v2330 = vld [vmem:[%s2294 + $0x118] sm:$0xff]
  %v2331 = vld [vmem:[%s2294 + $0x120] sm:$0xff]
  %v2332 = vld [vmem:[%s2294 + $0x128] sm:$0xff]
  %v2333 = vld [vmem:[%s2294 + $0x130] sm:$0xff]
  %v2334 = vld [vmem:[%s2294 + $0x138] sm:$0xff]
  %v2335 = vld [vmem:[%s2294 + $0x140] sm:$0xff]
  %v2336 = vld [vmem:[%s2294 + $0x148] sm:$0xff]
  %v2337 = vld [vmem:[%s2294 + $0x150] sm:$0xff]
  %v2338 = vld [vmem:[%s2294 + $0x158] sm:$0xff]
  %v2339 = vld [vmem:[%s2294 + $0x160] sm:$0xff]
  %v2340 = vld [vmem:[%s2294 + $0x168] sm:$0xff]
  %v2341 = vld [vmem:[%s2294 + $0x170] sm:$0xff]
  %v2342 = vld [vmem:[%s2294 + $0x178] sm:$0xff]
  %v2343 = vld [vmem:[%s2294 + $0x180] sm:$0xff]
  %v2344 = vld [vmem:[%s2294 + $0x188] sm:$0xff]
  %v2345 = vld [vmem:[%s2294 + $0x190] sm:$0xff]
  %v2346 = vld [vmem:[%s2294 + $0x198] sm:$0xff]
  %v2347 = vld [vmem:[%s2294 + $0x1a0] sm:$0xff]
  %v2348 = vld [vmem:[%s2294 + $0x1a8] sm:$0xff]
  %v2349 = vld [vmem:[%s2294 + $0x1b0] sm:$0xff]
  %v2350 = vld [vmem:[%s2294 + $0x1b8] sm:$0xff]
  %v2351 = vld [vmem:[%s2294 + $0x1c0] sm:$0xff]
  %v2352 = vld [vmem:[%s2294 + $0x1c8] sm:$0xff]
  %v2353 = vld [vmem:[%s2294 + $0x1d0] sm:$0xff]
  %v2354 = vld [vmem:[%s2294 + $0x1d8] sm:$0xff]
  %v2355 = vld [vmem:[%s2294 + $0x1e0] sm:$0xff]
  %v2356 = vld [vmem:[%s2294 + $0x1e8] sm:$0xff]
  %v2357 = vld [vmem:[%s2294 + $0x1f0] sm:$0xff]
  %v2358 = vld [vmem:[%s2294 + $0x1f8] sm:$0xff]
  %2359 = vmatprep.subr.mxu0 0.0
  %2360 = vmatpush1.msra.mxu0 %v2295
  %2361 = vmatprep.subr.mxu0 0.0
  %2362 = vmatpush1.msra.mxu0 %v2296
  %2363 = vmatprep.subr.mxu0 0.0
  %2364 = vmatpush1.msra.mxu0 %v2297
  %2365 = vmatprep.subr.mxu0 0.0
  %2366 = vmatpush1.msra.mxu0 %v2298
  %2367 = vmatprep.subr.mxu0 0.0
  %2368 = vmatpush1.msra.mxu0 %v2299
  %2369 = vmatprep.subr.mxu0 0.0
  %2370 = vmatpush1.msra.mxu0 %v2300
  %2371 = vmatprep.subr.mxu0 0.0
  %2372 = vmatpush1.msra.mxu0 %v2301
  %2373 = vmatprep.subr.mxu0 0.0
  %2374 = vmatpush1.msra.mxu0 %v2302
  %2375 = vmatprep.subr.mxu0 0.0
  %2376 = vmatpush1.msra.mxu0 %v2303
  %2377 = vmatprep.subr.mxu0 0.0
  %2378 = vmatpush1.msra.mxu0 %v2304
  %2379 = vmatprep.subr.mxu0 0.0
  %2380 = vmatpush1.msra.mxu0 %v2305
  %2381 = vmatprep.subr.mxu0 0.0
  %2382 = vmatpush1.msra.mxu0 %v2306
  %2383 = vmatprep.subr.mxu0 0.0
  %2384 = vmatpush1.msra.mxu0 %v2307
  %2385 = vmatprep.subr.mxu0 0.0
  %2386 = vmatpush1.msra.mxu0 %v2308
  %2387 = vmatprep.subr.mxu0 0.0
  %2388 = vmatpush1.msra.mxu0 %v2309
  %2389 = vmatprep.subr.mxu0 0.0
  %2390 = vmatpush1.msra.mxu0 %v2310
  %2391 = vmatprep.subr.mxu0 0.0
  %2392 = vmatpush1.msra.mxu0 %v2311
  %2393 = vmatprep.subr.mxu0 0.0
  %2394 = vmatpush1.msra.mxu0 %v2312
  %2395 = vmatprep.subr.mxu0 0.0
  %2396 = vmatpush1.msra.mxu0 %v2313
  %2397 = vmatprep.subr.mxu0 0.0
  %2398 = vmatpush1.msra.mxu0 %v2314
  %2399 = vmatprep.subr.mxu0 0.0
  %2400 = vmatpush1.msra.mxu0 %v2315
  %2401 = vmatprep.subr.mxu0 0.0
  %2402 = vmatpush1.msra.mxu0 %v2316
  %2403 = vmatprep.subr.mxu0 0.0
  %2404 = vmatpush1.msra.mxu0 %v2317
  %2405 = vmatprep.subr.mxu0 0.0
  %2406 = vmatpush1.msra.mxu0 %v2318
  %2407 = vmatprep.subr.mxu0 0.0
  %2408 = vmatpush1.msra.mxu0 %v2319
  %2409 = vmatprep.subr.mxu0 0.0
  %2410 = vmatpush1.msra.mxu0 %v2320
  %2411 = vmatprep.subr.mxu0 0.0
  %2412 = vmatpush1.msra.mxu0 %v2321
  %2413 = vmatprep.subr.mxu0 0.0
  %2414 = vmatpush1.msra.mxu0 %v2322
  %2415 = vmatprep.subr.mxu0 0.0
  %2416 = vmatpush1.msra.mxu0 %v2323
  %2417 = vmatprep.subr.mxu0 0.0
  %2418 = vmatpush1.msra.mxu0 %v2324
  %2419 = vmatprep.subr.mxu0 0.0
  %2420 = vmatpush1.msra.mxu0 %v2325
  %2421 = vmatprep.subr.mxu0 0.0
  %2422 = vmatpush1.msra.mxu0 %v2326
  %2423 = vmatprep.mubr.f32.mxu0 %v256
  %2424 = vmatmul.mubr.f32.gmra.mrb[0].mxu0 %v255
  %v2425 = vpop.f32.mrb[0].mxu0
  %v2426 = vadd.f32 0.0, %v2425
  %v2427 = vpop.f32.mrb[0].mxu0
  %2428 = vdwg.mxu0
  %2429 = vmatprep.subr.mxu0 0.0
  %2430 = vmatpush1.msra.mxu0 %v2327
  %2431 = vmatprep.subr.mxu0 0.0
  %2432 = vmatpush1.msra.mxu0 %v2328
  %2433 = vmatprep.subr.mxu0 0.0
  %2434 = vmatpush1.msra.mxu0 %v2329
  %2435 = vmatprep.subr.mxu0 0.0
  %2436 = vmatpush1.msra.mxu0 %v2330
  %2437 = vmatprep.subr.mxu0 0.0
  %2438 = vmatpush1.msra.mxu0 %v2331
  %2439 = vmatprep.subr.mxu0 0.0
  %2440 = vmatpush1.msra.mxu0 %v2332
  %2441 = vmatprep.subr.mxu0 0.0
  %2442 = vmatpush1.msra.mxu0 %v2333
  %2443 = vmatprep.subr.mxu0 0.0
  %2444 = vmatpush1.msra.mxu0 %v2334
  %2445 = vmatprep.subr.mxu0 0.0
  %2446 = vmatpush1.msra.mxu0 %v2335
  %2447 = vmatprep.subr.mxu0 0.0
  %2448 = vmatpush1.msra.mxu0 %v2336
  %2449 = vmatprep.subr.mxu0 0.0
  %2450 = vmatpush1.msra.mxu0 %v2337
  %2451 = vmatprep.subr.mxu0 0.0
  %2452 = vmatpush1.msra.mxu0 %v2338
  %2453 = vmatprep.subr.mxu0 0.0
  %2454 = vmatpush1.msra.mxu0 %v2339
  %2455 = vmatprep.subr.mxu0 0.0
  %2456 = vmatpush1.msra.mxu0 %v2340
  %2457 = vmatprep.subr.mxu0 0.0
  %2458 = vmatpush1.msra.mxu0 %v2341
  %2459 = vmatprep.subr.mxu0 0.0
  %2460 = vmatpush1.msra.mxu0 %v2342
  %2461 = vmatprep.subr.mxu0 0.0
  %2462 = vmatpush1.msra.mxu0 %v2343
  %2463 = vmatprep.subr.mxu0 0.0
  %2464 = vmatpush1.msra.mxu0 %v2344
  %2465 = vmatprep.subr.mxu0 0.0
  %2466 = vmatpush1.msra.mxu0 %v2345
  %2467 = vmatprep.subr.mxu0 0.0
  %2468 = vmatpush1.msra.mxu0 %v2346
  %2469 = vmatprep.subr.mxu0 0.0
  %2470 = vmatpush1.msra.mxu0 %v2347
  %2471 = vmatprep.subr.mxu0 0.0
  %2472 = vmatpush1.msra.mxu0 %v2348
  %2473 = vmatprep.subr.mxu0 0.0
  %2474 = vmatpush1.msra.mxu0 %v2349
  %2475 = vmatprep.subr.mxu0 0.0
  %2476 = vmatpush1.msra.mxu0 %v2350
  %2477 = vmatprep.subr.mxu0 0.0
  %2478 = vmatpush1.msra.mxu0 %v2351
  %2479 = vmatprep.subr.mxu0 0.0
  %2480 = vmatpush1.msra.mxu0 %v2352
  %2481 = vmatprep.subr.mxu0 0.0
  %2482 = vmatpush1.msra.mxu0 %v2353
  %2483 = vmatprep.subr.mxu0 0.0
  %2484 = vmatpush1.msra.mxu0 %v2354
  %2485 = vmatprep.subr.mxu0 0.0
  %2486 = vmatpush1.msra.mxu0 %v2355
  %2487 = vmatprep.subr.mxu0 0.0
  %2488 = vmatpush1.msra.mxu0 %v2356
  %2489 = vmatprep.subr.mxu0 0.0
  %2490 = vmatpush1.msra.mxu0 %v2357
  %2491 = vmatprep.subr.mxu0 0.0
  %2492 = vmatpush1.msra.mxu0 %v2358
  %2493 = vmatprep.mubr.f32.mxu0 %v258
  %2494 = vmatmul.mubr.f32.gmra.mrb[0].mxu0 %v257
  %v2495 = vpop.f32.mrb[0].mxu0
  %v2496 = vadd.f32 %v2426, %v2495
  %v2497 = vpop.f32.mrb[0].mxu0
  %2498 = vdwg.mxu0
  %v2500 = vsel %vm673, %v2292, 0
  %v2503 = vsel %vm673, %v2293, 0
  %2505 = vmatprep.subr.mxu0 0.0
  %2506 = vmatpush1.msra.mxu0 %v2496
  %2507 = vmatprep.subr.mxu0 0.0
  %2508 = vmatpush1.msra.mxu0 0.0
  %2509 = vmatprep.subr.mxu0 0.0
  %2510 = vmatpush1.msra.mxu0 0.0
  %2511 = vmatprep.subr.mxu0 0.0
  %2512 = vmatpush1.msra.mxu0 0.0
  %2513 = vmatprep.subr.mxu0 0.0
  %2514 = vmatpush1.msra.mxu0 0.0
  %2515 = vmatprep.subr.mxu0 0.0
  %2516 = vmatpush1.msra.mxu0 0.0
  %2517 = vmatprep.subr.mxu0 0.0
  %2518 = vmatpush1.msra.mxu0 0.0
  %2519 = vmatprep.subr.mxu0 0.0
  %2520 = vmatpush1.msra.mxu0 0.0
  %2521 = vmatprep.subr.mxu0 0.0
  %2522 = vmatpush1.msra.mxu0 0.0
  %2523 = vmatprep.subr.mxu0 0.0
  %2524 = vmatpush1.msra.mxu0 0.0
  %2525 = vmatprep.subr.mxu0 0.0
  %2526 = vmatpush1.msra.mxu0 0.0
  %2527 = vmatprep.subr.mxu0 0.0
  %2528 = vmatpush1.msra.mxu0 0.0
  %2529 = vmatprep.subr.mxu0 0.0
  %2530 = vmatpush1.msra.mxu0 0.0
  %2531 = vmatprep.subr.mxu0 0.0
  %2532 = vmatpush1.msra.mxu0 0.0
  %2533 = vmatprep.subr.mxu0 0.0
  %2534 = vmatpush1.msra.mxu0 0.0
  %2535 = vmatprep.subr.mxu0 0.0
  %2536 = vmatpush1.msra.mxu0 0.0
  %2537 = vmatprep.subr.mxu0 0.0
  %2538 = vmatpush1.msra.mxu0 0.0
  %2539 = vmatprep.subr.mxu0 0.0
  %2540 = vmatpush1.msra.mxu0 0.0
  %2541 = vmatprep.subr.mxu0 0.0
  %2542 = vmatpush1.msra.mxu0 0.0
  %2543 = vmatprep.subr.mxu0 0.0
  %2544 = vmatpush1.msra.mxu0 0.0
  %2545 = vmatprep.subr.mxu0 0.0
  %2546 = vmatpush1.msra.mxu0 0.0
  %2547 = vmatprep.subr.mxu0 0.0
  %2548 = vmatpush1.msra.mxu0 0.0
  %2549 = vmatprep.subr.mxu0 0.0
  %2550 = vmatpush1.msra.mxu0 0.0
  %2551 = vmatprep.subr.mxu0 0.0
  %2552 = vmatpush1.msra.mxu0 0.0
  %2553 = vmatprep.subr.mxu0 0.0
  %2554 = vmatpush1.msra.mxu0 0.0
  %2555 = vmatprep.subr.mxu0 0.0
  %2556 = vmatpush1.msra.mxu0 0.0
  %2557 = vmatprep.subr.mxu0 0.0
  %2558 = vmatpush1.msra.mxu0 0.0
  %2559 = vmatprep.subr.mxu0 0.0
  %2560 = vmatpush1.msra.mxu0 0.0
  %2561 = vmatprep.subr.mxu0 0.0
  %2562 = vmatpush1.msra.mxu0 0.0
  %2563 = vmatprep.subr.mxu0 0.0
  %2564 = vmatpush1.msra.mxu0 0.0
  %2565 = vmatprep.subr.mxu0 0.0
  %2566 = vmatpush1.msra.mxu0 0.0
  %2567 = vmatprep.subr.mxu0 0.0
  %2568 = vmatpush1.msra.mxu0 0.0
  %2569 = vmatprep.mubr.f32.mxu0 0.0
  %2570 = vmatmul.mubr.f32.gmra.mrb[0].mxu0 %v2500
  %v2571 = vpop.f32.mrb[0].mxu0
  %v2572 = vadd.f32 0.0, %v2571
  %v2573 = vpop.f32.mrb[0].mxu0
  %2574 = vmatprep.mubr.f32.mxu0 0.0
  %2575 = vmatmul.mubr.f32.gmra.mrb[0].mxu0 %v2503
  %v2576 = vpop.f32.mrb[0].mxu0
  %v2577 = vadd.f32 0.0, %v2576
  %v2578 = vpop.f32.mrb[0].mxu0
  %2579 = vdwg.mxu0
  %v2580 = vadd.f32 %v2289, %v2572
  %v2581 = vadd.f32 %v2290, %v2577
  %s2582 = scalar_lea.vmem %s3, 128
  %v2583 = vld [vmem:[%s2582] sm:$0xff]
  %v2584 = vld [vmem:[%s2582 + $0x8] sm:$0xff]
  %s2585 = scalar_lea.vmem %s2, 4096
  %v2586 = vld [vmem:[%s2585] sm:$0xff]
  %v2587 = vld [vmem:[%s2585 + $0x8] sm:$0xff]
  %v2588 = vld [vmem:[%s2585 + $0x10] sm:$0xff]
  %v2589 = vld [vmem:[%s2585 + $0x18] sm:$0xff]
  %v2590 = vld [vmem:[%s2585 + $0x20] sm:$0xff]
  %v2591 = vld [vmem:[%s2585 + $0x28] sm:$0xff]
  %v2592 = vld [vmem:[%s2585 + $0x30] sm:$0xff]
  %v2593 = vld [vmem:[%s2585 + $0x38] sm:$0xff]
  %v2594 = vld [vmem:[%s2585 + $0x40] sm:$0xff]
  %v2595 = vld [vmem:[%s2585 + $0x48] sm:$0xff]
  %v2596 = vld [vmem:[%s2585 + $0x50] sm:$0xff]
  %v2597 = vld [vmem:[%s2585 + $0x58] sm:$0xff]
  %v2598 = vld [vmem:[%s2585 + $0x60] sm:$0xff]
  %v2599 = vld [vmem:[%s2585 + $0x68] sm:$0xff]
  %v2600 = vld [vmem:[%s2585 + $0x70] sm:$0xff]
  %v2601 = vld [vmem:[%s2585 + $0x78] sm:$0xff]
  %v2602 = vld [vmem:[%s2585 + $0x80] sm:$0xff]
  %v2603 = vld [vmem:[%s2585 + $0x88] sm:$0xff]
  %v2604 = vld [vmem:[%s2585 + $0x90] sm:$0xff]
  %v2605 = vld [vmem:[%s2585 + $0x98] sm:$0xff]
  %v2606 = vld [vmem:[%s2585 + $0xa0] sm:$0xff]
  %v2607 = vld [vmem:[%s2585 + $0xa8] sm:$0xff]
  %v2608 = vld [vmem:[%s2585 + $0xb0] sm:$0xff]
  %v2609 = vld [vmem:[%s2585 + $0xb8] sm:$0xff]
  %v2610 = vld [vmem:[%s2585 + $0xc0] sm:$0xff]
  %v2611 = vld [vmem:[%s2585 + $0xc8] sm:$0xff]
  %v2612 = vld [vmem:[%s2585 + $0xd0] sm:$0xff]
  %v2613 = vld [vmem:[%s2585 + $0xd8] sm:$0xff]
  %v2614 = vld [vmem:[%s2585 + $0xe0] sm:$0xff]
  %v2615 = vld [vmem:[%s2585 + $0xe8] sm:$0xff]
  %v2616 = vld [vmem:[%s2585 + $0xf0] sm:$0xff]
  %v2617 = vld [vmem:[%s2585 + $0xf8] sm:$0xff]
  %v2618 = vld [vmem:[%s2585 + $0x100] sm:$0xff]
  %v2619 = vld [vmem:[%s2585 + $0x108] sm:$0xff]
  %v2620 = vld [vmem:[%s2585 + $0x110] sm:$0xff]
  %v2621 = vld [vmem:[%s2585 + $0x118] sm:$0xff]
  %v2622 = vld [vmem:[%s2585 + $0x120] sm:$0xff]
  %v2623 = vld [vmem:[%s2585 + $0x128] sm:$0xff]
  %v2624 = vld [vmem:[%s2585 + $0x130] sm:$0xff]
  %v2625 = vld [vmem:[%s2585 + $0x138] sm:$0xff]
  %v2626 = vld [vmem:[%s2585 + $0x140] sm:$0xff]
  %v2627 = vld [vmem:[%s2585 + $0x148] sm:$0xff]
  %v2628 = vld [vmem:[%s2585 + $0x150] sm:$0xff]
  %v2629 = vld [vmem:[%s2585 + $0x158] sm:$0xff]
  %v2630 = vld [vmem:[%s2585 + $0x160] sm:$0xff]
  %v2631 = vld [vmem:[%s2585 + $0x168] sm:$0xff]
  %v2632 = vld [vmem:[%s2585 + $0x170] sm:$0xff]
  %v2633 = vld [vmem:[%s2585 + $0x178] sm:$0xff]
  %v2634 = vld [vmem:[%s2585 + $0x180] sm:$0xff]
  %v2635 = vld [vmem:[%s2585 + $0x188] sm:$0xff]
  %v2636 = vld [vmem:[%s2585 + $0x190] sm:$0xff]
  %v2637 = vld [vmem:[%s2585 + $0x198] sm:$0xff]
  %v2638 = vld [vmem:[%s2585 + $0x1a0] sm:$0xff]
  %v2639 = vld [vmem:[%s2585 + $0x1a8] sm:$0xff]
  %v2640 = vld [vmem:[%s2585 + $0x1b0] sm:$0xff]
  %v2641 = vld [vmem:[%s2585 + $0x1b8] sm:$0xff]
  %v2642 = vld [vmem:[%s2585 + $0x1c0] sm:$0xff]
  %v2643 = vld [vmem:[%s2585 + $0x1c8] sm:$0xff]
  %v2644 = vld [vmem:[%s2585 + $0x1d0] sm:$0xff]
  %v2645 = vld [vmem:[%s2585 + $0x1d8] sm:$0xff]
  %v2646 = vld [vmem:[%s2585 + $0x1e0] sm:$0xff]
  %v2647 = vld [vmem:[%s2585 + $0x1e8] sm:$0xff]
  %v2648 = vld [vmem:[%s2585 + $0x1f0] sm:$0xff]
  %v2649 = vld [vmem:[%s2585 + $0x1f8] sm:$0xff]
  %2650 = vmatprep.subr.mxu0 0.0
  %2651 = vmatpush1.msra.mxu0 %v2586
  %2652 = vmatprep.subr.mxu0 0.0
  %2653 = vmatpush1.msra.mxu0 %v2587
  %2654 = vmatprep.subr.mxu0 0.0
  %2655 = vmatpush1.msra.mxu0 %v2588
  %2656 = vmatprep.subr.mxu0 0.0
  %2657 = vmatpush1.msra.mxu0 %v2589
  %2658 = vmatprep.subr.mxu0 0.0
  %2659 = vmatpush1.msra.mxu0 %v2590
  %2660 = vmatprep.subr.mxu0 0.0
  %2661 = vmatpush1.msra.mxu0 %v2591
  %2662 = vmatprep.subr.mxu0 0.0
  %2663 = vmatpush1.msra.mxu0 %v2592
  %2664 = vmatprep.subr.mxu0 0.0
  %2665 = vmatpush1.msra.mxu0 %v2593
  %2666 = vmatprep.subr.mxu0 0.0
  %2667 = vmatpush1.msra.mxu0 %v2594
  %2668 = vmatprep.subr.mxu0 0.0
  %2669 = vmatpush1.msra.mxu0 %v2595
  %2670 = vmatprep.subr.mxu0 0.0
  %2671 = vmatpush1.msra.mxu0 %v2596
  %2672 = vmatprep.subr.mxu0 0.0
  %2673 = vmatpush1.msra.mxu0 %v2597
  %2674 = vmatprep.subr.mxu0 0.0
  %2675 = vmatpush1.msra.mxu0 %v2598
  %2676 = vmatprep.subr.mxu0 0.0
  %2677 = vmatpush1.msra.mxu0 %v2599
  %2678 = vmatprep.subr.mxu0 0.0
  %2679 = vmatpush1.msra.mxu0 %v2600
  %2680 = vmatprep.subr.mxu0 0.0
  %2681 = vmatpush1.msra.mxu0 %v2601
  %2682 = vmatprep.subr.mxu0 0.0
  %2683 = vmatpush1.msra.mxu0 %v2602
  %2684 = vmatprep.subr.mxu0 0.0
  %2685 = vmatpush1.msra.mxu0 %v2603
  %2686 = vmatprep.subr.mxu0 0.0
  %2687 = vmatpush1.msra.mxu0 %v2604
  %2688 = vmatprep.subr.mxu0 0.0
  %2689 = vmatpush1.msra.mxu0 %v2605
  %2690 = vmatprep.subr.mxu0 0.0
  %2691 = vmatpush1.msra.mxu0 %v2606
  %2692 = vmatprep.subr.mxu0 0.0
  %2693 = vmatpush1.msra.mxu0 %v2607
  %2694 = vmatprep.subr.mxu0 0.0
  %2695 = vmatpush1.msra.mxu0 %v2608
  %2696 = vmatprep.subr.mxu0 0.0
  %2697 = vmatpush1.msra.mxu0 %v2609
  %2698 = vmatprep.subr.mxu0 0.0
  %2699 = vmatpush1.msra.mxu0 %v2610
  %2700 = vmatprep.subr.mxu0 0.0
  %2701 = vmatpush1.msra.mxu0 %v2611
  %2702 = vmatprep.subr.mxu0 0.0
  %2703 = vmatpush1.msra.mxu0 %v2612
  %2704 = vmatprep.subr.mxu0 0.0
  %2705 = vmatpush1.msra.mxu0 %v2613
  %2706 = vmatprep.subr.mxu0 0.0
  %2707 = vmatpush1.msra.mxu0 %v2614
  %2708 = vmatprep.subr.mxu0 0.0
  %2709 = vmatpush1.msra.mxu0 %v2615
  %2710 = vmatprep.subr.mxu0 0.0
  %2711 = vmatpush1.msra.mxu0 %v2616
  %2712 = vmatprep.subr.mxu0 0.0
  %2713 = vmatpush1.msra.mxu0 %v2617
  %2714 = vmatprep.mubr.f32.mxu0 %v256
  %2715 = vmatmul.mubr.f32.gmra.mrb[0].mxu0 %v255
  %v2716 = vpop.f32.mrb[0].mxu0
  %v2717 = vadd.f32 0.0, %v2716
  %v2718 = vpop.f32.mrb[0].mxu0
  %2719 = vdwg.mxu0
  %2720 = vmatprep.subr.mxu0 0.0
  %2721 = vmatpush1.msra.mxu0 %v2618
  %2722 = vmatprep.subr.mxu0 0.0
  %2723 = vmatpush1.msra.mxu0 %v2619
  %2724 = vmatprep.subr.mxu0 0.0
  %2725 = vmatpush1.msra.mxu0 %v2620
  %2726 = vmatprep.subr.mxu0 0.0
  %2727 = vmatpush1.msra.mxu0 %v2621
  %2728 = vmatprep.subr.mxu0 0.0
  %2729 = vmatpush1.msra.mxu0 %v2622
  %2730 = vmatprep.subr.mxu0 0.0
  %2731 = vmatpush1.msra.mxu0 %v2623
  %2732 = vmatprep.subr.mxu0 0.0
  %2733 = vmatpush1.msra.mxu0 %v2624
  %2734 = vmatprep.subr.mxu0 0.0
  %2735 = vmatpush1.msra.mxu0 %v2625
  %2736 = vmatprep.subr.mxu0 0.0
  %2737 = vmatpush1.msra.mxu0 %v2626
  %2738 = vmatprep.subr.mxu0 0.0
  %2739 = vmatpush1.msra.mxu0 %v2627
  %2740 = vmatprep.subr.mxu0 0.0
  %2741 = vmatpush1.msra.mxu0 %v2628
  %2742 = vmatprep.subr.mxu0 0.0
  %2743 = vmatpush1.msra.mxu0 %v2629
  %2744 = vmatprep.subr.mxu0 0.0
  %2745 = vmatpush1.msra.mxu0 %v2630
  %2746 = vmatprep.subr.mxu0 0.0
  %2747 = vmatpush1.msra.mxu0 %v2631
  %2748 = vmatprep.subr.mxu0 0.0
  %2749 = vmatpush1.msra.mxu0 %v2632
  %2750 = vmatprep.subr.mxu0 0.0
  %2751 = vmatpush1.msra.mxu0 %v2633
  %2752 = vmatprep.subr.mxu0 0.0
  %2753 = vmatpush1.msra.mxu0 %v2634
  %2754 = vmatprep.subr.mxu0 0.0
  %2755 = vmatpush1.msra.mxu0 %v2635
  %2756 = vmatprep.subr.mxu0 0.0
  %2757 = vmatpush1.msra.mxu0 %v2636
  %2758 = vmatprep.subr.mxu0 0.0
  %2759 = vmatpush1.msra.mxu0 %v2637
  %2760 = vmatprep.subr.mxu0 0.0
  %2761 = vmatpush1.msra.mxu0 %v2638
  %2762 = vmatprep.subr.mxu0 0.0
  %2763 = vmatpush1.msra.mxu0 %v2639
  %2764 = vmatprep.subr.mxu0 0.0
  %2765 = vmatpush1.msra.mxu0 %v2640
  %2766 = vmatprep.subr.mxu0 0.0
  %2767 = vmatpush1.msra.mxu0 %v2641
  %2768 = vmatprep.subr.mxu0 0.0
  %2769 = vmatpush1.msra.mxu0 %v2642
  %2770 = vmatprep.subr.mxu0 0.0
  %2771 = vmatpush1.msra.mxu0 %v2643
  %2772 = vmatprep.subr.mxu0 0.0
  %2773 = vmatpush1.msra.mxu0 %v2644
  %2774 = vmatprep.subr.mxu0 0.0
  %2775 = vmatpush1.msra.mxu0 %v2645
  %2776 = vmatprep.subr.mxu0 0.0
  %2777 = vmatpush1.msra.mxu0 %v2646
  %2778 = vmatprep.subr.mxu0 0.0
  %2779 = vmatpush1.msra.mxu0 %v2647
  %2780 = vmatprep.subr.mxu0 0.0
  %2781 = vmatpush1.msra.mxu0 %v2648
  %2782 = vmatprep.subr.mxu0 0.0
  %2783 = vmatpush1.msra.mxu0 %v2649
  %2784 = vmatprep.mubr.f32.mxu0 %v258
  %2785 = vmatmul.mubr.f32.gmra.mrb[0].mxu0 %v257
  %v2786 = vpop.f32.mrb[0].mxu0
  %v2787 = vadd.f32 %v2717, %v2786
  %v2788 = vpop.f32.mrb[0].mxu0
  %2789 = vdwg.mxu0
  %v2791 = vsel %vm673, %v2583, 0
  %v2794 = vsel %vm673, %v2584, 0
  %2796 = vmatprep.subr.mxu0 0.0
  %2797 = vmatpush1.msra.mxu0 %v2787
  %2798 = vmatprep.subr.mxu0 0.0
  %2799 = vmatpush1.msra.mxu0 0.0
  %2800 = vmatprep.subr.mxu0 0.0
  %2801 = vmatpush1.msra.mxu0 0.0
  %2802 = vmatprep.subr.mxu0 0.0
  %2803 = vmatpush1.msra.mxu0 0.0
  %2804 = vmatprep.subr.mxu0 0.0
  %2805 = vmatpush1.msra.mxu0 0.0
  %2806 = vmatprep.subr.mxu0 0.0
  %2807 = vmatpush1.msra.mxu0 0.0
  %2808 = vmatprep.subr.mxu0 0.0
  %2809 = vmatpush1.msra.mxu0 0.0
  %2810 = vmatprep.subr.mxu0 0.0
  %2811 = vmatpush1.msra.mxu0 0.0
  %2812 = vmatprep.subr.mxu0 0.0
  %2813 = vmatpush1.msra.mxu0 0.0
  %2814 = vmatprep.subr.mxu0 0.0
  %2815 = vmatpush1.msra.mxu0 0.0
  %2816 = vmatprep.subr.mxu0 0.0
  %2817 = vmatpush1.msra.mxu0 0.0
  %2818 = vmatprep.subr.mxu0 0.0
  %2819 = vmatpush1.msra.mxu0 0.0
  %2820 = vmatprep.subr.mxu0 0.0
  %2821 = vmatpush1.msra.mxu0 0.0
  %2822 = vmatprep.subr.mxu0 0.0
  %2823 = vmatpush1.msra.mxu0 0.0
  %2824 = vmatprep.subr.mxu0 0.0
  %2825 = vmatpush1.msra.mxu0 0.0
  %2826 = vmatprep.subr.mxu0 0.0
  %2827 = vmatpush1.msra.mxu0 0.0
  %2828 = vmatprep.subr.mxu0 0.0
  %2829 = vmatpush1.msra.mxu0 0.0
  %2830 = vmatprep.subr.mxu0 0.0
  %2831 = vmatpush1.msra.mxu0 0.0
  %2832 = vmatprep.subr.mxu0 0.0
  %2833 = vmatpush1.msra.mxu0 0.0
  %2834 = vmatprep.subr.mxu0 0.0
  %2835 = vmatpush1.msra.mxu0 0.0
  %2836 = vmatprep.subr.mxu0 0.0
  %2837 = vmatpush1.msra.mxu0 0.0
  %2838 = vmatprep.subr.mxu0 0.0
  %2839 = vmatpush1.msra.mxu0 0.0
  %2840 = vmatprep.subr.mxu0 0.0
  %2841 = vmatpush1.msra.mxu0 0.0
  %2842 = vmatprep.subr.mxu0 0.0
  %2843 = vmatpush1.msra.mxu0 0.0
  %2844 = vmatprep.subr.mxu0 0.0
  %2845 = vmatpush1.msra.mxu0 0.0
  %2846 = vmatprep.subr.mxu0 0.0
  %2847 = vmatpush1.msra.mxu0 0.0
  %2848 = vmatprep.subr.mxu0 0.0
  %2849 = vmatpush1.msra.mxu0 0.0
  %2850 = vmatprep.subr.mxu0 0.0
  %2851 = vmatpush1.msra.mxu0 0.0
  %2852 = vmatprep.subr.mxu0 0.0
  %2853 = vmatpush1.msra.mxu0 0.0
  %2854 = vmatprep.subr.mxu0 0.0
  %2855 = vmatpush1.msra.mxu0 0.0
  %2856 = vmatprep.subr.mxu0 0.0
  %2857 = vmatpush1.msra.mxu0 0.0
  %2858 = vmatprep.subr.mxu0 0.0
  %2859 = vmatpush1.msra.mxu0 0.0
  %2860 = vmatprep.mubr.f32.mxu0 0.0
  %2861 = vmatmul.mubr.f32.gmra.mrb[0].mxu0 %v2791
  %v2862 = vpop.f32.mrb[0].mxu0
  %v2863 = vadd.f32 0.0, %v2862
  %v2864 = vpop.f32.mrb[0].mxu0
  %2865 = vmatprep.mubr.f32.mxu0 0.0
  %2866 = vmatmul.mubr.f32.gmra.mrb[0].mxu0 %v2794
  %v2867 = vpop.f32.mrb[0].mxu0
  %v2868 = vadd.f32 0.0, %v2867
  %v2869 = vpop.f32.mrb[0].mxu0
  %2870 = vdwg.mxu0
  %v2871 = vadd.f32 %v2580, %v2863
  %v2872 = vadd.f32 %v2581, %v2868
  %2874 = vset.pattern.permute.xlu0 0
  %2875 = vperm.xlu0 %2874, %v48
  %v2876 = vpop.permute.xlu0 %2875
  %2879 = vset.pattern.permute.xlu0 0
  %2880 = vperm.xlu0 %2879, %v49
  %v2881 = vpop.permute.xlu0 %2880
  %v2883 = vadd.f32 %v2871, %v2876
  %v2884 = vadd.f32 %v2872, %v2881
  %vm2885 = vcmask 801792
  %v2886 = vsel %vm2885, %v2883, 0.0
  %2887 = vadd.xlane.f32.xlu0 %v2886
  %v2888 = vpop.xlane.xlu0 %2887
  %v2889 = vsel %vm2885, %v2884, 0.0
  %2890 = vadd.xlane.f32.xlu0 %v2889
  %v2891 = vpop.xlane.xlu0 %2890
  %v2892 = vrcp.pop 98.0
  %v2893 = vmul.f32 %v2888, %v2892
  %v2894 = vmul.f32 %v2891, %v2892
  %v2895 = vsub.f32 %v2883, %v2893
  %v2896 = vsub.f32 %v2884, %v2894
  %v2897 = vmul.f32 %v2895, %v2895
  %v2898 = vmul.f32 %v2896, %v2896
  %v2899 = vsel %vm2885, %v2897, 0.0
  %2900 = vadd.xlane.f32.xlu0 %v2899
  %v2901 = vpop.xlane.xlu0 %2900
  %v2902 = vsel %vm2885, %v2898, 0.0
  %2903 = vadd.xlane.f32.xlu0 %v2902
  %v2904 = vpop.xlane.xlu0 %2903
  %v2905 = vmul.f32 %v2901, %v2892
  %v2906 = vmul.f32 %v2904, %v2892
  %v2907 = vadd.f32 %v2905, 1e-05
  %v2908 = vadd.f32 %v2906, 1e-05
  %v2909 = vrsqrt.pop %v2907
  %v2910 = vrsqrt.pop %v2908
  %v2911 = vmul.f32 %v58, %v2909
  %v2912 = vmul.f32 %v59, %v2910
  %v2913 = vmul.f32 %v2893, %v2911
  %v2914 = vmul.f32 %v2894, %v2912
  %v2915 = vsub.f32 %v60, %v2913
  %v2916 = vsub.f32 %v61, %v2914
  %2918 = vset.pattern.permute.xlu0 0
  %2919 = vperm.xlu0 %2918, %v2911
  %v2920 = vpop.permute.xlu0 %2919
  %2923 = vset.pattern.permute.xlu0 0
  %2924 = vperm.xlu0 %2923, %v2912
  %v2925 = vpop.permute.xlu0 %2924
  %v2927 = vmul.f32 %v2883, %v2920
  %v2928 = vmul.f32 %v2884, %v2925
  %2930 = vset.pattern.permute.xlu0 0
  %2931 = vperm.xlu0 %2930, %v2915
  %v2932 = vpop.permute.xlu0 %2931
  %2935 = vset.pattern.permute.xlu0 0
  %2936 = vperm.xlu0 %2935, %v2916
  %v2937 = vpop.permute.xlu0 %2936
  %v2939 = vadd.f32 %v2927, %v2932
  %v2940 = vadd.f32 %v2928, %v2937
  %v2941 = vmax.f32 %v2939, 0.0
  %v2942 = vmax.f32 %v2940, 0.0
  %v2943 = vld [vmem:[%s5] sm:$0xff]
  %v2944 = vld [vmem:[%s5 + $0x8] sm:$0xff]
  %v2945 = vld [vmem:[%s5 + $0x10] sm:$0xff]
  %v2946 = vld [vmem:[%s5 + $0x18] sm:$0xff]
  %v2947 = vld [vmem:[%s4] sm:$0xff]
  %v2948 = vld [vmem:[%s4 + $0x8] sm:$0xff]
  %v2949 = vld [vmem:[%s4 + $0x10] sm:$0xff]
  %v2950 = vld [vmem:[%s4 + $0x18] sm:$0xff]
  %v2951 = vld [vmem:[%s4 + $0x20] sm:$0xff]
  %v2952 = vld [vmem:[%s4 + $0x28] sm:$0xff]
  %v2953 = vld [vmem:[%s4 + $0x30] sm:$0xff]
  %v2954 = vld [vmem:[%s4 + $0x38] sm:$0xff]
  %v2955 = vld [vmem:[%s4 + $0x40] sm:$0xff]
  %v2956 = vld [vmem:[%s4 + $0x48] sm:$0xff]
  %v2957 = vld [vmem:[%s4 + $0x50] sm:$0xff]
  %v2958 = vld [vmem:[%s4 + $0x58] sm:$0xff]
  %v2959 = vld [vmem:[%s4 + $0x60] sm:$0x3]
  %v2961 = vsel %vm2885, %v2941, 0
  %v2964 = vsel %vm2885, %v2942, 0
  %vm2966 = vcmask 1041408
  %v2968 = vsel %vm2966, %v2959, 0
  %2970 = vmatprep.subr.mxu0 0.0
  %2971 = vmatpush1.msra.mxu0 %v2947
  %2972 = vmatprep.subr.mxu0 0.0
  %2973 = vmatpush1.msra.mxu0 %v2948
  %2974 = vmatprep.subr.mxu0 0.0
  %2975 = vmatpush1.msra.mxu0 %v2949
  %2976 = vmatprep.subr.mxu0 0.0
  %2977 = vmatpush1.msra.mxu0 %v2950
  %2978 = vmatprep.subr.mxu0 0.0
  %2979 = vmatpush1.msra.mxu0 %v2951
  %2980 = vmatprep.subr.mxu0 0.0
  %2981 = vmatpush1.msra.mxu0 %v2952
  %2982 = vmatprep.subr.mxu0 0.0
  %2983 = vmatpush1.msra.mxu0 %v2953
  %2984 = vmatprep.subr.mxu0 0.0
  %2985 = vmatpush1.msra.mxu0 %v2954
  %2986 = vmatprep.subr.mxu0 0.0
  %2987 = vmatpush1.msra.mxu0 %v2955
  %2988 = vmatprep.subr.mxu0 0.0
  %2989 = vmatpush1.msra.mxu0 %v2956
  %2990 = vmatprep.subr.mxu0 0.0
  %2991 = vmatpush1.msra.mxu0 %v2957
  %2992 = vmatprep.subr.mxu0 0.0
  %2993 = vmatpush1.msra.mxu0 %v2958
  %2994 = vmatprep.subr.mxu0 0.0
  %2995 = vmatpush1.msra.mxu0 %v2968
  %2996 = vmatprep.subr.mxu0 0.0
  %2997 = vmatpush1.msra.mxu0 0.0
  %2998 = vmatprep.subr.mxu0 0.0
  %2999 = vmatpush1.msra.mxu0 0.0
  %3000 = vmatprep.subr.mxu0 0.0
  %3001 = vmatpush1.msra.mxu0 0.0
  %3002 = vmatprep.subr.mxu0 0.0
  %3003 = vmatpush1.msra.mxu0 0.0
  %3004 = vmatprep.subr.mxu0 0.0
  %3005 = vmatpush1.msra.mxu0 0.0
  %3006 = vmatprep.subr.mxu0 0.0
  %3007 = vmatpush1.msra.mxu0 0.0
  %3008 = vmatprep.subr.mxu0 0.0
  %3009 = vmatpush1.msra.mxu0 0.0
  %3010 = vmatprep.subr.mxu0 0.0
  %3011 = vmatpush1.msra.mxu0 0.0
  %3012 = vmatprep.subr.mxu0 0.0
  %3013 = vmatpush1.msra.mxu0 0.0
  %3014 = vmatprep.subr.mxu0 0.0
  %3015 = vmatpush1.msra.mxu0 0.0
  %3016 = vmatprep.subr.mxu0 0.0
  %3017 = vmatpush1.msra.mxu0 0.0
  %3018 = vmatprep.subr.mxu0 0.0
  %3019 = vmatpush1.msra.mxu0 0.0
  %3020 = vmatprep.subr.mxu0 0.0
  %3021 = vmatpush1.msra.mxu0 0.0
  %3022 = vmatprep.subr.mxu0 0.0
  %3023 = vmatpush1.msra.mxu0 0.0
  %3024 = vmatprep.subr.mxu0 0.0
  %3025 = vmatpush1.msra.mxu0 0.0
  %3026 = vmatprep.subr.mxu0 0.0
  %3027 = vmatpush1.msra.mxu0 0.0
  %3028 = vmatprep.subr.mxu0 0.0
  %3029 = vmatpush1.msra.mxu0 0.0
  %3030 = vmatprep.subr.mxu0 0.0
  %3031 = vmatpush1.msra.mxu0 0.0
  %3032 = vmatprep.subr.mxu0 0.0
  %3033 = vmatpush1.msra.mxu0 0.0
  %3034 = vmatprep.mubr.f32.mxu0 0.0
  %3035 = vmatmul.mubr.f32.gmra.mrb[0].mxu0 %v2961
  %v3036 = vpop.f32.mrb[0].mxu0
  %v3037 = vadd.f32 0.0, %v3036
  %v3038 = vpop.f32.mrb[0].mxu0
  %3039 = vmatprep.mubr.f32.mxu0 0.0
  %3040 = vmatmul.mubr.f32.gmra.mrb[0].mxu0 %v2964
  %v3041 = vpop.f32.mrb[0].mxu0
  %v3042 = vadd.f32 0.0, %v3041
  %v3043 = vpop.f32.mrb[0].mxu0
  %3044 = vdwg.mxu0
  %s3045 = scalar_lea.vmem %s5, 32
  %v3046 = vld [vmem:[%s3045] sm:$0xff]
  %v3047 = vld [vmem:[%s3045 + $0x8] sm:$0xff]
  %v3048 = vld [vmem:[%s3045 + $0x10] sm:$0xff]
  %v3049 = vld [vmem:[%s3045 + $0x18] sm:$0xff]
  %s3050 = scalar_lea.vmem %s4, 104
  %v3051 = vld [vmem:[%s3050] sm:$0xff]
  %v3052 = vld [vmem:[%s3050 + $0x8] sm:$0xff]
  %v3053 = vld [vmem:[%s3050 + $0x10] sm:$0xff]
  %v3054 = vld [vmem:[%s3050 + $0x18] sm:$0xff]
  %v3055 = vld [vmem:[%s3050 + $0x20] sm:$0xff]
  %v3056 = vld [vmem:[%s3050 + $0x28] sm:$0xff]
  %v3057 = vld [vmem:[%s3050 + $0x30] sm:$0xff]
  %v3058 = vld [vmem:[%s3050 + $0x38] sm:$0xff]
  %v3059 = vld [vmem:[%s3050 + $0x40] sm:$0xff]
  %v3060 = vld [vmem:[%s3050 + $0x48] sm:$0xff]
  %v3061 = vld [vmem:[%s3050 + $0x50] sm:$0xff]
  %v3062 = vld [vmem:[%s3050 + $0x58] sm:$0xff]
  %v3063 = vld [vmem:[%s3050 + $0x60] sm:$0x3]
  %v3065 = vsel %vm2966, %v3063, 0
  %3067 = vmatprep.subr.mxu0 0.0
  %3068 = vmatpush1.msra.mxu0 %v3051
  %3069 = vmatprep.subr.mxu0 0.0
  %3070 = vmatpush1.msra.mxu0 %v3052
  %3071 = vmatprep.subr.mxu0 0.0
  %3072 = vmatpush1.msra.mxu0 %v3053
  %3073 = vmatprep.subr.mxu0 0.0
  %3074 = vmatpush1.msra.mxu0 %v3054
  %3075 = vmatprep.subr.mxu0 0.0
  %3076 = vmatpush1.msra.mxu0 %v3055
  %3077 = vmatprep.subr.mxu0 0.0
  %3078 = vmatpush1.msra.mxu0 %v3056
  %3079 = vmatprep.subr.mxu0 0.0
  %3080 = vmatpush1.msra.mxu0 %v3057
  %3081 = vmatprep.subr.mxu0 0.0
  %3082 = vmatpush1.msra.mxu0 %v3058
  %3083 = vmatprep.subr.mxu0 0.0
  %3084 = vmatpush1.msra.mxu0 %v3059
  %3085 = vmatprep.subr.mxu0 0.0
  %3086 = vmatpush1.msra.mxu0 %v3060
  %3087 = vmatprep.subr.mxu0 0.0
  %3088 = vmatpush1.msra.mxu0 %v3061
  %3089 = vmatprep.subr.mxu0 0.0
  %3090 = vmatpush1.msra.mxu0 %v3062
  %3091 = vmatprep.subr.mxu0 0.0
  %3092 = vmatpush1.msra.mxu0 %v3065
  %3093 = vmatprep.subr.mxu0 0.0
  %3094 = vmatpush1.msra.mxu0 0.0
  %3095 = vmatprep.subr.mxu0 0.0
  %3096 = vmatpush1.msra.mxu0 0.0
  %3097 = vmatprep.subr.mxu0 0.0
  %3098 = vmatpush1.msra.mxu0 0.0
  %3099 = vmatprep.subr.mxu0 0.0
  %3100 = vmatpush1.msra.mxu0 0.0
  %3101 = vmatprep.subr.mxu0 0.0
  %3102 = vmatpush1.msra.mxu0 0.0
  %3103 = vmatprep.subr.mxu0 0.0
  %3104 = vmatpush1.msra.mxu0 0.0
  %3105 = vmatprep.subr.mxu0 0.0
  %3106 = vmatpush1.msra.mxu0 0.0
  %3107 = vmatprep.subr.mxu0 0.0
  %3108 = vmatpush1.msra.mxu0 0.0
  %3109 = vmatprep.subr.mxu0 0.0
  %3110 = vmatpush1.msra.mxu0 0.0
  %3111 = vmatprep.subr.mxu0 0.0
  %3112 = vmatpush1.msra.mxu0 0.0
  %3113 = vmatprep.subr.mxu0 0.0
  %3114 = vmatpush1.msra.mxu0 0.0
  %3115 = vmatprep.subr.mxu0 0.0
  %3116 = vmatpush1.msra.mxu0 0.0
  %3117 = vmatprep.subr.mxu0 0.0
  %3118 = vmatpush1.msra.mxu0 0.0
  %3119 = vmatprep.subr.mxu0 0.0
  %3120 = vmatpush1.msra.mxu0 0.0
  %3121 = vmatprep.subr.mxu0 0.0
  %3122 = vmatpush1.msra.mxu0 0.0
  %3123 = vmatprep.subr.mxu0 0.0
  %3124 = vmatpush1.msra.mxu0 0.0
  %3125 = vmatprep.subr.mxu0 0.0
  %3126 = vmatpush1.msra.mxu0 0.0
  %3127 = vmatprep.subr.mxu0 0.0
  %3128 = vmatpush1.msra.mxu0 0.0
  %3129 = vmatprep.subr.mxu0 0.0
  %3130 = vmatpush1.msra.mxu0 0.0
  %3131 = vmatprep.mubr.f32.mxu0 0.0
  %3132 = vmatmul.mubr.f32.gmra.mrb[0].mxu0 %v2961
  %v3133 = vpop.f32.mrb[0].mxu0
  %v3134 = vadd.f32 0.0, %v3133
  %v3135 = vpop.f32.mrb[0].mxu0
  %3136 = vmatprep.mubr.f32.mxu0 0.0
  %3137 = vmatmul.mubr.f32.gmra.mrb[0].mxu0 %v2964
  %v3138 = vpop.f32.mrb[0].mxu0
  %v3139 = vadd.f32 0.0, %v3138
  %v3140 = vpop.f32.mrb[0].mxu0
  %3141 = vdwg.mxu0
  %vm3142 = vcmask 130048
  %v3144 = vsel %vm3142, %v3046, 0
  %v3147 = vsel %vm3142, %v3047, 0
  %v3150 = vsel %vm3142, %v3048, 0
  %v3153 = vsel %vm3142, %v3049, 0
  %3155 = vmatprep.subr.mxu0 0.0
  %3156 = vmatpush1.msra.mxu0 %v3134
  %3157 = vmatprep.subr.mxu0 0.0
  %3158 = vmatpush1.msra.mxu0 %v3139
  %3159 = vmatprep.subr.mxu0 0.0
  %3160 = vmatpush1.msra.mxu0 0.0
  %3161 = vmatprep.subr.mxu0 0.0
  %3162 = vmatpush1.msra.mxu0 0.0
  %3163 = vmatprep.subr.mxu0 0.0
  %3164 = vmatpush1.msra.mxu0 0.0
  %3165 = vmatprep.subr.mxu0 0.0
  %3166 = vmatpush1.msra.mxu0 0.0
  %3167 = vmatprep.subr.mxu0 0.0
  %3168 = vmatpush1.msra.mxu0 0.0
  %3169 = vmatprep.subr.mxu0 0.0
  %3170 = vmatpush1.msra.mxu0 0.0
  %3171 = vmatprep.subr.mxu0 0.0
  %3172 = vmatpush1.msra.mxu0 0.0
  %3173 = vmatprep.subr.mxu0 0.0
  %3174 = vmatpush1.msra.mxu0 0.0
  %3175 = vmatprep.subr.mxu0 0.0
  %3176 = vmatpush1.msra.mxu0 0.0
  %3177 = vmatprep.subr.mxu0 0.0
  %3178 = vmatpush1.msra.mxu0 0.0
  %3179 = vmatprep.subr.mxu0 0.0
  %3180 = vmatpush1.msra.mxu0 0.0
  %3181 = vmatprep.subr.mxu0 0.0
  %3182 = vmatpush1.msra.mxu0 0.0
  %3183 = vmatprep.subr.mxu0 0.0
  %3184 = vmatpush1.msra.mxu0 0.0
  %3185 = vmatprep.subr.mxu0 0.0
  %3186 = vmatpush1.msra.mxu0 0.0
  %3187 = vmatprep.subr.mxu0 0.0
  %3188 = vmatpush1.msra.mxu0 0.0
  %3189 = vmatprep.subr.mxu0 0.0
  %3190 = vmatpush1.msra.mxu0 0.0
  %3191 = vmatprep.subr.mxu0 0.0
  %3192 = vmatpush1.msra.mxu0 0.0
  %3193 = vmatprep.subr.mxu0 0.0
  %3194 = vmatpush1.msra.mxu0 0.0
  %3195 = vmatprep.subr.mxu0 0.0
  %3196 = vmatpush1.msra.mxu0 0.0
  %3197 = vmatprep.subr.mxu0 0.0
  %3198 = vmatpush1.msra.mxu0 0.0
  %3199 = vmatprep.subr.mxu0 0.0
  %3200 = vmatpush1.msra.mxu0 0.0
  %3201 = vmatprep.subr.mxu0 0.0
  %3202 = vmatpush1.msra.mxu0 0.0
  %3203 = vmatprep.subr.mxu0 0.0
  %3204 = vmatpush1.msra.mxu0 0.0
  %3205 = vmatprep.subr.mxu0 0.0
  %3206 = vmatpush1.msra.mxu0 0.0
  %3207 = vmatprep.subr.mxu0 0.0
  %3208 = vmatpush1.msra.mxu0 0.0
  %3209 = vmatprep.subr.mxu0 0.0
  %3210 = vmatpush1.msra.mxu0 0.0
  %3211 = vmatprep.subr.mxu0 0.0
  %3212 = vmatpush1.msra.mxu0 0.0
  %3213 = vmatprep.subr.mxu0 0.0
  %3214 = vmatpush1.msra.mxu0 0.0
  %3215 = vmatprep.subr.mxu0 0.0
  %3216 = vmatpush1.msra.mxu0 0.0
  %3217 = vmatprep.subr.mxu0 0.0
  %3218 = vmatpush1.msra.mxu0 0.0
  %3219 = vmatprep.mubr.f32.mxu0 0.0
  %3220 = vmatmul.mubr.f32.gmra.mrb[0].mxu0 %v3144
  %v3221 = vpop.f32.mrb[0].mxu0
  %v3222 = vadd.f32 0.0, %v3221
  %v3223 = vpop.f32.mrb[0].mxu0
  %3224 = vmatprep.mubr.f32.mxu0 0.0
  %3225 = vmatmul.mubr.f32.gmra.mrb[0].mxu0 %v3147
  %v3226 = vpop.f32.mrb[0].mxu0
  %v3227 = vadd.f32 0.0, %v3226
  %v3228 = vpop.f32.mrb[0].mxu0
  %3229 = vmatprep.mubr.f32.mxu0 0.0
  %3230 = vmatmul.mubr.f32.gmra.mrb[0].mxu0 %v3150
  %v3231 = vpop.f32.mrb[0].mxu0
  %v3232 = vadd.f32 0.0, %v3231
  %v3233 = vpop.f32.mrb[0].mxu0
  %3234 = vmatprep.mubr.f32.mxu0 0.0
  %3235 = vmatmul.mubr.f32.gmra.mrb[0].mxu0 %v3153
  %v3236 = vpop.f32.mrb[0].mxu0
  %v3237 = vadd.f32 0.0, %v3236
  %v3238 = vpop.f32.mrb[0].mxu0
  %3239 = vdwg.mxu0
  %v3241 = vsel %vm3142, %v2943, 0
  %v3244 = vsel %vm3142, %v2944, 0
  %v3247 = vsel %vm3142, %v2945, 0
  %v3250 = vsel %vm3142, %v2946, 0
  %3252 = vmatprep.subr.mxu0 0.0
  %3253 = vmatpush1.msra.mxu0 %v3037
  %3254 = vmatprep.subr.mxu0 0.0
  %3255 = vmatpush1.msra.mxu0 %v3042
  %3256 = vmatprep.subr.mxu0 0.0
  %3257 = vmatpush1.msra.mxu0 0.0
  %3258 = vmatprep.subr.mxu0 0.0
  %3259 = vmatpush1.msra.mxu0 0.0
  %3260 = vmatprep.subr.mxu0 0.0
  %3261 = vmatpush1.msra.mxu0 0.0
  %3262 = vmatprep.subr.mxu0 0.0
  %3263 = vmatpush1.msra.mxu0 0.0
  %3264 = vmatprep.subr.mxu0 0.0
  %3265 = vmatpush1.msra.mxu0 0.0
  %3266 = vmatprep.subr.mxu0 0.0
  %3267 = vmatpush1.msra.mxu0 0.0
  %3268 = vmatprep.subr.mxu0 0.0
  %3269 = vmatpush1.msra.mxu0 0.0
  %3270 = vmatprep.subr.mxu0 0.0
  %3271 = vmatpush1.msra.mxu0 0.0
  %3272 = vmatprep.subr.mxu0 0.0
  %3273 = vmatpush1.msra.mxu0 0.0
  %3274 = vmatprep.subr.mxu0 0.0
  %3275 = vmatpush1.msra.mxu0 0.0
  %3276 = vmatprep.subr.mxu0 0.0
  %3277 = vmatpush1.msra.mxu0 0.0
  %3278 = vmatprep.subr.mxu0 0.0
  %3279 = vmatpush1.msra.mxu0 0.0
  %3280 = vmatprep.subr.mxu0 0.0
  %3281 = vmatpush1.msra.mxu0 0.0
  %3282 = vmatprep.subr.mxu0 0.0
  %3283 = vmatpush1.msra.mxu0 0.0
  %3284 = vmatprep.subr.mxu0 0.0
  %3285 = vmatpush1.msra.mxu0 0.0
  %3286 = vmatprep.subr.mxu0 0.0
  %3287 = vmatpush1.msra.mxu0 0.0
  %3288 = vmatprep.subr.mxu0 0.0
  %3289 = vmatpush1.msra.mxu0 0.0
  %3290 = vmatprep.subr.mxu0 0.0
  %3291 = vmatpush1.msra.mxu0 0.0
  %3292 = vmatprep.subr.mxu0 0.0
  %3293 = vmatpush1.msra.mxu0 0.0
  %3294 = vmatprep.subr.mxu0 0.0
  %3295 = vmatpush1.msra.mxu0 0.0
  %3296 = vmatprep.subr.mxu0 0.0
  %3297 = vmatpush1.msra.mxu0 0.0
  %3298 = vmatprep.subr.mxu0 0.0
  %3299 = vmatpush1.msra.mxu0 0.0
  %3300 = vmatprep.subr.mxu0 0.0
  %3301 = vmatpush1.msra.mxu0 0.0
  %3302 = vmatprep.subr.mxu0 0.0
  %3303 = vmatpush1.msra.mxu0 0.0
  %3304 = vmatprep.subr.mxu0 0.0
  %3305 = vmatpush1.msra.mxu0 0.0
  %3306 = vmatprep.subr.mxu0 0.0
  %3307 = vmatpush1.msra.mxu0 0.0
  %3308 = vmatprep.subr.mxu0 0.0
  %3309 = vmatpush1.msra.mxu0 0.0
  %3310 = vmatprep.subr.mxu0 0.0
  %3311 = vmatpush1.msra.mxu0 0.0
  %3312 = vmatprep.subr.mxu0 0.0
  %3313 = vmatpush1.msra.mxu0 0.0
  %3314 = vmatprep.subr.mxu0 0.0
  %3315 = vmatpush1.msra.mxu0 0.0
  %3316 = vmatprep.mubr.f32.mxu0 0.0
  %3317 = vmatmul.mubr.f32.gmra.mrb[0].mxu0 %v3241
  %v3318 = vpop.f32.mrb[0].mxu0
  %v3319 = vadd.f32 %v3222, %v3318
  %v3320 = vpop.f32.mrb[0].mxu0
  %3321 = vmatprep.mubr.f32.mxu0 0.0
  %3322 = vmatmul.mubr.f32.gmra.mrb[0].mxu0 %v3244
  %v3323 = vpop.f32.mrb[0].mxu0
  %v3324 = vadd.f32 %v3227, %v3323
  %v3325 = vpop.f32.mrb[0].mxu0
  %3326 = vmatprep.mubr.f32.mxu0 0.0
  %3327 = vmatmul.mubr.f32.gmra.mrb[0].mxu0 %v3247
  %v3328 = vpop.f32.mrb[0].mxu0
  %v3329 = vadd.f32 %v3232, %v3328
  %v3330 = vpop.f32.mrb[0].mxu0
  %3331 = vmatprep.mubr.f32.mxu0 0.0
  %3332 = vmatmul.mubr.f32.gmra.mrb[0].mxu0 %v3250
  %v3333 = vpop.f32.mrb[0].mxu0
  %v3334 = vadd.f32 %v3237, %v3333
  %v3335 = vpop.f32.mrb[0].mxu0
  %3336 = vdwg.mxu0
  %s3337 = scalar_lea.vmem %s5, 64
  %v3338 = vld [vmem:[%s3337] sm:$0xff]
  %v3339 = vld [vmem:[%s3337 + $0x8] sm:$0xff]
  %v3340 = vld [vmem:[%s3337 + $0x10] sm:$0xff]
  %v3341 = vld [vmem:[%s3337 + $0x18] sm:$0xff]
  %s3342 = scalar_lea.vmem %s4, 208
  %v3343 = vld [vmem:[%s3342] sm:$0xff]
  %v3344 = vld [vmem:[%s3342 + $0x8] sm:$0xff]
  %v3345 = vld [vmem:[%s3342 + $0x10] sm:$0xff]
  %v3346 = vld [vmem:[%s3342 + $0x18] sm:$0xff]
  %v3347 = vld [vmem:[%s3342 + $0x20] sm:$0xff]
  %v3348 = vld [vmem:[%s3342 + $0x28] sm:$0xff]
  %v3349 = vld [vmem:[%s3342 + $0x30] sm:$0xff]
  %v3350 = vld [vmem:[%s3342 + $0x38] sm:$0xff]
  %v3351 = vld [vmem:[%s3342 + $0x40] sm:$0xff]
  %v3352 = vld [vmem:[%s3342 + $0x48] sm:$0xff]
  %v3353 = vld [vmem:[%s3342 + $0x50] sm:$0xff]
  %v3354 = vld [vmem:[%s3342 + $0x58] sm:$0xff]
  %v3355 = vld [vmem:[%s3342 + $0x60] sm:$0x3]
  %v3357 = vsel %vm2966, %v3355, 0
  %3359 = vmatprep.subr.mxu0 0.0
  %3360 = vmatpush1.msra.mxu0 %v3343
  %3361 = vmatprep.subr.mxu0 0.0
  %3362 = vmatpush1.msra.mxu0 %v3344
  %3363 = vmatprep.subr.mxu0 0.0
  %3364 = vmatpush1.msra.mxu0 %v3345
  %3365 = vmatprep.subr.mxu0 0.0
  %3366 = vmatpush1.msra.mxu0 %v3346
  %3367 = vmatprep.subr.mxu0 0.0
  %3368 = vmatpush1.msra.mxu0 %v3347
  %3369 = vmatprep.subr.mxu0 0.0
  %3370 = vmatpush1.msra.mxu0 %v3348
  %3371 = vmatprep.subr.mxu0 0.0
  %3372 = vmatpush1.msra.mxu0 %v3349
  %3373 = vmatprep.subr.mxu0 0.0
  %3374 = vmatpush1.msra.mxu0 %v3350
  %3375 = vmatprep.subr.mxu0 0.0
  %3376 = vmatpush1.msra.mxu0 %v3351
  %3377 = vmatprep.subr.mxu0 0.0
  %3378 = vmatpush1.msra.mxu0 %v3352
  %3379 = vmatprep.subr.mxu0 0.0
  %3380 = vmatpush1.msra.mxu0 %v3353
  %3381 = vmatprep.subr.mxu0 0.0
  %3382 = vmatpush1.msra.mxu0 %v3354
  %3383 = vmatprep.subr.mxu0 0.0
  %3384 = vmatpush1.msra.mxu0 %v3357
  %3385 = vmatprep.subr.mxu0 0.0
  %3386 = vmatpush1.msra.mxu0 0.0
  %3387 = vmatprep.subr.mxu0 0.0
  %3388 = vmatpush1.msra.mxu0 0.0
  %3389 = vmatprep.subr.mxu0 0.0
  %3390 = vmatpush1.msra.mxu0 0.0
  %3391 = vmatprep.subr.mxu0 0.0
  %3392 = vmatpush1.msra.mxu0 0.0
  %3393 = vmatprep.subr.mxu0 0.0
  %3394 = vmatpush1.msra.mxu0 0.0
  %3395 = vmatprep.subr.mxu0 0.0
  %3396 = vmatpush1.msra.mxu0 0.0
  %3397 = vmatprep.subr.mxu0 0.0
  %3398 = vmatpush1.msra.mxu0 0.0
  %3399 = vmatprep.subr.mxu0 0.0
  %3400 = vmatpush1.msra.mxu0 0.0
  %3401 = vmatprep.subr.mxu0 0.0
  %3402 = vmatpush1.msra.mxu0 0.0
  %3403 = vmatprep.subr.mxu0 0.0
  %3404 = vmatpush1.msra.mxu0 0.0
  %3405 = vmatprep.subr.mxu0 0.0
  %3406 = vmatpush1.msra.mxu0 0.0
  %3407 = vmatprep.subr.mxu0 0.0
  %3408 = vmatpush1.msra.mxu0 0.0
  %3409 = vmatprep.subr.mxu0 0.0
  %3410 = vmatpush1.msra.mxu0 0.0
  %3411 = vmatprep.subr.mxu0 0.0
  %3412 = vmatpush1.msra.mxu0 0.0
  %3413 = vmatprep.subr.mxu0 0.0
  %3414 = vmatpush1.msra.mxu0 0.0
  %3415 = vmatprep.subr.mxu0 0.0
  %3416 = vmatpush1.msra.mxu0 0.0
  %3417 = vmatprep.subr.mxu0 0.0
  %3418 = vmatpush1.msra.mxu0 0.0
  %3419 = vmatprep.subr.mxu0 0.0
  %3420 = vmatpush1.msra.mxu0 0.0
  %3421 = vmatprep.subr.mxu0 0.0
  %3422 = vmatpush1.msra.mxu0 0.0
  %3423 = vmatprep.mubr.f32.mxu0 0.0
  %3424 = vmatmul.mubr.f32.gmra.mrb[0].mxu0 %v2961
  %v3425 = vpop.f32.mrb[0].mxu0
  %v3426 = vadd.f32 0.0, %v3425
  %v3427 = vpop.f32.mrb[0].mxu0
  %3428 = vmatprep.mubr.f32.mxu0 0.0
  %3429 = vmatmul.mubr.f32.gmra.mrb[0].mxu0 %v2964
  %v3430 = vpop.f32.mrb[0].mxu0
  %v3431 = vadd.f32 0.0, %v3430
  %v3432 = vpop.f32.mrb[0].mxu0
  %3433 = vdwg.mxu0
  %v3435 = vsel %vm3142, %v3338, 0
  %v3438 = vsel %vm3142, %v3339, 0
  %v3441 = vsel %vm3142, %v3340, 0
  %v3444 = vsel %vm3142, %v3341, 0
  %3446 = vmatprep.subr.mxu0 0.0
  %3447 = vmatpush1.msra.mxu0 %v3426
  %3448 = vmatprep.subr.mxu0 0.0
  %3449 = vmatpush1.msra.mxu0 %v3431
  %3450 = vmatprep.subr.mxu0 0.0
  %3451 = vmatpush1.msra.mxu0 0.0
  %3452 = vmatprep.subr.mxu0 0.0
  %3453 = vmatpush1.msra.mxu0 0.0
  %3454 = vmatprep.subr.mxu0 0.0
  %3455 = vmatpush1.msra.mxu0 0.0
  %3456 = vmatprep.subr.mxu0 0.0
  %3457 = vmatpush1.msra.mxu0 0.0
  %3458 = vmatprep.subr.mxu0 0.0
  %3459 = vmatpush1.msra.mxu0 0.0
  %3460 = vmatprep.subr.mxu0 0.0
  %3461 = vmatpush1.msra.mxu0 0.0
  %3462 = vmatprep.subr.mxu0 0.0
  %3463 = vmatpush1.msra.mxu0 0.0
  %3464 = vmatprep.subr.mxu0 0.0
  %3465 = vmatpush1.msra.mxu0 0.0
  %3466 = vmatprep.subr.mxu0 0.0
  %3467 = vmatpush1.msra.mxu0 0.0
  %3468 = vmatprep.subr.mxu0 0.0
  %3469 = vmatpush1.msra.mxu0 0.0
  %3470 = vmatprep.subr.mxu0 0.0
  %3471 = vmatpush1.msra.mxu0 0.0
  %3472 = vmatprep.subr.mxu0 0.0
  %3473 = vmatpush1.msra.mxu0 0.0
  %3474 = vmatprep.subr.mxu0 0.0
  %3475 = vmatpush1.msra.mxu0 0.0
  %3476 = vmatprep.subr.mxu0 0.0
  %3477 = vmatpush1.msra.mxu0 0.0
  %3478 = vmatprep.subr.mxu0 0.0
  %3479 = vmatpush1.msra.mxu0 0.0
  %3480 = vmatprep.subr.mxu0 0.0
  %3481 = vmatpush1.msra.mxu0 0.0
  %3482 = vmatprep.subr.mxu0 0.0
  %3483 = vmatpush1.msra.mxu0 0.0
  %3484 = vmatprep.subr.mxu0 0.0
  %3485 = vmatpush1.msra.mxu0 0.0
  %3486 = vmatprep.subr.mxu0 0.0
  %3487 = vmatpush1.msra.mxu0 0.0
  %3488 = vmatprep.subr.mxu0 0.0
  %3489 = vmatpush1.msra.mxu0 0.0
  %3490 = vmatprep.subr.mxu0 0.0
  %3491 = vmatpush1.msra.mxu0 0.0
  %3492 = vmatprep.subr.mxu0 0.0
  %3493 = vmatpush1.msra.mxu0 0.0
  %3494 = vmatprep.subr.mxu0 0.0
  %3495 = vmatpush1.msra.mxu0 0.0
  %3496 = vmatprep.subr.mxu0 0.0
  %3497 = vmatpush1.msra.mxu0 0.0
  %3498 = vmatprep.subr.mxu0 0.0
  %3499 = vmatpush1.msra.mxu0 0.0
  %3500 = vmatprep.subr.mxu0 0.0
  %3501 = vmatpush1.msra.mxu0 0.0
  %3502 = vmatprep.subr.mxu0 0.0
  %3503 = vmatpush1.msra.mxu0 0.0
  %3504 = vmatprep.subr.mxu0 0.0
  %3505 = vmatpush1.msra.mxu0 0.0
  %3506 = vmatprep.subr.mxu0 0.0
  %3507 = vmatpush1.msra.mxu0 0.0
  %3508 = vmatprep.subr.mxu0 0.0
  %3509 = vmatpush1.msra.mxu0 0.0
  %3510 = vmatprep.mubr.f32.mxu0 0.0
  %3511 = vmatmul.mubr.f32.gmra.mrb[0].mxu0 %v3435
  %v3512 = vpop.f32.mrb[0].mxu0
  %v3513 = vadd.f32 0.0, %v3512
  %v3514 = vpop.f32.mrb[0].mxu0
  %3515 = vmatprep.mubr.f32.mxu0 0.0
  %3516 = vmatmul.mubr.f32.gmra.mrb[0].mxu0 %v3438
  %v3517 = vpop.f32.mrb[0].mxu0
  %v3518 = vadd.f32 0.0, %v3517
  %v3519 = vpop.f32.mrb[0].mxu0
  %3520 = vmatprep.mubr.f32.mxu0 0.0
  %3521 = vmatmul.mubr.f32.gmra.mrb[0].mxu0 %v3441
  %v3522 = vpop.f32.mrb[0].mxu0
  %v3523 = vadd.f32 0.0, %v3522
  %v3524 = vpop.f32.mrb[0].mxu0
  %3525 = vmatprep.mubr.f32.mxu0 0.0
  %3526 = vmatmul.mubr.f32.gmra.mrb[0].mxu0 %v3444
  %v3527 = vpop.f32.mrb[0].mxu0
  %v3528 = vadd.f32 0.0, %v3527
  %v3529 = vpop.f32.mrb[0].mxu0
  %3530 = vdwg.mxu0
  %v3531 = vadd.f32 %v3319, %v3513
  %v3532 = vadd.f32 %v3324, %v3518
  %v3533 = vadd.f32 %v3329, %v3523
  %v3534 = vadd.f32 %v3334, %v3528
  %s3535 = scalar_lea.vmem %s5, 96
  %v3536 = vld [vmem:[%s3535] sm:$0xff]
  %v3537 = vld [vmem:[%s3535 + $0x8] sm:$0xff]
  %v3538 = vld [vmem:[%s3535 + $0x10] sm:$0xff]
  %v3539 = vld [vmem:[%s3535 + $0x18] sm:$0xff]
  %s3540 = scalar_lea.vmem %s4, 312
  %v3541 = vld [vmem:[%s3540] sm:$0xff]
  %v3542 = vld [vmem:[%s3540 + $0x8] sm:$0xff]
  %v3543 = vld [vmem:[%s3540 + $0x10] sm:$0xff]
  %v3544 = vld [vmem:[%s3540 + $0x18] sm:$0xff]
  %v3545 = vld [vmem:[%s3540 + $0x20] sm:$0xff]
  %v3546 = vld [vmem:[%s3540 + $0x28] sm:$0xff]
  %v3547 = vld [vmem:[%s3540 + $0x30] sm:$0xff]
  %v3548 = vld [vmem:[%s3540 + $0x38] sm:$0xff]
  %v3549 = vld [vmem:[%s3540 + $0x40] sm:$0xff]
  %v3550 = vld [vmem:[%s3540 + $0x48] sm:$0xff]
  %v3551 = vld [vmem:[%s3540 + $0x50] sm:$0xff]
  %v3552 = vld [vmem:[%s3540 + $0x58] sm:$0xff]
  %v3553 = vld [vmem:[%s3540 + $0x60] sm:$0x3]
  %v3555 = vsel %vm2966, %v3553, 0
  %3557 = vmatprep.subr.mxu0 0.0
  %3558 = vmatpush1.msra.mxu0 %v3541
  %3559 = vmatprep.subr.mxu0 0.0
  %3560 = vmatpush1.msra.mxu0 %v3542
  %3561 = vmatprep.subr.mxu0 0.0
  %3562 = vmatpush1.msra.mxu0 %v3543
  %3563 = vmatprep.subr.mxu0 0.0
  %3564 = vmatpush1.msra.mxu0 %v3544
  %3565 = vmatprep.subr.mxu0 0.0
  %3566 = vmatpush1.msra.mxu0 %v3545
  %3567 = vmatprep.subr.mxu0 0.0
  %3568 = vmatpush1.msra.mxu0 %v3546
  %3569 = vmatprep.subr.mxu0 0.0
  %3570 = vmatpush1.msra.mxu0 %v3547
  %3571 = vmatprep.subr.mxu0 0.0
  %3572 = vmatpush1.msra.mxu0 %v3548
  %3573 = vmatprep.subr.mxu0 0.0
  %3574 = vmatpush1.msra.mxu0 %v3549
  %3575 = vmatprep.subr.mxu0 0.0
  %3576 = vmatpush1.msra.mxu0 %v3550
  %3577 = vmatprep.subr.mxu0 0.0
  %3578 = vmatpush1.msra.mxu0 %v3551
  %3579 = vmatprep.subr.mxu0 0.0
  %3580 = vmatpush1.msra.mxu0 %v3552
  %3581 = vmatprep.subr.mxu0 0.0
  %3582 = vmatpush1.msra.mxu0 %v3555
  %3583 = vmatprep.subr.mxu0 0.0
  %3584 = vmatpush1.msra.mxu0 0.0
  %3585 = vmatprep.subr.mxu0 0.0
  %3586 = vmatpush1.msra.mxu0 0.0
  %3587 = vmatprep.subr.mxu0 0.0
  %3588 = vmatpush1.msra.mxu0 0.0
  %3589 = vmatprep.subr.mxu0 0.0
  %3590 = vmatpush1.msra.mxu0 0.0
  %3591 = vmatprep.subr.mxu0 0.0
  %3592 = vmatpush1.msra.mxu0 0.0
  %3593 = vmatprep.subr.mxu0 0.0
  %3594 = vmatpush1.msra.mxu0 0.0
  %3595 = vmatprep.subr.mxu0 0.0
  %3596 = vmatpush1.msra.mxu0 0.0
  %3597 = vmatprep.subr.mxu0 0.0
  %3598 = vmatpush1.msra.mxu0 0.0
  %3599 = vmatprep.subr.mxu0 0.0
  %3600 = vmatpush1.msra.mxu0 0.0
  %3601 = vmatprep.subr.mxu0 0.0
  %3602 = vmatpush1.msra.mxu0 0.0
  %3603 = vmatprep.subr.mxu0 0.0
  %3604 = vmatpush1.msra.mxu0 0.0
  %3605 = vmatprep.subr.mxu0 0.0
  %3606 = vmatpush1.msra.mxu0 0.0
  %3607 = vmatprep.subr.mxu0 0.0
  %3608 = vmatpush1.msra.mxu0 0.0
  %3609 = vmatprep.subr.mxu0 0.0
  %3610 = vmatpush1.msra.mxu0 0.0
  %3611 = vmatprep.subr.mxu0 0.0
  %3612 = vmatpush1.msra.mxu0 0.0
  %3613 = vmatprep.subr.mxu0 0.0
  %3614 = vmatpush1.msra.mxu0 0.0
  %3615 = vmatprep.subr.mxu0 0.0
  %3616 = vmatpush1.msra.mxu0 0.0
  %3617 = vmatprep.subr.mxu0 0.0
  %3618 = vmatpush1.msra.mxu0 0.0
  %3619 = vmatprep.subr.mxu0 0.0
  %3620 = vmatpush1.msra.mxu0 0.0
  %3621 = vmatprep.mubr.f32.mxu0 0.0
  %3622 = vmatmul.mubr.f32.gmra.mrb[0].mxu0 %v2961
  %v3623 = vpop.f32.mrb[0].mxu0
  %v3624 = vadd.f32 0.0, %v3623
  %v3625 = vpop.f32.mrb[0].mxu0
  %3626 = vmatprep.mubr.f32.mxu0 0.0
  %3627 = vmatmul.mubr.f32.gmra.mrb[0].mxu0 %v2964
  %v3628 = vpop.f32.mrb[0].mxu0
  %v3629 = vadd.f32 0.0, %v3628
  %v3630 = vpop.f32.mrb[0].mxu0
  %3631 = vdwg.mxu0
  %v3633 = vsel %vm3142, %v3536, 0
  %v3636 = vsel %vm3142, %v3537, 0
  %v3639 = vsel %vm3142, %v3538, 0
  %v3642 = vsel %vm3142, %v3539, 0
  %3644 = vmatprep.subr.mxu0 0.0
  %3645 = vmatpush1.msra.mxu0 %v3624
  %3646 = vmatprep.subr.mxu0 0.0
  %3647 = vmatpush1.msra.mxu0 %v3629
  %3648 = vmatprep.subr.mxu0 0.0
  %3649 = vmatpush1.msra.mxu0 0.0
  %3650 = vmatprep.subr.mxu0 0.0
  %3651 = vmatpush1.msra.mxu0 0.0
  %3652 = vmatprep.subr.mxu0 0.0
  %3653 = vmatpush1.msra.mxu0 0.0
  %3654 = vmatprep.subr.mxu0 0.0
  %3655 = vmatpush1.msra.mxu0 0.0
  %3656 = vmatprep.subr.mxu0 0.0
  %3657 = vmatpush1.msra.mxu0 0.0
  %3658 = vmatprep.subr.mxu0 0.0
  %3659 = vmatpush1.msra.mxu0 0.0
  %3660 = vmatprep.subr.mxu0 0.0
  %3661 = vmatpush1.msra.mxu0 0.0
  %3662 = vmatprep.subr.mxu0 0.0
  %3663 = vmatpush1.msra.mxu0 0.0
  %3664 = vmatprep.subr.mxu0 0.0
  %3665 = vmatpush1.msra.mxu0 0.0
  %3666 = vmatprep.subr.mxu0 0.0
  %3667 = vmatpush1.msra.mxu0 0.0
  %3668 = vmatprep.subr.mxu0 0.0
  %3669 = vmatpush1.msra.mxu0 0.0
  %3670 = vmatprep.subr.mxu0 0.0
  %3671 = vmatpush1.msra.mxu0 0.0
  %3672 = vmatprep.subr.mxu0 0.0
  %3673 = vmatpush1.msra.mxu0 0.0
  %3674 = vmatprep.subr.mxu0 0.0
  %3675 = vmatpush1.msra.mxu0 0.0
  %3676 = vmatprep.subr.mxu0 0.0
  %3677 = vmatpush1.msra.mxu0 0.0
  %3678 = vmatprep.subr.mxu0 0.0
  %3679 = vmatpush1.msra.mxu0 0.0
  %3680 = vmatprep.subr.mxu0 0.0
  %3681 = vmatpush1.msra.mxu0 0.0
  %3682 = vmatprep.subr.mxu0 0.0
  %3683 = vmatpush1.msra.mxu0 0.0
  %3684 = vmatprep.subr.mxu0 0.0
  %3685 = vmatpush1.msra.mxu0 0.0
  %3686 = vmatprep.subr.mxu0 0.0
  %3687 = vmatpush1.msra.mxu0 0.0
  %3688 = vmatprep.subr.mxu0 0.0
  %3689 = vmatpush1.msra.mxu0 0.0
  %3690 = vmatprep.subr.mxu0 0.0
  %3691 = vmatpush1.msra.mxu0 0.0
  %3692 = vmatprep.subr.mxu0 0.0
  %3693 = vmatpush1.msra.mxu0 0.0
  %3694 = vmatprep.subr.mxu0 0.0
  %3695 = vmatpush1.msra.mxu0 0.0
  %3696 = vmatprep.subr.mxu0 0.0
  %3697 = vmatpush1.msra.mxu0 0.0
  %3698 = vmatprep.subr.mxu0 0.0
  %3699 = vmatpush1.msra.mxu0 0.0
  %3700 = vmatprep.subr.mxu0 0.0
  %3701 = vmatpush1.msra.mxu0 0.0
  %3702 = vmatprep.subr.mxu0 0.0
  %3703 = vmatpush1.msra.mxu0 0.0
  %3704 = vmatprep.subr.mxu0 0.0
  %3705 = vmatpush1.msra.mxu0 0.0
  %3706 = vmatprep.subr.mxu0 0.0
  %3707 = vmatpush1.msra.mxu0 0.0
  %3708 = vmatprep.mubr.f32.mxu0 0.0
  %3709 = vmatmul.mubr.f32.gmra.mrb[0].mxu0 %v3633
  %v3710 = vpop.f32.mrb[0].mxu0
  %v3711 = vadd.f32 0.0, %v3710
  %v3712 = vpop.f32.mrb[0].mxu0
  %3713 = vmatprep.mubr.f32.mxu0 0.0
  %3714 = vmatmul.mubr.f32.gmra.mrb[0].mxu0 %v3636
  %v3715 = vpop.f32.mrb[0].mxu0
  %v3716 = vadd.f32 0.0, %v3715
  %v3717 = vpop.f32.mrb[0].mxu0
  %3718 = vmatprep.mubr.f32.mxu0 0.0
  %3719 = vmatmul.mubr.f32.gmra.mrb[0].mxu0 %v3639
  %v3720 = vpop.f32.mrb[0].mxu0
  %v3721 = vadd.f32 0.0, %v3720
  %v3722 = vpop.f32.mrb[0].mxu0
  %3723 = vmatprep.mubr.f32.mxu0 0.0
  %3724 = vmatmul.mubr.f32.gmra.mrb[0].mxu0 %v3642
  %v3725 = vpop.f32.mrb[0].mxu0
  %v3726 = vadd.f32 0.0, %v3725
  %v3727 = vpop.f32.mrb[0].mxu0
  %3728 = vdwg.mxu0
  %v3729 = vadd.f32 %v3531, %v3711
  %v3730 = vadd.f32 %v3532, %v3716
  %v3731 = vadd.f32 %v3533, %v3721
  %v3732 = vadd.f32 %v3534, %v3726
  %s3733 = scalar_lea.vmem %s5, 128
  %v3734 = vld [vmem:[%s3733] sm:$0xff]
  %v3735 = vld [vmem:[%s3733 + $0x8] sm:$0xff]
  %v3736 = vld [vmem:[%s3733 + $0x10] sm:$0xff]
  %v3737 = vld [vmem:[%s3733 + $0x18] sm:$0xff]
  %s3738 = scalar_lea.vmem %s4, 416
  %v3739 = vld [vmem:[%s3738] sm:$0xff]
  %v3740 = vld [vmem:[%s3738 + $0x8] sm:$0xff]
  %v3741 = vld [vmem:[%s3738 + $0x10] sm:$0xff]
  %v3742 = vld [vmem:[%s3738 + $0x18] sm:$0xff]
  %v3743 = vld [vmem:[%s3738 + $0x20] sm:$0xff]
  %v3744 = vld [vmem:[%s3738 + $0x28] sm:$0xff]
  %v3745 = vld [vmem:[%s3738 + $0x30] sm:$0xff]
  %v3746 = vld [vmem:[%s3738 + $0x38] sm:$0xff]
  %v3747 = vld [vmem:[%s3738 + $0x40] sm:$0xff]
  %v3748 = vld [vmem:[%s3738 + $0x48] sm:$0xff]
  %v3749 = vld [vmem:[%s3738 + $0x50] sm:$0xff]
  %v3750 = vld [vmem:[%s3738 + $0x58] sm:$0xff]
  %v3751 = vld [vmem:[%s3738 + $0x60] sm:$0x3]
  %v3753 = vsel %vm2966, %v3751, 0
  %3755 = vmatprep.subr.mxu0 0.0
  %3756 = vmatpush1.msra.mxu0 %v3739
  %3757 = vmatprep.subr.mxu0 0.0
  %3758 = vmatpush1.msra.mxu0 %v3740
  %3759 = vmatprep.subr.mxu0 0.0
  %3760 = vmatpush1.msra.mxu0 %v3741
  %3761 = vmatprep.subr.mxu0 0.0
  %3762 = vmatpush1.msra.mxu0 %v3742
  %3763 = vmatprep.subr.mxu0 0.0
  %3764 = vmatpush1.msra.mxu0 %v3743
  %3765 = vmatprep.subr.mxu0 0.0
  %3766 = vmatpush1.msra.mxu0 %v3744
  %3767 = vmatprep.subr.mxu0 0.0
  %3768 = vmatpush1.msra.mxu0 %v3745
  %3769 = vmatprep.subr.mxu0 0.0
  %3770 = vmatpush1.msra.mxu0 %v3746
  %3771 = vmatprep.subr.mxu0 0.0
  %3772 = vmatpush1.msra.mxu0 %v3747
  %3773 = vmatprep.subr.mxu0 0.0
  %3774 = vmatpush1.msra.mxu0 %v3748
  %3775 = vmatprep.subr.mxu0 0.0
  %3776 = vmatpush1.msra.mxu0 %v3749
  %3777 = vmatprep.subr.mxu0 0.0
  %3778 = vmatpush1.msra.mxu0 %v3750
  %3779 = vmatprep.subr.mxu0 0.0
  %3780 = vmatpush1.msra.mxu0 %v3753
  %3781 = vmatprep.subr.mxu0 0.0
  %3782 = vmatpush1.msra.mxu0 0.0
  %3783 = vmatprep.subr.mxu0 0.0
  %3784 = vmatpush1.msra.mxu0 0.0
  %3785 = vmatprep.subr.mxu0 0.0
  %3786 = vmatpush1.msra.mxu0 0.0
  %3787 = vmatprep.subr.mxu0 0.0
  %3788 = vmatpush1.msra.mxu0 0.0
  %3789 = vmatprep.subr.mxu0 0.0
  %3790 = vmatpush1.msra.mxu0 0.0
  %3791 = vmatprep.subr.mxu0 0.0
  %3792 = vmatpush1.msra.mxu0 0.0
  %3793 = vmatprep.subr.mxu0 0.0
  %3794 = vmatpush1.msra.mxu0 0.0
  %3795 = vmatprep.subr.mxu0 0.0
  %3796 = vmatpush1.msra.mxu0 0.0
  %3797 = vmatprep.subr.mxu0 0.0
  %3798 = vmatpush1.msra.mxu0 0.0
  %3799 = vmatprep.subr.mxu0 0.0
  %3800 = vmatpush1.msra.mxu0 0.0
  %3801 = vmatprep.subr.mxu0 0.0
  %3802 = vmatpush1.msra.mxu0 0.0
  %3803 = vmatprep.subr.mxu0 0.0
  %3804 = vmatpush1.msra.mxu0 0.0
  %3805 = vmatprep.subr.mxu0 0.0
  %3806 = vmatpush1.msra.mxu0 0.0
  %3807 = vmatprep.subr.mxu0 0.0
  %3808 = vmatpush1.msra.mxu0 0.0
  %3809 = vmatprep.subr.mxu0 0.0
  %3810 = vmatpush1.msra.mxu0 0.0
  %3811 = vmatprep.subr.mxu0 0.0
  %3812 = vmatpush1.msra.mxu0 0.0
  %3813 = vmatprep.subr.mxu0 0.0
  %3814 = vmatpush1.msra.mxu0 0.0
  %3815 = vmatprep.subr.mxu0 0.0
  %3816 = vmatpush1.msra.mxu0 0.0
  %3817 = vmatprep.subr.mxu0 0.0
  %3818 = vmatpush1.msra.mxu0 0.0
  %3819 = vmatprep.mubr.f32.mxu0 0.0
  %3820 = vmatmul.mubr.f32.gmra.mrb[0].mxu0 %v2961
  %v3821 = vpop.f32.mrb[0].mxu0
  %v3822 = vadd.f32 0.0, %v3821
  %v3823 = vpop.f32.mrb[0].mxu0
  %3824 = vmatprep.mubr.f32.mxu0 0.0
  %3825 = vmatmul.mubr.f32.gmra.mrb[0].mxu0 %v2964
  %v3826 = vpop.f32.mrb[0].mxu0
  %v3827 = vadd.f32 0.0, %v3826
  %v3828 = vpop.f32.mrb[0].mxu0
  %3829 = vdwg.mxu0
  %v3831 = vsel %vm3142, %v3734, 0
  %v3834 = vsel %vm3142, %v3735, 0
  %v3837 = vsel %vm3142, %v3736, 0
  %v3840 = vsel %vm3142, %v3737, 0
  %3842 = vmatprep.subr.mxu0 0.0
  %3843 = vmatpush1.msra.mxu0 %v3822
  %3844 = vmatprep.subr.mxu0 0.0
  %3845 = vmatpush1.msra.mxu0 %v3827
  %3846 = vmatprep.subr.mxu0 0.0
  %3847 = vmatpush1.msra.mxu0 0.0
  %3848 = vmatprep.subr.mxu0 0.0
  %3849 = vmatpush1.msra.mxu0 0.0
  %3850 = vmatprep.subr.mxu0 0.0
  %3851 = vmatpush1.msra.mxu0 0.0
  %3852 = vmatprep.subr.mxu0 0.0
  %3853 = vmatpush1.msra.mxu0 0.0
  %3854 = vmatprep.subr.mxu0 0.0
  %3855 = vmatpush1.msra.mxu0 0.0
  %3856 = vmatprep.subr.mxu0 0.0
  %3857 = vmatpush1.msra.mxu0 0.0
  %3858 = vmatprep.subr.mxu0 0.0
  %3859 = vmatpush1.msra.mxu0 0.0
  %3860 = vmatprep.subr.mxu0 0.0
  %3861 = vmatpush1.msra.mxu0 0.0
  %3862 = vmatprep.subr.mxu0 0.0
  %3863 = vmatpush1.msra.mxu0 0.0
  %3864 = vmatprep.subr.mxu0 0.0
  %3865 = vmatpush1.msra.mxu0 0.0
  %3866 = vmatprep.subr.mxu0 0.0
  %3867 = vmatpush1.msra.mxu0 0.0
  %3868 = vmatprep.subr.mxu0 0.0
  %3869 = vmatpush1.msra.mxu0 0.0
  %3870 = vmatprep.subr.mxu0 0.0
  %3871 = vmatpush1.msra.mxu0 0.0
  %3872 = vmatprep.subr.mxu0 0.0
  %3873 = vmatpush1.msra.mxu0 0.0
  %3874 = vmatprep.subr.mxu0 0.0
  %3875 = vmatpush1.msra.mxu0 0.0
  %3876 = vmatprep.subr.mxu0 0.0
  %3877 = vmatpush1.msra.mxu0 0.0
  %3878 = vmatprep.subr.mxu0 0.0
  %3879 = vmatpush1.msra.mxu0 0.0
  %3880 = vmatprep.subr.mxu0 0.0
  %3881 = vmatpush1.msra.mxu0 0.0
  %3882 = vmatprep.subr.mxu0 0.0
  %3883 = vmatpush1.msra.mxu0 0.0
  %3884 = vmatprep.subr.mxu0 0.0
  %3885 = vmatpush1.msra.mxu0 0.0
  %3886 = vmatprep.subr.mxu0 0.0
  %3887 = vmatpush1.msra.mxu0 0.0
  %3888 = vmatprep.subr.mxu0 0.0
  %3889 = vmatpush1.msra.mxu0 0.0
  %3890 = vmatprep.subr.mxu0 0.0
  %3891 = vmatpush1.msra.mxu0 0.0
  %3892 = vmatprep.subr.mxu0 0.0
  %3893 = vmatpush1.msra.mxu0 0.0
  %3894 = vmatprep.subr.mxu0 0.0
  %3895 = vmatpush1.msra.mxu0 0.0
  %3896 = vmatprep.subr.mxu0 0.0
  %3897 = vmatpush1.msra.mxu0 0.0
  %3898 = vmatprep.subr.mxu0 0.0
  %3899 = vmatpush1.msra.mxu0 0.0
  %3900 = vmatprep.subr.mxu0 0.0
  %3901 = vmatpush1.msra.mxu0 0.0
  %3902 = vmatprep.subr.mxu0 0.0
  %3903 = vmatpush1.msra.mxu0 0.0
  %3904 = vmatprep.subr.mxu0 0.0
  %3905 = vmatpush1.msra.mxu0 0.0
  %3906 = vmatprep.mubr.f32.mxu0 0.0
  %3907 = vmatmul.mubr.f32.gmra.mrb[0].mxu0 %v3831
  %v3908 = vpop.f32.mrb[0].mxu0
  %v3909 = vadd.f32 0.0, %v3908
  %v3910 = vpop.f32.mrb[0].mxu0
  %3911 = vmatprep.mubr.f32.mxu0 0.0
  %3912 = vmatmul.mubr.f32.gmra.mrb[0].mxu0 %v3834
  %v3913 = vpop.f32.mrb[0].mxu0
  %v3914 = vadd.f32 0.0, %v3913
  %v3915 = vpop.f32.mrb[0].mxu0
  %3916 = vmatprep.mubr.f32.mxu0 0.0
  %3917 = vmatmul.mubr.f32.gmra.mrb[0].mxu0 %v3837
  %v3918 = vpop.f32.mrb[0].mxu0
  %v3919 = vadd.f32 0.0, %v3918
  %v3920 = vpop.f32.mrb[0].mxu0
  %3921 = vmatprep.mubr.f32.mxu0 0.0
  %3922 = vmatmul.mubr.f32.gmra.mrb[0].mxu0 %v3840
  %v3923 = vpop.f32.mrb[0].mxu0
  %v3924 = vadd.f32 0.0, %v3923
  %v3925 = vpop.f32.mrb[0].mxu0
  %3926 = vdwg.mxu0
  %v3927 = vadd.f32 %v3729, %v3909
  %v3928 = vadd.f32 %v3730, %v3914
  %v3929 = vadd.f32 %v3731, %v3919
  %v3930 = vadd.f32 %v3732, %v3924
  %s3931 = scalar_lea.vmem %s5, 160
  %v3932 = vld [vmem:[%s3931] sm:$0xff]
  %v3933 = vld [vmem:[%s3931 + $0x8] sm:$0xff]
  %v3934 = vld [vmem:[%s3931 + $0x10] sm:$0xff]
  %v3935 = vld [vmem:[%s3931 + $0x18] sm:$0xff]
  %s3936 = scalar_lea.vmem %s4, 520
  %v3937 = vld [vmem:[%s3936] sm:$0xff]
  %v3938 = vld [vmem:[%s3936 + $0x8] sm:$0xff]
  %v3939 = vld [vmem:[%s3936 + $0x10] sm:$0xff]
  %v3940 = vld [vmem:[%s3936 + $0x18] sm:$0xff]
  %v3941 = vld [vmem:[%s3936 + $0x20] sm:$0xff]
  %v3942 = vld [vmem:[%s3936 + $0x28] sm:$0xff]
  %v3943 = vld [vmem:[%s3936 + $0x30] sm:$0xff]
  %v3944 = vld [vmem:[%s3936 + $0x38] sm:$0xff]
  %v3945 = vld [vmem:[%s3936 + $0x40] sm:$0xff]
  %v3946 = vld [vmem:[%s3936 + $0x48] sm:$0xff]
  %v3947 = vld [vmem:[%s3936 + $0x50] sm:$0xff]
  %v3948 = vld [vmem:[%s3936 + $0x58] sm:$0xff]
  %v3949 = vld [vmem:[%s3936 + $0x60] sm:$0x3]
  %v3951 = vsel %vm2966, %v3949, 0
  %3953 = vmatprep.subr.mxu0 0.0
  %3954 = vmatpush1.msra.mxu0 %v3937
  %3955 = vmatprep.subr.mxu0 0.0
  %3956 = vmatpush1.msra.mxu0 %v3938
  %3957 = vmatprep.subr.mxu0 0.0
  %3958 = vmatpush1.msra.mxu0 %v3939
  %3959 = vmatprep.subr.mxu0 0.0
  %3960 = vmatpush1.msra.mxu0 %v3940
  %3961 = vmatprep.subr.mxu0 0.0
  %3962 = vmatpush1.msra.mxu0 %v3941
  %3963 = vmatprep.subr.mxu0 0.0
  %3964 = vmatpush1.msra.mxu0 %v3942
  %3965 = vmatprep.subr.mxu0 0.0
  %3966 = vmatpush1.msra.mxu0 %v3943
  %3967 = vmatprep.subr.mxu0 0.0
  %3968 = vmatpush1.msra.mxu0 %v3944
  %3969 = vmatprep.subr.mxu0 0.0
  %3970 = vmatpush1.msra.mxu0 %v3945
  %3971 = vmatprep.subr.mxu0 0.0
  %3972 = vmatpush1.msra.mxu0 %v3946
  %3973 = vmatprep.subr.mxu0 0.0
  %3974 = vmatpush1.msra.mxu0 %v3947
  %3975 = vmatprep.subr.mxu0 0.0
  %3976 = vmatpush1.msra.mxu0 %v3948
  %3977 = vmatprep.subr.mxu0 0.0
  %3978 = vmatpush1.msra.mxu0 %v3951
  %3979 = vmatprep.subr.mxu0 0.0
  %3980 = vmatpush1.msra.mxu0 0.0
  %3981 = vmatprep.subr.mxu0 0.0
  %3982 = vmatpush1.msra.mxu0 0.0
  %3983 = vmatprep.subr.mxu0 0.0
  %3984 = vmatpush1.msra.mxu0 0.0
  %3985 = vmatprep.subr.mxu0 0.0
  %3986 = vmatpush1.msra.mxu0 0.0
  %3987 = vmatprep.subr.mxu0 0.0
  %3988 = vmatpush1.msra.mxu0 0.0
  %3989 = vmatprep.subr.mxu0 0.0
  %3990 = vmatpush1.msra.mxu0 0.0
  %3991 = vmatprep.subr.mxu0 0.0
  %3992 = vmatpush1.msra.mxu0 0.0
  %3993 = vmatprep.subr.mxu0 0.0
  %3994 = vmatpush1.msra.mxu0 0.0
  %3995 = vmatprep.subr.mxu0 0.0
  %3996 = vmatpush1.msra.mxu0 0.0
  %3997 = vmatprep.subr.mxu0 0.0
  %3998 = vmatpush1.msra.mxu0 0.0
  %3999 = vmatprep.subr.mxu0 0.0
  %4000 = vmatpush1.msra.mxu0 0.0
  %4001 = vmatprep.subr.mxu0 0.0
  %4002 = vmatpush1.msra.mxu0 0.0
  %4003 = vmatprep.subr.mxu0 0.0
  %4004 = vmatpush1.msra.mxu0 0.0
  %4005 = vmatprep.subr.mxu0 0.0
  %4006 = vmatpush1.msra.mxu0 0.0
  %4007 = vmatprep.subr.mxu0 0.0
  %4008 = vmatpush1.msra.mxu0 0.0
  %4009 = vmatprep.subr.mxu0 0.0
  %4010 = vmatpush1.msra.mxu0 0.0
  %4011 = vmatprep.subr.mxu0 0.0
  %4012 = vmatpush1.msra.mxu0 0.0
  %4013 = vmatprep.subr.mxu0 0.0
  %4014 = vmatpush1.msra.mxu0 0.0
  %4015 = vmatprep.subr.mxu0 0.0
  %4016 = vmatpush1.msra.mxu0 0.0
  %4017 = vmatprep.mubr.f32.mxu0 0.0
  %4018 = vmatmul.mubr.f32.gmra.mrb[0].mxu0 %v2961
  %v4019 = vpop.f32.mrb[0].mxu0
  %v4020 = vadd.f32 0.0, %v4019
  %v4021 = vpop.f32.mrb[0].mxu0
  %4022 = vmatprep.mubr.f32.mxu0 0.0
  %4023 = vmatmul.mubr.f32.gmra.mrb[0].mxu0 %v2964
  %v4024 = vpop.f32.mrb[0].mxu0
  %v4025 = vadd.f32 0.0, %v4024
  %v4026 = vpop.f32.mrb[0].mxu0
  %4027 = vdwg.mxu0
  %v4029 = vsel %vm3142, %v3932, 0
  %v4032 = vsel %vm3142, %v3933, 0
  %v4035 = vsel %vm3142, %v3934, 0
  %v4038 = vsel %vm3142, %v3935, 0
  %4040 = vmatprep.subr.mxu0 0.0
  %4041 = vmatpush1.msra.mxu0 %v4020
  %4042 = vmatprep.subr.mxu0 0.0
  %4043 = vmatpush1.msra.mxu0 %v4025
  %4044 = vmatprep.subr.mxu0 0.0
  %4045 = vmatpush1.msra.mxu0 0.0
  %4046 = vmatprep.subr.mxu0 0.0
  %4047 = vmatpush1.msra.mxu0 0.0
  %4048 = vmatprep.subr.mxu0 0.0
  %4049 = vmatpush1.msra.mxu0 0.0
  %4050 = vmatprep.subr.mxu0 0.0
  %4051 = vmatpush1.msra.mxu0 0.0
  %4052 = vmatprep.subr.mxu0 0.0
  %4053 = vmatpush1.msra.mxu0 0.0
  %4054 = vmatprep.subr.mxu0 0.0
  %4055 = vmatpush1.msra.mxu0 0.0
  %4056 = vmatprep.subr.mxu0 0.0
  %4057 = vmatpush1.msra.mxu0 0.0
  %4058 = vmatprep.subr.mxu0 0.0
  %4059 = vmatpush1.msra.mxu0 0.0
  %4060 = vmatprep.subr.mxu0 0.0
  %4061 = vmatpush1.msra.mxu0 0.0
  %4062 = vmatprep.subr.mxu0 0.0
  %4063 = vmatpush1.msra.mxu0 0.0
  %4064 = vmatprep.subr.mxu0 0.0
  %4065 = vmatpush1.msra.mxu0 0.0
  %4066 = vmatprep.subr.mxu0 0.0
  %4067 = vmatpush1.msra.mxu0 0.0
  %4068 = vmatprep.subr.mxu0 0.0
  %4069 = vmatpush1.msra.mxu0 0.0
  %4070 = vmatprep.subr.mxu0 0.0
  %4071 = vmatpush1.msra.mxu0 0.0
  %4072 = vmatprep.subr.mxu0 0.0
  %4073 = vmatpush1.msra.mxu0 0.0
  %4074 = vmatprep.subr.mxu0 0.0
  %4075 = vmatpush1.msra.mxu0 0.0
  %4076 = vmatprep.subr.mxu0 0.0
  %4077 = vmatpush1.msra.mxu0 0.0
  %4078 = vmatprep.subr.mxu0 0.0
  %4079 = vmatpush1.msra.mxu0 0.0
  %4080 = vmatprep.subr.mxu0 0.0
  %4081 = vmatpush1.msra.mxu0 0.0
  %4082 = vmatprep.subr.mxu0 0.0
  %4083 = vmatpush1.msra.mxu0 0.0
  %4084 = vmatprep.subr.mxu0 0.0
  %4085 = vmatpush1.msra.mxu0 0.0
  %4086 = vmatprep.subr.mxu0 0.0
  %4087 = vmatpush1.msra.mxu0 0.0
  %4088 = vmatprep.subr.mxu0 0.0
  %4089 = vmatpush1.msra.mxu0 0.0
  %4090 = vmatprep.subr.mxu0 0.0
  %4091 = vmatpush1.msra.mxu0 0.0
  %4092 = vmatprep.subr.mxu0 0.0
  %4093 = vmatpush1.msra.mxu0 0.0
  %4094 = vmatprep.subr.mxu0 0.0
  %4095 = vmatpush1.msra.mxu0 0.0
  %4096 = vmatprep.subr.mxu0 0.0
  %4097 = vmatpush1.msra.mxu0 0.0
  %4098 = vmatprep.subr.mxu0 0.0
  %4099 = vmatpush1.msra.mxu0 0.0
  %4100 = vmatprep.subr.mxu0 0.0
  %4101 = vmatpush1.msra.mxu0 0.0
  %4102 = vmatprep.subr.mxu0 0.0
  %4103 = vmatpush1.msra.mxu0 0.0
  %4104 = vmatprep.mubr.f32.mxu0 0.0
  %4105 = vmatmul.mubr.f32.gmra.mrb[0].mxu0 %v4029
  %v4106 = vpop.f32.mrb[0].mxu0
  %v4107 = vadd.f32 0.0, %v4106
  %v4108 = vpop.f32.mrb[0].mxu0
  %4109 = vmatprep.mubr.f32.mxu0 0.0
  %4110 = vmatmul.mubr.f32.gmra.mrb[0].mxu0 %v4032
  %v4111 = vpop.f32.mrb[0].mxu0
  %v4112 = vadd.f32 0.0, %v4111
  %v4113 = vpop.f32.mrb[0].mxu0
  %4114 = vmatprep.mubr.f32.mxu0 0.0
  %4115 = vmatmul.mubr.f32.gmra.mrb[0].mxu0 %v4035
  %v4116 = vpop.f32.mrb[0].mxu0
  %v4117 = vadd.f32 0.0, %v4116
  %v4118 = vpop.f32.mrb[0].mxu0
  %4119 = vmatprep.mubr.f32.mxu0 0.0
  %4120 = vmatmul.mubr.f32.gmra.mrb[0].mxu0 %v4038
  %v4121 = vpop.f32.mrb[0].mxu0
  %v4122 = vadd.f32 0.0, %v4121
  %v4123 = vpop.f32.mrb[0].mxu0
  %4124 = vdwg.mxu0
  %v4125 = vadd.f32 %v3927, %v4107
  %v4126 = vadd.f32 %v3928, %v4112
  %v4127 = vadd.f32 %v3929, %v4117
  %v4128 = vadd.f32 %v3930, %v4122
  %s4129 = scalar_lea.vmem %s5, 192
  %v4130 = vld [vmem:[%s4129] sm:$0xff]
  %v4131 = vld [vmem:[%s4129 + $0x8] sm:$0xff]
  %v4132 = vld [vmem:[%s4129 + $0x10] sm:$0xff]
  %v4133 = vld [vmem:[%s4129 + $0x18] sm:$0xff]
  %s4134 = scalar_lea.vmem %s4, 624
  %v4135 = vld [vmem:[%s4134] sm:$0xff]
  %v4136 = vld [vmem:[%s4134 + $0x8] sm:$0xff]
  %v4137 = vld [vmem:[%s4134 + $0x10] sm:$0xff]
  %v4138 = vld [vmem:[%s4134 + $0x18] sm:$0xff]
  %v4139 = vld [vmem:[%s4134 + $0x20] sm:$0xff]
  %v4140 = vld [vmem:[%s4134 + $0x28] sm:$0xff]
  %v4141 = vld [vmem:[%s4134 + $0x30] sm:$0xff]
  %v4142 = vld [vmem:[%s4134 + $0x38] sm:$0xff]
  %v4143 = vld [vmem:[%s4134 + $0x40] sm:$0xff]
  %v4144 = vld [vmem:[%s4134 + $0x48] sm:$0xff]
  %v4145 = vld [vmem:[%s4134 + $0x50] sm:$0xff]
  %v4146 = vld [vmem:[%s4134 + $0x58] sm:$0xff]
  %v4147 = vld [vmem:[%s4134 + $0x60] sm:$0x3]
  %v4149 = vsel %vm2966, %v4147, 0
  %4151 = vmatprep.subr.mxu0 0.0
  %4152 = vmatpush1.msra.mxu0 %v4135
  %4153 = vmatprep.subr.mxu0 0.0
  %4154 = vmatpush1.msra.mxu0 %v4136
  %4155 = vmatprep.subr.mxu0 0.0
  %4156 = vmatpush1.msra.mxu0 %v4137
  %4157 = vmatprep.subr.mxu0 0.0
  %4158 = vmatpush1.msra.mxu0 %v4138
  %4159 = vmatprep.subr.mxu0 0.0
  %4160 = vmatpush1.msra.mxu0 %v4139
  %4161 = vmatprep.subr.mxu0 0.0
  %4162 = vmatpush1.msra.mxu0 %v4140
  %4163 = vmatprep.subr.mxu0 0.0
  %4164 = vmatpush1.msra.mxu0 %v4141
  %4165 = vmatprep.subr.mxu0 0.0
  %4166 = vmatpush1.msra.mxu0 %v4142
  %4167 = vmatprep.subr.mxu0 0.0
  %4168 = vmatpush1.msra.mxu0 %v4143
  %4169 = vmatprep.subr.mxu0 0.0
  %4170 = vmatpush1.msra.mxu0 %v4144
  %4171 = vmatprep.subr.mxu0 0.0
  %4172 = vmatpush1.msra.mxu0 %v4145
  %4173 = vmatprep.subr.mxu0 0.0
  %4174 = vmatpush1.msra.mxu0 %v4146
  %4175 = vmatprep.subr.mxu0 0.0
  %4176 = vmatpush1.msra.mxu0 %v4149
  %4177 = vmatprep.subr.mxu0 0.0
  %4178 = vmatpush1.msra.mxu0 0.0
  %4179 = vmatprep.subr.mxu0 0.0
  %4180 = vmatpush1.msra.mxu0 0.0
  %4181 = vmatprep.subr.mxu0 0.0
  %4182 = vmatpush1.msra.mxu0 0.0
  %4183 = vmatprep.subr.mxu0 0.0
  %4184 = vmatpush1.msra.mxu0 0.0
  %4185 = vmatprep.subr.mxu0 0.0
  %4186 = vmatpush1.msra.mxu0 0.0
  %4187 = vmatprep.subr.mxu0 0.0
  %4188 = vmatpush1.msra.mxu0 0.0
  %4189 = vmatprep.subr.mxu0 0.0
  %4190 = vmatpush1.msra.mxu0 0.0
  %4191 = vmatprep.subr.mxu0 0.0
  %4192 = vmatpush1.msra.mxu0 0.0
  %4193 = vmatprep.subr.mxu0 0.0
  %4194 = vmatpush1.msra.mxu0 0.0
  %4195 = vmatprep.subr.mxu0 0.0
  %4196 = vmatpush1.msra.mxu0 0.0
  %4197 = vmatprep.subr.mxu0 0.0
  %4198 = vmatpush1.msra.mxu0 0.0
  %4199 = vmatprep.subr.mxu0 0.0
  %4200 = vmatpush1.msra.mxu0 0.0
  %4201 = vmatprep.subr.mxu0 0.0
  %4202 = vmatpush1.msra.mxu0 0.0
  %4203 = vmatprep.subr.mxu0 0.0
  %4204 = vmatpush1.msra.mxu0 0.0
  %4205 = vmatprep.subr.mxu0 0.0
  %4206 = vmatpush1.msra.mxu0 0.0
  %4207 = vmatprep.subr.mxu0 0.0
  %4208 = vmatpush1.msra.mxu0 0.0
  %4209 = vmatprep.subr.mxu0 0.0
  %4210 = vmatpush1.msra.mxu0 0.0
  %4211 = vmatprep.subr.mxu0 0.0
  %4212 = vmatpush1.msra.mxu0 0.0
  %4213 = vmatprep.subr.mxu0 0.0
  %4214 = vmatpush1.msra.mxu0 0.0
  %4215 = vmatprep.mubr.f32.mxu0 0.0
  %4216 = vmatmul.mubr.f32.gmra.mrb[0].mxu0 %v2961
  %v4217 = vpop.f32.mrb[0].mxu0
  %v4218 = vadd.f32 0.0, %v4217
  %v4219 = vpop.f32.mrb[0].mxu0
  %4220 = vmatprep.mubr.f32.mxu0 0.0
  %4221 = vmatmul.mubr.f32.gmra.mrb[0].mxu0 %v2964
  %v4222 = vpop.f32.mrb[0].mxu0
  %v4223 = vadd.f32 0.0, %v4222
  %v4224 = vpop.f32.mrb[0].mxu0
  %4225 = vdwg.mxu0
  %v4227 = vsel %vm3142, %v4130, 0
  %v4230 = vsel %vm3142, %v4131, 0
  %v4233 = vsel %vm3142, %v4132, 0
  %v4236 = vsel %vm3142, %v4133, 0
  %4238 = vmatprep.subr.mxu0 0.0
  %4239 = vmatpush1.msra.mxu0 %v4218
  %4240 = vmatprep.subr.mxu0 0.0
  %4241 = vmatpush1.msra.mxu0 %v4223
  %4242 = vmatprep.subr.mxu0 0.0
  %4243 = vmatpush1.msra.mxu0 0.0
  %4244 = vmatprep.subr.mxu0 0.0
  %4245 = vmatpush1.msra.mxu0 0.0
  %4246 = vmatprep.subr.mxu0 0.0
  %4247 = vmatpush1.msra.mxu0 0.0
  %4248 = vmatprep.subr.mxu0 0.0
  %4249 = vmatpush1.msra.mxu0 0.0
  %4250 = vmatprep.subr.mxu0 0.0
  %4251 = vmatpush1.msra.mxu0 0.0
  %4252 = vmatprep.subr.mxu0 0.0
  %4253 = vmatpush1.msra.mxu0 0.0
  %4254 = vmatprep.subr.mxu0 0.0
  %4255 = vmatpush1.msra.mxu0 0.0
  %4256 = vmatprep.subr.mxu0 0.0
  %4257 = vmatpush1.msra.mxu0 0.0
  %4258 = vmatprep.subr.mxu0 0.0
  %4259 = vmatpush1.msra.mxu0 0.0
  %4260 = vmatprep.subr.mxu0 0.0
  %4261 = vmatpush1.msra.mxu0 0.0
  %4262 = vmatprep.subr.mxu0 0.0
  %4263 = vmatpush1.msra.mxu0 0.0
  %4264 = vmatprep.subr.mxu0 0.0
  %4265 = vmatpush1.msra.mxu0 0.0
  %4266 = vmatprep.subr.mxu0 0.0
  %4267 = vmatpush1.msra.mxu0 0.0
  %4268 = vmatprep.subr.mxu0 0.0
  %4269 = vmatpush1.msra.mxu0 0.0
  %4270 = vmatprep.subr.mxu0 0.0
  %4271 = vmatpush1.msra.mxu0 0.0
  %4272 = vmatprep.subr.mxu0 0.0
  %4273 = vmatpush1.msra.mxu0 0.0
  %4274 = vmatprep.subr.mxu0 0.0
  %4275 = vmatpush1.msra.mxu0 0.0
  %4276 = vmatprep.subr.mxu0 0.0
  %4277 = vmatpush1.msra.mxu0 0.0
  %4278 = vmatprep.subr.mxu0 0.0
  %4279 = vmatpush1.msra.mxu0 0.0
  %4280 = vmatprep.subr.mxu0 0.0
  %4281 = vmatpush1.msra.mxu0 0.0
  %4282 = vmatprep.subr.mxu0 0.0
  %4283 = vmatpush1.msra.mxu0 0.0
  %4284 = vmatprep.subr.mxu0 0.0
  %4285 = vmatpush1.msra.mxu0 0.0
  %4286 = vmatprep.subr.mxu0 0.0
  %4287 = vmatpush1.msra.mxu0 0.0
  %4288 = vmatprep.subr.mxu0 0.0
  %4289 = vmatpush1.msra.mxu0 0.0
  %4290 = vmatprep.subr.mxu0 0.0
  %4291 = vmatpush1.msra.mxu0 0.0
  %4292 = vmatprep.subr.mxu0 0.0
  %4293 = vmatpush1.msra.mxu0 0.0
  %4294 = vmatprep.subr.mxu0 0.0
  %4295 = vmatpush1.msra.mxu0 0.0
  %4296 = vmatprep.subr.mxu0 0.0
  %4297 = vmatpush1.msra.mxu0 0.0
  %4298 = vmatprep.subr.mxu0 0.0
  %4299 = vmatpush1.msra.mxu0 0.0
  %4300 = vmatprep.subr.mxu0 0.0
  %4301 = vmatpush1.msra.mxu0 0.0
  %4302 = vmatprep.mubr.f32.mxu0 0.0
  %4303 = vmatmul.mubr.f32.gmra.mrb[0].mxu0 %v4227
  %v4304 = vpop.f32.mrb[0].mxu0
  %v4305 = vadd.f32 0.0, %v4304
  %v4306 = vpop.f32.mrb[0].mxu0
  %4307 = vmatprep.mubr.f32.mxu0 0.0
  %4308 = vmatmul.mubr.f32.gmra.mrb[0].mxu0 %v4230
  %v4309 = vpop.f32.mrb[0].mxu0
  %v4310 = vadd.f32 0.0, %v4309
  %v4311 = vpop.f32.mrb[0].mxu0
  %4312 = vmatprep.mubr.f32.mxu0 0.0
  %4313 = vmatmul.mubr.f32.gmra.mrb[0].mxu0 %v4233
  %v4314 = vpop.f32.mrb[0].mxu0
  %v4315 = vadd.f32 0.0, %v4314
  %v4316 = vpop.f32.mrb[0].mxu0
  %4317 = vmatprep.mubr.f32.mxu0 0.0
  %4318 = vmatmul.mubr.f32.gmra.mrb[0].mxu0 %v4236
  %v4319 = vpop.f32.mrb[0].mxu0
  %v4320 = vadd.f32 0.0, %v4319
  %v4321 = vpop.f32.mrb[0].mxu0
  %4322 = vdwg.mxu0
  %v4323 = vadd.f32 %v4125, %v4305
  %v4324 = vadd.f32 %v4126, %v4310
  %v4325 = vadd.f32 %v4127, %v4315
  %v4326 = vadd.f32 %v4128, %v4320
  %s4327 = scalar_lea.vmem %s5, 224
  %v4328 = vld [vmem:[%s4327] sm:$0xff]
  %v4329 = vld [vmem:[%s4327 + $0x8] sm:$0xff]
  %v4330 = vld [vmem:[%s4327 + $0x10] sm:$0xff]
  %v4331 = vld [vmem:[%s4327 + $0x18] sm:$0xff]
  %s4332 = scalar_lea.vmem %s4, 728
  %v4333 = vld [vmem:[%s4332] sm:$0xff]
  %v4334 = vld [vmem:[%s4332 + $0x8] sm:$0xff]
  %v4335 = vld [vmem:[%s4332 + $0x10] sm:$0xff]
  %v4336 = vld [vmem:[%s4332 + $0x18] sm:$0xff]
  %v4337 = vld [vmem:[%s4332 + $0x20] sm:$0xff]
  %v4338 = vld [vmem:[%s4332 + $0x28] sm:$0xff]
  %v4339 = vld [vmem:[%s4332 + $0x30] sm:$0xff]
  %v4340 = vld [vmem:[%s4332 + $0x38] sm:$0xff]
  %v4341 = vld [vmem:[%s4332 + $0x40] sm:$0xff]
  %v4342 = vld [vmem:[%s4332 + $0x48] sm:$0xff]
  %v4343 = vld [vmem:[%s4332 + $0x50] sm:$0xff]
  %v4344 = vld [vmem:[%s4332 + $0x58] sm:$0xff]
  %v4345 = vld [vmem:[%s4332 + $0x60] sm:$0x3]
  %v4347 = vsel %vm2966, %v4345, 0
  %4349 = vmatprep.subr.mxu0 0.0
  %4350 = vmatpush1.msra.mxu0 %v4333
  %4351 = vmatprep.subr.mxu0 0.0
  %4352 = vmatpush1.msra.mxu0 %v4334
  %4353 = vmatprep.subr.mxu0 0.0
  %4354 = vmatpush1.msra.mxu0 %v4335
  %4355 = vmatprep.subr.mxu0 0.0
  %4356 = vmatpush1.msra.mxu0 %v4336
  %4357 = vmatprep.subr.mxu0 0.0
  %4358 = vmatpush1.msra.mxu0 %v4337
  %4359 = vmatprep.subr.mxu0 0.0
  %4360 = vmatpush1.msra.mxu0 %v4338
  %4361 = vmatprep.subr.mxu0 0.0
  %4362 = vmatpush1.msra.mxu0 %v4339
  %4363 = vmatprep.subr.mxu0 0.0
  %4364 = vmatpush1.msra.mxu0 %v4340
  %4365 = vmatprep.subr.mxu0 0.0
  %4366 = vmatpush1.msra.mxu0 %v4341
  %4367 = vmatprep.subr.mxu0 0.0
  %4368 = vmatpush1.msra.mxu0 %v4342
  %4369 = vmatprep.subr.mxu0 0.0
  %4370 = vmatpush1.msra.mxu0 %v4343
  %4371 = vmatprep.subr.mxu0 0.0
  %4372 = vmatpush1.msra.mxu0 %v4344
  %4373 = vmatprep.subr.mxu0 0.0
  %4374 = vmatpush1.msra.mxu0 %v4347
  %4375 = vmatprep.subr.mxu0 0.0
  %4376 = vmatpush1.msra.mxu0 0.0
  %4377 = vmatprep.subr.mxu0 0.0
  %4378 = vmatpush1.msra.mxu0 0.0
  %4379 = vmatprep.subr.mxu0 0.0
  %4380 = vmatpush1.msra.mxu0 0.0
  %4381 = vmatprep.subr.mxu0 0.0
  %4382 = vmatpush1.msra.mxu0 0.0
  %4383 = vmatprep.subr.mxu0 0.0
  %4384 = vmatpush1.msra.mxu0 0.0
  %4385 = vmatprep.subr.mxu0 0.0
  %4386 = vmatpush1.msra.mxu0 0.0
  %4387 = vmatprep.subr.mxu0 0.0
  %4388 = vmatpush1.msra.mxu0 0.0
  %4389 = vmatprep.subr.mxu0 0.0
  %4390 = vmatpush1.msra.mxu0 0.0
  %4391 = vmatprep.subr.mxu0 0.0
  %4392 = vmatpush1.msra.mxu0 0.0
  %4393 = vmatprep.subr.mxu0 0.0
  %4394 = vmatpush1.msra.mxu0 0.0
  %4395 = vmatprep.subr.mxu0 0.0
  %4396 = vmatpush1.msra.mxu0 0.0
  %4397 = vmatprep.subr.mxu0 0.0
  %4398 = vmatpush1.msra.mxu0 0.0
  %4399 = vmatprep.subr.mxu0 0.0
  %4400 = vmatpush1.msra.mxu0 0.0
  %4401 = vmatprep.subr.mxu0 0.0
  %4402 = vmatpush1.msra.mxu0 0.0
  %4403 = vmatprep.subr.mxu0 0.0
  %4404 = vmatpush1.msra.mxu0 0.0
  %4405 = vmatprep.subr.mxu0 0.0
  %4406 = vmatpush1.msra.mxu0 0.0
  %4407 = vmatprep.subr.mxu0 0.0
  %4408 = vmatpush1.msra.mxu0 0.0
  %4409 = vmatprep.subr.mxu0 0.0
  %4410 = vmatpush1.msra.mxu0 0.0
  %4411 = vmatprep.subr.mxu0 0.0
  %4412 = vmatpush1.msra.mxu0 0.0
  %4413 = vmatprep.mubr.f32.mxu0 0.0
  %4414 = vmatmul.mubr.f32.gmra.mrb[0].mxu0 %v2961
  %v4415 = vpop.f32.mrb[0].mxu0
  %v4416 = vadd.f32 0.0, %v4415
  %v4417 = vpop.f32.mrb[0].mxu0
  %4418 = vmatprep.mubr.f32.mxu0 0.0
  %4419 = vmatmul.mubr.f32.gmra.mrb[0].mxu0 %v2964
  %v4420 = vpop.f32.mrb[0].mxu0
  %v4421 = vadd.f32 0.0, %v4420
  %v4422 = vpop.f32.mrb[0].mxu0
  %4423 = vdwg.mxu0
  %v4425 = vsel %vm3142, %v4328, 0
  %v4428 = vsel %vm3142, %v4329, 0
  %v4431 = vsel %vm3142, %v4330, 0
  %v4434 = vsel %vm3142, %v4331, 0
  %4436 = vmatprep.subr.mxu0 0.0
  %4437 = vmatpush1.msra.mxu0 %v4416
  %4438 = vmatprep.subr.mxu0 0.0
  %4439 = vmatpush1.msra.mxu0 %v4421
  %4440 = vmatprep.subr.mxu0 0.0
  %4441 = vmatpush1.msra.mxu0 0.0
  %4442 = vmatprep.subr.mxu0 0.0
  %4443 = vmatpush1.msra.mxu0 0.0
  %4444 = vmatprep.subr.mxu0 0.0
  %4445 = vmatpush1.msra.mxu0 0.0
  %4446 = vmatprep.subr.mxu0 0.0
  %4447 = vmatpush1.msra.mxu0 0.0
  %4448 = vmatprep.subr.mxu0 0.0
  %4449 = vmatpush1.msra.mxu0 0.0
  %4450 = vmatprep.subr.mxu0 0.0
  %4451 = vmatpush1.msra.mxu0 0.0
  %4452 = vmatprep.subr.mxu0 0.0
  %4453 = vmatpush1.msra.mxu0 0.0
  %4454 = vmatprep.subr.mxu0 0.0
  %4455 = vmatpush1.msra.mxu0 0.0
  %4456 = vmatprep.subr.mxu0 0.0
  %4457 = vmatpush1.msra.mxu0 0.0
  %4458 = vmatprep.subr.mxu0 0.0
  %4459 = vmatpush1.msra.mxu0 0.0
  %4460 = vmatprep.subr.mxu0 0.0
  %4461 = vmatpush1.msra.mxu0 0.0
  %4462 = vmatprep.subr.mxu0 0.0
  %4463 = vmatpush1.msra.mxu0 0.0
  %4464 = vmatprep.subr.mxu0 0.0
  %4465 = vmatpush1.msra.mxu0 0.0
  %4466 = vmatprep.subr.mxu0 0.0
  %4467 = vmatpush1.msra.mxu0 0.0
  %4468 = vmatprep.subr.mxu0 0.0
  %4469 = vmatpush1.msra.mxu0 0.0
  %4470 = vmatprep.subr.mxu0 0.0
  %4471 = vmatpush1.msra.mxu0 0.0
  %4472 = vmatprep.subr.mxu0 0.0
  %4473 = vmatpush1.msra.mxu0 0.0
  %4474 = vmatprep.subr.mxu0 0.0
  %4475 = vmatpush1.msra.mxu0 0.0
  %4476 = vmatprep.subr.mxu0 0.0
  %4477 = vmatpush1.msra.mxu0 0.0
  %4478 = vmatprep.subr.mxu0 0.0
  %4479 = vmatpush1.msra.mxu0 0.0
  %4480 = vmatprep.subr.mxu0 0.0
  %4481 = vmatpush1.msra.mxu0 0.0
  %4482 = vmatprep.subr.mxu0 0.0
  %4483 = vmatpush1.msra.mxu0 0.0
  %4484 = vmatprep.subr.mxu0 0.0
  %4485 = vmatpush1.msra.mxu0 0.0
  %4486 = vmatprep.subr.mxu0 0.0
  %4487 = vmatpush1.msra.mxu0 0.0
  %4488 = vmatprep.subr.mxu0 0.0
  %4489 = vmatpush1.msra.mxu0 0.0
  %4490 = vmatprep.subr.mxu0 0.0
  %4491 = vmatpush1.msra.mxu0 0.0
  %4492 = vmatprep.subr.mxu0 0.0
  %4493 = vmatpush1.msra.mxu0 0.0
  %4494 = vmatprep.subr.mxu0 0.0
  %4495 = vmatpush1.msra.mxu0 0.0
  %4496 = vmatprep.subr.mxu0 0.0
  %4497 = vmatpush1.msra.mxu0 0.0
  %4498 = vmatprep.subr.mxu0 0.0
  %4499 = vmatpush1.msra.mxu0 0.0
  %4500 = vmatprep.mubr.f32.mxu0 0.0
  %4501 = vmatmul.mubr.f32.gmra.mrb[0].mxu0 %v4425
  %v4502 = vpop.f32.mrb[0].mxu0
  %v4503 = vadd.f32 0.0, %v4502
  %v4504 = vpop.f32.mrb[0].mxu0
  %4505 = vmatprep.mubr.f32.mxu0 0.0
  %4506 = vmatmul.mubr.f32.gmra.mrb[0].mxu0 %v4428
  %v4507 = vpop.f32.mrb[0].mxu0
  %v4508 = vadd.f32 0.0, %v4507
  %v4509 = vpop.f32.mrb[0].mxu0
  %4510 = vmatprep.mubr.f32.mxu0 0.0
  %4511 = vmatmul.mubr.f32.gmra.mrb[0].mxu0 %v4431
  %v4512 = vpop.f32.mrb[0].mxu0
  %v4513 = vadd.f32 0.0, %v4512
  %v4514 = vpop.f32.mrb[0].mxu0
  %4515 = vmatprep.mubr.f32.mxu0 0.0
  %4516 = vmatmul.mubr.f32.gmra.mrb[0].mxu0 %v4434
  %v4517 = vpop.f32.mrb[0].mxu0
  %v4518 = vadd.f32 0.0, %v4517
  %v4519 = vpop.f32.mrb[0].mxu0
  %4520 = vdwg.mxu0
  %v4521 = vadd.f32 %v4323, %v4503
  %v4522 = vadd.f32 %v4324, %v4508
  %v4523 = vadd.f32 %v4325, %v4513
  %v4524 = vadd.f32 %v4326, %v4518
  %s4525 = scalar_lea.vmem %s5, 256
  %v4526 = vld [vmem:[%s4525] sm:$0xff]
  %v4527 = vld [vmem:[%s4525 + $0x8] sm:$0xff]
  %v4528 = vld [vmem:[%s4525 + $0x10] sm:$0xff]
  %v4529 = vld [vmem:[%s4525 + $0x18] sm:$0xff]
  %s4530 = scalar_lea.vmem %s4, 832
  %v4531 = vld [vmem:[%s4530] sm:$0xff]
  %v4532 = vld [vmem:[%s4530 + $0x8] sm:$0xff]
  %v4533 = vld [vmem:[%s4530 + $0x10] sm:$0xff]
  %v4534 = vld [vmem:[%s4530 + $0x18] sm:$0xff]
  %v4535 = vld [vmem:[%s4530 + $0x20] sm:$0xff]
  %v4536 = vld [vmem:[%s4530 + $0x28] sm:$0xff]
  %v4537 = vld [vmem:[%s4530 + $0x30] sm:$0xff]
  %v4538 = vld [vmem:[%s4530 + $0x38] sm:$0xff]
  %v4539 = vld [vmem:[%s4530 + $0x40] sm:$0xff]
  %v4540 = vld [vmem:[%s4530 + $0x48] sm:$0xff]
  %v4541 = vld [vmem:[%s4530 + $0x50] sm:$0xff]
  %v4542 = vld [vmem:[%s4530 + $0x58] sm:$0xff]
  %v4543 = vld [vmem:[%s4530 + $0x60] sm:$0x3]
  %v4545 = vsel %vm2966, %v4543, 0
  %4547 = vmatprep.subr.mxu0 0.0
  %4548 = vmatpush1.msra.mxu0 %v4531
  %4549 = vmatprep.subr.mxu0 0.0
  %4550 = vmatpush1.msra.mxu0 %v4532
  %4551 = vmatprep.subr.mxu0 0.0
  %4552 = vmatpush1.msra.mxu0 %v4533
  %4553 = vmatprep.subr.mxu0 0.0
  %4554 = vmatpush1.msra.mxu0 %v4534
  %4555 = vmatprep.subr.mxu0 0.0
  %4556 = vmatpush1.msra.mxu0 %v4535
  %4557 = vmatprep.subr.mxu0 0.0
  %4558 = vmatpush1.msra.mxu0 %v4536
  %4559 = vmatprep.subr.mxu0 0.0
  %4560 = vmatpush1.msra.mxu0 %v4537
  %4561 = vmatprep.subr.mxu0 0.0
  %4562 = vmatpush1.msra.mxu0 %v4538
  %4563 = vmatprep.subr.mxu0 0.0
  %4564 = vmatpush1.msra.mxu0 %v4539
  %4565 = vmatprep.subr.mxu0 0.0
  %4566 = vmatpush1.msra.mxu0 %v4540
  %4567 = vmatprep.subr.mxu0 0.0
  %4568 = vmatpush1.msra.mxu0 %v4541
  %4569 = vmatprep.subr.mxu0 0.0
  %4570 = vmatpush1.msra.mxu0 %v4542
  %4571 = vmatprep.subr.mxu0 0.0
  %4572 = vmatpush1.msra.mxu0 %v4545
  %4573 = vmatprep.subr.mxu0 0.0
  %4574 = vmatpush1.msra.mxu0 0.0
  %4575 = vmatprep.subr.mxu0 0.0
  %4576 = vmatpush1.msra.mxu0 0.0
  %4577 = vmatprep.subr.mxu0 0.0
  %4578 = vmatpush1.msra.mxu0 0.0
  %4579 = vmatprep.subr.mxu0 0.0
  %4580 = vmatpush1.msra.mxu0 0.0
  %4581 = vmatprep.subr.mxu0 0.0
  %4582 = vmatpush1.msra.mxu0 0.0
  %4583 = vmatprep.subr.mxu0 0.0
  %4584 = vmatpush1.msra.mxu0 0.0
  %4585 = vmatprep.subr.mxu0 0.0
  %4586 = vmatpush1.msra.mxu0 0.0
  %4587 = vmatprep.subr.mxu0 0.0
  %4588 = vmatpush1.msra.mxu0 0.0
  %4589 = vmatprep.subr.mxu0 0.0
  %4590 = vmatpush1.msra.mxu0 0.0
  %4591 = vmatprep.subr.mxu0 0.0
  %4592 = vmatpush1.msra.mxu0 0.0
  %4593 = vmatprep.subr.mxu0 0.0
  %4594 = vmatpush1.msra.mxu0 0.0
  %4595 = vmatprep.subr.mxu0 0.0
  %4596 = vmatpush1.msra.mxu0 0.0
  %4597 = vmatprep.subr.mxu0 0.0
  %4598 = vmatpush1.msra.mxu0 0.0
  %4599 = vmatprep.subr.mxu0 0.0
  %4600 = vmatpush1.msra.mxu0 0.0
  %4601 = vmatprep.subr.mxu0 0.0
  %4602 = vmatpush1.msra.mxu0 0.0
  %4603 = vmatprep.subr.mxu0 0.0
  %4604 = vmatpush1.msra.mxu0 0.0
  %4605 = vmatprep.subr.mxu0 0.0
  %4606 = vmatpush1.msra.mxu0 0.0
  %4607 = vmatprep.subr.mxu0 0.0
  %4608 = vmatpush1.msra.mxu0 0.0
  %4609 = vmatprep.subr.mxu0 0.0
  %4610 = vmatpush1.msra.mxu0 0.0
  %4611 = vmatprep.mubr.f32.mxu0 0.0
  %4612 = vmatmul.mubr.f32.gmra.mrb[0].mxu0 %v2961
  %v4613 = vpop.f32.mrb[0].mxu0
  %v4614 = vadd.f32 0.0, %v4613
  %v4615 = vpop.f32.mrb[0].mxu0
  %4616 = vmatprep.mubr.f32.mxu0 0.0
  %4617 = vmatmul.mubr.f32.gmra.mrb[0].mxu0 %v2964
  %v4618 = vpop.f32.mrb[0].mxu0
  %v4619 = vadd.f32 0.0, %v4618
  %v4620 = vpop.f32.mrb[0].mxu0
  %4621 = vdwg.mxu0
  %v4623 = vsel %vm3142, %v4526, 0
  %v4626 = vsel %vm3142, %v4527, 0
  %v4629 = vsel %vm3142, %v4528, 0
  %v4632 = vsel %vm3142, %v4529, 0
  %4634 = vmatprep.subr.mxu0 0.0
  %4635 = vmatpush1.msra.mxu0 %v4614
  %4636 = vmatprep.subr.mxu0 0.0
  %4637 = vmatpush1.msra.mxu0 %v4619
  %4638 = vmatprep.subr.mxu0 0.0
  %4639 = vmatpush1.msra.mxu0 0.0
  %4640 = vmatprep.subr.mxu0 0.0
  %4641 = vmatpush1.msra.mxu0 0.0
  %4642 = vmatprep.subr.mxu0 0.0
  %4643 = vmatpush1.msra.mxu0 0.0
  %4644 = vmatprep.subr.mxu0 0.0
  %4645 = vmatpush1.msra.mxu0 0.0
  %4646 = vmatprep.subr.mxu0 0.0
  %4647 = vmatpush1.msra.mxu0 0.0
  %4648 = vmatprep.subr.mxu0 0.0
  %4649 = vmatpush1.msra.mxu0 0.0
  %4650 = vmatprep.subr.mxu0 0.0
  %4651 = vmatpush1.msra.mxu0 0.0
  %4652 = vmatprep.subr.mxu0 0.0
  %4653 = vmatpush1.msra.mxu0 0.0
  %4654 = vmatprep.subr.mxu0 0.0
  %4655 = vmatpush1.msra.mxu0 0.0
  %4656 = vmatprep.subr.mxu0 0.0
  %4657 = vmatpush1.msra.mxu0 0.0
  %4658 = vmatprep.subr.mxu0 0.0
  %4659 = vmatpush1.msra.mxu0 0.0
  %4660 = vmatprep.subr.mxu0 0.0
  %4661 = vmatpush1.msra.mxu0 0.0
  %4662 = vmatprep.subr.mxu0 0.0
  %4663 = vmatpush1.msra.mxu0 0.0
  %4664 = vmatprep.subr.mxu0 0.0
  %4665 = vmatpush1.msra.mxu0 0.0
  %4666 = vmatprep.subr.mxu0 0.0
  %4667 = vmatpush1.msra.mxu0 0.0
  %4668 = vmatprep.subr.mxu0 0.0
  %4669 = vmatpush1.msra.mxu0 0.0
  %4670 = vmatprep.subr.mxu0 0.0
  %4671 = vmatpush1.msra.mxu0 0.0
  %4672 = vmatprep.subr.mxu0 0.0
  %4673 = vmatpush1.msra.mxu0 0.0
  %4674 = vmatprep.subr.mxu0 0.0
  %4675 = vmatpush1.msra.mxu0 0.0
  %4676 = vmatprep.subr.mxu0 0.0
  %4677 = vmatpush1.msra.mxu0 0.0
  %4678 = vmatprep.subr.mxu0 0.0
  %4679 = vmatpush1.msra.mxu0 0.0
  %4680 = vmatprep.subr.mxu0 0.0
  %4681 = vmatpush1.msra.mxu0 0.0
  %4682 = vmatprep.subr.mxu0 0.0
  %4683 = vmatpush1.msra.mxu0 0.0
  %4684 = vmatprep.subr.mxu0 0.0
  %4685 = vmatpush1.msra.mxu0 0.0
  %4686 = vmatprep.subr.mxu0 0.0
  %4687 = vmatpush1.msra.mxu0 0.0
  %4688 = vmatprep.subr.mxu0 0.0
  %4689 = vmatpush1.msra.mxu0 0.0
  %4690 = vmatprep.subr.mxu0 0.0
  %4691 = vmatpush1.msra.mxu0 0.0
  %4692 = vmatprep.subr.mxu0 0.0
  %4693 = vmatpush1.msra.mxu0 0.0
  %4694 = vmatprep.subr.mxu0 0.0
  %4695 = vmatpush1.msra.mxu0 0.0
  %4696 = vmatprep.subr.mxu0 0.0
  %4697 = vmatpush1.msra.mxu0 0.0
  %4698 = vmatprep.mubr.f32.mxu0 0.0
  %4699 = vmatmul.mubr.f32.gmra.mrb[0].mxu0 %v4623
  %v4700 = vpop.f32.mrb[0].mxu0
  %v4701 = vadd.f32 0.0, %v4700
  %v4702 = vpop.f32.mrb[0].mxu0
  %4703 = vmatprep.mubr.f32.mxu0 0.0
  %4704 = vmatmul.mubr.f32.gmra.mrb[0].mxu0 %v4626
  %v4705 = vpop.f32.mrb[0].mxu0
  %v4706 = vadd.f32 0.0, %v4705
  %v4707 = vpop.f32.mrb[0].mxu0
  %4708 = vmatprep.mubr.f32.mxu0 0.0
  %4709 = vmatmul.mubr.f32.gmra.mrb[0].mxu0 %v4629
  %v4710 = vpop.f32.mrb[0].mxu0
  %v4711 = vadd.f32 0.0, %v4710
  %v4712 = vpop.f32.mrb[0].mxu0
  %4713 = vmatprep.mubr.f32.mxu0 0.0
  %4714 = vmatmul.mubr.f32.gmra.mrb[0].mxu0 %v4632
  %v4715 = vpop.f32.mrb[0].mxu0
  %v4716 = vadd.f32 0.0, %v4715
  %v4717 = vpop.f32.mrb[0].mxu0
  %4718 = vdwg.mxu0
  %v4719 = vadd.f32 %v4521, %v4701
  %v4720 = vadd.f32 %v4522, %v4706
  %v4721 = vadd.f32 %v4523, %v4711
  %v4722 = vadd.f32 %v4524, %v4716
  %4724 = vset.pattern.permute.xlu0 0
  %4725 = vperm.xlu0 %4724, %v50
  %v4726 = vpop.permute.xlu0 %4725
  %4729 = vset.pattern.permute.xlu0 0
  %4730 = vperm.xlu0 %4729, %v51
  %v4731 = vpop.permute.xlu0 %4730
  %4734 = vset.pattern.permute.xlu0 0
  %4735 = vperm.xlu0 %4734, %v52
  %v4736 = vpop.permute.xlu0 %4735
  %4739 = vset.pattern.permute.xlu0 0
  %4740 = vperm.xlu0 %4739, %v53
  %v4741 = vpop.permute.xlu0 %4740
  %v4743 = vadd.f32 %v4719, %v4726
  %v4744 = vadd.f32 %v4720, %v4731
  %v4745 = vadd.f32 %v4721, %v4736
  %v4746 = vadd.f32 %v4722, %v4741
  %v4747 = vmax.f32 %v4743, 0.0
  %v4748 = vmax.f32 %v4744, 0.0
  %v4749 = vmax.f32 %v4745, 0.0
  %v4750 = vmax.f32 %v4746, 0.0
  %v4751 = vld [vmem:[%s7] sm:$0xff]
  %v4752 = vld [vmem:[%s7 + $0x8] sm:$0xff]
  %v4753 = vld [vmem:[%s7 + $0x10] sm:$0xff]
  %v4754 = vld [vmem:[%s7 + $0x18] sm:$0xff]
  %v4755 = vld [vmem:[%s6] sm:$0xff]
  %v4756 = vld [vmem:[%s6 + $0x8] sm:$0xff]
  %v4757 = vld [vmem:[%s6 + $0x10] sm:$0x3]
  %vm4758 = vcmask 146432
  %v4760 = vsel %vm4758, %v4747, 0
  %v4763 = vsel %vm4758, %v4748, 0
  %v4766 = vsel %vm4758, %v4749, 0
  %v4769 = vsel %vm4758, %v4750, 0
  %v4772 = vsel %vm2966, %v4757, 0
  %4774 = vmatprep.subr.mxu0 0.0
  %4775 = vmatpush1.msra.mxu0 %v4755
  %4776 = vmatprep.subr.mxu0 0.0
  %4777 = vmatpush1.msra.mxu0 %v4756
  %4778 = vmatprep.subr.mxu0 0.0
  %4779 = vmatpush1.msra.mxu0 %v4772
  %4780 = vmatprep.subr.mxu0 0.0
  %4781 = vmatpush1.msra.mxu0 0.0
  %4782 = vmatprep.subr.mxu0 0.0
  %4783 = vmatpush1.msra.mxu0 0.0
  %4784 = vmatprep.subr.mxu0 0.0
  %4785 = vmatpush1.msra.mxu0 0.0
  %4786 = vmatprep.subr.mxu0 0.0
  %4787 = vmatpush1.msra.mxu0 0.0
  %4788 = vmatprep.subr.mxu0 0.0
  %4789 = vmatpush1.msra.mxu0 0.0
  %4790 = vmatprep.subr.mxu0 0.0
  %4791 = vmatpush1.msra.mxu0 0.0
  %4792 = vmatprep.subr.mxu0 0.0
  %4793 = vmatpush1.msra.mxu0 0.0
  %4794 = vmatprep.subr.mxu0 0.0
  %4795 = vmatpush1.msra.mxu0 0.0
  %4796 = vmatprep.subr.mxu0 0.0
  %4797 = vmatpush1.msra.mxu0 0.0
  %4798 = vmatprep.subr.mxu0 0.0
  %4799 = vmatpush1.msra.mxu0 0.0
  %4800 = vmatprep.subr.mxu0 0.0
  %4801 = vmatpush1.msra.mxu0 0.0
  %4802 = vmatprep.subr.mxu0 0.0
  %4803 = vmatpush1.msra.mxu0 0.0
  %4804 = vmatprep.subr.mxu0 0.0
  %4805 = vmatpush1.msra.mxu0 0.0
  %4806 = vmatprep.subr.mxu0 0.0
  %4807 = vmatpush1.msra.mxu0 0.0
  %4808 = vmatprep.subr.mxu0 0.0
  %4809 = vmatpush1.msra.mxu0 0.0
  %4810 = vmatprep.subr.mxu0 0.0
  %4811 = vmatpush1.msra.mxu0 0.0
  %4812 = vmatprep.subr.mxu0 0.0
  %4813 = vmatpush1.msra.mxu0 0.0
  %4814 = vmatprep.subr.mxu0 0.0
  %4815 = vmatpush1.msra.mxu0 0.0
  %4816 = vmatprep.subr.mxu0 0.0
  %4817 = vmatpush1.msra.mxu0 0.0
  %4818 = vmatprep.subr.mxu0 0.0
  %4819 = vmatpush1.msra.mxu0 0.0
  %4820 = vmatprep.subr.mxu0 0.0
  %4821 = vmatpush1.msra.mxu0 0.0
  %4822 = vmatprep.subr.mxu0 0.0
  %4823 = vmatpush1.msra.mxu0 0.0
  %4824 = vmatprep.subr.mxu0 0.0
  %4825 = vmatpush1.msra.mxu0 0.0
  %4826 = vmatprep.subr.mxu0 0.0
  %4827 = vmatpush1.msra.mxu0 0.0
  %4828 = vmatprep.subr.mxu0 0.0
  %4829 = vmatpush1.msra.mxu0 0.0
  %4830 = vmatprep.subr.mxu0 0.0
  %4831 = vmatpush1.msra.mxu0 0.0
  %4832 = vmatprep.subr.mxu0 0.0
  %4833 = vmatpush1.msra.mxu0 0.0
  %4834 = vmatprep.subr.mxu0 0.0
  %4835 = vmatpush1.msra.mxu0 0.0
  %4836 = vmatprep.subr.mxu0 0.0
  %4837 = vmatpush1.msra.mxu0 0.0
  %4838 = vmatprep.mubr.f32.mxu0 0.0
  %4839 = vmatmul.mubr.f32.gmra.mrb[0].mxu0 %v4760
  %v4840 = vpop.f32.mrb[0].mxu0
  %v4841 = vadd.f32 0.0, %v4840
  %v4842 = vpop.f32.mrb[0].mxu0
  %4843 = vmatprep.mubr.f32.mxu0 0.0
  %4844 = vmatmul.mubr.f32.gmra.mrb[0].mxu0 %v4763
  %v4845 = vpop.f32.mrb[0].mxu0
  %v4846 = vadd.f32 0.0, %v4845
  %v4847 = vpop.f32.mrb[0].mxu0
  %4848 = vmatprep.mubr.f32.mxu0 0.0
  %4849 = vmatmul.mubr.f32.gmra.mrb[0].mxu0 %v4766
  %v4850 = vpop.f32.mrb[0].mxu0
  %v4851 = vadd.f32 0.0, %v4850
  %v4852 = vpop.f32.mrb[0].mxu0
  %4853 = vmatprep.mubr.f32.mxu0 0.0
  %4854 = vmatmul.mubr.f32.gmra.mrb[0].mxu0 %v4769
  %v4855 = vpop.f32.mrb[0].mxu0
  %v4856 = vadd.f32 0.0, %v4855
  %v4857 = vpop.f32.mrb[0].mxu0
  %4858 = vdwg.mxu0
  %s4859 = scalar_lea.vmem %s7, 32
  %v4860 = vld [vmem:[%s4859] sm:$0xff]
  %v4861 = vld [vmem:[%s4859 + $0x8] sm:$0xff]
  %v4862 = vld [vmem:[%s4859 + $0x10] sm:$0xff]
  %v4863 = vld [vmem:[%s4859 + $0x18] sm:$0xff]
  %s4864 = scalar_lea.vmem %s6, 24
  %v4865 = vld [vmem:[%s4864] sm:$0xff]
  %v4866 = vld [vmem:[%s4864 + $0x8] sm:$0xff]
  %v4867 = vld [vmem:[%s4864 + $0x10] sm:$0x3]
  %v4869 = vsel %vm2966, %v4867, 0
  %4871 = vmatprep.subr.mxu0 0.0
  %4872 = vmatpush1.msra.mxu0 %v4865
  %4873 = vmatprep.subr.mxu0 0.0
  %4874 = vmatpush1.msra.mxu0 %v4866
  %4875 = vmatprep.subr.mxu0 0.0
  %4876 = vmatpush1.msra.mxu0 %v4869
  %4877 = vmatprep.subr.mxu0 0.0
  %4878 = vmatpush1.msra.mxu0 0.0
  %4879 = vmatprep.subr.mxu0 0.0
  %4880 = vmatpush1.msra.mxu0 0.0
  %4881 = vmatprep.subr.mxu0 0.0
  %4882 = vmatpush1.msra.mxu0 0.0
  %4883 = vmatprep.subr.mxu0 0.0
  %4884 = vmatpush1.msra.mxu0 0.0
  %4885 = vmatprep.subr.mxu0 0.0
  %4886 = vmatpush1.msra.mxu0 0.0
  %4887 = vmatprep.subr.mxu0 0.0
  %4888 = vmatpush1.msra.mxu0 0.0
  %4889 = vmatprep.subr.mxu0 0.0
  %4890 = vmatpush1.msra.mxu0 0.0
  %4891 = vmatprep.subr.mxu0 0.0
  %4892 = vmatpush1.msra.mxu0 0.0
  %4893 = vmatprep.subr.mxu0 0.0
  %4894 = vmatpush1.msra.mxu0 0.0
  %4895 = vmatprep.subr.mxu0 0.0
  %4896 = vmatpush1.msra.mxu0 0.0
  %4897 = vmatprep.subr.mxu0 0.0
  %4898 = vmatpush1.msra.mxu0 0.0
  %4899 = vmatprep.subr.mxu0 0.0
  %4900 = vmatpush1.msra.mxu0 0.0
  %4901 = vmatprep.subr.mxu0 0.0
  %4902 = vmatpush1.msra.mxu0 0.0
  %4903 = vmatprep.subr.mxu0 0.0
  %4904 = vmatpush1.msra.mxu0 0.0
  %4905 = vmatprep.subr.mxu0 0.0
  %4906 = vmatpush1.msra.mxu0 0.0
  %4907 = vmatprep.subr.mxu0 0.0
  %4908 = vmatpush1.msra.mxu0 0.0
  %4909 = vmatprep.subr.mxu0 0.0
  %4910 = vmatpush1.msra.mxu0 0.0
  %4911 = vmatprep.subr.mxu0 0.0
  %4912 = vmatpush1.msra.mxu0 0.0
  %4913 = vmatprep.subr.mxu0 0.0
  %4914 = vmatpush1.msra.mxu0 0.0
  %4915 = vmatprep.subr.mxu0 0.0
  %4916 = vmatpush1.msra.mxu0 0.0
  %4917 = vmatprep.subr.mxu0 0.0
  %4918 = vmatpush1.msra.mxu0 0.0
  %4919 = vmatprep.subr.mxu0 0.0
  %4920 = vmatpush1.msra.mxu0 0.0
  %4921 = vmatprep.subr.mxu0 0.0
  %4922 = vmatpush1.msra.mxu0 0.0
  %4923 = vmatprep.subr.mxu0 0.0
  %4924 = vmatpush1.msra.mxu0 0.0
  %4925 = vmatprep.subr.mxu0 0.0
  %4926 = vmatpush1.msra.mxu0 0.0
  %4927 = vmatprep.subr.mxu0 0.0
  %4928 = vmatpush1.msra.mxu0 0.0
  %4929 = vmatprep.subr.mxu0 0.0
  %4930 = vmatpush1.msra.mxu0 0.0
  %4931 = vmatprep.subr.mxu0 0.0
  %4932 = vmatpush1.msra.mxu0 0.0
  %4933 = vmatprep.subr.mxu0 0.0
  %4934 = vmatpush1.msra.mxu0 0.0
  %4935 = vmatprep.mubr.f32.mxu0 0.0
  %4936 = vmatmul.mubr.f32.gmra.mrb[0].mxu0 %v4760
  %v4937 = vpop.f32.mrb[0].mxu0
  %v4938 = vadd.f32 0.0, %v4937
  %v4939 = vpop.f32.mrb[0].mxu0
  %4940 = vmatprep.mubr.f32.mxu0 0.0
  %4941 = vmatmul.mubr.f32.gmra.mrb[0].mxu0 %v4763
  %v4942 = vpop.f32.mrb[0].mxu0
  %v4943 = vadd.f32 0.0, %v4942
  %v4944 = vpop.f32.mrb[0].mxu0
  %4945 = vmatprep.mubr.f32.mxu0 0.0
  %4946 = vmatmul.mubr.f32.gmra.mrb[0].mxu0 %v4766
  %v4947 = vpop.f32.mrb[0].mxu0
  %v4948 = vadd.f32 0.0, %v4947
  %v4949 = vpop.f32.mrb[0].mxu0
  %4950 = vmatprep.mubr.f32.mxu0 0.0
  %4951 = vmatmul.mubr.f32.gmra.mrb[0].mxu0 %v4769
  %v4952 = vpop.f32.mrb[0].mxu0
  %v4953 = vadd.f32 0.0, %v4952
  %v4954 = vpop.f32.mrb[0].mxu0
  %4955 = vdwg.mxu0
  %vm4956 = vcmask 261120
  %v4958 = vsel %vm4956, %v4860, 0
  %v4961 = vsel %vm4956, %v4861, 0
  %v4964 = vsel %vm4956, %v4862, 0
  %v4967 = vsel %vm4956, %v4863, 0
  %4969 = vmatprep.subr.mxu0 0.0
  %4970 = vmatpush1.msra.mxu0 %v4938
  %4971 = vmatprep.subr.mxu0 0.0
  %4972 = vmatpush1.msra.mxu0 %v4943
  %4973 = vmatprep.subr.mxu0 0.0
  %4974 = vmatpush1.msra.mxu0 %v4948
  %4975 = vmatprep.subr.mxu0 0.0
  %4976 = vmatpush1.msra.mxu0 %v4953
  %4977 = vmatprep.subr.mxu0 0.0
  %4978 = vmatpush1.msra.mxu0 0.0
  %4979 = vmatprep.subr.mxu0 0.0
  %4980 = vmatpush1.msra.mxu0 0.0
  %4981 = vmatprep.subr.mxu0 0.0
  %4982 = vmatpush1.msra.mxu0 0.0
  %4983 = vmatprep.subr.mxu0 0.0
  %4984 = vmatpush1.msra.mxu0 0.0
  %4985 = vmatprep.subr.mxu0 0.0
  %4986 = vmatpush1.msra.mxu0 0.0
  %4987 = vmatprep.subr.mxu0 0.0
  %4988 = vmatpush1.msra.mxu0 0.0
  %4989 = vmatprep.subr.mxu0 0.0
  %4990 = vmatpush1.msra.mxu0 0.0
  %4991 = vmatprep.subr.mxu0 0.0
  %4992 = vmatpush1.msra.mxu0 0.0
  %4993 = vmatprep.subr.mxu0 0.0
  %4994 = vmatpush1.msra.mxu0 0.0
  %4995 = vmatprep.subr.mxu0 0.0
  %4996 = vmatpush1.msra.mxu0 0.0
  %4997 = vmatprep.subr.mxu0 0.0
  %4998 = vmatpush1.msra.mxu0 0.0
  %4999 = vmatprep.subr.mxu0 0.0
  %5000 = vmatpush1.msra.mxu0 0.0
  %5001 = vmatprep.subr.mxu0 0.0
  %5002 = vmatpush1.msra.mxu0 0.0
  %5003 = vmatprep.subr.mxu0 0.0
  %5004 = vmatpush1.msra.mxu0 0.0
  %5005 = vmatprep.subr.mxu0 0.0
  %5006 = vmatpush1.msra.mxu0 0.0
  %5007 = vmatprep.subr.mxu0 0.0
  %5008 = vmatpush1.msra.mxu0 0.0
  %5009 = vmatprep.subr.mxu0 0.0
  %5010 = vmatpush1.msra.mxu0 0.0
  %5011 = vmatprep.subr.mxu0 0.0
  %5012 = vmatpush1.msra.mxu0 0.0
  %5013 = vmatprep.subr.mxu0 0.0
  %5014 = vmatpush1.msra.mxu0 0.0
  %5015 = vmatprep.subr.mxu0 0.0
  %5016 = vmatpush1.msra.mxu0 0.0
  %5017 = vmatprep.subr.mxu0 0.0
  %5018 = vmatpush1.msra.mxu0 0.0
  %5019 = vmatprep.subr.mxu0 0.0
  %5020 = vmatpush1.msra.mxu0 0.0
  %5021 = vmatprep.subr.mxu0 0.0
  %5022 = vmatpush1.msra.mxu0 0.0
  %5023 = vmatprep.subr.mxu0 0.0
  %5024 = vmatpush1.msra.mxu0 0.0
  %5025 = vmatprep.subr.mxu0 0.0
  %5026 = vmatpush1.msra.mxu0 0.0
  %5027 = vmatprep.subr.mxu0 0.0
  %5028 = vmatpush1.msra.mxu0 0.0
  %5029 = vmatprep.subr.mxu0 0.0
  %5030 = vmatpush1.msra.mxu0 0.0
  %5031 = vmatprep.subr.mxu0 0.0
  %5032 = vmatpush1.msra.mxu0 0.0
  %5033 = vmatprep.mubr.f32.mxu0 0.0
  %5034 = vmatmul.mubr.f32.gmra.mrb[0].mxu0 %v4958
  %v5035 = vpop.f32.mrb[0].mxu0
  %v5036 = vadd.f32 0.0, %v5035
  %v5037 = vpop.f32.mrb[0].mxu0
  %5038 = vmatprep.mubr.f32.mxu0 0.0
  %5039 = vmatmul.mubr.f32.gmra.mrb[0].mxu0 %v4961
  %v5040 = vpop.f32.mrb[0].mxu0
  %v5041 = vadd.f32 0.0, %v5040
  %v5042 = vpop.f32.mrb[0].mxu0
  %5043 = vmatprep.mubr.f32.mxu0 0.0
  %5044 = vmatmul.mubr.f32.gmra.mrb[0].mxu0 %v4964
  %v5045 = vpop.f32.mrb[0].mxu0
  %v5046 = vadd.f32 0.0, %v5045
  %v5047 = vpop.f32.mrb[0].mxu0
  %5048 = vmatprep.mubr.f32.mxu0 0.0
  %5049 = vmatmul.mubr.f32.gmra.mrb[0].mxu0 %v4967
  %v5050 = vpop.f32.mrb[0].mxu0
  %v5051 = vadd.f32 0.0, %v5050
  %v5052 = vpop.f32.mrb[0].mxu0
  %5053 = vdwg.mxu0
  %v5055 = vsel %vm4956, %v4751, 0
  %v5058 = vsel %vm4956, %v4752, 0
  %v5061 = vsel %vm4956, %v4753, 0
  %v5064 = vsel %vm4956, %v4754, 0
  %5066 = vmatprep.subr.mxu0 0.0
  %5067 = vmatpush1.msra.mxu0 %v4841
  %5068 = vmatprep.subr.mxu0 0.0
  %5069 = vmatpush1.msra.mxu0 %v4846
  %5070 = vmatprep.subr.mxu0 0.0
  %5071 = vmatpush1.msra.mxu0 %v4851
  %5072 = vmatprep.subr.mxu0 0.0
  %5073 = vmatpush1.msra.mxu0 %v4856
  %5074 = vmatprep.subr.mxu0 0.0
  %5075 = vmatpush1.msra.mxu0 0.0
  %5076 = vmatprep.subr.mxu0 0.0
  %5077 = vmatpush1.msra.mxu0 0.0
  %5078 = vmatprep.subr.mxu0 0.0
  %5079 = vmatpush1.msra.mxu0 0.0
  %5080 = vmatprep.subr.mxu0 0.0
  %5081 = vmatpush1.msra.mxu0 0.0
  %5082 = vmatprep.subr.mxu0 0.0
  %5083 = vmatpush1.msra.mxu0 0.0
  %5084 = vmatprep.subr.mxu0 0.0
  %5085 = vmatpush1.msra.mxu0 0.0
  %5086 = vmatprep.subr.mxu0 0.0
  %5087 = vmatpush1.msra.mxu0 0.0
  %5088 = vmatprep.subr.mxu0 0.0
  %5089 = vmatpush1.msra.mxu0 0.0
  %5090 = vmatprep.subr.mxu0 0.0
  %5091 = vmatpush1.msra.mxu0 0.0
  %5092 = vmatprep.subr.mxu0 0.0
  %5093 = vmatpush1.msra.mxu0 0.0
  %5094 = vmatprep.subr.mxu0 0.0
  %5095 = vmatpush1.msra.mxu0 0.0
  %5096 = vmatprep.subr.mxu0 0.0
  %5097 = vmatpush1.msra.mxu0 0.0
  %5098 = vmatprep.subr.mxu0 0.0
  %5099 = vmatpush1.msra.mxu0 0.0
  %5100 = vmatprep.subr.mxu0 0.0
  %5101 = vmatpush1.msra.mxu0 0.0
  %5102 = vmatprep.subr.mxu0 0.0
  %5103 = vmatpush1.msra.mxu0 0.0
  %5104 = vmatprep.subr.mxu0 0.0
  %5105 = vmatpush1.msra.mxu0 0.0
  %5106 = vmatprep.subr.mxu0 0.0
  %5107 = vmatpush1.msra.mxu0 0.0
  %5108 = vmatprep.subr.mxu0 0.0
  %5109 = vmatpush1.msra.mxu0 0.0
  %5110 = vmatprep.subr.mxu0 0.0
  %5111 = vmatpush1.msra.mxu0 0.0
  %5112 = vmatprep.subr.mxu0 0.0
  %5113 = vmatpush1.msra.mxu0 0.0
  %5114 = vmatprep.subr.mxu0 0.0
  %5115 = vmatpush1.msra.mxu0 0.0
  %5116 = vmatprep.subr.mxu0 0.0
  %5117 = vmatpush1.msra.mxu0 0.0
  %5118 = vmatprep.subr.mxu0 0.0
  %5119 = vmatpush1.msra.mxu0 0.0
  %5120 = vmatprep.subr.mxu0 0.0
  %5121 = vmatpush1.msra.mxu0 0.0
  %5122 = vmatprep.subr.mxu0 0.0
  %5123 = vmatpush1.msra.mxu0 0.0
  %5124 = vmatprep.subr.mxu0 0.0
  %5125 = vmatpush1.msra.mxu0 0.0
  %5126 = vmatprep.subr.mxu0 0.0
  %5127 = vmatpush1.msra.mxu0 0.0
  %5128 = vmatprep.subr.mxu0 0.0
  %5129 = vmatpush1.msra.mxu0 0.0
  %5130 = vmatprep.mubr.f32.mxu0 0.0
  %5131 = vmatmul.mubr.f32.gmra.mrb[0].mxu0 %v5055
  %v5132 = vpop.f32.mrb[0].mxu0
  %v5133 = vadd.f32 %v5036, %v5132
  %v5134 = vpop.f32.mrb[0].mxu0
  %5135 = vmatprep.mubr.f32.mxu0 0.0
  %5136 = vmatmul.mubr.f32.gmra.mrb[0].mxu0 %v5058
  %v5137 = vpop.f32.mrb[0].mxu0
  %v5138 = vadd.f32 %v5041, %v5137
  %v5139 = vpop.f32.mrb[0].mxu0
  %5140 = vmatprep.mubr.f32.mxu0 0.0
  %5141 = vmatmul.mubr.f32.gmra.mrb[0].mxu0 %v5061
  %v5142 = vpop.f32.mrb[0].mxu0
  %v5143 = vadd.f32 %v5046, %v5142
  %v5144 = vpop.f32.mrb[0].mxu0
  %5145 = vmatprep.mubr.f32.mxu0 0.0
  %5146 = vmatmul.mubr.f32.gmra.mrb[0].mxu0 %v5064
  %v5147 = vpop.f32.mrb[0].mxu0
  %v5148 = vadd.f32 %v5051, %v5147
  %v5149 = vpop.f32.mrb[0].mxu0
  %5150 = vdwg.mxu0
  %s5151 = scalar_lea.vmem %s7, 64
  %v5152 = vld [vmem:[%s5151] sm:$0xff]
  %v5153 = vld [vmem:[%s5151 + $0x8] sm:$0xff]
  %v5154 = vld [vmem:[%s5151 + $0x10] sm:$0xff]
  %v5155 = vld [vmem:[%s5151 + $0x18] sm:$0xff]
  %s5156 = scalar_lea.vmem %s6, 48
  %v5157 = vld [vmem:[%s5156] sm:$0xff]
  %v5158 = vld [vmem:[%s5156 + $0x8] sm:$0xff]
  %v5159 = vld [vmem:[%s5156 + $0x10] sm:$0x3]
  %v5161 = vsel %vm2966, %v5159, 0
  %5163 = vmatprep.subr.mxu0 0.0
  %5164 = vmatpush1.msra.mxu0 %v5157
  %5165 = vmatprep.subr.mxu0 0.0
  %5166 = vmatpush1.msra.mxu0 %v5158
  %5167 = vmatprep.subr.mxu0 0.0
  %5168 = vmatpush1.msra.mxu0 %v5161
  %5169 = vmatprep.subr.mxu0 0.0
  %5170 = vmatpush1.msra.mxu0 0.0
  %5171 = vmatprep.subr.mxu0 0.0
  %5172 = vmatpush1.msra.mxu0 0.0
  %5173 = vmatprep.subr.mxu0 0.0
  %5174 = vmatpush1.msra.mxu0 0.0
  %5175 = vmatprep.subr.mxu0 0.0
  %5176 = vmatpush1.msra.mxu0 0.0
  %5177 = vmatprep.subr.mxu0 0.0
  %5178 = vmatpush1.msra.mxu0 0.0
  %5179 = vmatprep.subr.mxu0 0.0
  %5180 = vmatpush1.msra.mxu0 0.0
  %5181 = vmatprep.subr.mxu0 0.0
  %5182 = vmatpush1.msra.mxu0 0.0
  %5183 = vmatprep.subr.mxu0 0.0
  %5184 = vmatpush1.msra.mxu0 0.0
  %5185 = vmatprep.subr.mxu0 0.0
  %5186 = vmatpush1.msra.mxu0 0.0
  %5187 = vmatprep.subr.mxu0 0.0
  %5188 = vmatpush1.msra.mxu0 0.0
  %5189 = vmatprep.subr.mxu0 0.0
  %5190 = vmatpush1.msra.mxu0 0.0
  %5191 = vmatprep.subr.mxu0 0.0
  %5192 = vmatpush1.msra.mxu0 0.0
  %5193 = vmatprep.subr.mxu0 0.0
  %5194 = vmatpush1.msra.mxu0 0.0
  %5195 = vmatprep.subr.mxu0 0.0
  %5196 = vmatpush1.msra.mxu0 0.0
  %5197 = vmatprep.subr.mxu0 0.0
  %5198 = vmatpush1.msra.mxu0 0.0
  %5199 = vmatprep.subr.mxu0 0.0
  %5200 = vmatpush1.msra.mxu0 0.0
  %5201 = vmatprep.subr.mxu0 0.0
  %5202 = vmatpush1.msra.mxu0 0.0
  %5203 = vmatprep.subr.mxu0 0.0
  %5204 = vmatpush1.msra.mxu0 0.0
  %5205 = vmatprep.subr.mxu0 0.0
  %5206 = vmatpush1.msra.mxu0 0.0
  %5207 = vmatprep.subr.mxu0 0.0
  %5208 = vmatpush1.msra.mxu0 0.0
  %5209 = vmatprep.subr.mxu0 0.0
  %5210 = vmatpush1.msra.mxu0 0.0
  %5211 = vmatprep.subr.mxu0 0.0
  %5212 = vmatpush1.msra.mxu0 0.0
  %5213 = vmatprep.subr.mxu0 0.0
  %5214 = vmatpush1.msra.mxu0 0.0
  %5215 = vmatprep.subr.mxu0 0.0
  %5216 = vmatpush1.msra.mxu0 0.0
  %5217 = vmatprep.subr.mxu0 0.0
  %5218 = vmatpush1.msra.mxu0 0.0
  %5219 = vmatprep.subr.mxu0 0.0
  %5220 = vmatpush1.msra.mxu0 0.0
  %5221 = vmatprep.subr.mxu0 0.0
  %5222 = vmatpush1.msra.mxu0 0.0
  %5223 = vmatprep.subr.mxu0 0.0
  %5224 = vmatpush1.msra.mxu0 0.0
  %5225 = vmatprep.subr.mxu0 0.0
  %5226 = vmatpush1.msra.mxu0 0.0
  %5227 = vmatprep.mubr.f32.mxu0 0.0
  %5228 = vmatmul.mubr.f32.gmra.mrb[0].mxu0 %v4760
  %v5229 = vpop.f32.mrb[0].mxu0
  %v5230 = vadd.f32 0.0, %v5229
  %v5231 = vpop.f32.mrb[0].mxu0
  %5232 = vmatprep.mubr.f32.mxu0 0.0
  %5233 = vmatmul.mubr.f32.gmra.mrb[0].mxu0 %v4763
  %v5234 = vpop.f32.mrb[0].mxu0
  %v5235 = vadd.f32 0.0, %v5234
  %v5236 = vpop.f32.mrb[0].mxu0
  %5237 = vmatprep.mubr.f32.mxu0 0.0
  %5238 = vmatmul.mubr.f32.gmra.mrb[0].mxu0 %v4766
  %v5239 = vpop.f32.mrb[0].mxu0
  %v5240 = vadd.f32 0.0, %v5239
  %v5241 = vpop.f32.mrb[0].mxu0
  %5242 = vmatprep.mubr.f32.mxu0 0.0
  %5243 = vmatmul.mubr.f32.gmra.mrb[0].mxu0 %v4769
  %v5244 = vpop.f32.mrb[0].mxu0
  %v5245 = vadd.f32 0.0, %v5244
  %v5246 = vpop.f32.mrb[0].mxu0
  %5247 = vdwg.mxu0
  %v5249 = vsel %vm4956, %v5152, 0
  %v5252 = vsel %vm4956, %v5153, 0
  %v5255 = vsel %vm4956, %v5154, 0
  %v5258 = vsel %vm4956, %v5155, 0
  %5260 = vmatprep.subr.mxu0 0.0
  %5261 = vmatpush1.msra.mxu0 %v5230
  %5262 = vmatprep.subr.mxu0 0.0
  %5263 = vmatpush1.msra.mxu0 %v5235
  %5264 = vmatprep.subr.mxu0 0.0
  %5265 = vmatpush1.msra.mxu0 %v5240
  %5266 = vmatprep.subr.mxu0 0.0
  %5267 = vmatpush1.msra.mxu0 %v5245
  %5268 = vmatprep.subr.mxu0 0.0
  %5269 = vmatpush1.msra.mxu0 0.0
  %5270 = vmatprep.subr.mxu0 0.0
  %5271 = vmatpush1.msra.mxu0 0.0
  %5272 = vmatprep.subr.mxu0 0.0
  %5273 = vmatpush1.msra.mxu0 0.0
  %5274 = vmatprep.subr.mxu0 0.0
  %5275 = vmatpush1.msra.mxu0 0.0
  %5276 = vmatprep.subr.mxu0 0.0
  %5277 = vmatpush1.msra.mxu0 0.0
  %5278 = vmatprep.subr.mxu0 0.0
  %5279 = vmatpush1.msra.mxu0 0.0
  %5280 = vmatprep.subr.mxu0 0.0
  %5281 = vmatpush1.msra.mxu0 0.0
  %5282 = vmatprep.subr.mxu0 0.0
  %5283 = vmatpush1.msra.mxu0 0.0
  %5284 = vmatprep.subr.mxu0 0.0
  %5285 = vmatpush1.msra.mxu0 0.0
  %5286 = vmatprep.subr.mxu0 0.0
  %5287 = vmatpush1.msra.mxu0 0.0
  %5288 = vmatprep.subr.mxu0 0.0
  %5289 = vmatpush1.msra.mxu0 0.0
  %5290 = vmatprep.subr.mxu0 0.0
  %5291 = vmatpush1.msra.mxu0 0.0
  %5292 = vmatprep.subr.mxu0 0.0
  %5293 = vmatpush1.msra.mxu0 0.0
  %5294 = vmatprep.subr.mxu0 0.0
  %5295 = vmatpush1.msra.mxu0 0.0
  %5296 = vmatprep.subr.mxu0 0.0
  %5297 = vmatpush1.msra.mxu0 0.0
  %5298 = vmatprep.subr.mxu0 0.0
  %5299 = vmatpush1.msra.mxu0 0.0
  %5300 = vmatprep.subr.mxu0 0.0
  %5301 = vmatpush1.msra.mxu0 0.0
  %5302 = vmatprep.subr.mxu0 0.0
  %5303 = vmatpush1.msra.mxu0 0.0
  %5304 = vmatprep.subr.mxu0 0.0
  %5305 = vmatpush1.msra.mxu0 0.0
  %5306 = vmatprep.subr.mxu0 0.0
  %5307 = vmatpush1.msra.mxu0 0.0
  %5308 = vmatprep.subr.mxu0 0.0
  %5309 = vmatpush1.msra.mxu0 0.0
  %5310 = vmatprep.subr.mxu0 0.0
  %5311 = vmatpush1.msra.mxu0 0.0
  %5312 = vmatprep.subr.mxu0 0.0
  %5313 = vmatpush1.msra.mxu0 0.0
  %5314 = vmatprep.subr.mxu0 0.0
  %5315 = vmatpush1.msra.mxu0 0.0
  %5316 = vmatprep.subr.mxu0 0.0
  %5317 = vmatpush1.msra.mxu0 0.0
  %5318 = vmatprep.subr.mxu0 0.0
  %5319 = vmatpush1.msra.mxu0 0.0
  %5320 = vmatprep.subr.mxu0 0.0
  %5321 = vmatpush1.msra.mxu0 0.0
  %5322 = vmatprep.subr.mxu0 0.0
  %5323 = vmatpush1.msra.mxu0 0.0
  %5324 = vmatprep.mubr.f32.mxu0 0.0
  %5325 = vmatmul.mubr.f32.gmra.mrb[0].mxu0 %v5249
  %v5326 = vpop.f32.mrb[0].mxu0
  %v5327 = vadd.f32 0.0, %v5326
  %v5328 = vpop.f32.mrb[0].mxu0
  %5329 = vmatprep.mubr.f32.mxu0 0.0
  %5330 = vmatmul.mubr.f32.gmra.mrb[0].mxu0 %v5252
  %v5331 = vpop.f32.mrb[0].mxu0
  %v5332 = vadd.f32 0.0, %v5331
  %v5333 = vpop.f32.mrb[0].mxu0
  %5334 = vmatprep.mubr.f32.mxu0 0.0
  %5335 = vmatmul.mubr.f32.gmra.mrb[0].mxu0 %v5255
  %v5336 = vpop.f32.mrb[0].mxu0
  %v5337 = vadd.f32 0.0, %v5336
  %v5338 = vpop.f32.mrb[0].mxu0
  %5339 = vmatprep.mubr.f32.mxu0 0.0
  %5340 = vmatmul.mubr.f32.gmra.mrb[0].mxu0 %v5258
  %v5341 = vpop.f32.mrb[0].mxu0
  %v5342 = vadd.f32 0.0, %v5341
  %v5343 = vpop.f32.mrb[0].mxu0
  %5344 = vdwg.mxu0
  %v5345 = vadd.f32 %v5133, %v5327
  %v5346 = vadd.f32 %v5138, %v5332
  %v5347 = vadd.f32 %v5143, %v5337
  %v5348 = vadd.f32 %v5148, %v5342
  %s5349 = scalar_lea.vmem %s7, 96
  %v5350 = vld [vmem:[%s5349] sm:$0xff]
  %v5351 = vld [vmem:[%s5349 + $0x8] sm:$0xff]
  %v5352 = vld [vmem:[%s5349 + $0x10] sm:$0xff]
  %v5353 = vld [vmem:[%s5349 + $0x18] sm:$0xff]
  %s5354 = scalar_lea.vmem %s6, 72
  %v5355 = vld [vmem:[%s5354] sm:$0xff]
  %v5356 = vld [vmem:[%s5354 + $0x8] sm:$0xff]
  %v5357 = vld [vmem:[%s5354 + $0x10] sm:$0x3]
  %v5359 = vsel %vm2966, %v5357, 0
  %5361 = vmatprep.subr.mxu0 0.0
  %5362 = vmatpush1.msra.mxu0 %v5355
  %5363 = vmatprep.subr.mxu0 0.0
  %5364 = vmatpush1.msra.mxu0 %v5356
  %5365 = vmatprep.subr.mxu0 0.0
  %5366 = vmatpush1.msra.mxu0 %v5359
  %5367 = vmatprep.subr.mxu0 0.0
  %5368 = vmatpush1.msra.mxu0 0.0
  %5369 = vmatprep.subr.mxu0 0.0
  %5370 = vmatpush1.msra.mxu0 0.0
  %5371 = vmatprep.subr.mxu0 0.0
  %5372 = vmatpush1.msra.mxu0 0.0
  %5373 = vmatprep.subr.mxu0 0.0
  %5374 = vmatpush1.msra.mxu0 0.0
  %5375 = vmatprep.subr.mxu0 0.0
  %5376 = vmatpush1.msra.mxu0 0.0
  %5377 = vmatprep.subr.mxu0 0.0
  %5378 = vmatpush1.msra.mxu0 0.0
  %5379 = vmatprep.subr.mxu0 0.0
  %5380 = vmatpush1.msra.mxu0 0.0
  %5381 = vmatprep.subr.mxu0 0.0
  %5382 = vmatpush1.msra.mxu0 0.0
  %5383 = vmatprep.subr.mxu0 0.0
  %5384 = vmatpush1.msra.mxu0 0.0
  %5385 = vmatprep.subr.mxu0 0.0
  %5386 = vmatpush1.msra.mxu0 0.0
  %5387 = vmatprep.subr.mxu0 0.0
  %5388 = vmatpush1.msra.mxu0 0.0
  %5389 = vmatprep.subr.mxu0 0.0
  %5390 = vmatpush1.msra.mxu0 0.0
  %5391 = vmatprep.subr.mxu0 0.0
  %5392 = vmatpush1.msra.mxu0 0.0
  %5393 = vmatprep.subr.mxu0 0.0
  %5394 = vmatpush1.msra.mxu0 0.0
  %5395 = vmatprep.subr.mxu0 0.0
  %5396 = vmatpush1.msra.mxu0 0.0
  %5397 = vmatprep.subr.mxu0 0.0
  %5398 = vmatpush1.msra.mxu0 0.0
  %5399 = vmatprep.subr.mxu0 0.0
  %5400 = vmatpush1.msra.mxu0 0.0
  %5401 = vmatprep.subr.mxu0 0.0
  %5402 = vmatpush1.msra.mxu0 0.0
  %5403 = vmatprep.subr.mxu0 0.0
  %5404 = vmatpush1.msra.mxu0 0.0
  %5405 = vmatprep.subr.mxu0 0.0
  %5406 = vmatpush1.msra.mxu0 0.0
  %5407 = vmatprep.subr.mxu0 0.0
  %5408 = vmatpush1.msra.mxu0 0.0
  %5409 = vmatprep.subr.mxu0 0.0
  %5410 = vmatpush1.msra.mxu0 0.0
  %5411 = vmatprep.subr.mxu0 0.0
  %5412 = vmatpush1.msra.mxu0 0.0
  %5413 = vmatprep.subr.mxu0 0.0
  %5414 = vmatpush1.msra.mxu0 0.0
  %5415 = vmatprep.subr.mxu0 0.0
  %5416 = vmatpush1.msra.mxu0 0.0
  %5417 = vmatprep.subr.mxu0 0.0
  %5418 = vmatpush1.msra.mxu0 0.0
  %5419 = vmatprep.subr.mxu0 0.0
  %5420 = vmatpush1.msra.mxu0 0.0
  %5421 = vmatprep.subr.mxu0 0.0
  %5422 = vmatpush1.msra.mxu0 0.0
  %5423 = vmatprep.subr.mxu0 0.0
  %5424 = vmatpush1.msra.mxu0 0.0
  %5425 = vmatprep.mubr.f32.mxu0 0.0
  %5426 = vmatmul.mubr.f32.gmra.mrb[0].mxu0 %v4760
  %v5427 = vpop.f32.mrb[0].mxu0
  %v5428 = vadd.f32 0.0, %v5427
  %v5429 = vpop.f32.mrb[0].mxu0
  %5430 = vmatprep.mubr.f32.mxu0 0.0
  %5431 = vmatmul.mubr.f32.gmra.mrb[0].mxu0 %v4763
  %v5432 = vpop.f32.mrb[0].mxu0
  %v5433 = vadd.f32 0.0, %v5432
  %v5434 = vpop.f32.mrb[0].mxu0
  %5435 = vmatprep.mubr.f32.mxu0 0.0
  %5436 = vmatmul.mubr.f32.gmra.mrb[0].mxu0 %v4766
  %v5437 = vpop.f32.mrb[0].mxu0
  %v5438 = vadd.f32 0.0, %v5437
  %v5439 = vpop.f32.mrb[0].mxu0
  %5440 = vmatprep.mubr.f32.mxu0 0.0
  %5441 = vmatmul.mubr.f32.gmra.mrb[0].mxu0 %v4769
  %v5442 = vpop.f32.mrb[0].mxu0
  %v5443 = vadd.f32 0.0, %v5442
  %v5444 = vpop.f32.mrb[0].mxu0
  %5445 = vdwg.mxu0
  %v5447 = vsel %vm4956, %v5350, 0
  %v5450 = vsel %vm4956, %v5351, 0
  %v5453 = vsel %vm4956, %v5352, 0
  %v5456 = vsel %vm4956, %v5353, 0
  %5458 = vmatprep.subr.mxu0 0.0
  %5459 = vmatpush1.msra.mxu0 %v5428
  %5460 = vmatprep.subr.mxu0 0.0
  %5461 = vmatpush1.msra.mxu0 %v5433
  %5462 = vmatprep.subr.mxu0 0.0
  %5463 = vmatpush1.msra.mxu0 %v5438
  %5464 = vmatprep.subr.mxu0 0.0
  %5465 = vmatpush1.msra.mxu0 %v5443
  %5466 = vmatprep.subr.mxu0 0.0
  %5467 = vmatpush1.msra.mxu0 0.0
  %5468 = vmatprep.subr.mxu0 0.0
  %5469 = vmatpush1.msra.mxu0 0.0
  %5470 = vmatprep.subr.mxu0 0.0
  %5471 = vmatpush1.msra.mxu0 0.0
  %5472 = vmatprep.subr.mxu0 0.0
  %5473 = vmatpush1.msra.mxu0 0.0
  %5474 = vmatprep.subr.mxu0 0.0
  %5475 = vmatpush1.msra.mxu0 0.0
  %5476 = vmatprep.subr.mxu0 0.0
  %5477 = vmatpush1.msra.mxu0 0.0
  %5478 = vmatprep.subr.mxu0 0.0
  %5479 = vmatpush1.msra.mxu0 0.0
  %5480 = vmatprep.subr.mxu0 0.0
  %5481 = vmatpush1.msra.mxu0 0.0
  %5482 = vmatprep.subr.mxu0 0.0
  %5483 = vmatpush1.msra.mxu0 0.0
  %5484 = vmatprep.subr.mxu0 0.0
  %5485 = vmatpush1.msra.mxu0 0.0
  %5486 = vmatprep.subr.mxu0 0.0
  %5487 = vmatpush1.msra.mxu0 0.0
  %5488 = vmatprep.subr.mxu0 0.0
  %5489 = vmatpush1.msra.mxu0 0.0
  %5490 = vmatprep.subr.mxu0 0.0
  %5491 = vmatpush1.msra.mxu0 0.0
  %5492 = vmatprep.subr.mxu0 0.0
  %5493 = vmatpush1.msra.mxu0 0.0
  %5494 = vmatprep.subr.mxu0 0.0
  %5495 = vmatpush1.msra.mxu0 0.0
  %5496 = vmatprep.subr.mxu0 0.0
  %5497 = vmatpush1.msra.mxu0 0.0
  %5498 = vmatprep.subr.mxu0 0.0
  %5499 = vmatpush1.msra.mxu0 0.0
  %5500 = vmatprep.subr.mxu0 0.0
  %5501 = vmatpush1.msra.mxu0 0.0
  %5502 = vmatprep.subr.mxu0 0.0
  %5503 = vmatpush1.msra.mxu0 0.0
  %5504 = vmatprep.subr.mxu0 0.0
  %5505 = vmatpush1.msra.mxu0 0.0
  %5506 = vmatprep.subr.mxu0 0.0
  %5507 = vmatpush1.msra.mxu0 0.0
  %5508 = vmatprep.subr.mxu0 0.0
  %5509 = vmatpush1.msra.mxu0 0.0
  %5510 = vmatprep.subr.mxu0 0.0
  %5511 = vmatpush1.msra.mxu0 0.0
  %5512 = vmatprep.subr.mxu0 0.0
  %5513 = vmatpush1.msra.mxu0 0.0
  %5514 = vmatprep.subr.mxu0 0.0
  %5515 = vmatpush1.msra.mxu0 0.0
  %5516 = vmatprep.subr.mxu0 0.0
  %5517 = vmatpush1.msra.mxu0 0.0
  %5518 = vmatprep.subr.mxu0 0.0
  %5519 = vmatpush1.msra.mxu0 0.0
  %5520 = vmatprep.subr.mxu0 0.0
  %5521 = vmatpush1.msra.mxu0 0.0
  %5522 = vmatprep.mubr.f32.mxu0 0.0
  %5523 = vmatmul.mubr.f32.gmra.mrb[0].mxu0 %v5447
  %v5524 = vpop.f32.mrb[0].mxu0
  %v5525 = vadd.f32 0.0, %v5524
  %v5526 = vpop.f32.mrb[0].mxu0
  %5527 = vmatprep.mubr.f32.mxu0 0.0
  %5528 = vmatmul.mubr.f32.gmra.mrb[0].mxu0 %v5450
  %v5529 = vpop.f32.mrb[0].mxu0
  %v5530 = vadd.f32 0.0, %v5529
  %v5531 = vpop.f32.mrb[0].mxu0
  %5532 = vmatprep.mubr.f32.mxu0 0.0
  %5533 = vmatmul.mubr.f32.gmra.mrb[0].mxu0 %v5453
  %v5534 = vpop.f32.mrb[0].mxu0
  %v5535 = vadd.f32 0.0, %v5534
  %v5536 = vpop.f32.mrb[0].mxu0
  %5537 = vmatprep.mubr.f32.mxu0 0.0
  %5538 = vmatmul.mubr.f32.gmra.mrb[0].mxu0 %v5456
  %v5539 = vpop.f32.mrb[0].mxu0
  %v5540 = vadd.f32 0.0, %v5539
  %v5541 = vpop.f32.mrb[0].mxu0
  %5542 = vdwg.mxu0
  %v5543 = vadd.f32 %v5345, %v5525
  %v5544 = vadd.f32 %v5346, %v5530
  %v5545 = vadd.f32 %v5347, %v5535
  %v5546 = vadd.f32 %v5348, %v5540
  %s5547 = scalar_lea.vmem %s7, 128
  %v5548 = vld [vmem:[%s5547] sm:$0xff]
  %v5549 = vld [vmem:[%s5547 + $0x8] sm:$0xff]
  %v5550 = vld [vmem:[%s5547 + $0x10] sm:$0xff]
  %v5551 = vld [vmem:[%s5547 + $0x18] sm:$0xff]
  %s5552 = scalar_lea.vmem %s6, 96
  %v5553 = vld [vmem:[%s5552] sm:$0xff]
  %v5554 = vld [vmem:[%s5552 + $0x8] sm:$0xff]
  %v5555 = vld [vmem:[%s5552 + $0x10] sm:$0x3]
  %v5557 = vsel %vm2966, %v5555, 0
  %5559 = vmatprep.subr.mxu0 0.0
  %5560 = vmatpush1.msra.mxu0 %v5553
  %5561 = vmatprep.subr.mxu0 0.0
  %5562 = vmatpush1.msra.mxu0 %v5554
  %5563 = vmatprep.subr.mxu0 0.0
  %5564 = vmatpush1.msra.mxu0 %v5557
  %5565 = vmatprep.subr.mxu0 0.0
  %5566 = vmatpush1.msra.mxu0 0.0
  %5567 = vmatprep.subr.mxu0 0.0
  %5568 = vmatpush1.msra.mxu0 0.0
  %5569 = vmatprep.subr.mxu0 0.0
  %5570 = vmatpush1.msra.mxu0 0.0
  %5571 = vmatprep.subr.mxu0 0.0
  %5572 = vmatpush1.msra.mxu0 0.0
  %5573 = vmatprep.subr.mxu0 0.0
  %5574 = vmatpush1.msra.mxu0 0.0
  %5575 = vmatprep.subr.mxu0 0.0
  %5576 = vmatpush1.msra.mxu0 0.0
  %5577 = vmatprep.subr.mxu0 0.0
  %5578 = vmatpush1.msra.mxu0 0.0
  %5579 = vmatprep.subr.mxu0 0.0
  %5580 = vmatpush1.msra.mxu0 0.0
  %5581 = vmatprep.subr.mxu0 0.0
  %5582 = vmatpush1.msra.mxu0 0.0
  %5583 = vmatprep.subr.mxu0 0.0
  %5584 = vmatpush1.msra.mxu0 0.0
  %5585 = vmatprep.subr.mxu0 0.0
  %5586 = vmatpush1.msra.mxu0 0.0
  %5587 = vmatprep.subr.mxu0 0.0
  %5588 = vmatpush1.msra.mxu0 0.0
  %5589 = vmatprep.subr.mxu0 0.0
  %5590 = vmatpush1.msra.mxu0 0.0
  %5591 = vmatprep.subr.mxu0 0.0
  %5592 = vmatpush1.msra.mxu0 0.0
  %5593 = vmatprep.subr.mxu0 0.0
  %5594 = vmatpush1.msra.mxu0 0.0
  %5595 = vmatprep.subr.mxu0 0.0
  %5596 = vmatpush1.msra.mxu0 0.0
  %5597 = vmatprep.subr.mxu0 0.0
  %5598 = vmatpush1.msra.mxu0 0.0
  %5599 = vmatprep.subr.mxu0 0.0
  %5600 = vmatpush1.msra.mxu0 0.0
  %5601 = vmatprep.subr.mxu0 0.0
  %5602 = vmatpush1.msra.mxu0 0.0
  %5603 = vmatprep.subr.mxu0 0.0
  %5604 = vmatpush1.msra.mxu0 0.0
  %5605 = vmatprep.subr.mxu0 0.0
  %5606 = vmatpush1.msra.mxu0 0.0
  %5607 = vmatprep.subr.mxu0 0.0
  %5608 = vmatpush1.msra.mxu0 0.0
  %5609 = vmatprep.subr.mxu0 0.0
  %5610 = vmatpush1.msra.mxu0 0.0
  %5611 = vmatprep.subr.mxu0 0.0
  %5612 = vmatpush1.msra.mxu0 0.0
  %5613 = vmatprep.subr.mxu0 0.0
  %5614 = vmatpush1.msra.mxu0 0.0
  %5615 = vmatprep.subr.mxu0 0.0
  %5616 = vmatpush1.msra.mxu0 0.0
  %5617 = vmatprep.subr.mxu0 0.0
  %5618 = vmatpush1.msra.mxu0 0.0
  %5619 = vmatprep.subr.mxu0 0.0
  %5620 = vmatpush1.msra.mxu0 0.0
  %5621 = vmatprep.subr.mxu0 0.0
  %5622 = vmatpush1.msra.mxu0 0.0
  %5623 = vmatprep.mubr.f32.mxu0 0.0
  %5624 = vmatmul.mubr.f32.gmra.mrb[0].mxu0 %v4760
  %v5625 = vpop.f32.mrb[0].mxu0
  %v5626 = vadd.f32 0.0, %v5625
  %v5627 = vpop.f32.mrb[0].mxu0
  %5628 = vmatprep.mubr.f32.mxu0 0.0
  %5629 = vmatmul.mubr.f32.gmra.mrb[0].mxu0 %v4763
  %v5630 = vpop.f32.mrb[0].mxu0
  %v5631 = vadd.f32 0.0, %v5630
  %v5632 = vpop.f32.mrb[0].mxu0
  %5633 = vmatprep.mubr.f32.mxu0 0.0
  %5634 = vmatmul.mubr.f32.gmra.mrb[0].mxu0 %v4766
  %v5635 = vpop.f32.mrb[0].mxu0
  %v5636 = vadd.f32 0.0, %v5635
  %v5637 = vpop.f32.mrb[0].mxu0
  %5638 = vmatprep.mubr.f32.mxu0 0.0
  %5639 = vmatmul.mubr.f32.gmra.mrb[0].mxu0 %v4769
  %v5640 = vpop.f32.mrb[0].mxu0
  %v5641 = vadd.f32 0.0, %v5640
  %v5642 = vpop.f32.mrb[0].mxu0
  %5643 = vdwg.mxu0
  %v5645 = vsel %vm4956, %v5548, 0
  %v5648 = vsel %vm4956, %v5549, 0
  %v5651 = vsel %vm4956, %v5550, 0
  %v5654 = vsel %vm4956, %v5551, 0
  %5656 = vmatprep.subr.mxu0 0.0
  %5657 = vmatpush1.msra.mxu0 %v5626
  %5658 = vmatprep.subr.mxu0 0.0
  %5659 = vmatpush1.msra.mxu0 %v5631
  %5660 = vmatprep.subr.mxu0 0.0
  %5661 = vmatpush1.msra.mxu0 %v5636
  %5662 = vmatprep.subr.mxu0 0.0
  %5663 = vmatpush1.msra.mxu0 %v5641
  %5664 = vmatprep.subr.mxu0 0.0
  %5665 = vmatpush1.msra.mxu0 0.0
  %5666 = vmatprep.subr.mxu0 0.0
  %5667 = vmatpush1.msra.mxu0 0.0
  %5668 = vmatprep.subr.mxu0 0.0
  %5669 = vmatpush1.msra.mxu0 0.0
  %5670 = vmatprep.subr.mxu0 0.0
  %5671 = vmatpush1.msra.mxu0 0.0
  %5672 = vmatprep.subr.mxu0 0.0
  %5673 = vmatpush1.msra.mxu0 0.0
  %5674 = vmatprep.subr.mxu0 0.0
  %5675 = vmatpush1.msra.mxu0 0.0
  %5676 = vmatprep.subr.mxu0 0.0
  %5677 = vmatpush1.msra.mxu0 0.0
  %5678 = vmatprep.subr.mxu0 0.0
  %5679 = vmatpush1.msra.mxu0 0.0
  %5680 = vmatprep.subr.mxu0 0.0
  %5681 = vmatpush1.msra.mxu0 0.0
  %5682 = vmatprep.subr.mxu0 0.0
  %5683 = vmatpush1.msra.mxu0 0.0
  %5684 = vmatprep.subr.mxu0 0.0
  %5685 = vmatpush1.msra.mxu0 0.0
  %5686 = vmatprep.subr.mxu0 0.0
  %5687 = vmatpush1.msra.mxu0 0.0
  %5688 = vmatprep.subr.mxu0 0.0
  %5689 = vmatpush1.msra.mxu0 0.0
  %5690 = vmatprep.subr.mxu0 0.0
  %5691 = vmatpush1.msra.mxu0 0.0
  %5692 = vmatprep.subr.mxu0 0.0
  %5693 = vmatpush1.msra.mxu0 0.0
  %5694 = vmatprep.subr.mxu0 0.0
  %5695 = vmatpush1.msra.mxu0 0.0
  %5696 = vmatprep.subr.mxu0 0.0
  %5697 = vmatpush1.msra.mxu0 0.0
  %5698 = vmatprep.subr.mxu0 0.0
  %5699 = vmatpush1.msra.mxu0 0.0
  %5700 = vmatprep.subr.mxu0 0.0
  %5701 = vmatpush1.msra.mxu0 0.0
  %5702 = vmatprep.subr.mxu0 0.0
  %5703 = vmatpush1.msra.mxu0 0.0
  %5704 = vmatprep.subr.mxu0 0.0
  %5705 = vmatpush1.msra.mxu0 0.0
  %5706 = vmatprep.subr.mxu0 0.0
  %5707 = vmatpush1.msra.mxu0 0.0
  %5708 = vmatprep.subr.mxu0 0.0
  %5709 = vmatpush1.msra.mxu0 0.0
  %5710 = vmatprep.subr.mxu0 0.0
  %5711 = vmatpush1.msra.mxu0 0.0
  %5712 = vmatprep.subr.mxu0 0.0
  %5713 = vmatpush1.msra.mxu0 0.0
  %5714 = vmatprep.subr.mxu0 0.0
  %5715 = vmatpush1.msra.mxu0 0.0
  %5716 = vmatprep.subr.mxu0 0.0
  %5717 = vmatpush1.msra.mxu0 0.0
  %5718 = vmatprep.subr.mxu0 0.0
  %5719 = vmatpush1.msra.mxu0 0.0
  %5720 = vmatprep.mubr.f32.mxu0 0.0
  %5721 = vmatmul.mubr.f32.gmra.mrb[0].mxu0 %v5645
  %v5722 = vpop.f32.mrb[0].mxu0
  %v5723 = vadd.f32 0.0, %v5722
  %v5724 = vpop.f32.mrb[0].mxu0
  %5725 = vmatprep.mubr.f32.mxu0 0.0
  %5726 = vmatmul.mubr.f32.gmra.mrb[0].mxu0 %v5648
  %v5727 = vpop.f32.mrb[0].mxu0
  %v5728 = vadd.f32 0.0, %v5727
  %v5729 = vpop.f32.mrb[0].mxu0
  %5730 = vmatprep.mubr.f32.mxu0 0.0
  %5731 = vmatmul.mubr.f32.gmra.mrb[0].mxu0 %v5651
  %v5732 = vpop.f32.mrb[0].mxu0
  %v5733 = vadd.f32 0.0, %v5732
  %v5734 = vpop.f32.mrb[0].mxu0
  %5735 = vmatprep.mubr.f32.mxu0 0.0
  %5736 = vmatmul.mubr.f32.gmra.mrb[0].mxu0 %v5654
  %v5737 = vpop.f32.mrb[0].mxu0
  %v5738 = vadd.f32 0.0, %v5737
  %v5739 = vpop.f32.mrb[0].mxu0
  %5740 = vdwg.mxu0
  %v5741 = vadd.f32 %v5543, %v5723
  %v5742 = vadd.f32 %v5544, %v5728
  %v5743 = vadd.f32 %v5545, %v5733
  %v5744 = vadd.f32 %v5546, %v5738
  %s5745 = scalar_lea.vmem %s7, 160
  %v5746 = vld [vmem:[%s5745] sm:$0xff]
  %v5747 = vld [vmem:[%s5745 + $0x8] sm:$0xff]
  %v5748 = vld [vmem:[%s5745 + $0x10] sm:$0xff]
  %v5749 = vld [vmem:[%s5745 + $0x18] sm:$0xff]
  %s5750 = scalar_lea.vmem %s6, 120
  %v5751 = vld [vmem:[%s5750] sm:$0xff]
  %v5752 = vld [vmem:[%s5750 + $0x8] sm:$0xff]
  %v5753 = vld [vmem:[%s5750 + $0x10] sm:$0x3]
  %v5755 = vsel %vm2966, %v5753, 0
  %5757 = vmatprep.subr.mxu0 0.0
  %5758 = vmatpush1.msra.mxu0 %v5751
  %5759 = vmatprep.subr.mxu0 0.0
  %5760 = vmatpush1.msra.mxu0 %v5752
  %5761 = vmatprep.subr.mxu0 0.0
  %5762 = vmatpush1.msra.mxu0 %v5755
  %5763 = vmatprep.subr.mxu0 0.0
  %5764 = vmatpush1.msra.mxu0 0.0
  %5765 = vmatprep.subr.mxu0 0.0
  %5766 = vmatpush1.msra.mxu0 0.0
  %5767 = vmatprep.subr.mxu0 0.0
  %5768 = vmatpush1.msra.mxu0 0.0
  %5769 = vmatprep.subr.mxu0 0.0
  %5770 = vmatpush1.msra.mxu0 0.0
  %5771 = vmatprep.subr.mxu0 0.0
  %5772 = vmatpush1.msra.mxu0 0.0
  %5773 = vmatprep.subr.mxu0 0.0
  %5774 = vmatpush1.msra.mxu0 0.0
  %5775 = vmatprep.subr.mxu0 0.0
  %5776 = vmatpush1.msra.mxu0 0.0
  %5777 = vmatprep.subr.mxu0 0.0
  %5778 = vmatpush1.msra.mxu0 0.0
  %5779 = vmatprep.subr.mxu0 0.0
  %5780 = vmatpush1.msra.mxu0 0.0
  %5781 = vmatprep.subr.mxu0 0.0
  %5782 = vmatpush1.msra.mxu0 0.0
  %5783 = vmatprep.subr.mxu0 0.0
  %5784 = vmatpush1.msra.mxu0 0.0
  %5785 = vmatprep.subr.mxu0 0.0
  %5786 = vmatpush1.msra.mxu0 0.0
  %5787 = vmatprep.subr.mxu0 0.0
  %5788 = vmatpush1.msra.mxu0 0.0
  %5789 = vmatprep.subr.mxu0 0.0
  %5790 = vmatpush1.msra.mxu0 0.0
  %5791 = vmatprep.subr.mxu0 0.0
  %5792 = vmatpush1.msra.mxu0 0.0
  %5793 = vmatprep.subr.mxu0 0.0
  %5794 = vmatpush1.msra.mxu0 0.0
  %5795 = vmatprep.subr.mxu0 0.0
  %5796 = vmatpush1.msra.mxu0 0.0
  %5797 = vmatprep.subr.mxu0 0.0
  %5798 = vmatpush1.msra.mxu0 0.0
  %5799 = vmatprep.subr.mxu0 0.0
  %5800 = vmatpush1.msra.mxu0 0.0
  %5801 = vmatprep.subr.mxu0 0.0
  %5802 = vmatpush1.msra.mxu0 0.0
  %5803 = vmatprep.subr.mxu0 0.0
  %5804 = vmatpush1.msra.mxu0 0.0
  %5805 = vmatprep.subr.mxu0 0.0
  %5806 = vmatpush1.msra.mxu0 0.0
  %5807 = vmatprep.subr.mxu0 0.0
  %5808 = vmatpush1.msra.mxu0 0.0
  %5809 = vmatprep.subr.mxu0 0.0
  %5810 = vmatpush1.msra.mxu0 0.0
  %5811 = vmatprep.subr.mxu0 0.0
  %5812 = vmatpush1.msra.mxu0 0.0
  %5813 = vmatprep.subr.mxu0 0.0
  %5814 = vmatpush1.msra.mxu0 0.0
  %5815 = vmatprep.subr.mxu0 0.0
  %5816 = vmatpush1.msra.mxu0 0.0
  %5817 = vmatprep.subr.mxu0 0.0
  %5818 = vmatpush1.msra.mxu0 0.0
  %5819 = vmatprep.subr.mxu0 0.0
  %5820 = vmatpush1.msra.mxu0 0.0
  %5821 = vmatprep.mubr.f32.mxu0 0.0
  %5822 = vmatmul.mubr.f32.gmra.mrb[0].mxu0 %v4760
  %v5823 = vpop.f32.mrb[0].mxu0
  %v5824 = vadd.f32 0.0, %v5823
  %v5825 = vpop.f32.mrb[0].mxu0
  %5826 = vmatprep.mubr.f32.mxu0 0.0
  %5827 = vmatmul.mubr.f32.gmra.mrb[0].mxu0 %v4763
  %v5828 = vpop.f32.mrb[0].mxu0
  %v5829 = vadd.f32 0.0, %v5828
  %v5830 = vpop.f32.mrb[0].mxu0
  %5831 = vmatprep.mubr.f32.mxu0 0.0
  %5832 = vmatmul.mubr.f32.gmra.mrb[0].mxu0 %v4766
  %v5833 = vpop.f32.mrb[0].mxu0
  %v5834 = vadd.f32 0.0, %v5833
  %v5835 = vpop.f32.mrb[0].mxu0
  %5836 = vmatprep.mubr.f32.mxu0 0.0
  %5837 = vmatmul.mubr.f32.gmra.mrb[0].mxu0 %v4769
  %v5838 = vpop.f32.mrb[0].mxu0
  %v5839 = vadd.f32 0.0, %v5838
  %v5840 = vpop.f32.mrb[0].mxu0
  %5841 = vdwg.mxu0
  %v5843 = vsel %vm4956, %v5746, 0
  %v5846 = vsel %vm4956, %v5747, 0
  %v5849 = vsel %vm4956, %v5748, 0
  %v5852 = vsel %vm4956, %v5749, 0
  %5854 = vmatprep.subr.mxu0 0.0
  %5855 = vmatpush1.msra.mxu0 %v5824
  %5856 = vmatprep.subr.mxu0 0.0
  %5857 = vmatpush1.msra.mxu0 %v5829
  %5858 = vmatprep.subr.mxu0 0.0
  %5859 = vmatpush1.msra.mxu0 %v5834
  %5860 = vmatprep.subr.mxu0 0.0
  %5861 = vmatpush1.msra.mxu0 %v5839
  %5862 = vmatprep.subr.mxu0 0.0
  %5863 = vmatpush1.msra.mxu0 0.0
  %5864 = vmatprep.subr.mxu0 0.0
  %5865 = vmatpush1.msra.mxu0 0.0
  %5866 = vmatprep.subr.mxu0 0.0
  %5867 = vmatpush1.msra.mxu0 0.0
  %5868 = vmatprep.subr.mxu0 0.0
  %5869 = vmatpush1.msra.mxu0 0.0
  %5870 = vmatprep.subr.mxu0 0.0
  %5871 = vmatpush1.msra.mxu0 0.0
  %5872 = vmatprep.subr.mxu0 0.0
  %5873 = vmatpush1.msra.mxu0 0.0
  %5874 = vmatprep.subr.mxu0 0.0
  %5875 = vmatpush1.msra.mxu0 0.0
  %5876 = vmatprep.subr.mxu0 0.0
  %5877 = vmatpush1.msra.mxu0 0.0
  %5878 = vmatprep.subr.mxu0 0.0
  %5879 = vmatpush1.msra.mxu0 0.0
  %5880 = vmatprep.subr.mxu0 0.0
  %5881 = vmatpush1.msra.mxu0 0.0
  %5882 = vmatprep.subr.mxu0 0.0
  %5883 = vmatpush1.msra.mxu0 0.0
  %5884 = vmatprep.subr.mxu0 0.0
  %5885 = vmatpush1.msra.mxu0 0.0
  %5886 = vmatprep.subr.mxu0 0.0
  %5887 = vmatpush1.msra.mxu0 0.0
  %5888 = vmatprep.subr.mxu0 0.0
  %5889 = vmatpush1.msra.mxu0 0.0
  %5890 = vmatprep.subr.mxu0 0.0
  %5891 = vmatpush1.msra.mxu0 0.0
  %5892 = vmatprep.subr.mxu0 0.0
  %5893 = vmatpush1.msra.mxu0 0.0
  %5894 = vmatprep.subr.mxu0 0.0
  %5895 = vmatpush1.msra.mxu0 0.0
  %5896 = vmatprep.subr.mxu0 0.0
  %5897 = vmatpush1.msra.mxu0 0.0
  %5898 = vmatprep.subr.mxu0 0.0
  %5899 = vmatpush1.msra.mxu0 0.0
  %5900 = vmatprep.subr.mxu0 0.0
  %5901 = vmatpush1.msra.mxu0 0.0
  %5902 = vmatprep.subr.mxu0 0.0
  %5903 = vmatpush1.msra.mxu0 0.0
  %5904 = vmatprep.subr.mxu0 0.0
  %5905 = vmatpush1.msra.mxu0 0.0
  %5906 = vmatprep.subr.mxu0 0.0
  %5907 = vmatpush1.msra.mxu0 0.0
  %5908 = vmatprep.subr.mxu0 0.0
  %5909 = vmatpush1.msra.mxu0 0.0
  %5910 = vmatprep.subr.mxu0 0.0
  %5911 = vmatpush1.msra.mxu0 0.0
  %5912 = vmatprep.subr.mxu0 0.0
  %5913 = vmatpush1.msra.mxu0 0.0
  %5914 = vmatprep.subr.mxu0 0.0
  %5915 = vmatpush1.msra.mxu0 0.0
  %5916 = vmatprep.subr.mxu0 0.0
  %5917 = vmatpush1.msra.mxu0 0.0
  %5918 = vmatprep.mubr.f32.mxu0 0.0
  %5919 = vmatmul.mubr.f32.gmra.mrb[0].mxu0 %v5843
  %v5920 = vpop.f32.mrb[0].mxu0
  %v5921 = vadd.f32 0.0, %v5920
  %v5922 = vpop.f32.mrb[0].mxu0
  %5923 = vmatprep.mubr.f32.mxu0 0.0
  %5924 = vmatmul.mubr.f32.gmra.mrb[0].mxu0 %v5846
  %v5925 = vpop.f32.mrb[0].mxu0
  %v5926 = vadd.f32 0.0, %v5925
  %v5927 = vpop.f32.mrb[0].mxu0
  %5928 = vmatprep.mubr.f32.mxu0 0.0
  %5929 = vmatmul.mubr.f32.gmra.mrb[0].mxu0 %v5849
  %v5930 = vpop.f32.mrb[0].mxu0
  %v5931 = vadd.f32 0.0, %v5930
  %v5932 = vpop.f32.mrb[0].mxu0
  %5933 = vmatprep.mubr.f32.mxu0 0.0
  %5934 = vmatmul.mubr.f32.gmra.mrb[0].mxu0 %v5852
  %v5935 = vpop.f32.mrb[0].mxu0
  %v5936 = vadd.f32 0.0, %v5935
  %v5937 = vpop.f32.mrb[0].mxu0
  %5938 = vdwg.mxu0
  %v5939 = vadd.f32 %v5741, %v5921
  %v5940 = vadd.f32 %v5742, %v5926
  %v5941 = vadd.f32 %v5743, %v5931
  %v5942 = vadd.f32 %v5744, %v5936
  %s5943 = scalar_lea.vmem %s7, 192
  %v5944 = vld [vmem:[%s5943] sm:$0xff]
  %v5945 = vld [vmem:[%s5943 + $0x8] sm:$0xff]
  %v5946 = vld [vmem:[%s5943 + $0x10] sm:$0xff]
  %v5947 = vld [vmem:[%s5943 + $0x18] sm:$0xff]
  %s5948 = scalar_lea.vmem %s6, 144
  %v5949 = vld [vmem:[%s5948] sm:$0xff]
  %v5950 = vld [vmem:[%s5948 + $0x8] sm:$0xff]
  %v5951 = vld [vmem:[%s5948 + $0x10] sm:$0x3]
  %v5953 = vsel %vm2966, %v5951, 0
  %5955 = vmatprep.subr.mxu0 0.0
  %5956 = vmatpush1.msra.mxu0 %v5949
  %5957 = vmatprep.subr.mxu0 0.0
  %5958 = vmatpush1.msra.mxu0 %v5950
  %5959 = vmatprep.subr.mxu0 0.0
  %5960 = vmatpush1.msra.mxu0 %v5953
  %5961 = vmatprep.subr.mxu0 0.0
  %5962 = vmatpush1.msra.mxu0 0.0
  %5963 = vmatprep.subr.mxu0 0.0
  %5964 = vmatpush1.msra.mxu0 0.0
  %5965 = vmatprep.subr.mxu0 0.0
  %5966 = vmatpush1.msra.mxu0 0.0
  %5967 = vmatprep.subr.mxu0 0.0
  %5968 = vmatpush1.msra.mxu0 0.0
  %5969 = vmatprep.subr.mxu0 0.0
  %5970 = vmatpush1.msra.mxu0 0.0
  %5971 = vmatprep.subr.mxu0 0.0
  %5972 = vmatpush1.msra.mxu0 0.0
  %5973 = vmatprep.subr.mxu0 0.0
  %5974 = vmatpush1.msra.mxu0 0.0
  %5975 = vmatprep.subr.mxu0 0.0
  %5976 = vmatpush1.msra.mxu0 0.0
  %5977 = vmatprep.subr.mxu0 0.0
  %5978 = vmatpush1.msra.mxu0 0.0
  %5979 = vmatprep.subr.mxu0 0.0
  %5980 = vmatpush1.msra.mxu0 0.0
  %5981 = vmatprep.subr.mxu0 0.0
  %5982 = vmatpush1.msra.mxu0 0.0
  %5983 = vmatprep.subr.mxu0 0.0
  %5984 = vmatpush1.msra.mxu0 0.0
  %5985 = vmatprep.subr.mxu0 0.0
  %5986 = vmatpush1.msra.mxu0 0.0
  %5987 = vmatprep.subr.mxu0 0.0
  %5988 = vmatpush1.msra.mxu0 0.0
  %5989 = vmatprep.subr.mxu0 0.0
  %5990 = vmatpush1.msra.mxu0 0.0
  %5991 = vmatprep.subr.mxu0 0.0
  %5992 = vmatpush1.msra.mxu0 0.0
  %5993 = vmatprep.subr.mxu0 0.0
  %5994 = vmatpush1.msra.mxu0 0.0
  %5995 = vmatprep.subr.mxu0 0.0
  %5996 = vmatpush1.msra.mxu0 0.0
  %5997 = vmatprep.subr.mxu0 0.0
  %5998 = vmatpush1.msra.mxu0 0.0
  %5999 = vmatprep.subr.mxu0 0.0
  %6000 = vmatpush1.msra.mxu0 0.0
  %6001 = vmatprep.subr.mxu0 0.0
  %6002 = vmatpush1.msra.mxu0 0.0
  %6003 = vmatprep.subr.mxu0 0.0
  %6004 = vmatpush1.msra.mxu0 0.0
  %6005 = vmatprep.subr.mxu0 0.0
  %6006 = vmatpush1.msra.mxu0 0.0
  %6007 = vmatprep.subr.mxu0 0.0
  %6008 = vmatpush1.msra.mxu0 0.0
  %6009 = vmatprep.subr.mxu0 0.0
  %6010 = vmatpush1.msra.mxu0 0.0
  %6011 = vmatprep.subr.mxu0 0.0
  %6012 = vmatpush1.msra.mxu0 0.0
  %6013 = vmatprep.subr.mxu0 0.0
  %6014 = vmatpush1.msra.mxu0 0.0
  %6015 = vmatprep.subr.mxu0 0.0
  %6016 = vmatpush1.msra.mxu0 0.0
  %6017 = vmatprep.subr.mxu0 0.0
  %6018 = vmatpush1.msra.mxu0 0.0
  %6019 = vmatprep.mubr.f32.mxu0 0.0
  %6020 = vmatmul.mubr.f32.gmra.mrb[0].mxu0 %v4760
  %v6021 = vpop.f32.mrb[0].mxu0
  %v6022 = vadd.f32 0.0, %v6021
  %v6023 = vpop.f32.mrb[0].mxu0
  %6024 = vmatprep.mubr.f32.mxu0 0.0
  %6025 = vmatmul.mubr.f32.gmra.mrb[0].mxu0 %v4763
  %v6026 = vpop.f32.mrb[0].mxu0
  %v6027 = vadd.f32 0.0, %v6026
  %v6028 = vpop.f32.mrb[0].mxu0
  %6029 = vmatprep.mubr.f32.mxu0 0.0
  %6030 = vmatmul.mubr.f32.gmra.mrb[0].mxu0 %v4766
  %v6031 = vpop.f32.mrb[0].mxu0
  %v6032 = vadd.f32 0.0, %v6031
  %v6033 = vpop.f32.mrb[0].mxu0
  %6034 = vmatprep.mubr.f32.mxu0 0.0
  %6035 = vmatmul.mubr.f32.gmra.mrb[0].mxu0 %v4769
  %v6036 = vpop.f32.mrb[0].mxu0
  %v6037 = vadd.f32 0.0, %v6036
  %v6038 = vpop.f32.mrb[0].mxu0
  %6039 = vdwg.mxu0
  %v6041 = vsel %vm4956, %v5944, 0
  %v6044 = vsel %vm4956, %v5945, 0
  %v6047 = vsel %vm4956, %v5946, 0
  %v6050 = vsel %vm4956, %v5947, 0
  %6052 = vmatprep.subr.mxu0 0.0
  %6053 = vmatpush1.msra.mxu0 %v6022
  %6054 = vmatprep.subr.mxu0 0.0
  %6055 = vmatpush1.msra.mxu0 %v6027
  %6056 = vmatprep.subr.mxu0 0.0
  %6057 = vmatpush1.msra.mxu0 %v6032
  %6058 = vmatprep.subr.mxu0 0.0
  %6059 = vmatpush1.msra.mxu0 %v6037
  %6060 = vmatprep.subr.mxu0 0.0
  %6061 = vmatpush1.msra.mxu0 0.0
  %6062 = vmatprep.subr.mxu0 0.0
  %6063 = vmatpush1.msra.mxu0 0.0
  %6064 = vmatprep.subr.mxu0 0.0
  %6065 = vmatpush1.msra.mxu0 0.0
  %6066 = vmatprep.subr.mxu0 0.0
  %6067 = vmatpush1.msra.mxu0 0.0
  %6068 = vmatprep.subr.mxu0 0.0
  %6069 = vmatpush1.msra.mxu0 0.0
  %6070 = vmatprep.subr.mxu0 0.0
  %6071 = vmatpush1.msra.mxu0 0.0
  %6072 = vmatprep.subr.mxu0 0.0
  %6073 = vmatpush1.msra.mxu0 0.0
  %6074 = vmatprep.subr.mxu0 0.0
  %6075 = vmatpush1.msra.mxu0 0.0
  %6076 = vmatprep.subr.mxu0 0.0
  %6077 = vmatpush1.msra.mxu0 0.0
  %6078 = vmatprep.subr.mxu0 0.0
  %6079 = vmatpush1.msra.mxu0 0.0
  %6080 = vmatprep.subr.mxu0 0.0
  %6081 = vmatpush1.msra.mxu0 0.0
  %6082 = vmatprep.subr.mxu0 0.0
  %6083 = vmatpush1.msra.mxu0 0.0
  %6084 = vmatprep.subr.mxu0 0.0
  %6085 = vmatpush1.msra.mxu0 0.0
  %6086 = vmatprep.subr.mxu0 0.0
  %6087 = vmatpush1.msra.mxu0 0.0
  %6088 = vmatprep.subr.mxu0 0.0
  %6089 = vmatpush1.msra.mxu0 0.0
  %6090 = vmatprep.subr.mxu0 0.0
  %6091 = vmatpush1.msra.mxu0 0.0
  %6092 = vmatprep.subr.mxu0 0.0
  %6093 = vmatpush1.msra.mxu0 0.0
  %6094 = vmatprep.subr.mxu0 0.0
  %6095 = vmatpush1.msra.mxu0 0.0
  %6096 = vmatprep.subr.mxu0 0.0
  %6097 = vmatpush1.msra.mxu0 0.0
  %6098 = vmatprep.subr.mxu0 0.0
  %6099 = vmatpush1.msra.mxu0 0.0
  %6100 = vmatprep.subr.mxu0 0.0
  %6101 = vmatpush1.msra.mxu0 0.0
  %6102 = vmatprep.subr.mxu0 0.0
  %6103 = vmatpush1.msra.mxu0 0.0
  %6104 = vmatprep.subr.mxu0 0.0
  %6105 = vmatpush1.msra.mxu0 0.0
  %6106 = vmatprep.subr.mxu0 0.0
  %6107 = vmatpush1.msra.mxu0 0.0
  %6108 = vmatprep.subr.mxu0 0.0
  %6109 = vmatpush1.msra.mxu0 0.0
  %6110 = vmatprep.subr.mxu0 0.0
  %6111 = vmatpush1.msra.mxu0 0.0
  %6112 = vmatprep.subr.mxu0 0.0
  %6113 = vmatpush1.msra.mxu0 0.0
  %6114 = vmatprep.subr.mxu0 0.0
  %6115 = vmatpush1.msra.mxu0 0.0
  %6116 = vmatprep.mubr.f32.mxu0 0.0
  %6117 = vmatmul.mubr.f32.gmra.mrb[0].mxu0 %v6041
  %v6118 = vpop.f32.mrb[0].mxu0
  %v6119 = vadd.f32 0.0, %v6118
  %v6120 = vpop.f32.mrb[0].mxu0
  %6121 = vmatprep.mubr.f32.mxu0 0.0
  %6122 = vmatmul.mubr.f32.gmra.mrb[0].mxu0 %v6044
  %v6123 = vpop.f32.mrb[0].mxu0
  %v6124 = vadd.f32 0.0, %v6123
  %v6125 = vpop.f32.mrb[0].mxu0
  %6126 = vmatprep.mubr.f32.mxu0 0.0
  %6127 = vmatmul.mubr.f32.gmra.mrb[0].mxu0 %v6047
  %v6128 = vpop.f32.mrb[0].mxu0
  %v6129 = vadd.f32 0.0, %v6128
  %v6130 = vpop.f32.mrb[0].mxu0
  %6131 = vmatprep.mubr.f32.mxu0 0.0
  %6132 = vmatmul.mubr.f32.gmra.mrb[0].mxu0 %v6050
  %v6133 = vpop.f32.mrb[0].mxu0
  %v6134 = vadd.f32 0.0, %v6133
  %v6135 = vpop.f32.mrb[0].mxu0
  %6136 = vdwg.mxu0
  %v6137 = vadd.f32 %v5939, %v6119
  %v6138 = vadd.f32 %v5940, %v6124
  %v6139 = vadd.f32 %v5941, %v6129
  %v6140 = vadd.f32 %v5942, %v6134
  %s6141 = scalar_lea.vmem %s7, 224
  %v6142 = vld [vmem:[%s6141] sm:$0xff]
  %v6143 = vld [vmem:[%s6141 + $0x8] sm:$0xff]
  %v6144 = vld [vmem:[%s6141 + $0x10] sm:$0xff]
  %v6145 = vld [vmem:[%s6141 + $0x18] sm:$0xff]
  %s6146 = scalar_lea.vmem %s6, 168
  %v6147 = vld [vmem:[%s6146] sm:$0xff]
  %v6148 = vld [vmem:[%s6146 + $0x8] sm:$0xff]
  %v6149 = vld [vmem:[%s6146 + $0x10] sm:$0x3]
  %v6151 = vsel %vm2966, %v6149, 0
  %6153 = vmatprep.subr.mxu0 0.0
  %6154 = vmatpush1.msra.mxu0 %v6147
  %6155 = vmatprep.subr.mxu0 0.0
  %6156 = vmatpush1.msra.mxu0 %v6148
  %6157 = vmatprep.subr.mxu0 0.0
  %6158 = vmatpush1.msra.mxu0 %v6151
  %6159 = vmatprep.subr.mxu0 0.0
  %6160 = vmatpush1.msra.mxu0 0.0
  %6161 = vmatprep.subr.mxu0 0.0
  %6162 = vmatpush1.msra.mxu0 0.0
  %6163 = vmatprep.subr.mxu0 0.0
  %6164 = vmatpush1.msra.mxu0 0.0
  %6165 = vmatprep.subr.mxu0 0.0
  %6166 = vmatpush1.msra.mxu0 0.0
  %6167 = vmatprep.subr.mxu0 0.0
  %6168 = vmatpush1.msra.mxu0 0.0
  %6169 = vmatprep.subr.mxu0 0.0
  %6170 = vmatpush1.msra.mxu0 0.0
  %6171 = vmatprep.subr.mxu0 0.0
  %6172 = vmatpush1.msra.mxu0 0.0
  %6173 = vmatprep.subr.mxu0 0.0
  %6174 = vmatpush1.msra.mxu0 0.0
  %6175 = vmatprep.subr.mxu0 0.0
  %6176 = vmatpush1.msra.mxu0 0.0
  %6177 = vmatprep.subr.mxu0 0.0
  %6178 = vmatpush1.msra.mxu0 0.0
  %6179 = vmatprep.subr.mxu0 0.0
  %6180 = vmatpush1.msra.mxu0 0.0
  %6181 = vmatprep.subr.mxu0 0.0
  %6182 = vmatpush1.msra.mxu0 0.0
  %6183 = vmatprep.subr.mxu0 0.0
  %6184 = vmatpush1.msra.mxu0 0.0
  %6185 = vmatprep.subr.mxu0 0.0
  %6186 = vmatpush1.msra.mxu0 0.0
  %6187 = vmatprep.subr.mxu0 0.0
  %6188 = vmatpush1.msra.mxu0 0.0
  %6189 = vmatprep.subr.mxu0 0.0
  %6190 = vmatpush1.msra.mxu0 0.0
  %6191 = vmatprep.subr.mxu0 0.0
  %6192 = vmatpush1.msra.mxu0 0.0
  %6193 = vmatprep.subr.mxu0 0.0
  %6194 = vmatpush1.msra.mxu0 0.0
  %6195 = vmatprep.subr.mxu0 0.0
  %6196 = vmatpush1.msra.mxu0 0.0
  %6197 = vmatprep.subr.mxu0 0.0
  %6198 = vmatpush1.msra.mxu0 0.0
  %6199 = vmatprep.subr.mxu0 0.0
  %6200 = vmatpush1.msra.mxu0 0.0
  %6201 = vmatprep.subr.mxu0 0.0
  %6202 = vmatpush1.msra.mxu0 0.0
  %6203 = vmatprep.subr.mxu0 0.0
  %6204 = vmatpush1.msra.mxu0 0.0
  %6205 = vmatprep.subr.mxu0 0.0
  %6206 = vmatpush1.msra.mxu0 0.0
  %6207 = vmatprep.subr.mxu0 0.0
  %6208 = vmatpush1.msra.mxu0 0.0
  %6209 = vmatprep.subr.mxu0 0.0
  %6210 = vmatpush1.msra.mxu0 0.0
  %6211 = vmatprep.subr.mxu0 0.0
  %6212 = vmatpush1.msra.mxu0 0.0
  %6213 = vmatprep.subr.mxu0 0.0
  %6214 = vmatpush1.msra.mxu0 0.0
  %6215 = vmatprep.subr.mxu0 0.0
  %6216 = vmatpush1.msra.mxu0 0.0
  %6217 = vmatprep.mubr.f32.mxu0 0.0
  %6218 = vmatmul.mubr.f32.gmra.mrb[0].mxu0 %v4760
  %v6219 = vpop.f32.mrb[0].mxu0
  %v6220 = vadd.f32 0.0, %v6219
  %v6221 = vpop.f32.mrb[0].mxu0
  %6222 = vmatprep.mubr.f32.mxu0 0.0
  %6223 = vmatmul.mubr.f32.gmra.mrb[0].mxu0 %v4763
  %v6224 = vpop.f32.mrb[0].mxu0
  %v6225 = vadd.f32 0.0, %v6224
  %v6226 = vpop.f32.mrb[0].mxu0
  %6227 = vmatprep.mubr.f32.mxu0 0.0
  %6228 = vmatmul.mubr.f32.gmra.mrb[0].mxu0 %v4766
  %v6229 = vpop.f32.mrb[0].mxu0
  %v6230 = vadd.f32 0.0, %v6229
  %v6231 = vpop.f32.mrb[0].mxu0
  %6232 = vmatprep.mubr.f32.mxu0 0.0
  %6233 = vmatmul.mubr.f32.gmra.mrb[0].mxu0 %v4769
  %v6234 = vpop.f32.mrb[0].mxu0
  %v6235 = vadd.f32 0.0, %v6234
  %v6236 = vpop.f32.mrb[0].mxu0
  %6237 = vdwg.mxu0
  %v6239 = vsel %vm4956, %v6142, 0
  %v6242 = vsel %vm4956, %v6143, 0
  %v6245 = vsel %vm4956, %v6144, 0
  %v6248 = vsel %vm4956, %v6145, 0
  %6250 = vmatprep.subr.mxu0 0.0
  %6251 = vmatpush1.msra.mxu0 %v6220
  %6252 = vmatprep.subr.mxu0 0.0
  %6253 = vmatpush1.msra.mxu0 %v6225
  %6254 = vmatprep.subr.mxu0 0.0
  %6255 = vmatpush1.msra.mxu0 %v6230
  %6256 = vmatprep.subr.mxu0 0.0
  %6257 = vmatpush1.msra.mxu0 %v6235
  %6258 = vmatprep.subr.mxu0 0.0
  %6259 = vmatpush1.msra.mxu0 0.0
  %6260 = vmatprep.subr.mxu0 0.0
  %6261 = vmatpush1.msra.mxu0 0.0
  %6262 = vmatprep.subr.mxu0 0.0
  %6263 = vmatpush1.msra.mxu0 0.0
  %6264 = vmatprep.subr.mxu0 0.0
  %6265 = vmatpush1.msra.mxu0 0.0
  %6266 = vmatprep.subr.mxu0 0.0
  %6267 = vmatpush1.msra.mxu0 0.0
  %6268 = vmatprep.subr.mxu0 0.0
  %6269 = vmatpush1.msra.mxu0 0.0
  %6270 = vmatprep.subr.mxu0 0.0
  %6271 = vmatpush1.msra.mxu0 0.0
  %6272 = vmatprep.subr.mxu0 0.0
  %6273 = vmatpush1.msra.mxu0 0.0
  %6274 = vmatprep.subr.mxu0 0.0
  %6275 = vmatpush1.msra.mxu0 0.0
  %6276 = vmatprep.subr.mxu0 0.0
  %6277 = vmatpush1.msra.mxu0 0.0
  %6278 = vmatprep.subr.mxu0 0.0
  %6279 = vmatpush1.msra.mxu0 0.0
  %6280 = vmatprep.subr.mxu0 0.0
  %6281 = vmatpush1.msra.mxu0 0.0
  %6282 = vmatprep.subr.mxu0 0.0
  %6283 = vmatpush1.msra.mxu0 0.0
  %6284 = vmatprep.subr.mxu0 0.0
  %6285 = vmatpush1.msra.mxu0 0.0
  %6286 = vmatprep.subr.mxu0 0.0
  %6287 = vmatpush1.msra.mxu0 0.0
  %6288 = vmatprep.subr.mxu0 0.0
  %6289 = vmatpush1.msra.mxu0 0.0
  %6290 = vmatprep.subr.mxu0 0.0
  %6291 = vmatpush1.msra.mxu0 0.0
  %6292 = vmatprep.subr.mxu0 0.0
  %6293 = vmatpush1.msra.mxu0 0.0
  %6294 = vmatprep.subr.mxu0 0.0
  %6295 = vmatpush1.msra.mxu0 0.0
  %6296 = vmatprep.subr.mxu0 0.0
  %6297 = vmatpush1.msra.mxu0 0.0
  %6298 = vmatprep.subr.mxu0 0.0
  %6299 = vmatpush1.msra.mxu0 0.0
  %6300 = vmatprep.subr.mxu0 0.0
  %6301 = vmatpush1.msra.mxu0 0.0
  %6302 = vmatprep.subr.mxu0 0.0
  %6303 = vmatpush1.msra.mxu0 0.0
  %6304 = vmatprep.subr.mxu0 0.0
  %6305 = vmatpush1.msra.mxu0 0.0
  %6306 = vmatprep.subr.mxu0 0.0
  %6307 = vmatpush1.msra.mxu0 0.0
  %6308 = vmatprep.subr.mxu0 0.0
  %6309 = vmatpush1.msra.mxu0 0.0
  %6310 = vmatprep.subr.mxu0 0.0
  %6311 = vmatpush1.msra.mxu0 0.0
  %6312 = vmatprep.subr.mxu0 0.0
  %6313 = vmatpush1.msra.mxu0 0.0
  %6314 = vmatprep.mubr.f32.mxu0 0.0
  %6315 = vmatmul.mubr.f32.gmra.mrb[0].mxu0 %v6239
  %v6316 = vpop.f32.mrb[0].mxu0
  %v6317 = vadd.f32 0.0, %v6316
  %v6318 = vpop.f32.mrb[0].mxu0
  %6319 = vmatprep.mubr.f32.mxu0 0.0
  %6320 = vmatmul.mubr.f32.gmra.mrb[0].mxu0 %v6242
  %v6321 = vpop.f32.mrb[0].mxu0
  %v6322 = vadd.f32 0.0, %v6321
  %v6323 = vpop.f32.mrb[0].mxu0
  %6324 = vmatprep.mubr.f32.mxu0 0.0
  %6325 = vmatmul.mubr.f32.gmra.mrb[0].mxu0 %v6245
  %v6326 = vpop.f32.mrb[0].mxu0
  %v6327 = vadd.f32 0.0, %v6326
  %v6328 = vpop.f32.mrb[0].mxu0
  %6329 = vmatprep.mubr.f32.mxu0 0.0
  %6330 = vmatmul.mubr.f32.gmra.mrb[0].mxu0 %v6248
  %v6331 = vpop.f32.mrb[0].mxu0
  %v6332 = vadd.f32 0.0, %v6331
  %v6333 = vpop.f32.mrb[0].mxu0
  %6334 = vdwg.mxu0
  %v6335 = vadd.f32 %v6137, %v6317
  %v6336 = vadd.f32 %v6138, %v6322
  %v6337 = vadd.f32 %v6139, %v6327
  %v6338 = vadd.f32 %v6140, %v6332
  %s6339 = scalar_lea.vmem %s7, 256
  %v6340 = vld [vmem:[%s6339] sm:$0xff]
  %v6341 = vld [vmem:[%s6339 + $0x8] sm:$0xff]
  %v6342 = vld [vmem:[%s6339 + $0x10] sm:$0xff]
  %v6343 = vld [vmem:[%s6339 + $0x18] sm:$0xff]
  %s6344 = scalar_lea.vmem %s6, 192
  %v6345 = vld [vmem:[%s6344] sm:$0xff]
  %v6346 = vld [vmem:[%s6344 + $0x8] sm:$0xff]
  %v6347 = vld [vmem:[%s6344 + $0x10] sm:$0x3]
  %v6349 = vsel %vm2966, %v6347, 0
  %6351 = vmatprep.subr.mxu0 0.0
  %6352 = vmatpush1.msra.mxu0 %v6345
  %6353 = vmatprep.subr.mxu0 0.0
  %6354 = vmatpush1.msra.mxu0 %v6346
  %6355 = vmatprep.subr.mxu0 0.0
  %6356 = vmatpush1.msra.mxu0 %v6349
  %6357 = vmatprep.subr.mxu0 0.0
  %6358 = vmatpush1.msra.mxu0 0.0
  %6359 = vmatprep.subr.mxu0 0.0
  %6360 = vmatpush1.msra.mxu0 0.0
  %6361 = vmatprep.subr.mxu0 0.0
  %6362 = vmatpush1.msra.mxu0 0.0
  %6363 = vmatprep.subr.mxu0 0.0
  %6364 = vmatpush1.msra.mxu0 0.0
  %6365 = vmatprep.subr.mxu0 0.0
  %6366 = vmatpush1.msra.mxu0 0.0
  %6367 = vmatprep.subr.mxu0 0.0
  %6368 = vmatpush1.msra.mxu0 0.0
  %6369 = vmatprep.subr.mxu0 0.0
  %6370 = vmatpush1.msra.mxu0 0.0
  %6371 = vmatprep.subr.mxu0 0.0
  %6372 = vmatpush1.msra.mxu0 0.0
  %6373 = vmatprep.subr.mxu0 0.0
  %6374 = vmatpush1.msra.mxu0 0.0
  %6375 = vmatprep.subr.mxu0 0.0
  %6376 = vmatpush1.msra.mxu0 0.0
  %6377 = vmatprep.subr.mxu0 0.0
  %6378 = vmatpush1.msra.mxu0 0.0
  %6379 = vmatprep.subr.mxu0 0.0
  %6380 = vmatpush1.msra.mxu0 0.0
  %6381 = vmatprep.subr.mxu0 0.0
  %6382 = vmatpush1.msra.mxu0 0.0
  %6383 = vmatprep.subr.mxu0 0.0
  %6384 = vmatpush1.msra.mxu0 0.0
  %6385 = vmatprep.subr.mxu0 0.0
  %6386 = vmatpush1.msra.mxu0 0.0
  %6387 = vmatprep.subr.mxu0 0.0
  %6388 = vmatpush1.msra.mxu0 0.0
  %6389 = vmatprep.subr.mxu0 0.0
  %6390 = vmatpush1.msra.mxu0 0.0
  %6391 = vmatprep.subr.mxu0 0.0
  %6392 = vmatpush1.msra.mxu0 0.0
  %6393 = vmatprep.subr.mxu0 0.0
  %6394 = vmatpush1.msra.mxu0 0.0
  %6395 = vmatprep.subr.mxu0 0.0
  %6396 = vmatpush1.msra.mxu0 0.0
  %6397 = vmatprep.subr.mxu0 0.0
  %6398 = vmatpush1.msra.mxu0 0.0
  %6399 = vmatprep.subr.mxu0 0.0
  %6400 = vmatpush1.msra.mxu0 0.0
  %6401 = vmatprep.subr.mxu0 0.0
  %6402 = vmatpush1.msra.mxu0 0.0
  %6403 = vmatprep.subr.mxu0 0.0
  %6404 = vmatpush1.msra.mxu0 0.0
  %6405 = vmatprep.subr.mxu0 0.0
  %6406 = vmatpush1.msra.mxu0 0.0
  %6407 = vmatprep.subr.mxu0 0.0
  %6408 = vmatpush1.msra.mxu0 0.0
  %6409 = vmatprep.subr.mxu0 0.0
  %6410 = vmatpush1.msra.mxu0 0.0
  %6411 = vmatprep.subr.mxu0 0.0
  %6412 = vmatpush1.msra.mxu0 0.0
  %6413 = vmatprep.subr.mxu0 0.0
  %6414 = vmatpush1.msra.mxu0 0.0
  %6415 = vmatprep.mubr.f32.mxu0 0.0
  %6416 = vmatmul.mubr.f32.gmra.mrb[0].mxu0 %v4760
  %v6417 = vpop.f32.mrb[0].mxu0
  %v6418 = vadd.f32 0.0, %v6417
  %v6419 = vpop.f32.mrb[0].mxu0
  %6420 = vmatprep.mubr.f32.mxu0 0.0
  %6421 = vmatmul.mubr.f32.gmra.mrb[0].mxu0 %v4763
  %v6422 = vpop.f32.mrb[0].mxu0
  %v6423 = vadd.f32 0.0, %v6422
  %v6424 = vpop.f32.mrb[0].mxu0
  %6425 = vmatprep.mubr.f32.mxu0 0.0
  %6426 = vmatmul.mubr.f32.gmra.mrb[0].mxu0 %v4766
  %v6427 = vpop.f32.mrb[0].mxu0
  %v6428 = vadd.f32 0.0, %v6427
  %v6429 = vpop.f32.mrb[0].mxu0
  %6430 = vmatprep.mubr.f32.mxu0 0.0
  %6431 = vmatmul.mubr.f32.gmra.mrb[0].mxu0 %v4769
  %v6432 = vpop.f32.mrb[0].mxu0
  %v6433 = vadd.f32 0.0, %v6432
  %v6434 = vpop.f32.mrb[0].mxu0
  %6435 = vdwg.mxu0
  %v6437 = vsel %vm4956, %v6340, 0
  %v6440 = vsel %vm4956, %v6341, 0
  %v6443 = vsel %vm4956, %v6342, 0
  %v6446 = vsel %vm4956, %v6343, 0
  %6448 = vmatprep.subr.mxu0 0.0
  %6449 = vmatpush1.msra.mxu0 %v6418
  %6450 = vmatprep.subr.mxu0 0.0
  %6451 = vmatpush1.msra.mxu0 %v6423
  %6452 = vmatprep.subr.mxu0 0.0
  %6453 = vmatpush1.msra.mxu0 %v6428
  %6454 = vmatprep.subr.mxu0 0.0
  %6455 = vmatpush1.msra.mxu0 %v6433
  %6456 = vmatprep.subr.mxu0 0.0
  %6457 = vmatpush1.msra.mxu0 0.0
  %6458 = vmatprep.subr.mxu0 0.0
  %6459 = vmatpush1.msra.mxu0 0.0
  %6460 = vmatprep.subr.mxu0 0.0
  %6461 = vmatpush1.msra.mxu0 0.0
  %6462 = vmatprep.subr.mxu0 0.0
  %6463 = vmatpush1.msra.mxu0 0.0
  %6464 = vmatprep.subr.mxu0 0.0
  %6465 = vmatpush1.msra.mxu0 0.0
  %6466 = vmatprep.subr.mxu0 0.0
  %6467 = vmatpush1.msra.mxu0 0.0
  %6468 = vmatprep.subr.mxu0 0.0
  %6469 = vmatpush1.msra.mxu0 0.0
  %6470 = vmatprep.subr.mxu0 0.0
  %6471 = vmatpush1.msra.mxu0 0.0
  %6472 = vmatprep.subr.mxu0 0.0
  %6473 = vmatpush1.msra.mxu0 0.0
  %6474 = vmatprep.subr.mxu0 0.0
  %6475 = vmatpush1.msra.mxu0 0.0
  %6476 = vmatprep.subr.mxu0 0.0
  %6477 = vmatpush1.msra.mxu0 0.0
  %6478 = vmatprep.subr.mxu0 0.0
  %6479 = vmatpush1.msra.mxu0 0.0
  %6480 = vmatprep.subr.mxu0 0.0
  %6481 = vmatpush1.msra.mxu0 0.0
  %6482 = vmatprep.subr.mxu0 0.0
  %6483 = vmatpush1.msra.mxu0 0.0
  %6484 = vmatprep.subr.mxu0 0.0
  %6485 = vmatpush1.msra.mxu0 0.0
  %6486 = vmatprep.subr.mxu0 0.0
  %6487 = vmatpush1.msra.mxu0 0.0
  %6488 = vmatprep.subr.mxu0 0.0
  %6489 = vmatpush1.msra.mxu0 0.0
  %6490 = vmatprep.subr.mxu0 0.0
  %6491 = vmatpush1.msra.mxu0 0.0
  %6492 = vmatprep.subr.mxu0 0.0
  %6493 = vmatpush1.msra.mxu0 0.0
  %6494 = vmatprep.subr.mxu0 0.0
  %6495 = vmatpush1.msra.mxu0 0.0
  %6496 = vmatprep.subr.mxu0 0.0
  %6497 = vmatpush1.msra.mxu0 0.0
  %6498 = vmatprep.subr.mxu0 0.0
  %6499 = vmatpush1.msra.mxu0 0.0
  %6500 = vmatprep.subr.mxu0 0.0
  %6501 = vmatpush1.msra.mxu0 0.0
  %6502 = vmatprep.subr.mxu0 0.0
  %6503 = vmatpush1.msra.mxu0 0.0
  %6504 = vmatprep.subr.mxu0 0.0
  %6505 = vmatpush1.msra.mxu0 0.0
  %6506 = vmatprep.subr.mxu0 0.0
  %6507 = vmatpush1.msra.mxu0 0.0
  %6508 = vmatprep.subr.mxu0 0.0
  %6509 = vmatpush1.msra.mxu0 0.0
  %6510 = vmatprep.subr.mxu0 0.0
  %6511 = vmatpush1.msra.mxu0 0.0
  %6512 = vmatprep.mubr.f32.mxu0 0.0
  %6513 = vmatmul.mubr.f32.gmra.mrb[0].mxu0 %v6437
  %v6514 = vpop.f32.mrb[0].mxu0
  %v6515 = vadd.f32 0.0, %v6514
  %v6516 = vpop.f32.mrb[0].mxu0
  %6517 = vmatprep.mubr.f32.mxu0 0.0
  %6518 = vmatmul.mubr.f32.gmra.mrb[0].mxu0 %v6440
  %v6519 = vpop.f32.mrb[0].mxu0
  %v6520 = vadd.f32 0.0, %v6519
  %v6521 = vpop.f32.mrb[0].mxu0
  %6522 = vmatprep.mubr.f32.mxu0 0.0
  %6523 = vmatmul.mubr.f32.gmra.mrb[0].mxu0 %v6443
  %v6524 = vpop.f32.mrb[0].mxu0
  %v6525 = vadd.f32 0.0, %v6524
  %v6526 = vpop.f32.mrb[0].mxu0
  %6527 = vmatprep.mubr.f32.mxu0 0.0
  %6528 = vmatmul.mubr.f32.gmra.mrb[0].mxu0 %v6446
  %v6529 = vpop.f32.mrb[0].mxu0
  %v6530 = vadd.f32 0.0, %v6529
  %v6531 = vpop.f32.mrb[0].mxu0
  %6532 = vdwg.mxu0
  %v6533 = vadd.f32 %v6335, %v6515
  %v6534 = vadd.f32 %v6336, %v6520
  %v6535 = vadd.f32 %v6337, %v6525
  %v6536 = vadd.f32 %v6338, %v6530
  %6538 = vset.pattern.permute.xlu0 0
  %6539 = vperm.xlu0 %6538, %v54
  %v6540 = vpop.permute.xlu0 %6539
  %6543 = vset.pattern.permute.xlu0 0
  %6544 = vperm.xlu0 %6543, %v55
  %v6545 = vpop.permute.xlu0 %6544
  %6548 = vset.pattern.permute.xlu0 0
  %6549 = vperm.xlu0 %6548, %v56
  %v6550 = vpop.permute.xlu0 %6549
  %6553 = vset.pattern.permute.xlu0 0
  %6554 = vperm.xlu0 %6553, %v57
  %v6555 = vpop.permute.xlu0 %6554
  %v6557 = vadd.f32 %v6533, %v6540
  %v6558 = vadd.f32 %v6534, %v6545
  %v6559 = vadd.f32 %v6535, %v6550
  %v6560 = vadd.f32 %v6536, %v6555
  %v6561 = vmax.f32 %v6557, 0.0
  %v6562 = vmax.f32 %v6558, 0.0
  %v6563 = vmax.f32 %v6559, 0.0
  %v6564 = vmax.f32 %v6560, 0.0
  %v6565 = vld [vmem:[%s8] sm:$0xff]
  %v6566 = vld [vmem:[%s8 + $0x8] sm:$0xff]
  %v6567 = vld [vmem:[%s8 + $0x10] sm:$0xff]
  %v6568 = vld [vmem:[%s8 + $0x18] sm:$0xff]
  %v6569 = vld [vmem:[%s8 + $0x20] sm:$0xff]
  %v6570 = vld [vmem:[%s8 + $0x28] sm:$0xff]
  %v6571 = vld [vmem:[%s8 + $0x30] sm:$0xff]
  %v6572 = vld [vmem:[%s8 + $0x38] sm:$0xff]
  %v6573 = vld [vmem:[%s9] sm:$0xff]
  %v6574 = vld [vmem:[%s9 + $0x8] sm:$0xff]
  %v6575 = vld [vmem:[%s9 + $0x10] sm:$0xff]
  %v6576 = vld [vmem:[%s9 + $0x18] sm:$0xff]
  %v6577 = vld [vmem:[%s9 + $0x20] sm:$0xff]
  %v6578 = vld [vmem:[%s9 + $0x28] sm:$0xff]
  %v6579 = vld [vmem:[%s9 + $0x30] sm:$0xff]
  %v6580 = vld [vmem:[%s9 + $0x38] sm:$0xff]
  %v6581 = vld [vmem:[%s12] sm:$0x1]
  %6583 = vset.pattern.permute.xlu0 0
  %6584 = vperm.xlu0 %6583, %v6573
  %v6585 = vpop.permute.xlu0 %6584
  %6588 = vset.pattern.permute.xlu0 0
  %6589 = vperm.xlu0 %6588, %v6574
  %v6590 = vpop.permute.xlu0 %6589
  %6593 = vset.pattern.permute.xlu0 0
  %6594 = vperm.xlu0 %6593, %v6575
  %v6595 = vpop.permute.xlu0 %6594
  %6598 = vset.pattern.permute.xlu0 0
  %6599 = vperm.xlu0 %6598, %v6576
  %v6600 = vpop.permute.xlu0 %6599
  %6603 = vset.pattern.permute.xlu0 0
  %6604 = vperm.xlu0 %6603, %v6577
  %v6605 = vpop.permute.xlu0 %6604
  %6608 = vset.pattern.permute.xlu0 0
  %6609 = vperm.xlu0 %6608, %v6578
  %v6610 = vpop.permute.xlu0 %6609
  %6613 = vset.pattern.permute.xlu0 0
  %6614 = vperm.xlu0 %6613, %v6579
  %v6615 = vpop.permute.xlu0 %6614
  %6618 = vset.pattern.permute.xlu0 0
  %6619 = vperm.xlu0 %6618, %v6580
  %v6620 = vpop.permute.xlu0 %6619
  %v6623 = vlaneseq
  %v6624 = vshrl.u32 %v6623, 7
  %v6625 = vsub.s32 0, %v6624
  %v6626 = vrot.slane %v6581, %v6625
  %v6628 = vmul.f32 %v6585, %v6626
  %v6629 = vmul.f32 %v6590, %v6626
  %v6630 = vmul.f32 %v6595, %v6626
  %v6631 = vmul.f32 %v6600, %v6626
  %v6632 = vmul.f32 %v6605, %v6626
  %v6633 = vmul.f32 %v6610, %v6626
  %v6634 = vmul.f32 %v6615, %v6626
  %v6635 = vmul.f32 %v6620, %v6626
  %v6637 = vsel %vm4956, %v6565, 0
  %v6640 = vsel %vm4956, %v6566, 0
  %v6643 = vsel %vm4956, %v6567, 0
  %v6646 = vsel %vm4956, %v6568, 0
  %v6649 = vsel %vm4956, %v6569, 0
  %v6652 = vsel %vm4956, %v6570, 0
  %v6655 = vsel %vm4956, %v6571, 0
  %v6658 = vsel %vm4956, %v6572, 0
  %6660 = vmatprep.subr.mxu0 0.0
  %6661 = vmatpush1.msra.mxu0 %v6561
  %6662 = vmatprep.subr.mxu0 0.0
  %6663 = vmatpush1.msra.mxu0 %v6562
  %6664 = vmatprep.subr.mxu0 0.0
  %6665 = vmatpush1.msra.mxu0 %v6563
  %6666 = vmatprep.subr.mxu0 0.0
  %6667 = vmatpush1.msra.mxu0 %v6564
  %6668 = vmatprep.subr.mxu0 0.0
  %6669 = vmatpush1.msra.mxu0 0.0
  %6670 = vmatprep.subr.mxu0 0.0
  %6671 = vmatpush1.msra.mxu0 0.0
  %6672 = vmatprep.subr.mxu0 0.0
  %6673 = vmatpush1.msra.mxu0 0.0
  %6674 = vmatprep.subr.mxu0 0.0
  %6675 = vmatpush1.msra.mxu0 0.0
  %6676 = vmatprep.subr.mxu0 0.0
  %6677 = vmatpush1.msra.mxu0 0.0
  %6678 = vmatprep.subr.mxu0 0.0
  %6679 = vmatpush1.msra.mxu0 0.0
  %6680 = vmatprep.subr.mxu0 0.0
  %6681 = vmatpush1.msra.mxu0 0.0
  %6682 = vmatprep.subr.mxu0 0.0
  %6683 = vmatpush1.msra.mxu0 0.0
  %6684 = vmatprep.subr.mxu0 0.0
  %6685 = vmatpush1.msra.mxu0 0.0
  %6686 = vmatprep.subr.mxu0 0.0
  %6687 = vmatpush1.msra.mxu0 0.0
  %6688 = vmatprep.subr.mxu0 0.0
  %6689 = vmatpush1.msra.mxu0 0.0
  %6690 = vmatprep.subr.mxu0 0.0
  %6691 = vmatpush1.msra.mxu0 0.0
  %6692 = vmatprep.subr.mxu0 0.0
  %6693 = vmatpush1.msra.mxu0 0.0
  %6694 = vmatprep.subr.mxu0 0.0
  %6695 = vmatpush1.msra.mxu0 0.0
  %6696 = vmatprep.subr.mxu0 0.0
  %6697 = vmatpush1.msra.mxu0 0.0
  %6698 = vmatprep.subr.mxu0 0.0
  %6699 = vmatpush1.msra.mxu0 0.0
  %6700 = vmatprep.subr.mxu0 0.0
  %6701 = vmatpush1.msra.mxu0 0.0
  %6702 = vmatprep.subr.mxu0 0.0
  %6703 = vmatpush1.msra.mxu0 0.0
  %6704 = vmatprep.subr.mxu0 0.0
  %6705 = vmatpush1.msra.mxu0 0.0
  %6706 = vmatprep.subr.mxu0 0.0
  %6707 = vmatpush1.msra.mxu0 0.0
  %6708 = vmatprep.subr.mxu0 0.0
  %6709 = vmatpush1.msra.mxu0 0.0
  %6710 = vmatprep.subr.mxu0 0.0
  %6711 = vmatpush1.msra.mxu0 0.0
  %6712 = vmatprep.subr.mxu0 0.0
  %6713 = vmatpush1.msra.mxu0 0.0
  %6714 = vmatprep.subr.mxu0 0.0
  %6715 = vmatpush1.msra.mxu0 0.0
  %6716 = vmatprep.subr.mxu0 0.0
  %6717 = vmatpush1.msra.mxu0 0.0
  %6718 = vmatprep.subr.mxu0 0.0
  %6719 = vmatpush1.msra.mxu0 0.0
  %6720 = vmatprep.subr.mxu0 0.0
  %6721 = vmatpush1.msra.mxu0 0.0
  %6722 = vmatprep.subr.mxu0 0.0
  %6723 = vmatpush1.msra.mxu0 0.0
  %6724 = vmatprep.mubr.f32.mxu0 0.0
  %6725 = vmatmul.mubr.f32.gmra.mrb[0].mxu0 %v6637
  %v6726 = vpop.f32.mrb[0].mxu0
  %v6727 = vadd.f32 %v6628, %v6726
  %v6728 = vpop.f32.mrb[0].mxu0
  %6729 = vmatprep.mubr.f32.mxu0 0.0
  %6730 = vmatmul.mubr.f32.gmra.mrb[0].mxu0 %v6640
  %v6731 = vpop.f32.mrb[0].mxu0
  %v6732 = vadd.f32 %v6629, %v6731
  %v6733 = vpop.f32.mrb[0].mxu0
  %6734 = vmatprep.mubr.f32.mxu0 0.0
  %6735 = vmatmul.mubr.f32.gmra.mrb[0].mxu0 %v6643
  %v6736 = vpop.f32.mrb[0].mxu0
  %v6737 = vadd.f32 %v6630, %v6736
  %v6738 = vpop.f32.mrb[0].mxu0
  %6739 = vmatprep.mubr.f32.mxu0 0.0
  %6740 = vmatmul.mubr.f32.gmra.mrb[0].mxu0 %v6646
  %v6741 = vpop.f32.mrb[0].mxu0
  %v6742 = vadd.f32 %v6631, %v6741
  %v6743 = vpop.f32.mrb[0].mxu0
  %6744 = vmatprep.mubr.f32.mxu0 0.0
  %6745 = vmatmul.mubr.f32.gmra.mrb[0].mxu0 %v6649
  %v6746 = vpop.f32.mrb[0].mxu0
  %v6747 = vadd.f32 %v6632, %v6746
  %v6748 = vpop.f32.mrb[0].mxu0
  %6749 = vmatprep.mubr.f32.mxu0 0.0
  %6750 = vmatmul.mubr.f32.gmra.mrb[0].mxu0 %v6652
  %v6751 = vpop.f32.mrb[0].mxu0
  %v6752 = vadd.f32 %v6633, %v6751
  %v6753 = vpop.f32.mrb[0].mxu0
  %6754 = vmatprep.mubr.f32.mxu0 0.0
  %6755 = vmatmul.mubr.f32.gmra.mrb[0].mxu0 %v6655
  %v6756 = vpop.f32.mrb[0].mxu0
  %v6757 = vadd.f32 %v6634, %v6756
  %v6758 = vpop.f32.mrb[0].mxu0
  %6759 = vmatprep.mubr.f32.mxu0 0.0
  %6760 = vmatmul.mubr.f32.gmra.mrb[0].mxu0 %v6658
  %v6761 = vpop.f32.mrb[0].mxu0
  %v6762 = vadd.f32 %v6635, %v6761
  %v6763 = vpop.f32.mrb[0].mxu0
  %6764 = vdwg.mxu0
  %6766 = vset.pattern.permute.xlu0 0
  %6767 = vperm.xlu0 %6766, %v62
  %v6768 = vpop.permute.xlu0 %6767
  %6771 = vset.pattern.permute.xlu0 0
  %6772 = vperm.xlu0 %6771, %v63
  %v6773 = vpop.permute.xlu0 %6772
  %6776 = vset.pattern.permute.xlu0 0
  %6777 = vperm.xlu0 %6776, %v64
  %v6778 = vpop.permute.xlu0 %6777
  %6781 = vset.pattern.permute.xlu0 0
  %6782 = vperm.xlu0 %6781, %v65
  %v6783 = vpop.permute.xlu0 %6782
  %6786 = vset.pattern.permute.xlu0 0
  %6787 = vperm.xlu0 %6786, %v66
  %v6788 = vpop.permute.xlu0 %6787
  %6791 = vset.pattern.permute.xlu0 0
  %6792 = vperm.xlu0 %6791, %v67
  %v6793 = vpop.permute.xlu0 %6792
  %6796 = vset.pattern.permute.xlu0 0
  %6797 = vperm.xlu0 %6796, %v68
  %v6798 = vpop.permute.xlu0 %6797
  %6801 = vset.pattern.permute.xlu0 0
  %6802 = vperm.xlu0 %6801, %v69
  %v6803 = vpop.permute.xlu0 %6802
  %v6805 = vadd.f32 %v6727, %v6768
  %v6806 = vadd.f32 %v6732, %v6773
  %v6807 = vadd.f32 %v6737, %v6778
  %v6808 = vadd.f32 %v6742, %v6783
  %v6809 = vadd.f32 %v6747, %v6788
  %v6810 = vadd.f32 %v6752, %v6793
  %v6811 = vadd.f32 %v6757, %v6798
  %v6812 = vadd.f32 %v6762, %v6803
  %v6813 = vld [vmem:[%s10] sm:$0xff]
  %v6814 = vld [vmem:[%s10 + $0x8] sm:$0xff]
  %v6815 = vld [vmem:[%s10 + $0x10] sm:$0xff]
  %v6816 = vld [vmem:[%s10 + $0x18] sm:$0xff]
  %6818 = vset.pattern.permute.xlu0 0
  %6819 = vperm.xlu0 %6818, %v70
  %v6820 = vpop.permute.xlu0 %6819
  %6823 = vset.pattern.permute.xlu0 0
  %6824 = vperm.xlu0 %6823, %v71
  %v6825 = vpop.permute.xlu0 %6824
  %6828 = vset.pattern.permute.xlu0 0
  %6829 = vperm.xlu0 %6828, %v72
  %v6830 = vpop.permute.xlu0 %6829
  %6833 = vset.pattern.permute.xlu0 0
  %6834 = vperm.xlu0 %6833, %v73
  %v6835 = vpop.permute.xlu0 %6834
  %vm6837 = vcmask 523264
  %v6839 = vsel %vm6837, %v6813, 0
  %v6842 = vsel %vm6837, %v6814, 0
  %v6845 = vsel %vm6837, %v6815, 0
  %v6848 = vsel %vm6837, %v6816, 0
  %6850 = vmatprep.subr.mxu0 0.0
  %6851 = vmatpush1.msra.mxu0 %v6805
  %6852 = vmatprep.subr.mxu0 0.0
  %6853 = vmatpush1.msra.mxu0 %v6806
  %6854 = vmatprep.subr.mxu0 0.0
  %6855 = vmatpush1.msra.mxu0 %v6807
  %6856 = vmatprep.subr.mxu0 0.0
  %6857 = vmatpush1.msra.mxu0 %v6808
  %6858 = vmatprep.subr.mxu0 0.0
  %6859 = vmatpush1.msra.mxu0 %v6809
  %6860 = vmatprep.subr.mxu0 0.0
  %6861 = vmatpush1.msra.mxu0 %v6810
  %6862 = vmatprep.subr.mxu0 0.0
  %6863 = vmatpush1.msra.mxu0 %v6811
  %6864 = vmatprep.subr.mxu0 0.0
  %6865 = vmatpush1.msra.mxu0 %v6812
  %6866 = vmatprep.subr.mxu0 0.0
  %6867 = vmatpush1.msra.mxu0 0.0
  %6868 = vmatprep.subr.mxu0 0.0
  %6869 = vmatpush1.msra.mxu0 0.0
  %6870 = vmatprep.subr.mxu0 0.0
  %6871 = vmatpush1.msra.mxu0 0.0
  %6872 = vmatprep.subr.mxu0 0.0
  %6873 = vmatpush1.msra.mxu0 0.0
  %6874 = vmatprep.subr.mxu0 0.0
  %6875 = vmatpush1.msra.mxu0 0.0
  %6876 = vmatprep.subr.mxu0 0.0
  %6877 = vmatpush1.msra.mxu0 0.0
  %6878 = vmatprep.subr.mxu0 0.0
  %6879 = vmatpush1.msra.mxu0 0.0
  %6880 = vmatprep.subr.mxu0 0.0
  %6881 = vmatpush1.msra.mxu0 0.0
  %6882 = vmatprep.subr.mxu0 0.0
  %6883 = vmatpush1.msra.mxu0 0.0
  %6884 = vmatprep.subr.mxu0 0.0
  %6885 = vmatpush1.msra.mxu0 0.0
  %6886 = vmatprep.subr.mxu0 0.0
  %6887 = vmatpush1.msra.mxu0 0.0
  %6888 = vmatprep.subr.mxu0 0.0
  %6889 = vmatpush1.msra.mxu0 0.0
  %6890 = vmatprep.subr.mxu0 0.0
  %6891 = vmatpush1.msra.mxu0 0.0
  %6892 = vmatprep.subr.mxu0 0.0
  %6893 = vmatpush1.msra.mxu0 0.0
  %6894 = vmatprep.subr.mxu0 0.0
  %6895 = vmatpush1.msra.mxu0 0.0
  %6896 = vmatprep.subr.mxu0 0.0
  %6897 = vmatpush1.msra.mxu0 0.0
  %6898 = vmatprep.subr.mxu0 0.0
  %6899 = vmatpush1.msra.mxu0 0.0
  %6900 = vmatprep.subr.mxu0 0.0
  %6901 = vmatpush1.msra.mxu0 0.0
  %6902 = vmatprep.subr.mxu0 0.0
  %6903 = vmatpush1.msra.mxu0 0.0
  %6904 = vmatprep.subr.mxu0 0.0
  %6905 = vmatpush1.msra.mxu0 0.0
  %6906 = vmatprep.subr.mxu0 0.0
  %6907 = vmatpush1.msra.mxu0 0.0
  %6908 = vmatprep.subr.mxu0 0.0
  %6909 = vmatpush1.msra.mxu0 0.0
  %6910 = vmatprep.subr.mxu0 0.0
  %6911 = vmatpush1.msra.mxu0 0.0
  %6912 = vmatprep.subr.mxu0 0.0
  %6913 = vmatpush1.msra.mxu0 0.0
  %6914 = vmatprep.mubr.f32.mxu0 0.0
  %6915 = vmatmul.mubr.f32.gmra.mrb[0].mxu0 %v6839
  %v6916 = vpop.f32.mrb[0].mxu0
  %v6917 = vadd.f32 %v6820, %v6916
  %v6918 = vpop.f32.mrb[0].mxu0
  %6919 = vmatprep.mubr.f32.mxu0 0.0
  %6920 = vmatmul.mubr.f32.gmra.mrb[0].mxu0 %v6842
  %v6921 = vpop.f32.mrb[0].mxu0
  %v6922 = vadd.f32 %v6825, %v6921
  %v6923 = vpop.f32.mrb[0].mxu0
  %6924 = vmatprep.mubr.f32.mxu0 0.0
  %6925 = vmatmul.mubr.f32.gmra.mrb[0].mxu0 %v6845
  %v6926 = vpop.f32.mrb[0].mxu0
  %v6927 = vadd.f32 %v6830, %v6926
  %v6928 = vpop.f32.mrb[0].mxu0
  %6929 = vmatprep.mubr.f32.mxu0 0.0
  %6930 = vmatmul.mubr.f32.gmra.mrb[0].mxu0 %v6848
  %v6931 = vpop.f32.mrb[0].mxu0
  %v6932 = vadd.f32 %v6835, %v6931
  %v6933 = vpop.f32.mrb[0].mxu0
  %6934 = vdwg.mxu0
  %v6935 = vmul.f32 %v6927, 1.442695
  %v6936 = vpow.pop %v6935
  %v6937 = vmul.f32 %v6932, 1.442695
  %v6938 = vpow.pop %v6937
  %v6939 = vld [vmem:[%s13] sm:$0xff]
  %v6940 = vld [vmem:[%s13 + $0x8] sm:$0xff]
  %v6941 = vmul.f32 %v6936, %v6939
  %v6942 = vmul.f32 %v6938, %v6940
  %v6943 = vadd.f32 %v6917, %v6941
  %v6944 = vadd.f32 %v6922, %v6942
  %vm6945 = vcmask 15360
  %6946 = vst.msk [vmem:[%s14] sm:$0xff] %vm6945, %v6943
  %6947 = vst.msk [vmem:[%s14 + $0x8] sm:$0xff] %vm6945, %v6944
  // Predicated region
  $region58: #{encoder_forward.1} parent=0 // pred_check
    _
  $region59: #{encoder_forward.1} parent=0 // pred_check_branch
    %6949 = sbr.rel (0) target = $region61
  $region60: #{encoder_forward.1} parent=0 // pred_region
    _
  $region61: #{encoder_forward.1} parent=0 // pred_fallthru
    _
  // Predicated region
  $region62: #{encoder_forward.1} parent=0 // pred_check
    _
  $region63: #{encoder_forward.1} parent=0 // pred_check_branch
    %6951 = sbr.rel (0) target = $region65
  $region64: #{encoder_forward.1} parent=0 // pred_region
    _
  $region65: #{encoder_forward.1} parent=0 // pred_fallthru
    _

</llo_original>
